<compile_context>
chip_gen: v7x
topology: tpu7x:2x2x1
jax: 0.10.0
libtpu: 0.0.40
codegen_flags: <defaults>
</compile_context>

<pallas_src>
import jax
import jax.numpy as jnp
from jax.experimental import pallas as pl
from jax.experimental.pallas import tpu as pltpu

_EPS = 1e-5
_BT = 8  # batch tile (rows per grid step), multiple of 8 sublanes


# ---------------------------------------------------------------------------
# Fused forward kernel
# ---------------------------------------------------------------------------

def _fused_forward_kernel(x_ref, w1_ref, s1_ref, w2_ref, s2_ref,
                          w3_ref, s3_ref, wfc_ref, bfc_ref, o_ref):
    f32 = jnp.float32
    bf16 = jnp.bfloat16

    s1 = s1_ref[...]        # [1, 12*16]
    s2 = s2_ref[...]        # [1, 4*32]
    s3 = s3_ref[...]        # [1, 2*64]
    bfc = bfc_ref[...]      # [1, 10]

    # ---- layer1: 5x5 / stride-2 conv + BN + ReLU, fused with the 2x2 maxpool.
    # One output row (12 positions x 16 ch = 192 lanes) per matmul-accumulation;
    # the stride-2 width structure lives in the Toeplitz-expanded weights.
    def conv1_row(oy):
        acc = jnp.dot(x_ref[:, 2 * oy, :].astype(bf16), w1_ref[0],
                      preferred_element_type=f32)
        for i in range(1, 5):
            acc = acc + jnp.dot(x_ref[:, 2 * oy + i, :].astype(bf16), w1_ref[i],
                                preferred_element_type=f32)
        return jnp.maximum(acc + s1, 0.0)                        # [bt, 192]

    pooled1 = []                                                 # 6 x [bt, 6*16]
    for u in range(6):
        rmax = jnp.maximum(conv1_row(2 * u), conv1_row(2 * u + 1))   # pool over H
        parts = [jnp.maximum(rmax[:, 32 * v: 32 * v + 16],           # pool over W
                             rmax[:, 32 * v + 16: 32 * v + 32])
                 for v in range(6)]
        pooled1.append(jnp.concatenate(parts, axis=-1))          # [bt, 96]

    # ---- layer2: 3x3 conv + BN + ReLU; output rows are 4*32 = 128 lanes.
    act2 = []
    for oy in range(4):
        acc = jnp.dot(pooled1[oy].astype(bf16), w2_ref[0],
                      preferred_element_type=f32)
        for di in range(1, 3):
            acc = acc + jnp.dot(pooled1[oy + di].astype(bf16), w2_ref[di],
                                preferred_element_type=f32)
        act2.append(jnp.maximum(acc + s2, 0.0))                  # [bt, 128]

    # ---- layer3: 3x3 conv + BN + ReLU; output rows are 2*64 = 128 lanes.
    act3 = []
    for oy in range(2):
        acc = jnp.dot(act2[oy].astype(bf16), w3_ref[0],
                      preferred_element_type=f32)
        for di in range(1, 3):
            acc = acc + jnp.dot(act2[oy + di].astype(bf16), w3_ref[di],
                                preferred_element_type=f32)
        act3.append(jnp.maximum(acc + s3, 0.0))                  # [bt, 128]

    # ---- final 2x2 maxpool over the remaining 2x2 spatial map -> [bt, 64]
    feat = jnp.maximum(jnp.maximum(act3[0][:, 0:64], act3[0][:, 64:128]),
                       jnp.maximum(act3[1][:, 0:64], act3[1][:, 64:128]))

    # ---- fc: [bt, 64] @ [64, 10] + bias
    out = jnp.dot(feat.astype(bf16), wfc_ref[...],
                  preferred_element_type=f32) + bfc
    o_ref[...] = out.astype(o_ref.dtype)


# ---------------------------------------------------------------------------
# Wrapper
# ---------------------------------------------------------------------------

def conv2d_fashion_mnist_forward(x_nchw, params, *, batch_tile=_BT):
    B = x_nchw.shape[0]
    assert x_nchw.shape[1:] == (1, 28, 28), "expects FashionMNIST 1x28x28 input"
    x = x_nchw.reshape(B, 28, 28).astype(jnp.float32)

    nb = -(-B // batch_tile)
    b_pad = nb * batch_tile
    if b_pad != B:
        x = jnp.pad(x, ((0, b_pad - B), (0, 0), (0, 0)))

    def fixed(a):  # whole-array block; constant index_map -> fetched once
        return pl.BlockSpec(a.shape, lambda i, _nd=a.ndim: (0,) * _nd)

    out = pl.pallas_call(
        _fused_forward_kernel,
        out_shape=jax.ShapeDtypeStruct((b_pad, 10), jnp.float32),
        grid=(nb,),
        in_specs=[
            pl.BlockSpec((batch_tile, 28, 28), lambda i: (i, 0, 0)),
            fixed(params["w1"]), fixed(params["s1"]),
            fixed(params["w2"]), fixed(params["s2"]),
            fixed(params["w3"]), fixed(params["s3"]),
            fixed(params["wfc"]), fixed(params["bfc"]),
        ],
        out_specs=pl.BlockSpec((batch_tile, 10), lambda i: (i, 0)),
        compiler_params=pltpu.CompilerParams(
            dimension_semantics=("parallel",)),
    )(x, params["w1"], params["s1"], params["w2"], params["s2"],
      params["w3"], params["s3"], params["wfc"], params["bfc"])
    return out[:B]


# ---------------------------------------------------------------------------
# Parameter setup (PyTorch layouts) + BN-fold + Toeplitz expansion
# ---------------------------------------------------------------------------

def init_raw_params(key):
    """Random params in PyTorch layouts (Conv2d: [cout,cin,kh,kw], Linear:
    [out,in]) with eval-mode BatchNorm statistics."""
    ks = jax.random.split(key, 4)

    def conv(k, cin, cout, ksz):
        k1, k2, k3, k4, k5, k6 = jax.random.split(k, 6)
        bound = 1.0 / (cin * ksz * ksz) ** 0.5
        return dict(
            w=jax.random.uniform(k1, (cout, cin, ksz, ksz), jnp.float32, -bound, bound),
            b=jax.random.uniform(k2, (cout,), jnp.float32, -bound, bound),
            gamma=jax.random.uniform(k3, (cout,), jnp.float32, 0.5, 1.5),
            beta=jax.random.normal(k4, (cout,)) * 0.1,
            mean=jax.random.normal(k5, (cout,)) * 0.1,
            var=jax.random.uniform(k6, (cout,), jnp.float32, 0.5, 1.5),
        )

    kfc1, kfc2 = jax.random.split(ks[3])
    bound = 1.0 / 64.0 ** 0.5
    return dict(
        layer1=conv(ks[0], 1, 16, 5),
        layer2=conv(ks[1], 16, 32, 3),
        layer3=conv(ks[2], 32, 64, 3),
        fc=dict(w=jax.random.uniform(kfc1, (10, 64), jnp.float32, -bound, bound),
                b=jax.random.uniform(kfc2, (10,), jnp.float32, -bound, bound)),
    )


def _expand_conv(w, scale, w_in, ow, stride):
    """Toeplitz-expand conv weights [cout,cin,kh,kw] (with BN scale folded in)
    to [kh, w_in*cin, ow*cout]: one output width-row (lanes=(ox,cout)) becomes a
    single matmul of one input width-row (lanes=(w,cin)) per kernel row kh."""
    cout, cin, kh, kw = w.shape
    wf = jnp.transpose(w * scale[:, None, None, None], (2, 3, 1, 0))  # [kh,kw,cin,cout]
    blk = wf.reshape(kh, kw * cin, cout)
    e = jnp.zeros((kh, w_in * cin, ow * cout), jnp.float32)
    for ox in range(ow):
        r0 = ox * stride * cin
        e = e.at[:, r0:r0 + kw * cin, ox * cout:(ox + 1) * cout].set(blk)
    return e


def prepare_params(raw):
    """Fold eval-mode BN (scale into weights, shift into add) and expand."""
    def fold(layer):
        scale = layer["gamma"] / jnp.sqrt(layer["var"] + _EPS)
        shift = layer["beta"] + (layer["b"] - layer["mean"]) * scale
        return scale, shift

    s1, h1 = fold(raw["layer1"])
    s2, h2 = fold(raw["layer2"])
    s3, h3 = fold(raw["layer3"])
    return dict(
        w1=_expand_conv(raw["layer1"]["w"], s1, 28, 12, 2).astype(jnp.bfloat16),
        s1=jnp.tile(h1, 12)[None, :].astype(jnp.float32),        # [1, 192]
        w2=_expand_conv(raw["layer2"]["w"], s2, 6, 4, 1).astype(jnp.bfloat16),
        s2=jnp.tile(h2, 4)[None, :].astype(jnp.float32),         # [1, 128]
        w3=_expand_conv(raw["layer3"]["w"], s3, 4, 2, 1).astype(jnp.bfloat16),
        s3=jnp.tile(h3, 2)[None, :].astype(jnp.float32),         # [1, 128]
        wfc=raw["fc"]["w"].T.astype(jnp.bfloat16),               # [64, 10]
        bfc=raw["fc"]["b"][None, :].astype(jnp.float32),         # [1, 10]
    )


# ---------------------------------------------------------------------------
# Pure-JAX reference (for a correctness check of the fused kernel)
# ---------------------------------------------------------------------------

def reference_forward(x_nchw, raw):
    def conv_bn_relu(x, p, stride):
        y = jax.lax.conv_general_dilated(
            x, p["w"], (stride, stride), "VALID",
            dimension_numbers=("NCHW", "OIHW", "NCHW"))
        y = y + p["b"][None, :, None, None]
        y = ((y - p["mean"][None, :, None, None])
             / jnp.sqrt(p["var"][None, :, None, None] + _EPS)
             * p["gamma"][None, :, None, None]
             + p["beta"][None, :, None, None])
        return jnp.maximum(y, 0.0)

    def maxpool2(x):
        return jax.lax.reduce_window(x, -jnp.inf, jax.lax.max,
                                     (1, 1, 2, 2), (1, 1, 2, 2), "VALID")

    x = conv_bn_relu(x_nchw, raw["layer1"], 2)
    x = maxpool2(x)
    x = conv_bn_relu(x, raw["layer2"], 1)
    x = conv_bn_relu(x, raw["layer3"], 1)
    x = maxpool2(x)
    x = x.reshape(x.shape[0], -1)
    return x @ raw["fc"]["w"].T + raw["fc"]["b"]


if __name__ == "__main__":
    key = jax.random.PRNGKey(0)
    pkey, xkey = jax.random.split(key)
    raw = init_raw_params(pkey)
    params = prepare_params(raw)

    # PyTorch-style NCHW FashionMNIST input: batch=2, 1x28x28.
    x = jax.random.normal(xkey, (2, 1, 28, 28), jnp.float32)

    fwd = jax.jit(lambda xx: conv2d_fashion_mnist_forward(xx, params))
    out = jax.block_until_ready(fwd(x))
    assert out.shape == (2, 10) and out.dtype == jnp.float32

    ref = jax.block_until_ready(jax.jit(lambda xx: reference_forward(xx, raw))(x))
    err = float(jnp.max(jnp.abs(out - ref)))
    assert err < 7.5e-2, f"kernel/reference mismatch: max abs err = {err}"
    print("KERNEL_OK")
</pallas_src>

<mosaic_0001>
module attributes {stable_mosaic.version = 11 : i64} {
  func.func @_fused_forward_kernel(%arg0: i32, %arg1: memref<8x28x28xf32, #tpu.memory_space<vmem>>, %arg2: memref<5x28x192xbf16, #tpu.memory_space<vmem>>, %arg3: memref<1x192xf32, #tpu.memory_space<vmem>>, %arg4: memref<3x96x128xbf16, #tpu.memory_space<vmem>>, %arg5: memref<1x128xf32, #tpu.memory_space<vmem>>, %arg6: memref<3x128x128xbf16, #tpu.memory_space<vmem>>, %arg7: memref<1x128xf32, #tpu.memory_space<vmem>>, %arg8: memref<64x10xbf16, #tpu.memory_space<vmem>>, %arg9: memref<1x10xf32, #tpu.memory_space<vmem>>, %arg10: memref<8x10xf32, #tpu.memory_space<vmem>>) attributes {dimension_semantics = [#tpu.dimension_semantics<parallel>], iteration_bounds = array<i64: 1>, scalar_prefetch = 0 : i64, scratch_operands = 0 : i64, tpu.core_type = #tpu.core_type<tc>, window_params = [{transform_indices = @transform_0, window_bounds = array<i64: 8, 28, 28>}, {pipeline_mode = #tpu.pipeline_mode<synchronous>, transform_indices = @transform_1, window_bounds = array<i64: 5, 28, 192>}, {pipeline_mode = #tpu.pipeline_mode<synchronous>, transform_indices = @transform_2, window_bounds = array<i64: 1, 192>}, {pipeline_mode = #tpu.pipeline_mode<synchronous>, transform_indices = @transform_3, window_bounds = array<i64: 3, 96, 128>}, {pipeline_mode = #tpu.pipeline_mode<synchronous>, transform_indices = @transform_4, window_bounds = array<i64: 1, 128>}, {pipeline_mode = #tpu.pipeline_mode<synchronous>, transform_indices = @transform_5, window_bounds = array<i64: 3, 128, 128>}, {pipeline_mode = #tpu.pipeline_mode<synchronous>, transform_indices = @transform_6, window_bounds = array<i64: 1, 128>}, {pipeline_mode = #tpu.pipeline_mode<synchronous>, transform_indices = @transform_7, window_bounds = array<i64: 64, 10>}, {pipeline_mode = #tpu.pipeline_mode<synchronous>, transform_indices = @transform_8, window_bounds = array<i64: 1, 10>}, {transform_indices = @transform_9, window_bounds = array<i64: 8, 10>}]} {
    %c0 = arith.constant 0 : index
    %c0_0 = arith.constant 0 : index
    %0 = vector.load %arg3[%c0, %c0_0] : memref<1x192xf32, #tpu.memory_space<vmem>>, vector<1x192xf32>
    %c0_1 = arith.constant 0 : index
    %c0_2 = arith.constant 0 : index
    %1 = vector.load %arg5[%c0_1, %c0_2] : memref<1x128xf32, #tpu.memory_space<vmem>>, vector<1x128xf32>
    %c0_3 = arith.constant 0 : index
    %c0_4 = arith.constant 0 : index
    %2 = vector.load %arg7[%c0_3, %c0_4] : memref<1x128xf32, #tpu.memory_space<vmem>>, vector<1x128xf32>
    %c0_5 = arith.constant 0 : index
    %c0_6 = arith.constant 0 : index
    %3 = vector.load %arg9[%c0_5, %c0_6] : memref<1x10xf32, #tpu.memory_space<vmem>>, vector<1x10xf32>
    %c0_7 = arith.constant 0 : index
    %c0_8 = arith.constant 0 : index
    %c0_9 = arith.constant 0 : index
    %4 = vector.load %arg1[%c0_7, %c0_8, %c0_9] : memref<8x28x28xf32, #tpu.memory_space<vmem>>, vector<8x1x28xf32>
    %5 = vector.shape_cast %4 : vector<8x1x28xf32> to vector<8x28xf32>
    %6 = arith.truncf %5 : vector<8x28xf32> to vector<8x28xbf16>
    %c0_10 = arith.constant 0 : index
    %c0_11 = arith.constant 0 : index
    %c0_12 = arith.constant 0 : index
    %7 = vector.load %arg2[%c0_10, %c0_11, %c0_12] : memref<5x28x192xbf16, #tpu.memory_space<vmem>>, vector<1x28x192xbf16>
    %8 = vector.shape_cast %7 : vector<1x28x192xbf16> to vector<28x192xbf16>
    %cst = arith.constant dense<0.000000e+00> : vector<8x192xf32>
    %9 = tpu.matmul %6, %8, %cst {dimension_numbers = #tpu.dot_dimension_numbers<[1], [0], [0], [1], [0, 0, 1, 1], [], []>} : vector<8x28xbf16>, vector<28x192xbf16>, vector<8x192xf32> -> vector<8x192xf32>
    %c0_13 = arith.constant 0 : index
    %c1 = arith.constant 1 : index
    %c0_14 = arith.constant 0 : index
    %10 = vector.load %arg1[%c0_13, %c1, %c0_14] : memref<8x28x28xf32, #tpu.memory_space<vmem>>, vector<8x1x28xf32>
    %11 = vector.shape_cast %10 : vector<8x1x28xf32> to vector<8x28xf32>
    %12 = arith.truncf %11 : vector<8x28xf32> to vector<8x28xbf16>
    %c1_15 = arith.constant 1 : index
    %c0_16 = arith.constant 0 : index
    %c0_17 = arith.constant 0 : index
    %13 = vector.load %arg2[%c1_15, %c0_16, %c0_17] : memref<5x28x192xbf16, #tpu.memory_space<vmem>>, vector<1x28x192xbf16>
    %14 = vector.shape_cast %13 : vector<1x28x192xbf16> to vector<28x192xbf16>
    %cst_18 = arith.constant dense<0.000000e+00> : vector<8x192xf32>
    %15 = tpu.matmul %12, %14, %cst_18 {dimension_numbers = #tpu.dot_dimension_numbers<[1], [0], [0], [1], [0, 0, 1, 1], [], []>} : vector<8x28xbf16>, vector<28x192xbf16>, vector<8x192xf32> -> vector<8x192xf32>
    %16 = arith.addf %9, %15 : vector<8x192xf32>
    %c0_19 = arith.constant 0 : index
    %c2 = arith.constant 2 : index
    %c0_20 = arith.constant 0 : index
    %17 = vector.load %arg1[%c0_19, %c2, %c0_20] : memref<8x28x28xf32, #tpu.memory_space<vmem>>, vector<8x1x28xf32>
    %18 = vector.shape_cast %17 : vector<8x1x28xf32> to vector<8x28xf32>
    %19 = arith.truncf %18 : vector<8x28xf32> to vector<8x28xbf16>
    %c2_21 = arith.constant 2 : index
    %c0_22 = arith.constant 0 : index
    %c0_23 = arith.constant 0 : index
    %20 = vector.load %arg2[%c2_21, %c0_22, %c0_23] : memref<5x28x192xbf16, #tpu.memory_space<vmem>>, vector<1x28x192xbf16>
    %21 = vector.shape_cast %20 : vector<1x28x192xbf16> to vector<28x192xbf16>
    %cst_24 = arith.constant dense<0.000000e+00> : vector<8x192xf32>
    %22 = tpu.matmul %19, %21, %cst_24 {dimension_numbers = #tpu.dot_dimension_numbers<[1], [0], [0], [1], [0, 0, 1, 1], [], []>} : vector<8x28xbf16>, vector<28x192xbf16>, vector<8x192xf32> -> vector<8x192xf32>
    %23 = arith.addf %16, %22 : vector<8x192xf32>
    %c0_25 = arith.constant 0 : index
    %c3 = arith.constant 3 : index
    %c0_26 = arith.constant 0 : index
    %24 = vector.load %arg1[%c0_25, %c3, %c0_26] : memref<8x28x28xf32, #tpu.memory_space<vmem>>, vector<8x1x28xf32>
    %25 = vector.shape_cast %24 : vector<8x1x28xf32> to vector<8x28xf32>
    %26 = arith.truncf %25 : vector<8x28xf32> to vector<8x28xbf16>
    %c3_27 = arith.constant 3 : index
    %c0_28 = arith.constant 0 : index
    %c0_29 = arith.constant 0 : index
    %27 = vector.load %arg2[%c3_27, %c0_28, %c0_29] : memref<5x28x192xbf16, #tpu.memory_space<vmem>>, vector<1x28x192xbf16>
    %28 = vector.shape_cast %27 : vector<1x28x192xbf16> to vector<28x192xbf16>
    %cst_30 = arith.constant dense<0.000000e+00> : vector<8x192xf32>
    %29 = tpu.matmul %26, %28, %cst_30 {dimension_numbers = #tpu.dot_dimension_numbers<[1], [0], [0], [1], [0, 0, 1, 1], [], []>} : vector<8x28xbf16>, vector<28x192xbf16>, vector<8x192xf32> -> vector<8x192xf32>
    %30 = arith.addf %23, %29 : vector<8x192xf32>
    %c0_31 = arith.constant 0 : index
    %c4 = arith.constant 4 : index
    %c0_32 = arith.constant 0 : index
    %31 = vector.load %arg1[%c0_31, %c4, %c0_32] : memref<8x28x28xf32, #tpu.memory_space<vmem>>, vector<8x1x28xf32>
    %32 = vector.shape_cast %31 : vector<8x1x28xf32> to vector<8x28xf32>
    %33 = arith.truncf %32 : vector<8x28xf32> to vector<8x28xbf16>
    %c4_33 = arith.constant 4 : index
    %c0_34 = arith.constant 0 : index
    %c0_35 = arith.constant 0 : index
    %34 = vector.load %arg2[%c4_33, %c0_34, %c0_35] : memref<5x28x192xbf16, #tpu.memory_space<vmem>>, vector<1x28x192xbf16>
    %35 = vector.shape_cast %34 : vector<1x28x192xbf16> to vector<28x192xbf16>
    %cst_36 = arith.constant dense<0.000000e+00> : vector<8x192xf32>
    %36 = tpu.matmul %33, %35, %cst_36 {dimension_numbers = #tpu.dot_dimension_numbers<[1], [0], [0], [1], [0, 0, 1, 1], [], []>} : vector<8x28xbf16>, vector<28x192xbf16>, vector<8x192xf32> -> vector<8x192xf32>
    %37 = arith.addf %30, %36 : vector<8x192xf32>
    %38 = vector.broadcast %0 : vector<1x192xf32> to vector<8x192xf32>
    %39 = arith.addf %37, %38 : vector<8x192xf32>
    %cst_37 = arith.constant 0.000000e+00 : f32
    %40 = vector.broadcast %cst_37 : f32 to vector<8x192xf32>
    %41 = arith.maximumf %39, %40 : vector<8x192xf32>
    %c0_38 = arith.constant 0 : index
    %c2_39 = arith.constant 2 : index
    %c0_40 = arith.constant 0 : index
    %42 = vector.load %arg1[%c0_38, %c2_39, %c0_40] : memref<8x28x28xf32, #tpu.memory_space<vmem>>, vector<8x1x28xf32>
    %43 = vector.shape_cast %42 : vector<8x1x28xf32> to vector<8x28xf32>
    %44 = arith.truncf %43 : vector<8x28xf32> to vector<8x28xbf16>
    %c0_41 = arith.constant 0 : index
    %c0_42 = arith.constant 0 : index
    %c0_43 = arith.constant 0 : index
    %45 = vector.load %arg2[%c0_41, %c0_42, %c0_43] : memref<5x28x192xbf16, #tpu.memory_space<vmem>>, vector<1x28x192xbf16>
    %46 = vector.shape_cast %45 : vector<1x28x192xbf16> to vector<28x192xbf16>
    %cst_44 = arith.constant dense<0.000000e+00> : vector<8x192xf32>
    %47 = tpu.matmul %44, %46, %cst_44 {dimension_numbers = #tpu.dot_dimension_numbers<[1], [0], [0], [1], [0, 0, 1, 1], [], []>} : vector<8x28xbf16>, vector<28x192xbf16>, vector<8x192xf32> -> vector<8x192xf32>
    %c0_45 = arith.constant 0 : index
    %c3_46 = arith.constant 3 : index
    %c0_47 = arith.constant 0 : index
    %48 = vector.load %arg1[%c0_45, %c3_46, %c0_47] : memref<8x28x28xf32, #tpu.memory_space<vmem>>, vector<8x1x28xf32>
    %49 = vector.shape_cast %48 : vector<8x1x28xf32> to vector<8x28xf32>
    %50 = arith.truncf %49 : vector<8x28xf32> to vector<8x28xbf16>
    %c1_48 = arith.constant 1 : index
    %c0_49 = arith.constant 0 : index
    %c0_50 = arith.constant 0 : index
    %51 = vector.load %arg2[%c1_48, %c0_49, %c0_50] : memref<5x28x192xbf16, #tpu.memory_space<vmem>>, vector<1x28x192xbf16>
    %52 = vector.shape_cast %51 : vector<1x28x192xbf16> to vector<28x192xbf16>
    %cst_51 = arith.constant dense<0.000000e+00> : vector<8x192xf32>
    %53 = tpu.matmul %50, %52, %cst_51 {dimension_numbers = #tpu.dot_dimension_numbers<[1], [0], [0], [1], [0, 0, 1, 1], [], []>} : vector<8x28xbf16>, vector<28x192xbf16>, vector<8x192xf32> -> vector<8x192xf32>
    %54 = arith.addf %47, %53 : vector<8x192xf32>
    %c0_52 = arith.constant 0 : index
    %c4_53 = arith.constant 4 : index
    %c0_54 = arith.constant 0 : index
    %55 = vector.load %arg1[%c0_52, %c4_53, %c0_54] : memref<8x28x28xf32, #tpu.memory_space<vmem>>, vector<8x1x28xf32>
    %56 = vector.shape_cast %55 : vector<8x1x28xf32> to vector<8x28xf32>
    %57 = arith.truncf %56 : vector<8x28xf32> to vector<8x28xbf16>
    %c2_55 = arith.constant 2 : index
    %c0_56 = arith.constant 0 : index
    %c0_57 = arith.constant 0 : index
    %58 = vector.load %arg2[%c2_55, %c0_56, %c0_57] : memref<5x28x192xbf16, #tpu.memory_space<vmem>>, vector<1x28x192xbf16>
    %59 = vector.shape_cast %58 : vector<1x28x192xbf16> to vector<28x192xbf16>
    %cst_58 = arith.constant dense<0.000000e+00> : vector<8x192xf32>
    %60 = tpu.matmul %57, %59, %cst_58 {dimension_numbers = #tpu.dot_dimension_numbers<[1], [0], [0], [1], [0, 0, 1, 1], [], []>} : vector<8x28xbf16>, vector<28x192xbf16>, vector<8x192xf32> -> vector<8x192xf32>
    %61 = arith.addf %54, %60 : vector<8x192xf32>
    %c0_59 = arith.constant 0 : index
    %c5 = arith.constant 5 : index
    %c0_60 = arith.constant 0 : index
    %62 = vector.load %arg1[%c0_59, %c5, %c0_60] : memref<8x28x28xf32, #tpu.memory_space<vmem>>, vector<8x1x28xf32>
    %63 = vector.shape_cast %62 : vector<8x1x28xf32> to vector<8x28xf32>
    %64 = arith.truncf %63 : vector<8x28xf32> to vector<8x28xbf16>
    %c3_61 = arith.constant 3 : index
    %c0_62 = arith.constant 0 : index
    %c0_63 = arith.constant 0 : index
    %65 = vector.load %arg2[%c3_61, %c0_62, %c0_63] : memref<5x28x192xbf16, #tpu.memory_space<vmem>>, vector<1x28x192xbf16>
    %66 = vector.shape_cast %65 : vector<1x28x192xbf16> to vector<28x192xbf16>
    %cst_64 = arith.constant dense<0.000000e+00> : vector<8x192xf32>
    %67 = tpu.matmul %64, %66, %cst_64 {dimension_numbers = #tpu.dot_dimension_numbers<[1], [0], [0], [1], [0, 0, 1, 1], [], []>} : vector<8x28xbf16>, vector<28x192xbf16>, vector<8x192xf32> -> vector<8x192xf32>
    %68 = arith.addf %61, %67 : vector<8x192xf32>
    %c0_65 = arith.constant 0 : index
    %c6 = arith.constant 6 : index
    %c0_66 = arith.constant 0 : index
    %69 = vector.load %arg1[%c0_65, %c6, %c0_66] : memref<8x28x28xf32, #tpu.memory_space<vmem>>, vector<8x1x28xf32>
    %70 = vector.shape_cast %69 : vector<8x1x28xf32> to vector<8x28xf32>
    %71 = arith.truncf %70 : vector<8x28xf32> to vector<8x28xbf16>
    %c4_67 = arith.constant 4 : index
    %c0_68 = arith.constant 0 : index
    %c0_69 = arith.constant 0 : index
    %72 = vector.load %arg2[%c4_67, %c0_68, %c0_69] : memref<5x28x192xbf16, #tpu.memory_space<vmem>>, vector<1x28x192xbf16>
    %73 = vector.shape_cast %72 : vector<1x28x192xbf16> to vector<28x192xbf16>
    %cst_70 = arith.constant dense<0.000000e+00> : vector<8x192xf32>
    %74 = tpu.matmul %71, %73, %cst_70 {dimension_numbers = #tpu.dot_dimension_numbers<[1], [0], [0], [1], [0, 0, 1, 1], [], []>} : vector<8x28xbf16>, vector<28x192xbf16>, vector<8x192xf32> -> vector<8x192xf32>
    %75 = arith.addf %68, %74 : vector<8x192xf32>
    %76 = vector.broadcast %0 : vector<1x192xf32> to vector<8x192xf32>
    %77 = arith.addf %75, %76 : vector<8x192xf32>
    %cst_71 = arith.constant 0.000000e+00 : f32
    %78 = vector.broadcast %cst_71 : f32 to vector<8x192xf32>
    %79 = arith.maximumf %77, %78 : vector<8x192xf32>
    %80 = arith.maximumf %41, %79 : vector<8x192xf32>
    %81 = vector.extract_strided_slice %80 {offsets = [0, 0], sizes = [8, 16], strides = [1, 1]} : vector<8x192xf32> to vector<8x16xf32>
    %82 = vector.extract_strided_slice %80 {offsets = [0, 16], sizes = [8, 16], strides = [1, 1]} : vector<8x192xf32> to vector<8x16xf32>
    %83 = arith.maximumf %81, %82 : vector<8x16xf32>
    %84 = vector.extract_strided_slice %80 {offsets = [0, 32], sizes = [8, 16], strides = [1, 1]} : vector<8x192xf32> to vector<8x16xf32>
    %85 = vector.extract_strided_slice %80 {offsets = [0, 48], sizes = [8, 16], strides = [1, 1]} : vector<8x192xf32> to vector<8x16xf32>
    %86 = arith.maximumf %84, %85 : vector<8x16xf32>
    %87 = vector.extract_strided_slice %80 {offsets = [0, 64], sizes = [8, 16], strides = [1, 1]} : vector<8x192xf32> to vector<8x16xf32>
    %88 = vector.extract_strided_slice %80 {offsets = [0, 80], sizes = [8, 16], strides = [1, 1]} : vector<8x192xf32> to vector<8x16xf32>
    %89 = arith.maximumf %87, %88 : vector<8x16xf32>
    %90 = vector.extract_strided_slice %80 {offsets = [0, 96], sizes = [8, 16], strides = [1, 1]} : vector<8x192xf32> to vector<8x16xf32>
    %91 = vector.extract_strided_slice %80 {offsets = [0, 112], sizes = [8, 16], strides = [1, 1]} : vector<8x192xf32> to vector<8x16xf32>
    %92 = arith.maximumf %90, %91 : vector<8x16xf32>
    %93 = vector.extract_strided_slice %80 {offsets = [0, 128], sizes = [8, 16], strides = [1, 1]} : vector<8x192xf32> to vector<8x16xf32>
    %94 = vector.extract_strided_slice %80 {offsets = [0, 144], sizes = [8, 16], strides = [1, 1]} : vector<8x192xf32> to vector<8x16xf32>
    %95 = arith.maximumf %93, %94 : vector<8x16xf32>
    %96 = vector.extract_strided_slice %80 {offsets = [0, 160], sizes = [8, 16], strides = [1, 1]} : vector<8x192xf32> to vector<8x16xf32>
    %97 = vector.extract_strided_slice %80 {offsets = [0, 176], sizes = [8, 16], strides = [1, 1]} : vector<8x192xf32> to vector<8x16xf32>
    %98 = arith.maximumf %96, %97 : vector<8x16xf32>
    %99 = tpu.concatenate %83, %86, %89, %92, %95, %98 in 1 : vector<8x16xf32>, vector<8x16xf32>, vector<8x16xf32>, vector<8x16xf32>, vector<8x16xf32>, vector<8x16xf32> -> vector<8x96xf32>
    %c0_72 = arith.constant 0 : index
    %c4_73 = arith.constant 4 : index
    %c0_74 = arith.constant 0 : index
    %100 = vector.load %arg1[%c0_72, %c4_73, %c0_74] : memref<8x28x28xf32, #tpu.memory_space<vmem>>, vector<8x1x28xf32>
    %101 = vector.shape_cast %100 : vector<8x1x28xf32> to vector<8x28xf32>
    %102 = arith.truncf %101 : vector<8x28xf32> to vector<8x28xbf16>
    %c0_75 = arith.constant 0 : index
    %c0_76 = arith.constant 0 : index
    %c0_77 = arith.constant 0 : index
    %103 = vector.load %arg2[%c0_75, %c0_76, %c0_77] : memref<5x28x192xbf16, #tpu.memory_space<vmem>>, vector<1x28x192xbf16>
    %104 = vector.shape_cast %103 : vector<1x28x192xbf16> to vector<28x192xbf16>
    %cst_78 = arith.constant dense<0.000000e+00> : vector<8x192xf32>
    %105 = tpu.matmul %102, %104, %cst_78 {dimension_numbers = #tpu.dot_dimension_numbers<[1], [0], [0], [1], [0, 0, 1, 1], [], []>} : vector<8x28xbf16>, vector<28x192xbf16>, vector<8x192xf32> -> vector<8x192xf32>
    %c0_79 = arith.constant 0 : index
    %c5_80 = arith.constant 5 : index
    %c0_81 = arith.constant 0 : index
    %106 = vector.load %arg1[%c0_79, %c5_80, %c0_81] : memref<8x28x28xf32, #tpu.memory_space<vmem>>, vector<8x1x28xf32>
    %107 = vector.shape_cast %106 : vector<8x1x28xf32> to vector<8x28xf32>
    %108 = arith.truncf %107 : vector<8x28xf32> to vector<8x28xbf16>
    %c1_82 = arith.constant 1 : index
    %c0_83 = arith.constant 0 : index
    %c0_84 = arith.constant 0 : index
    %109 = vector.load %arg2[%c1_82, %c0_83, %c0_84] : memref<5x28x192xbf16, #tpu.memory_space<vmem>>, vector<1x28x192xbf16>
    %110 = vector.shape_cast %109 : vector<1x28x192xbf16> to vector<28x192xbf16>
    %cst_85 = arith.constant dense<0.000000e+00> : vector<8x192xf32>
    %111 = tpu.matmul %108, %110, %cst_85 {dimension_numbers = #tpu.dot_dimension_numbers<[1], [0], [0], [1], [0, 0, 1, 1], [], []>} : vector<8x28xbf16>, vector<28x192xbf16>, vector<8x192xf32> -> vector<8x192xf32>
    %112 = arith.addf %105, %111 : vector<8x192xf32>
    %c0_86 = arith.constant 0 : index
    %c6_87 = arith.constant 6 : index
    %c0_88 = arith.constant 0 : index
    %113 = vector.load %arg1[%c0_86, %c6_87, %c0_88] : memref<8x28x28xf32, #tpu.memory_space<vmem>>, vector<8x1x28xf32>
    %114 = vector.shape_cast %113 : vector<8x1x28xf32> to vector<8x28xf32>
    %115 = arith.truncf %114 : vector<8x28xf32> to vector<8x28xbf16>
    %c2_89 = arith.constant 2 : index
    %c0_90 = arith.constant 0 : index
    %c0_91 = arith.constant 0 : index
    %116 = vector.load %arg2[%c2_89, %c0_90, %c0_91] : memref<5x28x192xbf16, #tpu.memory_space<vmem>>, vector<1x28x192xbf16>
    %117 = vector.shape_cast %116 : vector<1x28x192xbf16> to vector<28x192xbf16>
    %cst_92 = arith.constant dense<0.000000e+00> : vector<8x192xf32>
    %118 = tpu.matmul %115, %117, %cst_92 {dimension_numbers = #tpu.dot_dimension_numbers<[1], [0], [0], [1], [0, 0, 1, 1], [], []>} : vector<8x28xbf16>, vector<28x192xbf16>, vector<8x192xf32> -> vector<8x192xf32>
    %119 = arith.addf %112, %118 : vector<8x192xf32>
    %c0_93 = arith.constant 0 : index
    %c7 = arith.constant 7 : index
    %c0_94 = arith.constant 0 : index
    %120 = vector.load %arg1[%c0_93, %c7, %c0_94] : memref<8x28x28xf32, #tpu.memory_space<vmem>>, vector<8x1x28xf32>
    %121 = vector.shape_cast %120 : vector<8x1x28xf32> to vector<8x28xf32>
    %122 = arith.truncf %121 : vector<8x28xf32> to vector<8x28xbf16>
    %c3_95 = arith.constant 3 : index
    %c0_96 = arith.constant 0 : index
    %c0_97 = arith.constant 0 : index
    %123 = vector.load %arg2[%c3_95, %c0_96, %c0_97] : memref<5x28x192xbf16, #tpu.memory_space<vmem>>, vector<1x28x192xbf16>
    %124 = vector.shape_cast %123 : vector<1x28x192xbf16> to vector<28x192xbf16>
    %cst_98 = arith.constant dense<0.000000e+00> : vector<8x192xf32>
    %125 = tpu.matmul %122, %124, %cst_98 {dimension_numbers = #tpu.dot_dimension_numbers<[1], [0], [0], [1], [0, 0, 1, 1], [], []>} : vector<8x28xbf16>, vector<28x192xbf16>, vector<8x192xf32> -> vector<8x192xf32>
    %126 = arith.addf %119, %125 : vector<8x192xf32>
    %c0_99 = arith.constant 0 : index
    %c8 = arith.constant 8 : index
    %c0_100 = arith.constant 0 : index
    %127 = vector.load %arg1[%c0_99, %c8, %c0_100] : memref<8x28x28xf32, #tpu.memory_space<vmem>>, vector<8x1x28xf32>
    %128 = vector.shape_cast %127 : vector<8x1x28xf32> to vector<8x28xf32>
    %129 = arith.truncf %128 : vector<8x28xf32> to vector<8x28xbf16>
    %c4_101 = arith.constant 4 : index
    %c0_102 = arith.constant 0 : index
    %c0_103 = arith.constant 0 : index
    %130 = vector.load %arg2[%c4_101, %c0_102, %c0_103] : memref<5x28x192xbf16, #tpu.memory_space<vmem>>, vector<1x28x192xbf16>
    %131 = vector.shape_cast %130 : vector<1x28x192xbf16> to vector<28x192xbf16>
    %cst_104 = arith.constant dense<0.000000e+00> : vector<8x192xf32>
    %132 = tpu.matmul %129, %131, %cst_104 {dimension_numbers = #tpu.dot_dimension_numbers<[1], [0], [0], [1], [0, 0, 1, 1], [], []>} : vector<8x28xbf16>, vector<28x192xbf16>, vector<8x192xf32> -> vector<8x192xf32>
    %133 = arith.addf %126, %132 : vector<8x192xf32>
    %134 = vector.broadcast %0 : vector<1x192xf32> to vector<8x192xf32>
    %135 = arith.addf %133, %134 : vector<8x192xf32>
    %cst_105 = arith.constant 0.000000e+00 : f32
    %136 = vector.broadcast %cst_105 : f32 to vector<8x192xf32>
    %137 = arith.maximumf %135, %136 : vector<8x192xf32>
    %c0_106 = arith.constant 0 : index
    %c6_107 = arith.constant 6 : index
    %c0_108 = arith.constant 0 : index
    %138 = vector.load %arg1[%c0_106, %c6_107, %c0_108] : memref<8x28x28xf32, #tpu.memory_space<vmem>>, vector<8x1x28xf32>
    %139 = vector.shape_cast %138 : vector<8x1x28xf32> to vector<8x28xf32>
    %140 = arith.truncf %139 : vector<8x28xf32> to vector<8x28xbf16>
    %c0_109 = arith.constant 0 : index
    %c0_110 = arith.constant 0 : index
    %c0_111 = arith.constant 0 : index
    %141 = vector.load %arg2[%c0_109, %c0_110, %c0_111] : memref<5x28x192xbf16, #tpu.memory_space<vmem>>, vector<1x28x192xbf16>
    %142 = vector.shape_cast %141 : vector<1x28x192xbf16> to vector<28x192xbf16>
    %cst_112 = arith.constant dense<0.000000e+00> : vector<8x192xf32>
    %143 = tpu.matmul %140, %142, %cst_112 {dimension_numbers = #tpu.dot_dimension_numbers<[1], [0], [0], [1], [0, 0, 1, 1], [], []>} : vector<8x28xbf16>, vector<28x192xbf16>, vector<8x192xf32> -> vector<8x192xf32>
    %c0_113 = arith.constant 0 : index
    %c7_114 = arith.constant 7 : index
    %c0_115 = arith.constant 0 : index
    %144 = vector.load %arg1[%c0_113, %c7_114, %c0_115] : memref<8x28x28xf32, #tpu.memory_space<vmem>>, vector<8x1x28xf32>
    %145 = vector.shape_cast %144 : vector<8x1x28xf32> to vector<8x28xf32>
    %146 = arith.truncf %145 : vector<8x28xf32> to vector<8x28xbf16>
    %c1_116 = arith.constant 1 : index
    %c0_117 = arith.constant 0 : index
    %c0_118 = arith.constant 0 : index
    %147 = vector.load %arg2[%c1_116, %c0_117, %c0_118] : memref<5x28x192xbf16, #tpu.memory_space<vmem>>, vector<1x28x192xbf16>
    %148 = vector.shape_cast %147 : vector<1x28x192xbf16> to vector<28x192xbf16>
    %cst_119 = arith.constant dense<0.000000e+00> : vector<8x192xf32>
    %149 = tpu.matmul %146, %148, %cst_119 {dimension_numbers = #tpu.dot_dimension_numbers<[1], [0], [0], [1], [0, 0, 1, 1], [], []>} : vector<8x28xbf16>, vector<28x192xbf16>, vector<8x192xf32> -> vector<8x192xf32>
    %150 = arith.addf %143, %149 : vector<8x192xf32>
    %c0_120 = arith.constant 0 : index
    %c8_121 = arith.constant 8 : index
    %c0_122 = arith.constant 0 : index
    %151 = vector.load %arg1[%c0_120, %c8_121, %c0_122] : memref<8x28x28xf32, #tpu.memory_space<vmem>>, vector<8x1x28xf32>
    %152 = vector.shape_cast %151 : vector<8x1x28xf32> to vector<8x28xf32>
    %153 = arith.truncf %152 : vector<8x28xf32> to vector<8x28xbf16>
    %c2_123 = arith.constant 2 : index
    %c0_124 = arith.constant 0 : index
    %c0_125 = arith.constant 0 : index
    %154 = vector.load %arg2[%c2_123, %c0_124, %c0_125] : memref<5x28x192xbf16, #tpu.memory_space<vmem>>, vector<1x28x192xbf16>
    %155 = vector.shape_cast %154 : vector<1x28x192xbf16> to vector<28x192xbf16>
    %cst_126 = arith.constant dense<0.000000e+00> : vector<8x192xf32>
    %156 = tpu.matmul %153, %155, %cst_126 {dimension_numbers = #tpu.dot_dimension_numbers<[1], [0], [0], [1], [0, 0, 1, 1], [], []>} : vector<8x28xbf16>, vector<28x192xbf16>, vector<8x192xf32> -> vector<8x192xf32>
    %157 = arith.addf %150, %156 : vector<8x192xf32>
    %c0_127 = arith.constant 0 : index
    %c9 = arith.constant 9 : index
    %c0_128 = arith.constant 0 : index
    %158 = vector.load %arg1[%c0_127, %c9, %c0_128] : memref<8x28x28xf32, #tpu.memory_space<vmem>>, vector<8x1x28xf32>
    %159 = vector.shape_cast %158 : vector<8x1x28xf32> to vector<8x28xf32>
    %160 = arith.truncf %159 : vector<8x28xf32> to vector<8x28xbf16>
    %c3_129 = arith.constant 3 : index
    %c0_130 = arith.constant 0 : index
    %c0_131 = arith.constant 0 : index
    %161 = vector.load %arg2[%c3_129, %c0_130, %c0_131] : memref<5x28x192xbf16, #tpu.memory_space<vmem>>, vector<1x28x192xbf16>
    %162 = vector.shape_cast %161 : vector<1x28x192xbf16> to vector<28x192xbf16>
    %cst_132 = arith.constant dense<0.000000e+00> : vector<8x192xf32>
    %163 = tpu.matmul %160, %162, %cst_132 {dimension_numbers = #tpu.dot_dimension_numbers<[1], [0], [0], [1], [0, 0, 1, 1], [], []>} : vector<8x28xbf16>, vector<28x192xbf16>, vector<8x192xf32> -> vector<8x192xf32>
    %164 = arith.addf %157, %163 : vector<8x192xf32>
    %c0_133 = arith.constant 0 : index
    %c10 = arith.constant 10 : index
    %c0_134 = arith.constant 0 : index
    %165 = vector.load %arg1[%c0_133, %c10, %c0_134] : memref<8x28x28xf32, #tpu.memory_space<vmem>>, vector<8x1x28xf32>
    %166 = vector.shape_cast %165 : vector<8x1x28xf32> to vector<8x28xf32>
    %167 = arith.truncf %166 : vector<8x28xf32> to vector<8x28xbf16>
    %c4_135 = arith.constant 4 : index
    %c0_136 = arith.constant 0 : index
    %c0_137 = arith.constant 0 : index
    %168 = vector.load %arg2[%c4_135, %c0_136, %c0_137] : memref<5x28x192xbf16, #tpu.memory_space<vmem>>, vector<1x28x192xbf16>
    %169 = vector.shape_cast %168 : vector<1x28x192xbf16> to vector<28x192xbf16>
    %cst_138 = arith.constant dense<0.000000e+00> : vector<8x192xf32>
    %170 = tpu.matmul %167, %169, %cst_138 {dimension_numbers = #tpu.dot_dimension_numbers<[1], [0], [0], [1], [0, 0, 1, 1], [], []>} : vector<8x28xbf16>, vector<28x192xbf16>, vector<8x192xf32> -> vector<8x192xf32>
    %171 = arith.addf %164, %170 : vector<8x192xf32>
    %172 = vector.broadcast %0 : vector<1x192xf32> to vector<8x192xf32>
    %173 = arith.addf %171, %172 : vector<8x192xf32>
    %cst_139 = arith.constant 0.000000e+00 : f32
    %174 = vector.broadcast %cst_139 : f32 to vector<8x192xf32>
    %175 = arith.maximumf %173, %174 : vector<8x192xf32>
    %176 = arith.maximumf %137, %175 : vector<8x192xf32>
    %177 = vector.extract_strided_slice %176 {offsets = [0, 0], sizes = [8, 16], strides = [1, 1]} : vector<8x192xf32> to vector<8x16xf32>
    %178 = vector.extract_strided_slice %176 {offsets = [0, 16], sizes = [8, 16], strides = [1, 1]} : vector<8x192xf32> to vector<8x16xf32>
    %179 = arith.maximumf %177, %178 : vector<8x16xf32>
    %180 = vector.extract_strided_slice %176 {offsets = [0, 32], sizes = [8, 16], strides = [1, 1]} : vector<8x192xf32> to vector<8x16xf32>
    %181 = vector.extract_strided_slice %176 {offsets = [0, 48], sizes = [8, 16], strides = [1, 1]} : vector<8x192xf32> to vector<8x16xf32>
    %182 = arith.maximumf %180, %181 : vector<8x16xf32>
    %183 = vector.extract_strided_slice %176 {offsets = [0, 64], sizes = [8, 16], strides = [1, 1]} : vector<8x192xf32> to vector<8x16xf32>
    %184 = vector.extract_strided_slice %176 {offsets = [0, 80], sizes = [8, 16], strides = [1, 1]} : vector<8x192xf32> to vector<8x16xf32>
    %185 = arith.maximumf %183, %184 : vector<8x16xf32>
    %186 = vector.extract_strided_slice %176 {offsets = [0, 96], sizes = [8, 16], strides = [1, 1]} : vector<8x192xf32> to vector<8x16xf32>
    %187 = vector.extract_strided_slice %176 {offsets = [0, 112], sizes = [8, 16], strides = [1, 1]} : vector<8x192xf32> to vector<8x16xf32>
    %188 = arith.maximumf %186, %187 : vector<8x16xf32>
    %189 = vector.extract_strided_slice %176 {offsets = [0, 128], sizes = [8, 16], strides = [1, 1]} : vector<8x192xf32> to vector<8x16xf32>
    %190 = vector.extract_strided_slice %176 {offsets = [0, 144], sizes = [8, 16], strides = [1, 1]} : vector<8x192xf32> to vector<8x16xf32>
    %191 = arith.maximumf %189, %190 : vector<8x16xf32>
    %192 = vector.extract_strided_slice %176 {offsets = [0, 160], sizes = [8, 16], strides = [1, 1]} : vector<8x192xf32> to vector<8x16xf32>
    %193 = vector.extract_strided_slice %176 {offsets = [0, 176], sizes = [8, 16], strides = [1, 1]} : vector<8x192xf32> to vector<8x16xf32>
    %194 = arith.maximumf %192, %193 : vector<8x16xf32>
    %195 = tpu.concatenate %179, %182, %185, %188, %191, %194 in 1 : vector<8x16xf32>, vector<8x16xf32>, vector<8x16xf32>, vector<8x16xf32>, vector<8x16xf32>, vector<8x16xf32> -> vector<8x96xf32>
    %c0_140 = arith.constant 0 : index
    %c8_141 = arith.constant 8 : index
    %c0_142 = arith.constant 0 : index
    %196 = vector.load %arg1[%c0_140, %c8_141, %c0_142] : memref<8x28x28xf32, #tpu.memory_space<vmem>>, vector<8x1x28xf32>
    %197 = vector.shape_cast %196 : vector<8x1x28xf32> to vector<8x28xf32>
    %198 = arith.truncf %197 : vector<8x28xf32> to vector<8x28xbf16>
    %c0_143 = arith.constant 0 : index
    %c0_144 = arith.constant 0 : index
    %c0_145 = arith.constant 0 : index
    %199 = vector.load %arg2[%c0_143, %c0_144, %c0_145] : memref<5x28x192xbf16, #tpu.memory_space<vmem>>, vector<1x28x192xbf16>
    %200 = vector.shape_cast %199 : vector<1x28x192xbf16> to vector<28x192xbf16>
    %cst_146 = arith.constant dense<0.000000e+00> : vector<8x192xf32>
    %201 = tpu.matmul %198, %200, %cst_146 {dimension_numbers = #tpu.dot_dimension_numbers<[1], [0], [0], [1], [0, 0, 1, 1], [], []>} : vector<8x28xbf16>, vector<28x192xbf16>, vector<8x192xf32> -> vector<8x192xf32>
    %c0_147 = arith.constant 0 : index
    %c9_148 = arith.constant 9 : index
    %c0_149 = arith.constant 0 : index
    %202 = vector.load %arg1[%c0_147, %c9_148, %c0_149] : memref<8x28x28xf32, #tpu.memory_space<vmem>>, vector<8x1x28xf32>
    %203 = vector.shape_cast %202 : vector<8x1x28xf32> to vector<8x28xf32>
    %204 = arith.truncf %203 : vector<8x28xf32> to vector<8x28xbf16>
    %c1_150 = arith.constant 1 : index
    %c0_151 = arith.constant 0 : index
    %c0_152 = arith.constant 0 : index
    %205 = vector.load %arg2[%c1_150, %c0_151, %c0_152] : memref<5x28x192xbf16, #tpu.memory_space<vmem>>, vector<1x28x192xbf16>
    %206 = vector.shape_cast %205 : vector<1x28x192xbf16> to vector<28x192xbf16>
    %cst_153 = arith.constant dense<0.000000e+00> : vector<8x192xf32>
    %207 = tpu.matmul %204, %206, %cst_153 {dimension_numbers = #tpu.dot_dimension_numbers<[1], [0], [0], [1], [0, 0, 1, 1], [], []>} : vector<8x28xbf16>, vector<28x192xbf16>, vector<8x192xf32> -> vector<8x192xf32>
    %208 = arith.addf %201, %207 : vector<8x192xf32>
    %c0_154 = arith.constant 0 : index
    %c10_155 = arith.constant 10 : index
    %c0_156 = arith.constant 0 : index
    %209 = vector.load %arg1[%c0_154, %c10_155, %c0_156] : memref<8x28x28xf32, #tpu.memory_space<vmem>>, vector<8x1x28xf32>
    %210 = vector.shape_cast %209 : vector<8x1x28xf32> to vector<8x28xf32>
    %211 = arith.truncf %210 : vector<8x28xf32> to vector<8x28xbf16>
    %c2_157 = arith.constant 2 : index
    %c0_158 = arith.constant 0 : index
    %c0_159 = arith.constant 0 : index
    %212 = vector.load %arg2[%c2_157, %c0_158, %c0_159] : memref<5x28x192xbf16, #tpu.memory_space<vmem>>, vector<1x28x192xbf16>
    %213 = vector.shape_cast %212 : vector<1x28x192xbf16> to vector<28x192xbf16>
    %cst_160 = arith.constant dense<0.000000e+00> : vector<8x192xf32>
    %214 = tpu.matmul %211, %213, %cst_160 {dimension_numbers = #tpu.dot_dimension_numbers<[1], [0], [0], [1], [0, 0, 1, 1], [], []>} : vector<8x28xbf16>, vector<28x192xbf16>, vector<8x192xf32> -> vector<8x192xf32>
    %215 = arith.addf %208, %214 : vector<8x192xf32>
    %c0_161 = arith.constant 0 : index
    %c11 = arith.constant 11 : index
    %c0_162 = arith.constant 0 : index
    %216 = vector.load %arg1[%c0_161, %c11, %c0_162] : memref<8x28x28xf32, #tpu.memory_space<vmem>>, vector<8x1x28xf32>
    %217 = vector.shape_cast %216 : vector<8x1x28xf32> to vector<8x28xf32>
    %218 = arith.truncf %217 : vector<8x28xf32> to vector<8x28xbf16>
    %c3_163 = arith.constant 3 : index
    %c0_164 = arith.constant 0 : index
    %c0_165 = arith.constant 0 : index
    %219 = vector.load %arg2[%c3_163, %c0_164, %c0_165] : memref<5x28x192xbf16, #tpu.memory_space<vmem>>, vector<1x28x192xbf16>
    %220 = vector.shape_cast %219 : vector<1x28x192xbf16> to vector<28x192xbf16>
    %cst_166 = arith.constant dense<0.000000e+00> : vector<8x192xf32>
    %221 = tpu.matmul %218, %220, %cst_166 {dimension_numbers = #tpu.dot_dimension_numbers<[1], [0], [0], [1], [0, 0, 1, 1], [], []>} : vector<8x28xbf16>, vector<28x192xbf16>, vector<8x192xf32> -> vector<8x192xf32>
    %222 = arith.addf %215, %221 : vector<8x192xf32>
    %c0_167 = arith.constant 0 : index
    %c12 = arith.constant 12 : index
    %c0_168 = arith.constant 0 : index
    %223 = vector.load %arg1[%c0_167, %c12, %c0_168] : memref<8x28x28xf32, #tpu.memory_space<vmem>>, vector<8x1x28xf32>
    %224 = vector.shape_cast %223 : vector<8x1x28xf32> to vector<8x28xf32>
    %225 = arith.truncf %224 : vector<8x28xf32> to vector<8x28xbf16>
    %c4_169 = arith.constant 4 : index
    %c0_170 = arith.constant 0 : index
    %c0_171 = arith.constant 0 : index
    %226 = vector.load %arg2[%c4_169, %c0_170, %c0_171] : memref<5x28x192xbf16, #tpu.memory_space<vmem>>, vector<1x28x192xbf16>
    %227 = vector.shape_cast %226 : vector<1x28x192xbf16> to vector<28x192xbf16>
    %cst_172 = arith.constant dense<0.000000e+00> : vector<8x192xf32>
    %228 = tpu.matmul %225, %227, %cst_172 {dimension_numbers = #tpu.dot_dimension_numbers<[1], [0], [0], [1], [0, 0, 1, 1], [], []>} : vector<8x28xbf16>, vector<28x192xbf16>, vector<8x192xf32> -> vector<8x192xf32>
    %229 = arith.addf %222, %228 : vector<8x192xf32>
    %230 = vector.broadcast %0 : vector<1x192xf32> to vector<8x192xf32>
    %231 = arith.addf %229, %230 : vector<8x192xf32>
    %cst_173 = arith.constant 0.000000e+00 : f32
    %232 = vector.broadcast %cst_173 : f32 to vector<8x192xf32>
    %233 = arith.maximumf %231, %232 : vector<8x192xf32>
    %c0_174 = arith.constant 0 : index
    %c10_175 = arith.constant 10 : index
    %c0_176 = arith.constant 0 : index
    %234 = vector.load %arg1[%c0_174, %c10_175, %c0_176] : memref<8x28x28xf32, #tpu.memory_space<vmem>>, vector<8x1x28xf32>
    %235 = vector.shape_cast %234 : vector<8x1x28xf32> to vector<8x28xf32>
    %236 = arith.truncf %235 : vector<8x28xf32> to vector<8x28xbf16>
    %c0_177 = arith.constant 0 : index
    %c0_178 = arith.constant 0 : index
    %c0_179 = arith.constant 0 : index
    %237 = vector.load %arg2[%c0_177, %c0_178, %c0_179] : memref<5x28x192xbf16, #tpu.memory_space<vmem>>, vector<1x28x192xbf16>
    %238 = vector.shape_cast %237 : vector<1x28x192xbf16> to vector<28x192xbf16>
    %cst_180 = arith.constant dense<0.000000e+00> : vector<8x192xf32>
    %239 = tpu.matmul %236, %238, %cst_180 {dimension_numbers = #tpu.dot_dimension_numbers<[1], [0], [0], [1], [0, 0, 1, 1], [], []>} : vector<8x28xbf16>, vector<28x192xbf16>, vector<8x192xf32> -> vector<8x192xf32>
    %c0_181 = arith.constant 0 : index
    %c11_182 = arith.constant 11 : index
    %c0_183 = arith.constant 0 : index
    %240 = vector.load %arg1[%c0_181, %c11_182, %c0_183] : memref<8x28x28xf32, #tpu.memory_space<vmem>>, vector<8x1x28xf32>
    %241 = vector.shape_cast %240 : vector<8x1x28xf32> to vector<8x28xf32>
    %242 = arith.truncf %241 : vector<8x28xf32> to vector<8x28xbf16>
    %c1_184 = arith.constant 1 : index
    %c0_185 = arith.constant 0 : index
    %c0_186 = arith.constant 0 : index
    %243 = vector.load %arg2[%c1_184, %c0_185, %c0_186] : memref<5x28x192xbf16, #tpu.memory_space<vmem>>, vector<1x28x192xbf16>
    %244 = vector.shape_cast %243 : vector<1x28x192xbf16> to vector<28x192xbf16>
    %cst_187 = arith.constant dense<0.000000e+00> : vector<8x192xf32>
    %245 = tpu.matmul %242, %244, %cst_187 {dimension_numbers = #tpu.dot_dimension_numbers<[1], [0], [0], [1], [0, 0, 1, 1], [], []>} : vector<8x28xbf16>, vector<28x192xbf16>, vector<8x192xf32> -> vector<8x192xf32>
    %246 = arith.addf %239, %245 : vector<8x192xf32>
    %c0_188 = arith.constant 0 : index
    %c12_189 = arith.constant 12 : index
    %c0_190 = arith.constant 0 : index
    %247 = vector.load %arg1[%c0_188, %c12_189, %c0_190] : memref<8x28x28xf32, #tpu.memory_space<vmem>>, vector<8x1x28xf32>
    %248 = vector.shape_cast %247 : vector<8x1x28xf32> to vector<8x28xf32>
    %249 = arith.truncf %248 : vector<8x28xf32> to vector<8x28xbf16>
    %c2_191 = arith.constant 2 : index
    %c0_192 = arith.constant 0 : index
    %c0_193 = arith.constant 0 : index
    %250 = vector.load %arg2[%c2_191, %c0_192, %c0_193] : memref<5x28x192xbf16, #tpu.memory_space<vmem>>, vector<1x28x192xbf16>
    %251 = vector.shape_cast %250 : vector<1x28x192xbf16> to vector<28x192xbf16>
    %cst_194 = arith.constant dense<0.000000e+00> : vector<8x192xf32>
    %252 = tpu.matmul %249, %251, %cst_194 {dimension_numbers = #tpu.dot_dimension_numbers<[1], [0], [0], [1], [0, 0, 1, 1], [], []>} : vector<8x28xbf16>, vector<28x192xbf16>, vector<8x192xf32> -> vector<8x192xf32>
    %253 = arith.addf %246, %252 : vector<8x192xf32>
    %c0_195 = arith.constant 0 : index
    %c13 = arith.constant 13 : index
    %c0_196 = arith.constant 0 : index
    %254 = vector.load %arg1[%c0_195, %c13, %c0_196] : memref<8x28x28xf32, #tpu.memory_space<vmem>>, vector<8x1x28xf32>
    %255 = vector.shape_cast %254 : vector<8x1x28xf32> to vector<8x28xf32>
    %256 = arith.truncf %255 : vector<8x28xf32> to vector<8x28xbf16>
    %c3_197 = arith.constant 3 : index
    %c0_198 = arith.constant 0 : index
    %c0_199 = arith.constant 0 : index
    %257 = vector.load %arg2[%c3_197, %c0_198, %c0_199] : memref<5x28x192xbf16, #tpu.memory_space<vmem>>, vector<1x28x192xbf16>
    %258 = vector.shape_cast %257 : vector<1x28x192xbf16> to vector<28x192xbf16>
    %cst_200 = arith.constant dense<0.000000e+00> : vector<8x192xf32>
    %259 = tpu.matmul %256, %258, %cst_200 {dimension_numbers = #tpu.dot_dimension_numbers<[1], [0], [0], [1], [0, 0, 1, 1], [], []>} : vector<8x28xbf16>, vector<28x192xbf16>, vector<8x192xf32> -> vector<8x192xf32>
    %260 = arith.addf %253, %259 : vector<8x192xf32>
    %c0_201 = arith.constant 0 : index
    %c14 = arith.constant 14 : index
    %c0_202 = arith.constant 0 : index
    %261 = vector.load %arg1[%c0_201, %c14, %c0_202] : memref<8x28x28xf32, #tpu.memory_space<vmem>>, vector<8x1x28xf32>
    %262 = vector.shape_cast %261 : vector<8x1x28xf32> to vector<8x28xf32>
    %263 = arith.truncf %262 : vector<8x28xf32> to vector<8x28xbf16>
    %c4_203 = arith.constant 4 : index
    %c0_204 = arith.constant 0 : index
    %c0_205 = arith.constant 0 : index
    %264 = vector.load %arg2[%c4_203, %c0_204, %c0_205] : memref<5x28x192xbf16, #tpu.memory_space<vmem>>, vector<1x28x192xbf16>
    %265 = vector.shape_cast %264 : vector<1x28x192xbf16> to vector<28x192xbf16>
    %cst_206 = arith.constant dense<0.000000e+00> : vector<8x192xf32>
    %266 = tpu.matmul %263, %265, %cst_206 {dimension_numbers = #tpu.dot_dimension_numbers<[1], [0], [0], [1], [0, 0, 1, 1], [], []>} : vector<8x28xbf16>, vector<28x192xbf16>, vector<8x192xf32> -> vector<8x192xf32>
    %267 = arith.addf %260, %266 : vector<8x192xf32>
    %268 = vector.broadcast %0 : vector<1x192xf32> to vector<8x192xf32>
    %269 = arith.addf %267, %268 : vector<8x192xf32>
    %cst_207 = arith.constant 0.000000e+00 : f32
    %270 = vector.broadcast %cst_207 : f32 to vector<8x192xf32>
    %271 = arith.maximumf %269, %270 : vector<8x192xf32>
    %272 = arith.maximumf %233, %271 : vector<8x192xf32>
    %273 = vector.extract_strided_slice %272 {offsets = [0, 0], sizes = [8, 16], strides = [1, 1]} : vector<8x192xf32> to vector<8x16xf32>
    %274 = vector.extract_strided_slice %272 {offsets = [0, 16], sizes = [8, 16], strides = [1, 1]} : vector<8x192xf32> to vector<8x16xf32>
    %275 = arith.maximumf %273, %274 : vector<8x16xf32>
    %276 = vector.extract_strided_slice %272 {offsets = [0, 32], sizes = [8, 16], strides = [1, 1]} : vector<8x192xf32> to vector<8x16xf32>
    %277 = vector.extract_strided_slice %272 {offsets = [0, 48], sizes = [8, 16], strides = [1, 1]} : vector<8x192xf32> to vector<8x16xf32>
    %278 = arith.maximumf %276, %277 : vector<8x16xf32>
    %279 = vector.extract_strided_slice %272 {offsets = [0, 64], sizes = [8, 16], strides = [1, 1]} : vector<8x192xf32> to vector<8x16xf32>
    %280 = vector.extract_strided_slice %272 {offsets = [0, 80], sizes = [8, 16], strides = [1, 1]} : vector<8x192xf32> to vector<8x16xf32>
    %281 = arith.maximumf %279, %280 : vector<8x16xf32>
    %282 = vector.extract_strided_slice %272 {offsets = [0, 96], sizes = [8, 16], strides = [1, 1]} : vector<8x192xf32> to vector<8x16xf32>
    %283 = vector.extract_strided_slice %272 {offsets = [0, 112], sizes = [8, 16], strides = [1, 1]} : vector<8x192xf32> to vector<8x16xf32>
    %284 = arith.maximumf %282, %283 : vector<8x16xf32>
    %285 = vector.extract_strided_slice %272 {offsets = [0, 128], sizes = [8, 16], strides = [1, 1]} : vector<8x192xf32> to vector<8x16xf32>
    %286 = vector.extract_strided_slice %272 {offsets = [0, 144], sizes = [8, 16], strides = [1, 1]} : vector<8x192xf32> to vector<8x16xf32>
    %287 = arith.maximumf %285, %286 : vector<8x16xf32>
    %288 = vector.extract_strided_slice %272 {offsets = [0, 160], sizes = [8, 16], strides = [1, 1]} : vector<8x192xf32> to vector<8x16xf32>
    %289 = vector.extract_strided_slice %272 {offsets = [0, 176], sizes = [8, 16], strides = [1, 1]} : vector<8x192xf32> to vector<8x16xf32>
    %290 = arith.maximumf %288, %289 : vector<8x16xf32>
    %291 = tpu.concatenate %275, %278, %281, %284, %287, %290 in 1 : vector<8x16xf32>, vector<8x16xf32>, vector<8x16xf32>, vector<8x16xf32>, vector<8x16xf32>, vector<8x16xf32> -> vector<8x96xf32>
    %c0_208 = arith.constant 0 : index
    %c12_209 = arith.constant 12 : index
    %c0_210 = arith.constant 0 : index
    %292 = vector.load %arg1[%c0_208, %c12_209, %c0_210] : memref<8x28x28xf32, #tpu.memory_space<vmem>>, vector<8x1x28xf32>
    %293 = vector.shape_cast %292 : vector<8x1x28xf32> to vector<8x28xf32>
    %294 = arith.truncf %293 : vector<8x28xf32> to vector<8x28xbf16>
    %c0_211 = arith.constant 0 : index
    %c0_212 = arith.constant 0 : index
    %c0_213 = arith.constant 0 : index
    %295 = vector.load %arg2[%c0_211, %c0_212, %c0_213] : memref<5x28x192xbf16, #tpu.memory_space<vmem>>, vector<1x28x192xbf16>
    %296 = vector.shape_cast %295 : vector<1x28x192xbf16> to vector<28x192xbf16>
    %cst_214 = arith.constant dense<0.000000e+00> : vector<8x192xf32>
    %297 = tpu.matmul %294, %296, %cst_214 {dimension_numbers = #tpu.dot_dimension_numbers<[1], [0], [0], [1], [0, 0, 1, 1], [], []>} : vector<8x28xbf16>, vector<28x192xbf16>, vector<8x192xf32> -> vector<8x192xf32>
    %c0_215 = arith.constant 0 : index
    %c13_216 = arith.constant 13 : index
    %c0_217 = arith.constant 0 : index
    %298 = vector.load %arg1[%c0_215, %c13_216, %c0_217] : memref<8x28x28xf32, #tpu.memory_space<vmem>>, vector<8x1x28xf32>
    %299 = vector.shape_cast %298 : vector<8x1x28xf32> to vector<8x28xf32>
    %300 = arith.truncf %299 : vector<8x28xf32> to vector<8x28xbf16>
    %c1_218 = arith.constant 1 : index
    %c0_219 = arith.constant 0 : index
    %c0_220 = arith.constant 0 : index
    %301 = vector.load %arg2[%c1_218, %c0_219, %c0_220] : memref<5x28x192xbf16, #tpu.memory_space<vmem>>, vector<1x28x192xbf16>
    %302 = vector.shape_cast %301 : vector<1x28x192xbf16> to vector<28x192xbf16>
    %cst_221 = arith.constant dense<0.000000e+00> : vector<8x192xf32>
    %303 = tpu.matmul %300, %302, %cst_221 {dimension_numbers = #tpu.dot_dimension_numbers<[1], [0], [0], [1], [0, 0, 1, 1], [], []>} : vector<8x28xbf16>, vector<28x192xbf16>, vector<8x192xf32> -> vector<8x192xf32>
    %304 = arith.addf %297, %303 : vector<8x192xf32>
    %c0_222 = arith.constant 0 : index
    %c14_223 = arith.constant 14 : index
    %c0_224 = arith.constant 0 : index
    %305 = vector.load %arg1[%c0_222, %c14_223, %c0_224] : memref<8x28x28xf32, #tpu.memory_space<vmem>>, vector<8x1x28xf32>
    %306 = vector.shape_cast %305 : vector<8x1x28xf32> to vector<8x28xf32>
    %307 = arith.truncf %306 : vector<8x28xf32> to vector<8x28xbf16>
    %c2_225 = arith.constant 2 : index
    %c0_226 = arith.constant 0 : index
    %c0_227 = arith.constant 0 : index
    %308 = vector.load %arg2[%c2_225, %c0_226, %c0_227] : memref<5x28x192xbf16, #tpu.memory_space<vmem>>, vector<1x28x192xbf16>
    %309 = vector.shape_cast %308 : vector<1x28x192xbf16> to vector<28x192xbf16>
    %cst_228 = arith.constant dense<0.000000e+00> : vector<8x192xf32>
    %310 = tpu.matmul %307, %309, %cst_228 {dimension_numbers = #tpu.dot_dimension_numbers<[1], [0], [0], [1], [0, 0, 1, 1], [], []>} : vector<8x28xbf16>, vector<28x192xbf16>, vector<8x192xf32> -> vector<8x192xf32>
    %311 = arith.addf %304, %310 : vector<8x192xf32>
    %c0_229 = arith.constant 0 : index
    %c15 = arith.constant 15 : index
    %c0_230 = arith.constant 0 : index
    %312 = vector.load %arg1[%c0_229, %c15, %c0_230] : memref<8x28x28xf32, #tpu.memory_space<vmem>>, vector<8x1x28xf32>
    %313 = vector.shape_cast %312 : vector<8x1x28xf32> to vector<8x28xf32>
    %314 = arith.truncf %313 : vector<8x28xf32> to vector<8x28xbf16>
    %c3_231 = arith.constant 3 : index
    %c0_232 = arith.constant 0 : index
    %c0_233 = arith.constant 0 : index
    %315 = vector.load %arg2[%c3_231, %c0_232, %c0_233] : memref<5x28x192xbf16, #tpu.memory_space<vmem>>, vector<1x28x192xbf16>
    %316 = vector.shape_cast %315 : vector<1x28x192xbf16> to vector<28x192xbf16>
    %cst_234 = arith.constant dense<0.000000e+00> : vector<8x192xf32>
    %317 = tpu.matmul %314, %316, %cst_234 {dimension_numbers = #tpu.dot_dimension_numbers<[1], [0], [0], [1], [0, 0, 1, 1], [], []>} : vector<8x28xbf16>, vector<28x192xbf16>, vector<8x192xf32> -> vector<8x192xf32>
    %318 = arith.addf %311, %317 : vector<8x192xf32>
    %c0_235 = arith.constant 0 : index
    %c16 = arith.constant 16 : index
    %c0_236 = arith.constant 0 : index
    %319 = vector.load %arg1[%c0_235, %c16, %c0_236] : memref<8x28x28xf32, #tpu.memory_space<vmem>>, vector<8x1x28xf32>
    %320 = vector.shape_cast %319 : vector<8x1x28xf32> to vector<8x28xf32>
    %321 = arith.truncf %320 : vector<8x28xf32> to vector<8x28xbf16>
    %c4_237 = arith.constant 4 : index
    %c0_238 = arith.constant 0 : index
    %c0_239 = arith.constant 0 : index
    %322 = vector.load %arg2[%c4_237, %c0_238, %c0_239] : memref<5x28x192xbf16, #tpu.memory_space<vmem>>, vector<1x28x192xbf16>
    %323 = vector.shape_cast %322 : vector<1x28x192xbf16> to vector<28x192xbf16>
    %cst_240 = arith.constant dense<0.000000e+00> : vector<8x192xf32>
    %324 = tpu.matmul %321, %323, %cst_240 {dimension_numbers = #tpu.dot_dimension_numbers<[1], [0], [0], [1], [0, 0, 1, 1], [], []>} : vector<8x28xbf16>, vector<28x192xbf16>, vector<8x192xf32> -> vector<8x192xf32>
    %325 = arith.addf %318, %324 : vector<8x192xf32>
    %326 = vector.broadcast %0 : vector<1x192xf32> to vector<8x192xf32>
    %327 = arith.addf %325, %326 : vector<8x192xf32>
    %cst_241 = arith.constant 0.000000e+00 : f32
    %328 = vector.broadcast %cst_241 : f32 to vector<8x192xf32>
    %329 = arith.maximumf %327, %328 : vector<8x192xf32>
    %c0_242 = arith.constant 0 : index
    %c14_243 = arith.constant 14 : index
    %c0_244 = arith.constant 0 : index
    %330 = vector.load %arg1[%c0_242, %c14_243, %c0_244] : memref<8x28x28xf32, #tpu.memory_space<vmem>>, vector<8x1x28xf32>
    %331 = vector.shape_cast %330 : vector<8x1x28xf32> to vector<8x28xf32>
    %332 = arith.truncf %331 : vector<8x28xf32> to vector<8x28xbf16>
    %c0_245 = arith.constant 0 : index
    %c0_246 = arith.constant 0 : index
    %c0_247 = arith.constant 0 : index
    %333 = vector.load %arg2[%c0_245, %c0_246, %c0_247] : memref<5x28x192xbf16, #tpu.memory_space<vmem>>, vector<1x28x192xbf16>
    %334 = vector.shape_cast %333 : vector<1x28x192xbf16> to vector<28x192xbf16>
    %cst_248 = arith.constant dense<0.000000e+00> : vector<8x192xf32>
    %335 = tpu.matmul %332, %334, %cst_248 {dimension_numbers = #tpu.dot_dimension_numbers<[1], [0], [0], [1], [0, 0, 1, 1], [], []>} : vector<8x28xbf16>, vector<28x192xbf16>, vector<8x192xf32> -> vector<8x192xf32>
    %c0_249 = arith.constant 0 : index
    %c15_250 = arith.constant 15 : index
    %c0_251 = arith.constant 0 : index
    %336 = vector.load %arg1[%c0_249, %c15_250, %c0_251] : memref<8x28x28xf32, #tpu.memory_space<vmem>>, vector<8x1x28xf32>
    %337 = vector.shape_cast %336 : vector<8x1x28xf32> to vector<8x28xf32>
    %338 = arith.truncf %337 : vector<8x28xf32> to vector<8x28xbf16>
    %c1_252 = arith.constant 1 : index
    %c0_253 = arith.constant 0 : index
    %c0_254 = arith.constant 0 : index
    %339 = vector.load %arg2[%c1_252, %c0_253, %c0_254] : memref<5x28x192xbf16, #tpu.memory_space<vmem>>, vector<1x28x192xbf16>
    %340 = vector.shape_cast %339 : vector<1x28x192xbf16> to vector<28x192xbf16>
    %cst_255 = arith.constant dense<0.000000e+00> : vector<8x192xf32>
    %341 = tpu.matmul %338, %340, %cst_255 {dimension_numbers = #tpu.dot_dimension_numbers<[1], [0], [0], [1], [0, 0, 1, 1], [], []>} : vector<8x28xbf16>, vector<28x192xbf16>, vector<8x192xf32> -> vector<8x192xf32>
    %342 = arith.addf %335, %341 : vector<8x192xf32>
    %c0_256 = arith.constant 0 : index
    %c16_257 = arith.constant 16 : index
    %c0_258 = arith.constant 0 : index
    %343 = vector.load %arg1[%c0_256, %c16_257, %c0_258] : memref<8x28x28xf32, #tpu.memory_space<vmem>>, vector<8x1x28xf32>
    %344 = vector.shape_cast %343 : vector<8x1x28xf32> to vector<8x28xf32>
    %345 = arith.truncf %344 : vector<8x28xf32> to vector<8x28xbf16>
    %c2_259 = arith.constant 2 : index
    %c0_260 = arith.constant 0 : index
    %c0_261 = arith.constant 0 : index
    %346 = vector.load %arg2[%c2_259, %c0_260, %c0_261] : memref<5x28x192xbf16, #tpu.memory_space<vmem>>, vector<1x28x192xbf16>
    %347 = vector.shape_cast %346 : vector<1x28x192xbf16> to vector<28x192xbf16>
    %cst_262 = arith.constant dense<0.000000e+00> : vector<8x192xf32>
    %348 = tpu.matmul %345, %347, %cst_262 {dimension_numbers = #tpu.dot_dimension_numbers<[1], [0], [0], [1], [0, 0, 1, 1], [], []>} : vector<8x28xbf16>, vector<28x192xbf16>, vector<8x192xf32> -> vector<8x192xf32>
    %349 = arith.addf %342, %348 : vector<8x192xf32>
    %c0_263 = arith.constant 0 : index
    %c17 = arith.constant 17 : index
    %c0_264 = arith.constant 0 : index
    %350 = vector.load %arg1[%c0_263, %c17, %c0_264] : memref<8x28x28xf32, #tpu.memory_space<vmem>>, vector<8x1x28xf32>
    %351 = vector.shape_cast %350 : vector<8x1x28xf32> to vector<8x28xf32>
    %352 = arith.truncf %351 : vector<8x28xf32> to vector<8x28xbf16>
    %c3_265 = arith.constant 3 : index
    %c0_266 = arith.constant 0 : index
    %c0_267 = arith.constant 0 : index
    %353 = vector.load %arg2[%c3_265, %c0_266, %c0_267] : memref<5x28x192xbf16, #tpu.memory_space<vmem>>, vector<1x28x192xbf16>
    %354 = vector.shape_cast %353 : vector<1x28x192xbf16> to vector<28x192xbf16>
    %cst_268 = arith.constant dense<0.000000e+00> : vector<8x192xf32>
    %355 = tpu.matmul %352, %354, %cst_268 {dimension_numbers = #tpu.dot_dimension_numbers<[1], [0], [0], [1], [0, 0, 1, 1], [], []>} : vector<8x28xbf16>, vector<28x192xbf16>, vector<8x192xf32> -> vector<8x192xf32>
    %356 = arith.addf %349, %355 : vector<8x192xf32>
    %c0_269 = arith.constant 0 : index
    %c18 = arith.constant 18 : index
    %c0_270 = arith.constant 0 : index
    %357 = vector.load %arg1[%c0_269, %c18, %c0_270] : memref<8x28x28xf32, #tpu.memory_space<vmem>>, vector<8x1x28xf32>
    %358 = vector.shape_cast %357 : vector<8x1x28xf32> to vector<8x28xf32>
    %359 = arith.truncf %358 : vector<8x28xf32> to vector<8x28xbf16>
    %c4_271 = arith.constant 4 : index
    %c0_272 = arith.constant 0 : index
    %c0_273 = arith.constant 0 : index
    %360 = vector.load %arg2[%c4_271, %c0_272, %c0_273] : memref<5x28x192xbf16, #tpu.memory_space<vmem>>, vector<1x28x192xbf16>
    %361 = vector.shape_cast %360 : vector<1x28x192xbf16> to vector<28x192xbf16>
    %cst_274 = arith.constant dense<0.000000e+00> : vector<8x192xf32>
    %362 = tpu.matmul %359, %361, %cst_274 {dimension_numbers = #tpu.dot_dimension_numbers<[1], [0], [0], [1], [0, 0, 1, 1], [], []>} : vector<8x28xbf16>, vector<28x192xbf16>, vector<8x192xf32> -> vector<8x192xf32>
    %363 = arith.addf %356, %362 : vector<8x192xf32>
    %364 = vector.broadcast %0 : vector<1x192xf32> to vector<8x192xf32>
    %365 = arith.addf %363, %364 : vector<8x192xf32>
    %cst_275 = arith.constant 0.000000e+00 : f32
    %366 = vector.broadcast %cst_275 : f32 to vector<8x192xf32>
    %367 = arith.maximumf %365, %366 : vector<8x192xf32>
    %368 = arith.maximumf %329, %367 : vector<8x192xf32>
    %369 = vector.extract_strided_slice %368 {offsets = [0, 0], sizes = [8, 16], strides = [1, 1]} : vector<8x192xf32> to vector<8x16xf32>
    %370 = vector.extract_strided_slice %368 {offsets = [0, 16], sizes = [8, 16], strides = [1, 1]} : vector<8x192xf32> to vector<8x16xf32>
    %371 = arith.maximumf %369, %370 : vector<8x16xf32>
    %372 = vector.extract_strided_slice %368 {offsets = [0, 32], sizes = [8, 16], strides = [1, 1]} : vector<8x192xf32> to vector<8x16xf32>
    %373 = vector.extract_strided_slice %368 {offsets = [0, 48], sizes = [8, 16], strides = [1, 1]} : vector<8x192xf32> to vector<8x16xf32>
    %374 = arith.maximumf %372, %373 : vector<8x16xf32>
    %375 = vector.extract_strided_slice %368 {offsets = [0, 64], sizes = [8, 16], strides = [1, 1]} : vector<8x192xf32> to vector<8x16xf32>
    %376 = vector.extract_strided_slice %368 {offsets = [0, 80], sizes = [8, 16], strides = [1, 1]} : vector<8x192xf32> to vector<8x16xf32>
    %377 = arith.maximumf %375, %376 : vector<8x16xf32>
    %378 = vector.extract_strided_slice %368 {offsets = [0, 96], sizes = [8, 16], strides = [1, 1]} : vector<8x192xf32> to vector<8x16xf32>
    %379 = vector.extract_strided_slice %368 {offsets = [0, 112], sizes = [8, 16], strides = [1, 1]} : vector<8x192xf32> to vector<8x16xf32>
    %380 = arith.maximumf %378, %379 : vector<8x16xf32>
    %381 = vector.extract_strided_slice %368 {offsets = [0, 128], sizes = [8, 16], strides = [1, 1]} : vector<8x192xf32> to vector<8x16xf32>
    %382 = vector.extract_strided_slice %368 {offsets = [0, 144], sizes = [8, 16], strides = [1, 1]} : vector<8x192xf32> to vector<8x16xf32>
    %383 = arith.maximumf %381, %382 : vector<8x16xf32>
    %384 = vector.extract_strided_slice %368 {offsets = [0, 160], sizes = [8, 16], strides = [1, 1]} : vector<8x192xf32> to vector<8x16xf32>
    %385 = vector.extract_strided_slice %368 {offsets = [0, 176], sizes = [8, 16], strides = [1, 1]} : vector<8x192xf32> to vector<8x16xf32>
    %386 = arith.maximumf %384, %385 : vector<8x16xf32>
    %387 = tpu.concatenate %371, %374, %377, %380, %383, %386 in 1 : vector<8x16xf32>, vector<8x16xf32>, vector<8x16xf32>, vector<8x16xf32>, vector<8x16xf32>, vector<8x16xf32> -> vector<8x96xf32>
    %c0_276 = arith.constant 0 : index
    %c16_277 = arith.constant 16 : index
    %c0_278 = arith.constant 0 : index
    %388 = vector.load %arg1[%c0_276, %c16_277, %c0_278] : memref<8x28x28xf32, #tpu.memory_space<vmem>>, vector<8x1x28xf32>
    %389 = vector.shape_cast %388 : vector<8x1x28xf32> to vector<8x28xf32>
    %390 = arith.truncf %389 : vector<8x28xf32> to vector<8x28xbf16>
    %c0_279 = arith.constant 0 : index
    %c0_280 = arith.constant 0 : index
    %c0_281 = arith.constant 0 : index
    %391 = vector.load %arg2[%c0_279, %c0_280, %c0_281] : memref<5x28x192xbf16, #tpu.memory_space<vmem>>, vector<1x28x192xbf16>
    %392 = vector.shape_cast %391 : vector<1x28x192xbf16> to vector<28x192xbf16>
    %cst_282 = arith.constant dense<0.000000e+00> : vector<8x192xf32>
    %393 = tpu.matmul %390, %392, %cst_282 {dimension_numbers = #tpu.dot_dimension_numbers<[1], [0], [0], [1], [0, 0, 1, 1], [], []>} : vector<8x28xbf16>, vector<28x192xbf16>, vector<8x192xf32> -> vector<8x192xf32>
    %c0_283 = arith.constant 0 : index
    %c17_284 = arith.constant 17 : index
    %c0_285 = arith.constant 0 : index
    %394 = vector.load %arg1[%c0_283, %c17_284, %c0_285] : memref<8x28x28xf32, #tpu.memory_space<vmem>>, vector<8x1x28xf32>
    %395 = vector.shape_cast %394 : vector<8x1x28xf32> to vector<8x28xf32>
    %396 = arith.truncf %395 : vector<8x28xf32> to vector<8x28xbf16>
    %c1_286 = arith.constant 1 : index
    %c0_287 = arith.constant 0 : index
    %c0_288 = arith.constant 0 : index
    %397 = vector.load %arg2[%c1_286, %c0_287, %c0_288] : memref<5x28x192xbf16, #tpu.memory_space<vmem>>, vector<1x28x192xbf16>
    %398 = vector.shape_cast %397 : vector<1x28x192xbf16> to vector<28x192xbf16>
    %cst_289 = arith.constant dense<0.000000e+00> : vector<8x192xf32>
    %399 = tpu.matmul %396, %398, %cst_289 {dimension_numbers = #tpu.dot_dimension_numbers<[1], [0], [0], [1], [0, 0, 1, 1], [], []>} : vector<8x28xbf16>, vector<28x192xbf16>, vector<8x192xf32> -> vector<8x192xf32>
    %400 = arith.addf %393, %399 : vector<8x192xf32>
    %c0_290 = arith.constant 0 : index
    %c18_291 = arith.constant 18 : index
    %c0_292 = arith.constant 0 : index
    %401 = vector.load %arg1[%c0_290, %c18_291, %c0_292] : memref<8x28x28xf32, #tpu.memory_space<vmem>>, vector<8x1x28xf32>
    %402 = vector.shape_cast %401 : vector<8x1x28xf32> to vector<8x28xf32>
    %403 = arith.truncf %402 : vector<8x28xf32> to vector<8x28xbf16>
    %c2_293 = arith.constant 2 : index
    %c0_294 = arith.constant 0 : index
    %c0_295 = arith.constant 0 : index
    %404 = vector.load %arg2[%c2_293, %c0_294, %c0_295] : memref<5x28x192xbf16, #tpu.memory_space<vmem>>, vector<1x28x192xbf16>
    %405 = vector.shape_cast %404 : vector<1x28x192xbf16> to vector<28x192xbf16>
    %cst_296 = arith.constant dense<0.000000e+00> : vector<8x192xf32>
    %406 = tpu.matmul %403, %405, %cst_296 {dimension_numbers = #tpu.dot_dimension_numbers<[1], [0], [0], [1], [0, 0, 1, 1], [], []>} : vector<8x28xbf16>, vector<28x192xbf16>, vector<8x192xf32> -> vector<8x192xf32>
    %407 = arith.addf %400, %406 : vector<8x192xf32>
    %c0_297 = arith.constant 0 : index
    %c19 = arith.constant 19 : index
    %c0_298 = arith.constant 0 : index
    %408 = vector.load %arg1[%c0_297, %c19, %c0_298] : memref<8x28x28xf32, #tpu.memory_space<vmem>>, vector<8x1x28xf32>
    %409 = vector.shape_cast %408 : vector<8x1x28xf32> to vector<8x28xf32>
    %410 = arith.truncf %409 : vector<8x28xf32> to vector<8x28xbf16>
    %c3_299 = arith.constant 3 : index
    %c0_300 = arith.constant 0 : index
    %c0_301 = arith.constant 0 : index
    %411 = vector.load %arg2[%c3_299, %c0_300, %c0_301] : memref<5x28x192xbf16, #tpu.memory_space<vmem>>, vector<1x28x192xbf16>
    %412 = vector.shape_cast %411 : vector<1x28x192xbf16> to vector<28x192xbf16>
    %cst_302 = arith.constant dense<0.000000e+00> : vector<8x192xf32>
    %413 = tpu.matmul %410, %412, %cst_302 {dimension_numbers = #tpu.dot_dimension_numbers<[1], [0], [0], [1], [0, 0, 1, 1], [], []>} : vector<8x28xbf16>, vector<28x192xbf16>, vector<8x192xf32> -> vector<8x192xf32>
    %414 = arith.addf %407, %413 : vector<8x192xf32>
    %c0_303 = arith.constant 0 : index
    %c20 = arith.constant 20 : index
    %c0_304 = arith.constant 0 : index
    %415 = vector.load %arg1[%c0_303, %c20, %c0_304] : memref<8x28x28xf32, #tpu.memory_space<vmem>>, vector<8x1x28xf32>
    %416 = vector.shape_cast %415 : vector<8x1x28xf32> to vector<8x28xf32>
    %417 = arith.truncf %416 : vector<8x28xf32> to vector<8x28xbf16>
    %c4_305 = arith.constant 4 : index
    %c0_306 = arith.constant 0 : index
    %c0_307 = arith.constant 0 : index
    %418 = vector.load %arg2[%c4_305, %c0_306, %c0_307] : memref<5x28x192xbf16, #tpu.memory_space<vmem>>, vector<1x28x192xbf16>
    %419 = vector.shape_cast %418 : vector<1x28x192xbf16> to vector<28x192xbf16>
    %cst_308 = arith.constant dense<0.000000e+00> : vector<8x192xf32>
    %420 = tpu.matmul %417, %419, %cst_308 {dimension_numbers = #tpu.dot_dimension_numbers<[1], [0], [0], [1], [0, 0, 1, 1], [], []>} : vector<8x28xbf16>, vector<28x192xbf16>, vector<8x192xf32> -> vector<8x192xf32>
    %421 = arith.addf %414, %420 : vector<8x192xf32>
    %422 = vector.broadcast %0 : vector<1x192xf32> to vector<8x192xf32>
    %423 = arith.addf %421, %422 : vector<8x192xf32>
    %cst_309 = arith.constant 0.000000e+00 : f32
    %424 = vector.broadcast %cst_309 : f32 to vector<8x192xf32>
    %425 = arith.maximumf %423, %424 : vector<8x192xf32>
    %c0_310 = arith.constant 0 : index
    %c18_311 = arith.constant 18 : index
    %c0_312 = arith.constant 0 : index
    %426 = vector.load %arg1[%c0_310, %c18_311, %c0_312] : memref<8x28x28xf32, #tpu.memory_space<vmem>>, vector<8x1x28xf32>
    %427 = vector.shape_cast %426 : vector<8x1x28xf32> to vector<8x28xf32>
    %428 = arith.truncf %427 : vector<8x28xf32> to vector<8x28xbf16>
    %c0_313 = arith.constant 0 : index
    %c0_314 = arith.constant 0 : index
    %c0_315 = arith.constant 0 : index
    %429 = vector.load %arg2[%c0_313, %c0_314, %c0_315] : memref<5x28x192xbf16, #tpu.memory_space<vmem>>, vector<1x28x192xbf16>
    %430 = vector.shape_cast %429 : vector<1x28x192xbf16> to vector<28x192xbf16>
    %cst_316 = arith.constant dense<0.000000e+00> : vector<8x192xf32>
    %431 = tpu.matmul %428, %430, %cst_316 {dimension_numbers = #tpu.dot_dimension_numbers<[1], [0], [0], [1], [0, 0, 1, 1], [], []>} : vector<8x28xbf16>, vector<28x192xbf16>, vector<8x192xf32> -> vector<8x192xf32>
    %c0_317 = arith.constant 0 : index
    %c19_318 = arith.constant 19 : index
    %c0_319 = arith.constant 0 : index
    %432 = vector.load %arg1[%c0_317, %c19_318, %c0_319] : memref<8x28x28xf32, #tpu.memory_space<vmem>>, vector<8x1x28xf32>
    %433 = vector.shape_cast %432 : vector<8x1x28xf32> to vector<8x28xf32>
    %434 = arith.truncf %433 : vector<8x28xf32> to vector<8x28xbf16>
    %c1_320 = arith.constant 1 : index
    %c0_321 = arith.constant 0 : index
    %c0_322 = arith.constant 0 : index
    %435 = vector.load %arg2[%c1_320, %c0_321, %c0_322] : memref<5x28x192xbf16, #tpu.memory_space<vmem>>, vector<1x28x192xbf16>
    %436 = vector.shape_cast %435 : vector<1x28x192xbf16> to vector<28x192xbf16>
    %cst_323 = arith.constant dense<0.000000e+00> : vector<8x192xf32>
    %437 = tpu.matmul %434, %436, %cst_323 {dimension_numbers = #tpu.dot_dimension_numbers<[1], [0], [0], [1], [0, 0, 1, 1], [], []>} : vector<8x28xbf16>, vector<28x192xbf16>, vector<8x192xf32> -> vector<8x192xf32>
    %438 = arith.addf %431, %437 : vector<8x192xf32>
    %c0_324 = arith.constant 0 : index
    %c20_325 = arith.constant 20 : index
    %c0_326 = arith.constant 0 : index
    %439 = vector.load %arg1[%c0_324, %c20_325, %c0_326] : memref<8x28x28xf32, #tpu.memory_space<vmem>>, vector<8x1x28xf32>
    %440 = vector.shape_cast %439 : vector<8x1x28xf32> to vector<8x28xf32>
    %441 = arith.truncf %440 : vector<8x28xf32> to vector<8x28xbf16>
    %c2_327 = arith.constant 2 : index
    %c0_328 = arith.constant 0 : index
    %c0_329 = arith.constant 0 : index
    %442 = vector.load %arg2[%c2_327, %c0_328, %c0_329] : memref<5x28x192xbf16, #tpu.memory_space<vmem>>, vector<1x28x192xbf16>
    %443 = vector.shape_cast %442 : vector<1x28x192xbf16> to vector<28x192xbf16>
    %cst_330 = arith.constant dense<0.000000e+00> : vector<8x192xf32>
    %444 = tpu.matmul %441, %443, %cst_330 {dimension_numbers = #tpu.dot_dimension_numbers<[1], [0], [0], [1], [0, 0, 1, 1], [], []>} : vector<8x28xbf16>, vector<28x192xbf16>, vector<8x192xf32> -> vector<8x192xf32>
    %445 = arith.addf %438, %444 : vector<8x192xf32>
    %c0_331 = arith.constant 0 : index
    %c21 = arith.constant 21 : index
    %c0_332 = arith.constant 0 : index
    %446 = vector.load %arg1[%c0_331, %c21, %c0_332] : memref<8x28x28xf32, #tpu.memory_space<vmem>>, vector<8x1x28xf32>
    %447 = vector.shape_cast %446 : vector<8x1x28xf32> to vector<8x28xf32>
    %448 = arith.truncf %447 : vector<8x28xf32> to vector<8x28xbf16>
    %c3_333 = arith.constant 3 : index
    %c0_334 = arith.constant 0 : index
    %c0_335 = arith.constant 0 : index
    %449 = vector.load %arg2[%c3_333, %c0_334, %c0_335] : memref<5x28x192xbf16, #tpu.memory_space<vmem>>, vector<1x28x192xbf16>
    %450 = vector.shape_cast %449 : vector<1x28x192xbf16> to vector<28x192xbf16>
    %cst_336 = arith.constant dense<0.000000e+00> : vector<8x192xf32>
    %451 = tpu.matmul %448, %450, %cst_336 {dimension_numbers = #tpu.dot_dimension_numbers<[1], [0], [0], [1], [0, 0, 1, 1], [], []>} : vector<8x28xbf16>, vector<28x192xbf16>, vector<8x192xf32> -> vector<8x192xf32>
    %452 = arith.addf %445, %451 : vector<8x192xf32>
    %c0_337 = arith.constant 0 : index
    %c22 = arith.constant 22 : index
    %c0_338 = arith.constant 0 : index
    %453 = vector.load %arg1[%c0_337, %c22, %c0_338] : memref<8x28x28xf32, #tpu.memory_space<vmem>>, vector<8x1x28xf32>
    %454 = vector.shape_cast %453 : vector<8x1x28xf32> to vector<8x28xf32>
    %455 = arith.truncf %454 : vector<8x28xf32> to vector<8x28xbf16>
    %c4_339 = arith.constant 4 : index
    %c0_340 = arith.constant 0 : index
    %c0_341 = arith.constant 0 : index
    %456 = vector.load %arg2[%c4_339, %c0_340, %c0_341] : memref<5x28x192xbf16, #tpu.memory_space<vmem>>, vector<1x28x192xbf16>
    %457 = vector.shape_cast %456 : vector<1x28x192xbf16> to vector<28x192xbf16>
    %cst_342 = arith.constant dense<0.000000e+00> : vector<8x192xf32>
    %458 = tpu.matmul %455, %457, %cst_342 {dimension_numbers = #tpu.dot_dimension_numbers<[1], [0], [0], [1], [0, 0, 1, 1], [], []>} : vector<8x28xbf16>, vector<28x192xbf16>, vector<8x192xf32> -> vector<8x192xf32>
    %459 = arith.addf %452, %458 : vector<8x192xf32>
    %460 = vector.broadcast %0 : vector<1x192xf32> to vector<8x192xf32>
    %461 = arith.addf %459, %460 : vector<8x192xf32>
    %cst_343 = arith.constant 0.000000e+00 : f32
    %462 = vector.broadcast %cst_343 : f32 to vector<8x192xf32>
    %463 = arith.maximumf %461, %462 : vector<8x192xf32>
    %464 = arith.maximumf %425, %463 : vector<8x192xf32>
    %465 = vector.extract_strided_slice %464 {offsets = [0, 0], sizes = [8, 16], strides = [1, 1]} : vector<8x192xf32> to vector<8x16xf32>
    %466 = vector.extract_strided_slice %464 {offsets = [0, 16], sizes = [8, 16], strides = [1, 1]} : vector<8x192xf32> to vector<8x16xf32>
    %467 = arith.maximumf %465, %466 : vector<8x16xf32>
    %468 = vector.extract_strided_slice %464 {offsets = [0, 32], sizes = [8, 16], strides = [1, 1]} : vector<8x192xf32> to vector<8x16xf32>
    %469 = vector.extract_strided_slice %464 {offsets = [0, 48], sizes = [8, 16], strides = [1, 1]} : vector<8x192xf32> to vector<8x16xf32>
    %470 = arith.maximumf %468, %469 : vector<8x16xf32>
    %471 = vector.extract_strided_slice %464 {offsets = [0, 64], sizes = [8, 16], strides = [1, 1]} : vector<8x192xf32> to vector<8x16xf32>
    %472 = vector.extract_strided_slice %464 {offsets = [0, 80], sizes = [8, 16], strides = [1, 1]} : vector<8x192xf32> to vector<8x16xf32>
    %473 = arith.maximumf %471, %472 : vector<8x16xf32>
    %474 = vector.extract_strided_slice %464 {offsets = [0, 96], sizes = [8, 16], strides = [1, 1]} : vector<8x192xf32> to vector<8x16xf32>
    %475 = vector.extract_strided_slice %464 {offsets = [0, 112], sizes = [8, 16], strides = [1, 1]} : vector<8x192xf32> to vector<8x16xf32>
    %476 = arith.maximumf %474, %475 : vector<8x16xf32>
    %477 = vector.extract_strided_slice %464 {offsets = [0, 128], sizes = [8, 16], strides = [1, 1]} : vector<8x192xf32> to vector<8x16xf32>
    %478 = vector.extract_strided_slice %464 {offsets = [0, 144], sizes = [8, 16], strides = [1, 1]} : vector<8x192xf32> to vector<8x16xf32>
    %479 = arith.maximumf %477, %478 : vector<8x16xf32>
    %480 = vector.extract_strided_slice %464 {offsets = [0, 160], sizes = [8, 16], strides = [1, 1]} : vector<8x192xf32> to vector<8x16xf32>
    %481 = vector.extract_strided_slice %464 {offsets = [0, 176], sizes = [8, 16], strides = [1, 1]} : vector<8x192xf32> to vector<8x16xf32>
    %482 = arith.maximumf %480, %481 : vector<8x16xf32>
    %483 = tpu.concatenate %467, %470, %473, %476, %479, %482 in 1 : vector<8x16xf32>, vector<8x16xf32>, vector<8x16xf32>, vector<8x16xf32>, vector<8x16xf32>, vector<8x16xf32> -> vector<8x96xf32>
    %c0_344 = arith.constant 0 : index
    %c20_345 = arith.constant 20 : index
    %c0_346 = arith.constant 0 : index
    %484 = vector.load %arg1[%c0_344, %c20_345, %c0_346] : memref<8x28x28xf32, #tpu.memory_space<vmem>>, vector<8x1x28xf32>
    %485 = vector.shape_cast %484 : vector<8x1x28xf32> to vector<8x28xf32>
    %486 = arith.truncf %485 : vector<8x28xf32> to vector<8x28xbf16>
    %c0_347 = arith.constant 0 : index
    %c0_348 = arith.constant 0 : index
    %c0_349 = arith.constant 0 : index
    %487 = vector.load %arg2[%c0_347, %c0_348, %c0_349] : memref<5x28x192xbf16, #tpu.memory_space<vmem>>, vector<1x28x192xbf16>
    %488 = vector.shape_cast %487 : vector<1x28x192xbf16> to vector<28x192xbf16>
    %cst_350 = arith.constant dense<0.000000e+00> : vector<8x192xf32>
    %489 = tpu.matmul %486, %488, %cst_350 {dimension_numbers = #tpu.dot_dimension_numbers<[1], [0], [0], [1], [0, 0, 1, 1], [], []>} : vector<8x28xbf16>, vector<28x192xbf16>, vector<8x192xf32> -> vector<8x192xf32>
    %c0_351 = arith.constant 0 : index
    %c21_352 = arith.constant 21 : index
    %c0_353 = arith.constant 0 : index
    %490 = vector.load %arg1[%c0_351, %c21_352, %c0_353] : memref<8x28x28xf32, #tpu.memory_space<vmem>>, vector<8x1x28xf32>
    %491 = vector.shape_cast %490 : vector<8x1x28xf32> to vector<8x28xf32>
    %492 = arith.truncf %491 : vector<8x28xf32> to vector<8x28xbf16>
    %c1_354 = arith.constant 1 : index
    %c0_355 = arith.constant 0 : index
    %c0_356 = arith.constant 0 : index
    %493 = vector.load %arg2[%c1_354, %c0_355, %c0_356] : memref<5x28x192xbf16, #tpu.memory_space<vmem>>, vector<1x28x192xbf16>
    %494 = vector.shape_cast %493 : vector<1x28x192xbf16> to vector<28x192xbf16>
    %cst_357 = arith.constant dense<0.000000e+00> : vector<8x192xf32>
    %495 = tpu.matmul %492, %494, %cst_357 {dimension_numbers = #tpu.dot_dimension_numbers<[1], [0], [0], [1], [0, 0, 1, 1], [], []>} : vector<8x28xbf16>, vector<28x192xbf16>, vector<8x192xf32> -> vector<8x192xf32>
    %496 = arith.addf %489, %495 : vector<8x192xf32>
    %c0_358 = arith.constant 0 : index
    %c22_359 = arith.constant 22 : index
    %c0_360 = arith.constant 0 : index
    %497 = vector.load %arg1[%c0_358, %c22_359, %c0_360] : memref<8x28x28xf32, #tpu.memory_space<vmem>>, vector<8x1x28xf32>
    %498 = vector.shape_cast %497 : vector<8x1x28xf32> to vector<8x28xf32>
    %499 = arith.truncf %498 : vector<8x28xf32> to vector<8x28xbf16>
    %c2_361 = arith.constant 2 : index
    %c0_362 = arith.constant 0 : index
    %c0_363 = arith.constant 0 : index
    %500 = vector.load %arg2[%c2_361, %c0_362, %c0_363] : memref<5x28x192xbf16, #tpu.memory_space<vmem>>, vector<1x28x192xbf16>
    %501 = vector.shape_cast %500 : vector<1x28x192xbf16> to vector<28x192xbf16>
    %cst_364 = arith.constant dense<0.000000e+00> : vector<8x192xf32>
    %502 = tpu.matmul %499, %501, %cst_364 {dimension_numbers = #tpu.dot_dimension_numbers<[1], [0], [0], [1], [0, 0, 1, 1], [], []>} : vector<8x28xbf16>, vector<28x192xbf16>, vector<8x192xf32> -> vector<8x192xf32>
    %503 = arith.addf %496, %502 : vector<8x192xf32>
    %c0_365 = arith.constant 0 : index
    %c23 = arith.constant 23 : index
    %c0_366 = arith.constant 0 : index
    %504 = vector.load %arg1[%c0_365, %c23, %c0_366] : memref<8x28x28xf32, #tpu.memory_space<vmem>>, vector<8x1x28xf32>
    %505 = vector.shape_cast %504 : vector<8x1x28xf32> to vector<8x28xf32>
    %506 = arith.truncf %505 : vector<8x28xf32> to vector<8x28xbf16>
    %c3_367 = arith.constant 3 : index
    %c0_368 = arith.constant 0 : index
    %c0_369 = arith.constant 0 : index
    %507 = vector.load %arg2[%c3_367, %c0_368, %c0_369] : memref<5x28x192xbf16, #tpu.memory_space<vmem>>, vector<1x28x192xbf16>
    %508 = vector.shape_cast %507 : vector<1x28x192xbf16> to vector<28x192xbf16>
    %cst_370 = arith.constant dense<0.000000e+00> : vector<8x192xf32>
    %509 = tpu.matmul %506, %508, %cst_370 {dimension_numbers = #tpu.dot_dimension_numbers<[1], [0], [0], [1], [0, 0, 1, 1], [], []>} : vector<8x28xbf16>, vector<28x192xbf16>, vector<8x192xf32> -> vector<8x192xf32>
    %510 = arith.addf %503, %509 : vector<8x192xf32>
    %c0_371 = arith.constant 0 : index
    %c24 = arith.constant 24 : index
    %c0_372 = arith.constant 0 : index
    %511 = vector.load %arg1[%c0_371, %c24, %c0_372] : memref<8x28x28xf32, #tpu.memory_space<vmem>>, vector<8x1x28xf32>
    %512 = vector.shape_cast %511 : vector<8x1x28xf32> to vector<8x28xf32>
    %513 = arith.truncf %512 : vector<8x28xf32> to vector<8x28xbf16>
    %c4_373 = arith.constant 4 : index
    %c0_374 = arith.constant 0 : index
    %c0_375 = arith.constant 0 : index
    %514 = vector.load %arg2[%c4_373, %c0_374, %c0_375] : memref<5x28x192xbf16, #tpu.memory_space<vmem>>, vector<1x28x192xbf16>
    %515 = vector.shape_cast %514 : vector<1x28x192xbf16> to vector<28x192xbf16>
    %cst_376 = arith.constant dense<0.000000e+00> : vector<8x192xf32>
    %516 = tpu.matmul %513, %515, %cst_376 {dimension_numbers = #tpu.dot_dimension_numbers<[1], [0], [0], [1], [0, 0, 1, 1], [], []>} : vector<8x28xbf16>, vector<28x192xbf16>, vector<8x192xf32> -> vector<8x192xf32>
    %517 = arith.addf %510, %516 : vector<8x192xf32>
    %518 = vector.broadcast %0 : vector<1x192xf32> to vector<8x192xf32>
    %519 = arith.addf %517, %518 : vector<8x192xf32>
    %cst_377 = arith.constant 0.000000e+00 : f32
    %520 = vector.broadcast %cst_377 : f32 to vector<8x192xf32>
    %521 = arith.maximumf %519, %520 : vector<8x192xf32>
    %c0_378 = arith.constant 0 : index
    %c22_379 = arith.constant 22 : index
    %c0_380 = arith.constant 0 : index
    %522 = vector.load %arg1[%c0_378, %c22_379, %c0_380] : memref<8x28x28xf32, #tpu.memory_space<vmem>>, vector<8x1x28xf32>
    %523 = vector.shape_cast %522 : vector<8x1x28xf32> to vector<8x28xf32>
    %524 = arith.truncf %523 : vector<8x28xf32> to vector<8x28xbf16>
    %c0_381 = arith.constant 0 : index
    %c0_382 = arith.constant 0 : index
    %c0_383 = arith.constant 0 : index
    %525 = vector.load %arg2[%c0_381, %c0_382, %c0_383] : memref<5x28x192xbf16, #tpu.memory_space<vmem>>, vector<1x28x192xbf16>
    %526 = vector.shape_cast %525 : vector<1x28x192xbf16> to vector<28x192xbf16>
    %cst_384 = arith.constant dense<0.000000e+00> : vector<8x192xf32>
    %527 = tpu.matmul %524, %526, %cst_384 {dimension_numbers = #tpu.dot_dimension_numbers<[1], [0], [0], [1], [0, 0, 1, 1], [], []>} : vector<8x28xbf16>, vector<28x192xbf16>, vector<8x192xf32> -> vector<8x192xf32>
    %c0_385 = arith.constant 0 : index
    %c23_386 = arith.constant 23 : index
    %c0_387 = arith.constant 0 : index
    %528 = vector.load %arg1[%c0_385, %c23_386, %c0_387] : memref<8x28x28xf32, #tpu.memory_space<vmem>>, vector<8x1x28xf32>
    %529 = vector.shape_cast %528 : vector<8x1x28xf32> to vector<8x28xf32>
    %530 = arith.truncf %529 : vector<8x28xf32> to vector<8x28xbf16>
    %c1_388 = arith.constant 1 : index
    %c0_389 = arith.constant 0 : index
    %c0_390 = arith.constant 0 : index
    %531 = vector.load %arg2[%c1_388, %c0_389, %c0_390] : memref<5x28x192xbf16, #tpu.memory_space<vmem>>, vector<1x28x192xbf16>
    %532 = vector.shape_cast %531 : vector<1x28x192xbf16> to vector<28x192xbf16>
    %cst_391 = arith.constant dense<0.000000e+00> : vector<8x192xf32>
    %533 = tpu.matmul %530, %532, %cst_391 {dimension_numbers = #tpu.dot_dimension_numbers<[1], [0], [0], [1], [0, 0, 1, 1], [], []>} : vector<8x28xbf16>, vector<28x192xbf16>, vector<8x192xf32> -> vector<8x192xf32>
    %534 = arith.addf %527, %533 : vector<8x192xf32>
    %c0_392 = arith.constant 0 : index
    %c24_393 = arith.constant 24 : index
    %c0_394 = arith.constant 0 : index
    %535 = vector.load %arg1[%c0_392, %c24_393, %c0_394] : memref<8x28x28xf32, #tpu.memory_space<vmem>>, vector<8x1x28xf32>
    %536 = vector.shape_cast %535 : vector<8x1x28xf32> to vector<8x28xf32>
    %537 = arith.truncf %536 : vector<8x28xf32> to vector<8x28xbf16>
    %c2_395 = arith.constant 2 : index
    %c0_396 = arith.constant 0 : index
    %c0_397 = arith.constant 0 : index
    %538 = vector.load %arg2[%c2_395, %c0_396, %c0_397] : memref<5x28x192xbf16, #tpu.memory_space<vmem>>, vector<1x28x192xbf16>
    %539 = vector.shape_cast %538 : vector<1x28x192xbf16> to vector<28x192xbf16>
    %cst_398 = arith.constant dense<0.000000e+00> : vector<8x192xf32>
    %540 = tpu.matmul %537, %539, %cst_398 {dimension_numbers = #tpu.dot_dimension_numbers<[1], [0], [0], [1], [0, 0, 1, 1], [], []>} : vector<8x28xbf16>, vector<28x192xbf16>, vector<8x192xf32> -> vector<8x192xf32>
    %541 = arith.addf %534, %540 : vector<8x192xf32>
    %c0_399 = arith.constant 0 : index
    %c25 = arith.constant 25 : index
    %c0_400 = arith.constant 0 : index
    %542 = vector.load %arg1[%c0_399, %c25, %c0_400] : memref<8x28x28xf32, #tpu.memory_space<vmem>>, vector<8x1x28xf32>
    %543 = vector.shape_cast %542 : vector<8x1x28xf32> to vector<8x28xf32>
    %544 = arith.truncf %543 : vector<8x28xf32> to vector<8x28xbf16>
    %c3_401 = arith.constant 3 : index
    %c0_402 = arith.constant 0 : index
    %c0_403 = arith.constant 0 : index
    %545 = vector.load %arg2[%c3_401, %c0_402, %c0_403] : memref<5x28x192xbf16, #tpu.memory_space<vmem>>, vector<1x28x192xbf16>
    %546 = vector.shape_cast %545 : vector<1x28x192xbf16> to vector<28x192xbf16>
    %cst_404 = arith.constant dense<0.000000e+00> : vector<8x192xf32>
    %547 = tpu.matmul %544, %546, %cst_404 {dimension_numbers = #tpu.dot_dimension_numbers<[1], [0], [0], [1], [0, 0, 1, 1], [], []>} : vector<8x28xbf16>, vector<28x192xbf16>, vector<8x192xf32> -> vector<8x192xf32>
    %548 = arith.addf %541, %547 : vector<8x192xf32>
    %c0_405 = arith.constant 0 : index
    %c26 = arith.constant 26 : index
    %c0_406 = arith.constant 0 : index
    %549 = vector.load %arg1[%c0_405, %c26, %c0_406] : memref<8x28x28xf32, #tpu.memory_space<vmem>>, vector<8x1x28xf32>
    %550 = vector.shape_cast %549 : vector<8x1x28xf32> to vector<8x28xf32>
    %551 = arith.truncf %550 : vector<8x28xf32> to vector<8x28xbf16>
    %c4_407 = arith.constant 4 : index
    %c0_408 = arith.constant 0 : index
    %c0_409 = arith.constant 0 : index
    %552 = vector.load %arg2[%c4_407, %c0_408, %c0_409] : memref<5x28x192xbf16, #tpu.memory_space<vmem>>, vector<1x28x192xbf16>
    %553 = vector.shape_cast %552 : vector<1x28x192xbf16> to vector<28x192xbf16>
    %cst_410 = arith.constant dense<0.000000e+00> : vector<8x192xf32>
    %554 = tpu.matmul %551, %553, %cst_410 {dimension_numbers = #tpu.dot_dimension_numbers<[1], [0], [0], [1], [0, 0, 1, 1], [], []>} : vector<8x28xbf16>, vector<28x192xbf16>, vector<8x192xf32> -> vector<8x192xf32>
    %555 = arith.addf %548, %554 : vector<8x192xf32>
    %556 = vector.broadcast %0 : vector<1x192xf32> to vector<8x192xf32>
    %557 = arith.addf %555, %556 : vector<8x192xf32>
    %cst_411 = arith.constant 0.000000e+00 : f32
    %558 = vector.broadcast %cst_411 : f32 to vector<8x192xf32>
    %559 = arith.maximumf %557, %558 : vector<8x192xf32>
    %560 = arith.maximumf %521, %559 : vector<8x192xf32>
    %561 = vector.extract_strided_slice %560 {offsets = [0, 0], sizes = [8, 16], strides = [1, 1]} : vector<8x192xf32> to vector<8x16xf32>
    %562 = vector.extract_strided_slice %560 {offsets = [0, 16], sizes = [8, 16], strides = [1, 1]} : vector<8x192xf32> to vector<8x16xf32>
    %563 = arith.maximumf %561, %562 : vector<8x16xf32>
    %564 = vector.extract_strided_slice %560 {offsets = [0, 32], sizes = [8, 16], strides = [1, 1]} : vector<8x192xf32> to vector<8x16xf32>
    %565 = vector.extract_strided_slice %560 {offsets = [0, 48], sizes = [8, 16], strides = [1, 1]} : vector<8x192xf32> to vector<8x16xf32>
    %566 = arith.maximumf %564, %565 : vector<8x16xf32>
    %567 = vector.extract_strided_slice %560 {offsets = [0, 64], sizes = [8, 16], strides = [1, 1]} : vector<8x192xf32> to vector<8x16xf32>
    %568 = vector.extract_strided_slice %560 {offsets = [0, 80], sizes = [8, 16], strides = [1, 1]} : vector<8x192xf32> to vector<8x16xf32>
    %569 = arith.maximumf %567, %568 : vector<8x16xf32>
    %570 = vector.extract_strided_slice %560 {offsets = [0, 96], sizes = [8, 16], strides = [1, 1]} : vector<8x192xf32> to vector<8x16xf32>
    %571 = vector.extract_strided_slice %560 {offsets = [0, 112], sizes = [8, 16], strides = [1, 1]} : vector<8x192xf32> to vector<8x16xf32>
    %572 = arith.maximumf %570, %571 : vector<8x16xf32>
    %573 = vector.extract_strided_slice %560 {offsets = [0, 128], sizes = [8, 16], strides = [1, 1]} : vector<8x192xf32> to vector<8x16xf32>
    %574 = vector.extract_strided_slice %560 {offsets = [0, 144], sizes = [8, 16], strides = [1, 1]} : vector<8x192xf32> to vector<8x16xf32>
    %575 = arith.maximumf %573, %574 : vector<8x16xf32>
    %576 = vector.extract_strided_slice %560 {offsets = [0, 160], sizes = [8, 16], strides = [1, 1]} : vector<8x192xf32> to vector<8x16xf32>
    %577 = vector.extract_strided_slice %560 {offsets = [0, 176], sizes = [8, 16], strides = [1, 1]} : vector<8x192xf32> to vector<8x16xf32>
    %578 = arith.maximumf %576, %577 : vector<8x16xf32>
    %579 = tpu.concatenate %563, %566, %569, %572, %575, %578 in 1 : vector<8x16xf32>, vector<8x16xf32>, vector<8x16xf32>, vector<8x16xf32>, vector<8x16xf32>, vector<8x16xf32> -> vector<8x96xf32>
    %580 = arith.truncf %99 : vector<8x96xf32> to vector<8x96xbf16>
    %c0_412 = arith.constant 0 : index
    %c0_413 = arith.constant 0 : index
    %c0_414 = arith.constant 0 : index
    %581 = vector.load %arg4[%c0_412, %c0_413, %c0_414] : memref<3x96x128xbf16, #tpu.memory_space<vmem>>, vector<1x96x128xbf16>
    %582 = vector.shape_cast %581 : vector<1x96x128xbf16> to vector<96x128xbf16>
    %cst_415 = arith.constant dense<0.000000e+00> : vector<8x128xf32>
    %583 = tpu.matmul %580, %582, %cst_415 {dimension_numbers = #tpu.dot_dimension_numbers<[1], [0], [0], [1], [0, 0, 1, 1], [], []>} : vector<8x96xbf16>, vector<96x128xbf16>, vector<8x128xf32> -> vector<8x128xf32>
    %584 = arith.truncf %195 : vector<8x96xf32> to vector<8x96xbf16>
    %c1_416 = arith.constant 1 : index
    %c0_417 = arith.constant 0 : index
    %c0_418 = arith.constant 0 : index
    %585 = vector.load %arg4[%c1_416, %c0_417, %c0_418] : memref<3x96x128xbf16, #tpu.memory_space<vmem>>, vector<1x96x128xbf16>
    %586 = vector.shape_cast %585 : vector<1x96x128xbf16> to vector<96x128xbf16>
    %cst_419 = arith.constant dense<0.000000e+00> : vector<8x128xf32>
    %587 = tpu.matmul %584, %586, %cst_419 {dimension_numbers = #tpu.dot_dimension_numbers<[1], [0], [0], [1], [0, 0, 1, 1], [], []>} : vector<8x96xbf16>, vector<96x128xbf16>, vector<8x128xf32> -> vector<8x128xf32>
    %588 = arith.addf %583, %587 : vector<8x128xf32>
    %589 = arith.truncf %291 : vector<8x96xf32> to vector<8x96xbf16>
    %c2_420 = arith.constant 2 : index
    %c0_421 = arith.constant 0 : index
    %c0_422 = arith.constant 0 : index
    %590 = vector.load %arg4[%c2_420, %c0_421, %c0_422] : memref<3x96x128xbf16, #tpu.memory_space<vmem>>, vector<1x96x128xbf16>
    %591 = vector.shape_cast %590 : vector<1x96x128xbf16> to vector<96x128xbf16>
    %cst_423 = arith.constant dense<0.000000e+00> : vector<8x128xf32>
    %592 = tpu.matmul %589, %591, %cst_423 {dimension_numbers = #tpu.dot_dimension_numbers<[1], [0], [0], [1], [0, 0, 1, 1], [], []>} : vector<8x96xbf16>, vector<96x128xbf16>, vector<8x128xf32> -> vector<8x128xf32>
    %593 = arith.addf %588, %592 : vector<8x128xf32>
    %594 = vector.broadcast %1 : vector<1x128xf32> to vector<8x128xf32>
    %595 = arith.addf %593, %594 : vector<8x128xf32>
    %cst_424 = arith.constant 0.000000e+00 : f32
    %596 = vector.broadcast %cst_424 : f32 to vector<8x128xf32>
    %597 = arith.maximumf %595, %596 : vector<8x128xf32>
    %598 = arith.truncf %195 : vector<8x96xf32> to vector<8x96xbf16>
    %c0_425 = arith.constant 0 : index
    %c0_426 = arith.constant 0 : index
    %c0_427 = arith.constant 0 : index
    %599 = vector.load %arg4[%c0_425, %c0_426, %c0_427] : memref<3x96x128xbf16, #tpu.memory_space<vmem>>, vector<1x96x128xbf16>
    %600 = vector.shape_cast %599 : vector<1x96x128xbf16> to vector<96x128xbf16>
    %cst_428 = arith.constant dense<0.000000e+00> : vector<8x128xf32>
    %601 = tpu.matmul %598, %600, %cst_428 {dimension_numbers = #tpu.dot_dimension_numbers<[1], [0], [0], [1], [0, 0, 1, 1], [], []>} : vector<8x96xbf16>, vector<96x128xbf16>, vector<8x128xf32> -> vector<8x128xf32>
    %602 = arith.truncf %291 : vector<8x96xf32> to vector<8x96xbf16>
    %c1_429 = arith.constant 1 : index
    %c0_430 = arith.constant 0 : index
    %c0_431 = arith.constant 0 : index
    %603 = vector.load %arg4[%c1_429, %c0_430, %c0_431] : memref<3x96x128xbf16, #tpu.memory_space<vmem>>, vector<1x96x128xbf16>
    %604 = vector.shape_cast %603 : vector<1x96x128xbf16> to vector<96x128xbf16>
    %cst_432 = arith.constant dense<0.000000e+00> : vector<8x128xf32>
    %605 = tpu.matmul %602, %604, %cst_432 {dimension_numbers = #tpu.dot_dimension_numbers<[1], [0], [0], [1], [0, 0, 1, 1], [], []>} : vector<8x96xbf16>, vector<96x128xbf16>, vector<8x128xf32> -> vector<8x128xf32>
    %606 = arith.addf %601, %605 : vector<8x128xf32>
    %607 = arith.truncf %387 : vector<8x96xf32> to vector<8x96xbf16>
    %c2_433 = arith.constant 2 : index
    %c0_434 = arith.constant 0 : index
    %c0_435 = arith.constant 0 : index
    %608 = vector.load %arg4[%c2_433, %c0_434, %c0_435] : memref<3x96x128xbf16, #tpu.memory_space<vmem>>, vector<1x96x128xbf16>
    %609 = vector.shape_cast %608 : vector<1x96x128xbf16> to vector<96x128xbf16>
    %cst_436 = arith.constant dense<0.000000e+00> : vector<8x128xf32>
    %610 = tpu.matmul %607, %609, %cst_436 {dimension_numbers = #tpu.dot_dimension_numbers<[1], [0], [0], [1], [0, 0, 1, 1], [], []>} : vector<8x96xbf16>, vector<96x128xbf16>, vector<8x128xf32> -> vector<8x128xf32>
    %611 = arith.addf %606, %610 : vector<8x128xf32>
    %612 = vector.broadcast %1 : vector<1x128xf32> to vector<8x128xf32>
    %613 = arith.addf %611, %612 : vector<8x128xf32>
    %cst_437 = arith.constant 0.000000e+00 : f32
    %614 = vector.broadcast %cst_437 : f32 to vector<8x128xf32>
    %615 = arith.maximumf %613, %614 : vector<8x128xf32>
    %616 = arith.truncf %291 : vector<8x96xf32> to vector<8x96xbf16>
    %c0_438 = arith.constant 0 : index
    %c0_439 = arith.constant 0 : index
    %c0_440 = arith.constant 0 : index
    %617 = vector.load %arg4[%c0_438, %c0_439, %c0_440] : memref<3x96x128xbf16, #tpu.memory_space<vmem>>, vector<1x96x128xbf16>
    %618 = vector.shape_cast %617 : vector<1x96x128xbf16> to vector<96x128xbf16>
    %cst_441 = arith.constant dense<0.000000e+00> : vector<8x128xf32>
    %619 = tpu.matmul %616, %618, %cst_441 {dimension_numbers = #tpu.dot_dimension_numbers<[1], [0], [0], [1], [0, 0, 1, 1], [], []>} : vector<8x96xbf16>, vector<96x128xbf16>, vector<8x128xf32> -> vector<8x128xf32>
    %620 = arith.truncf %387 : vector<8x96xf32> to vector<8x96xbf16>
    %c1_442 = arith.constant 1 : index
    %c0_443 = arith.constant 0 : index
    %c0_444 = arith.constant 0 : index
    %621 = vector.load %arg4[%c1_442, %c0_443, %c0_444] : memref<3x96x128xbf16, #tpu.memory_space<vmem>>, vector<1x96x128xbf16>
    %622 = vector.shape_cast %621 : vector<1x96x128xbf16> to vector<96x128xbf16>
    %cst_445 = arith.constant dense<0.000000e+00> : vector<8x128xf32>
    %623 = tpu.matmul %620, %622, %cst_445 {dimension_numbers = #tpu.dot_dimension_numbers<[1], [0], [0], [1], [0, 0, 1, 1], [], []>} : vector<8x96xbf16>, vector<96x128xbf16>, vector<8x128xf32> -> vector<8x128xf32>
    %624 = arith.addf %619, %623 : vector<8x128xf32>
    %625 = arith.truncf %483 : vector<8x96xf32> to vector<8x96xbf16>
    %c2_446 = arith.constant 2 : index
    %c0_447 = arith.constant 0 : index
    %c0_448 = arith.constant 0 : index
    %626 = vector.load %arg4[%c2_446, %c0_447, %c0_448] : memref<3x96x128xbf16, #tpu.memory_space<vmem>>, vector<1x96x128xbf16>
    %627 = vector.shape_cast %626 : vector<1x96x128xbf16> to vector<96x128xbf16>
    %cst_449 = arith.constant dense<0.000000e+00> : vector<8x128xf32>
    %628 = tpu.matmul %625, %627, %cst_449 {dimension_numbers = #tpu.dot_dimension_numbers<[1], [0], [0], [1], [0, 0, 1, 1], [], []>} : vector<8x96xbf16>, vector<96x128xbf16>, vector<8x128xf32> -> vector<8x128xf32>
    %629 = arith.addf %624, %628 : vector<8x128xf32>
    %630 = vector.broadcast %1 : vector<1x128xf32> to vector<8x128xf32>
    %631 = arith.addf %629, %630 : vector<8x128xf32>
    %cst_450 = arith.constant 0.000000e+00 : f32
    %632 = vector.broadcast %cst_450 : f32 to vector<8x128xf32>
    %633 = arith.maximumf %631, %632 : vector<8x128xf32>
    %634 = arith.truncf %387 : vector<8x96xf32> to vector<8x96xbf16>
    %c0_451 = arith.constant 0 : index
    %c0_452 = arith.constant 0 : index
    %c0_453 = arith.constant 0 : index
    %635 = vector.load %arg4[%c0_451, %c0_452, %c0_453] : memref<3x96x128xbf16, #tpu.memory_space<vmem>>, vector<1x96x128xbf16>
    %636 = vector.shape_cast %635 : vector<1x96x128xbf16> to vector<96x128xbf16>
    %cst_454 = arith.constant dense<0.000000e+00> : vector<8x128xf32>
    %637 = tpu.matmul %634, %636, %cst_454 {dimension_numbers = #tpu.dot_dimension_numbers<[1], [0], [0], [1], [0, 0, 1, 1], [], []>} : vector<8x96xbf16>, vector<96x128xbf16>, vector<8x128xf32> -> vector<8x128xf32>
    %638 = arith.truncf %483 : vector<8x96xf32> to vector<8x96xbf16>
    %c1_455 = arith.constant 1 : index
    %c0_456 = arith.constant 0 : index
    %c0_457 = arith.constant 0 : index
    %639 = vector.load %arg4[%c1_455, %c0_456, %c0_457] : memref<3x96x128xbf16, #tpu.memory_space<vmem>>, vector<1x96x128xbf16>
    %640 = vector.shape_cast %639 : vector<1x96x128xbf16> to vector<96x128xbf16>
    %cst_458 = arith.constant dense<0.000000e+00> : vector<8x128xf32>
    %641 = tpu.matmul %638, %640, %cst_458 {dimension_numbers = #tpu.dot_dimension_numbers<[1], [0], [0], [1], [0, 0, 1, 1], [], []>} : vector<8x96xbf16>, vector<96x128xbf16>, vector<8x128xf32> -> vector<8x128xf32>
    %642 = arith.addf %637, %641 : vector<8x128xf32>
    %643 = arith.truncf %579 : vector<8x96xf32> to vector<8x96xbf16>
    %c2_459 = arith.constant 2 : index
    %c0_460 = arith.constant 0 : index
    %c0_461 = arith.constant 0 : index
    %644 = vector.load %arg4[%c2_459, %c0_460, %c0_461] : memref<3x96x128xbf16, #tpu.memory_space<vmem>>, vector<1x96x128xbf16>
    %645 = vector.shape_cast %644 : vector<1x96x128xbf16> to vector<96x128xbf16>
    %cst_462 = arith.constant dense<0.000000e+00> : vector<8x128xf32>
    %646 = tpu.matmul %643, %645, %cst_462 {dimension_numbers = #tpu.dot_dimension_numbers<[1], [0], [0], [1], [0, 0, 1, 1], [], []>} : vector<8x96xbf16>, vector<96x128xbf16>, vector<8x128xf32> -> vector<8x128xf32>
    %647 = arith.addf %642, %646 : vector<8x128xf32>
    %648 = vector.broadcast %1 : vector<1x128xf32> to vector<8x128xf32>
    %649 = arith.addf %647, %648 : vector<8x128xf32>
    %cst_463 = arith.constant 0.000000e+00 : f32
    %650 = vector.broadcast %cst_463 : f32 to vector<8x128xf32>
    %651 = arith.maximumf %649, %650 : vector<8x128xf32>
    %652 = arith.truncf %597 : vector<8x128xf32> to vector<8x128xbf16>
    %c0_464 = arith.constant 0 : index
    %c0_465 = arith.constant 0 : index
    %c0_466 = arith.constant 0 : index
    %653 = vector.load %arg6[%c0_464, %c0_465, %c0_466] : memref<3x128x128xbf16, #tpu.memory_space<vmem>>, vector<1x128x128xbf16>
    %654 = vector.shape_cast %653 : vector<1x128x128xbf16> to vector<128x128xbf16>
    %cst_467 = arith.constant dense<0.000000e+00> : vector<8x128xf32>
    %655 = tpu.matmul %652, %654, %cst_467 {dimension_numbers = #tpu.dot_dimension_numbers<[1], [0], [0], [1], [0, 0, 1, 1], [], []>} : vector<8x128xbf16>, vector<128x128xbf16>, vector<8x128xf32> -> vector<8x128xf32>
    %656 = arith.truncf %615 : vector<8x128xf32> to vector<8x128xbf16>
    %c1_468 = arith.constant 1 : index
    %c0_469 = arith.constant 0 : index
    %c0_470 = arith.constant 0 : index
    %657 = vector.load %arg6[%c1_468, %c0_469, %c0_470] : memref<3x128x128xbf16, #tpu.memory_space<vmem>>, vector<1x128x128xbf16>
    %658 = vector.shape_cast %657 : vector<1x128x128xbf16> to vector<128x128xbf16>
    %cst_471 = arith.constant dense<0.000000e+00> : vector<8x128xf32>
    %659 = tpu.matmul %656, %658, %cst_471 {dimension_numbers = #tpu.dot_dimension_numbers<[1], [0], [0], [1], [0, 0, 1, 1], [], []>} : vector<8x128xbf16>, vector<128x128xbf16>, vector<8x128xf32> -> vector<8x128xf32>
    %660 = arith.addf %655, %659 : vector<8x128xf32>
    %661 = arith.truncf %633 : vector<8x128xf32> to vector<8x128xbf16>
    %c2_472 = arith.constant 2 : index
    %c0_473 = arith.constant 0 : index
    %c0_474 = arith.constant 0 : index
    %662 = vector.load %arg6[%c2_472, %c0_473, %c0_474] : memref<3x128x128xbf16, #tpu.memory_space<vmem>>, vector<1x128x128xbf16>
    %663 = vector.shape_cast %662 : vector<1x128x128xbf16> to vector<128x128xbf16>
    %cst_475 = arith.constant dense<0.000000e+00> : vector<8x128xf32>
    %664 = tpu.matmul %661, %663, %cst_475 {dimension_numbers = #tpu.dot_dimension_numbers<[1], [0], [0], [1], [0, 0, 1, 1], [], []>} : vector<8x128xbf16>, vector<128x128xbf16>, vector<8x128xf32> -> vector<8x128xf32>
    %665 = arith.addf %660, %664 : vector<8x128xf32>
    %666 = vector.broadcast %2 : vector<1x128xf32> to vector<8x128xf32>
    %667 = arith.addf %665, %666 : vector<8x128xf32>
    %cst_476 = arith.constant 0.000000e+00 : f32
    %668 = vector.broadcast %cst_476 : f32 to vector<8x128xf32>
    %669 = arith.maximumf %667, %668 : vector<8x128xf32>
    %670 = arith.truncf %615 : vector<8x128xf32> to vector<8x128xbf16>
    %c0_477 = arith.constant 0 : index
    %c0_478 = arith.constant 0 : index
    %c0_479 = arith.constant 0 : index
    %671 = vector.load %arg6[%c0_477, %c0_478, %c0_479] : memref<3x128x128xbf16, #tpu.memory_space<vmem>>, vector<1x128x128xbf16>
    %672 = vector.shape_cast %671 : vector<1x128x128xbf16> to vector<128x128xbf16>
    %cst_480 = arith.constant dense<0.000000e+00> : vector<8x128xf32>
    %673 = tpu.matmul %670, %672, %cst_480 {dimension_numbers = #tpu.dot_dimension_numbers<[1], [0], [0], [1], [0, 0, 1, 1], [], []>} : vector<8x128xbf16>, vector<128x128xbf16>, vector<8x128xf32> -> vector<8x128xf32>
    %674 = arith.truncf %633 : vector<8x128xf32> to vector<8x128xbf16>
    %c1_481 = arith.constant 1 : index
    %c0_482 = arith.constant 0 : index
    %c0_483 = arith.constant 0 : index
    %675 = vector.load %arg6[%c1_481, %c0_482, %c0_483] : memref<3x128x128xbf16, #tpu.memory_space<vmem>>, vector<1x128x128xbf16>
    %676 = vector.shape_cast %675 : vector<1x128x128xbf16> to vector<128x128xbf16>
    %cst_484 = arith.constant dense<0.000000e+00> : vector<8x128xf32>
    %677 = tpu.matmul %674, %676, %cst_484 {dimension_numbers = #tpu.dot_dimension_numbers<[1], [0], [0], [1], [0, 0, 1, 1], [], []>} : vector<8x128xbf16>, vector<128x128xbf16>, vector<8x128xf32> -> vector<8x128xf32>
    %678 = arith.addf %673, %677 : vector<8x128xf32>
    %679 = arith.truncf %651 : vector<8x128xf32> to vector<8x128xbf16>
    %c2_485 = arith.constant 2 : index
    %c0_486 = arith.constant 0 : index
    %c0_487 = arith.constant 0 : index
    %680 = vector.load %arg6[%c2_485, %c0_486, %c0_487] : memref<3x128x128xbf16, #tpu.memory_space<vmem>>, vector<1x128x128xbf16>
    %681 = vector.shape_cast %680 : vector<1x128x128xbf16> to vector<128x128xbf16>
    %cst_488 = arith.constant dense<0.000000e+00> : vector<8x128xf32>
    %682 = tpu.matmul %679, %681, %cst_488 {dimension_numbers = #tpu.dot_dimension_numbers<[1], [0], [0], [1], [0, 0, 1, 1], [], []>} : vector<8x128xbf16>, vector<128x128xbf16>, vector<8x128xf32> -> vector<8x128xf32>
    %683 = arith.addf %678, %682 : vector<8x128xf32>
    %684 = vector.broadcast %2 : vector<1x128xf32> to vector<8x128xf32>
    %685 = arith.addf %683, %684 : vector<8x128xf32>
    %cst_489 = arith.constant 0.000000e+00 : f32
    %686 = vector.broadcast %cst_489 : f32 to vector<8x128xf32>
    %687 = arith.maximumf %685, %686 : vector<8x128xf32>
    %688 = vector.extract_strided_slice %669 {offsets = [0, 0], sizes = [8, 64], strides = [1, 1]} : vector<8x128xf32> to vector<8x64xf32>
    %689 = vector.extract_strided_slice %669 {offsets = [0, 64], sizes = [8, 64], strides = [1, 1]} : vector<8x128xf32> to vector<8x64xf32>
    %690 = arith.maximumf %688, %689 : vector<8x64xf32>
    %691 = vector.extract_strided_slice %687 {offsets = [0, 0], sizes = [8, 64], strides = [1, 1]} : vector<8x128xf32> to vector<8x64xf32>
    %692 = vector.extract_strided_slice %687 {offsets = [0, 64], sizes = [8, 64], strides = [1, 1]} : vector<8x128xf32> to vector<8x64xf32>
    %693 = arith.maximumf %691, %692 : vector<8x64xf32>
    %694 = arith.maximumf %690, %693 : vector<8x64xf32>
    %695 = arith.truncf %694 : vector<8x64xf32> to vector<8x64xbf16>
    %c0_490 = arith.constant 0 : index
    %c0_491 = arith.constant 0 : index
    %696 = vector.load %arg8[%c0_490, %c0_491] : memref<64x10xbf16, #tpu.memory_space<vmem>>, vector<64x10xbf16>
    %cst_492 = arith.constant dense<0.000000e+00> : vector<8x10xf32>
    %697 = tpu.matmul %695, %696, %cst_492 {dimension_numbers = #tpu.dot_dimension_numbers<[1], [0], [0], [1], [0, 0, 1, 1], [], []>} : vector<8x64xbf16>, vector<64x10xbf16>, vector<8x10xf32> -> vector<8x10xf32>
    %698 = vector.broadcast %3 : vector<1x10xf32> to vector<8x10xf32>
    %699 = arith.addf %697, %698 : vector<8x10xf32>
    %c0_493 = arith.constant 0 : index
    %c0_494 = arith.constant 0 : index
    %700 = vector.load %arg10[%c0_493, %c0_494] : memref<8x10xf32, #tpu.memory_space<vmem>>, vector<8x10xf32>
    tpu.vector_store %arg10[%c0_493, %c0_494], %699 {strides = array<i32>} : memref<8x10xf32, #tpu.memory_space<vmem>>, vector<8x10xf32>,
    return
  }
  func.func @transform_0(%arg0: i32) -> (i32, i32, i32) {
    %c0_i32 = arith.constant 0 : i32
    %c0_i32_0 = arith.constant 0 : i32
    %c0_i32_1 = arith.constant 0 : i32
    return %arg0, %c0_i32, %c0_i32_0 : i32, i32, i32
  }
  func.func @transform_1(%arg0: i32) -> (i32, i32, i32) {
    %c0_i32 = arith.constant 0 : i32
    %c0_i32_0 = arith.constant 0 : i32
    %c0_i32_1 = arith.constant 0 : i32
    %c0_i32_2 = arith.constant 0 : i32
    return %c0_i32, %c0_i32_0, %c0_i32_1 : i32, i32, i32
  }
  func.func @transform_2(%arg0: i32) -> (i32, i32) {
    %c0_i32 = arith.constant 0 : i32
    %c0_i32_0 = arith.constant 0 : i32
    %c0_i32_1 = arith.constant 0 : i32
    return %c0_i32, %c0_i32_0 : i32, i32
  }
  func.func @transform_3(%arg0: i32) -> (i32, i32, i32) {
    %c0_i32 = arith.constant 0 : i32
    %c0_i32_0 = arith.constant 0 : i32
    %c0_i32_1 = arith.constant 0 : i32
    %c0_i32_2 = arith.constant 0 : i32
    return %c0_i32, %c0_i32_0, %c0_i32_1 : i32, i32, i32
  }
  func.func @transform_4(%arg0: i32) -> (i32, i32) {
    %c0_i32 = arith.constant 0 : i32
    %c0_i32_0 = arith.constant 0 : i32
    %c0_i32_1 = arith.constant 0 : i32
    return %c0_i32, %c0_i32_0 : i32, i32
  }
  func.func @transform_5(%arg0: i32) -> (i32, i32, i32) {
    %c0_i32 = arith.constant 0 : i32
    %c0_i32_0 = arith.constant 0 : i32
    %c0_i32_1 = arith.constant 0 : i32
    %c0_i32_2 = arith.constant 0 : i32
    return %c0_i32, %c0_i32_0, %c0_i32_1 : i32, i32, i32
  }
  func.func @transform_6(%arg0: i32) -> (i32, i32) {
    %c0_i32 = arith.constant 0 : i32
    %c0_i32_0 = arith.constant 0 : i32
    %c0_i32_1 = arith.constant 0 : i32
    return %c0_i32, %c0_i32_0 : i32, i32
  }
  func.func @transform_7(%arg0: i32) -> (i32, i32) {
    %c0_i32 = arith.constant 0 : i32
    %c0_i32_0 = arith.constant 0 : i32
    %c0_i32_1 = arith.constant 0 : i32
    return %c0_i32, %c0_i32_0 : i32, i32
  }
  func.func @transform_8(%arg0: i32) -> (i32, i32) {
    %c0_i32 = arith.constant 0 : i32
    %c0_i32_0 = arith.constant 0 : i32
    %c0_i32_1 = arith.constant 0 : i32
    return %c0_i32, %c0_i32_0 : i32, i32
  }
  func.func @transform_9(%arg0: i32) -> (i32, i32) {
    %c0_i32 = arith.constant 0 : i32
    %c0_i32_0 = arith.constant 0 : i32
    return %arg0, %c0_i32 : i32, i32
  }
}

</mosaic_0001>

<llo_original>
// kernel: _lambda_.1
$region0: #{_lambda_.1}
  #allocation0 [shape = 'u32[]', space=smem, size = 0x4, offset = 0x4, fixed_abs, tag = 'smem constant byte address 0x4 - core index']
  #allocation1 [shape = 'u32[144,128]{1,0:T(1,128)}', space=vmem, size = 0x12000, scoped, tag = 'internal scratch']
  %s0 = inlined_call_operand.vmem [shape: f32[8,28,28], index: 0, kind: input, shape index: {}]
  %s1 = inlined_call_operand.vmem [shape: bf16[5,28,192], index: 1, kind: input, shape index: {}]
  %s2 = inlined_call_operand.vmem [shape: f32[1,192], index: 2, kind: input, shape index: {}]
  %s3 = inlined_call_operand.vmem [shape: bf16[3,96,128], index: 3, kind: input, shape index: {}]
  %s4 = inlined_call_operand.vmem [shape: f32[1,128], index: 4, kind: input, shape index: {}]
  %s5 = inlined_call_operand.vmem [shape: bf16[3,128,128], index: 5, kind: input, shape index: {}]
  %s6 = inlined_call_operand.vmem [shape: f32[1,128], index: 6, kind: input, shape index: {}]
  %s7 = inlined_call_operand.vmem [shape: bf16[64,10], index: 7, kind: input, shape index: {}]
  %s8 = inlined_call_operand.vmem [shape: f32[1,10], index: 8, kind: input, shape index: {}]
  %s9 = inlined_call_operand.vmem [shape: f32[8,10], index: 9, kind: output, shape index: {}]
  %s10 = sld [smem:[#allocation0]]
  $region46: #{_lambda_.1} parent=0
    _
  %s12 = ssub.s32 1, %s10
  %s13 = scalar_select 0, %s12, %s10
  // Predicated region
  $region2: #{_lambda_.1} parent=0 // pred_check
    _
  $region3: #{_lambda_.1} parent=0 // pred_check_branch
    %15 = sbr.rel (0) target = $region5
  $region4: #{_lambda_.1} parent=0 // pred_region
    _
  $region5: #{_lambda_.1} parent=0 // pred_fallthru
    _
  // Predicated region
  $region6: #{_lambda_.1} parent=0 // pred_check
    _
  $region7: #{_lambda_.1} parent=0 // pred_check_branch
    %17 = sbr.rel (0) target = $region9
  $region8: #{_lambda_.1} parent=0 // pred_region
    _
  $region9: #{_lambda_.1} parent=0 // pred_fallthru
    _
  // Predicated region
  $region10: #{_lambda_.1} parent=0 // pred_check
    _
  $region11: #{_lambda_.1} parent=0 // pred_check_branch
    %19 = sbr.rel (0) target = $region13
  $region12: #{_lambda_.1} parent=0 // pred_region
    _
  $region13: #{_lambda_.1} parent=0 // pred_fallthru
    _
  // Predicated region
  $region14: #{_lambda_.1} parent=0 // pred_check
    _
  $region15: #{_lambda_.1} parent=0 // pred_check_branch
    %21 = sbr.rel (0) target = $region17
  $region16: #{_lambda_.1} parent=0 // pred_region
    _
  $region17: #{_lambda_.1} parent=0 // pred_fallthru
    _
  // Predicated region
  $region18: #{_lambda_.1} parent=0 // pred_check
    _
  $region19: #{_lambda_.1} parent=0 // pred_check_branch
    %23 = sbr.rel (0) target = $region21
  $region20: #{_lambda_.1} parent=0 // pred_region
    _
  $region21: #{_lambda_.1} parent=0 // pred_fallthru
    _
  // Predicated region
  $region22: #{_lambda_.1} parent=0 // pred_check
    _
  $region23: #{_lambda_.1} parent=0 // pred_check_branch
    %25 = sbr.rel (0) target = $region25
  $region24: #{_lambda_.1} parent=0 // pred_region
    _
  $region25: #{_lambda_.1} parent=0 // pred_fallthru
    _
  // Predicated region
  $region26: #{_lambda_.1} parent=0 // pred_check
    _
  $region27: #{_lambda_.1} parent=0 // pred_check_branch
    %27 = sbr.rel (0) target = $region29
  $region28: #{_lambda_.1} parent=0 // pred_region
    _
  $region29: #{_lambda_.1} parent=0 // pred_fallthru
    _
  // Predicated region
  $region30: #{_lambda_.1} parent=0 // pred_check
    _
  $region31: #{_lambda_.1} parent=0 // pred_check_branch
    %29 = sbr.rel (0) target = $region33
  $region32: #{_lambda_.1} parent=0 // pred_region
    _
  $region33: #{_lambda_.1} parent=0 // pred_fallthru
    _
  // Predicated region
  $region34: #{_lambda_.1} parent=0 // pred_check
    _
  $region35: #{_lambda_.1} parent=0 // pred_check_branch
    %31 = sbr.rel (0) target = $region37
  $region36: #{_lambda_.1} parent=0 // pred_region
    _
  $region37: #{_lambda_.1} parent=0 // pred_fallthru
    _
  %v33 = vld [vmem:[%s2] sm:$0x3]
  %v34 = vld [vmem:[%s4] sm:$0x1]
  %v35 = vld [vmem:[%s6] sm:$0x1]
  %v36 = vld [vmem:[%s8] sm:$0x1]
  %v37 = vld [vmem:[%s0] sm:$0x1]
  %v38 = vld [vmem:[%s0 + $0x20] sm:$0x1]
  %v39 = vld [vmem:[%s0 + $0x40] sm:$0x1]
  %v40 = vld [vmem:[%s0 + $0x60] sm:$0x1]
  %v41 = vld [vmem:[%s0 + $0x80] sm:$0x1]
  %v42 = vld [vmem:[%s0 + $0xa0] sm:$0x1]
  %v43 = vld [vmem:[%s0 + $0xc0] sm:$0x1]
  %v44 = vld [vmem:[%s0 + $0xe0] sm:$0x1]
  %v45 = vpack.c.bf16 %v37, %v37
  %v46 = vpack.c.bf16 %v38, %v38
  %v47 = vpack.c.bf16 %v39, %v39
  %v48 = vpack.c.bf16 %v40, %v40
  %v49 = vpack.c.bf16 %v41, %v41
  %v50 = vpack.c.bf16 %v42, %v42
  %v51 = vpack.c.bf16 %v43, %v43
  %v52 = vpack.c.bf16 %v44, %v44
  %v53 = vld [vmem:[%s1] sm:$0xff]
  %v54 = vld [vmem:[%s1 + $0x8] sm:$0xff]
  %v55 = vld [vmem:[%s1 + $0x10] sm:$0xff]
  %v56 = vld [vmem:[%s1 + $0x18] sm:$0x33]
  %v57 = vld [vmem:[%s0 + $0x1] sm:$0x1]
  %v58 = vld [vmem:[%s0 + $0x21] sm:$0x1]
  %v59 = vld [vmem:[%s0 + $0x41] sm:$0x1]
  %v60 = vld [vmem:[%s0 + $0x61] sm:$0x1]
  %v61 = vld [vmem:[%s0 + $0x81] sm:$0x1]
  %v62 = vld [vmem:[%s0 + $0xa1] sm:$0x1]
  %v63 = vld [vmem:[%s0 + $0xc1] sm:$0x1]
  %v64 = vld [vmem:[%s0 + $0xe1] sm:$0x1]
  %v65 = vpack.c.bf16 %v57, %v57
  %v66 = vpack.c.bf16 %v58, %v58
  %v67 = vpack.c.bf16 %v59, %v59
  %v68 = vpack.c.bf16 %v60, %v60
  %v69 = vpack.c.bf16 %v61, %v61
  %v70 = vpack.c.bf16 %v62, %v62
  %v71 = vpack.c.bf16 %v63, %v63
  %v72 = vpack.c.bf16 %v64, %v64
  %s73 = scalar_lea.vmem %s1, 32
  %v74 = vld [vmem:[%s73] sm:$0xff]
  %v75 = vld [vmem:[%s73 + $0x8] sm:$0xff]
  %v76 = vld [vmem:[%s73 + $0x10] sm:$0xff]
  %v77 = vld [vmem:[%s73 + $0x18] sm:$0x33]
  %v86 = vunpack.c.l.b16 %v65
  %v87 = vunpack.c.l.b16 %v66
  %v88 = vunpack.c.l.b16 %v67
  %v89 = vunpack.c.l.b16 %v68
  %v90 = vunpack.c.l.b16 %v69
  %v91 = vunpack.c.l.b16 %v70
  %v92 = vunpack.c.l.b16 %v71
  %v93 = vunpack.c.l.b16 %v72
  %v94 = vrot.slane %v87, 7
  %vm95 = vcmask 1041409
  %v96 = vsel %vm95, %v94, %v86
  %v97 = vrot.slane %v88, 6
  %vm98 = vcmask 1042434
  %v99 = vsel %vm98, %v97, %v96
  %v100 = vrot.slane %v89, 5
  %vm101 = vcmask 1043459
  %v102 = vsel %vm101, %v100, %v99
  %v103 = vrot.slane %v90, 4
  %vm104 = vcmask 1044484
  %v105 = vsel %vm104, %v103, %v102
  %v106 = vrot.slane %v91, 3
  %vm107 = vcmask 1045509
  %v108 = vsel %vm107, %v106, %v105
  %v109 = vrot.slane %v92, 2
  %vm110 = vcmask 1046534
  %v111 = vsel %vm110, %v109, %v108
  %v112 = vrot.slane %v93, 1
  %vm113 = vcmask 1047559
  %v114 = vsel %vm113, %v112, %v111
  %v115 = vpack.c.b16 %v114, %v114
  %v120 = vunpack.c.l.b16 %v74
  %v121 = vunpack.c.h.b16 %v74
  %v122 = vunpack.c.l.b16 %v75
  %v123 = vunpack.c.h.b16 %v75
  %v124 = vunpack.c.l.b16 %v76
  %v125 = vunpack.c.h.b16 %v76
  %v126 = vunpack.c.l.b16 %v77
  %v127 = vunpack.c.h.b16 %v77
  %v128 = vpack.c.b16 %v122, %v120
  %v129 = vpack.c.b16 %v123, %v121
  %v130 = vpack.c.b16 %v126, %v124
  %v131 = vpack.c.b16 %v127, %v125
  %vm134 = vcmask 228352
  %v136 = vsel %vm134, %v115, 0
  %vm138 = vcmask 1045504
  %v140 = vsel %vm138, %v130, 0
  %v143 = vsel %vm138, %v131, 0
  %145 = vmatprep.subr.bf16.mxu0 %v129
  %146 = vmatpush1.bf16.msra.mxu0 %v128
  %147 = vmatprep.subr.bf16.mxu0 %v143
  %148 = vmatpush1.bf16.msra.mxu0 %v140
  %149 = vmatprep.subr.bf16.mxu0 0
  %150 = vmatpush1.bf16.msra.mxu0 0
  %151 = vmatprep.subr.bf16.mxu0 0
  %152 = vmatpush1.bf16.msra.mxu0 0
  %153 = vmatprep.subr.bf16.mxu0 0
  %154 = vmatpush1.bf16.msra.mxu0 0
  %155 = vmatprep.subr.bf16.mxu0 0
  %156 = vmatpush1.bf16.msra.mxu0 0
  %157 = vmatprep.subr.bf16.mxu0 0
  %158 = vmatpush1.bf16.msra.mxu0 0
  %159 = vmatprep.subr.bf16.mxu0 0
  %160 = vmatpush1.bf16.msra.mxu0 0
  %161 = vmatprep.subr.bf16.mxu0 0
  %162 = vmatpush1.bf16.msra.mxu0 0
  %163 = vmatprep.subr.bf16.mxu0 0
  %164 = vmatpush1.bf16.msra.mxu0 0
  %165 = vmatprep.subr.bf16.mxu0 0
  %166 = vmatpush1.bf16.msra.mxu0 0
  %167 = vmatprep.subr.bf16.mxu0 0
  %168 = vmatpush1.bf16.msra.mxu0 0
  %169 = vmatprep.subr.bf16.mxu0 0
  %170 = vmatpush1.bf16.msra.mxu0 0
  %171 = vmatprep.subr.bf16.mxu0 0
  %172 = vmatpush1.bf16.msra.mxu0 0
  %173 = vmatprep.subr.bf16.mxu0 0
  %174 = vmatpush1.bf16.msra.mxu0 0
  %175 = vmatprep.subr.bf16.mxu0 0
  %176 = vmatpush1.bf16.msra.mxu0 0
  %177 = vmatprep.mubr.bf16.mxu0 0
  %178 = vmatmul.mubr.bf16.gmra.mrb[0].mxu0 %v136
  %v179 = vpop.f32.mrb[0].mxu0
  %v180 = vadd.f32 0.0, %v179
  %v181 = vpop.f32.mrb[0].mxu0
  %v182 = vadd.f32 0.0, %v181
  %v183 = vpop.f32.mrb[0].mxu0
  %v184 = vpop.f32.mrb[0].mxu0
  %185 = vdwg.mxu0
  %v194 = vunpack.c.l.b16 %v45
  %v195 = vunpack.c.l.b16 %v46
  %v196 = vunpack.c.l.b16 %v47
  %v197 = vunpack.c.l.b16 %v48
  %v198 = vunpack.c.l.b16 %v49
  %v199 = vunpack.c.l.b16 %v50
  %v200 = vunpack.c.l.b16 %v51
  %v201 = vunpack.c.l.b16 %v52
  %v202 = vrot.slane %v195, 7
  %v203 = vsel %vm95, %v202, %v194
  %v204 = vrot.slane %v196, 6
  %v205 = vsel %vm98, %v204, %v203
  %v206 = vrot.slane %v197, 5
  %v207 = vsel %vm101, %v206, %v205
  %v208 = vrot.slane %v198, 4
  %v209 = vsel %vm104, %v208, %v207
  %v210 = vrot.slane %v199, 3
  %v211 = vsel %vm107, %v210, %v209
  %v212 = vrot.slane %v200, 2
  %v213 = vsel %vm110, %v212, %v211
  %v214 = vrot.slane %v201, 1
  %v215 = vsel %vm113, %v214, %v213
  %v216 = vpack.c.b16 %v215, %v215
  %v221 = vunpack.c.l.b16 %v53
  %v222 = vunpack.c.h.b16 %v53
  %v223 = vunpack.c.l.b16 %v54
  %v224 = vunpack.c.h.b16 %v54
  %v225 = vunpack.c.l.b16 %v55
  %v226 = vunpack.c.h.b16 %v55
  %v227 = vunpack.c.l.b16 %v56
  %v228 = vunpack.c.h.b16 %v56
  %v229 = vpack.c.b16 %v223, %v221
  %v230 = vpack.c.b16 %v224, %v222
  %v231 = vpack.c.b16 %v227, %v225
  %v232 = vpack.c.b16 %v228, %v226
  %v236 = vsel %vm134, %v216, 0
  %v239 = vsel %vm138, %v231, 0
  %v242 = vsel %vm138, %v232, 0
  %244 = vmatprep.subr.bf16.mxu0 %v230
  %245 = vmatpush1.bf16.msra.mxu0 %v229
  %246 = vmatprep.subr.bf16.mxu0 %v242
  %247 = vmatpush1.bf16.msra.mxu0 %v239
  %248 = vmatprep.subr.bf16.mxu0 0
  %249 = vmatpush1.bf16.msra.mxu0 0
  %250 = vmatprep.subr.bf16.mxu0 0
  %251 = vmatpush1.bf16.msra.mxu0 0
  %252 = vmatprep.subr.bf16.mxu0 0
  %253 = vmatpush1.bf16.msra.mxu0 0
  %254 = vmatprep.subr.bf16.mxu0 0
  %255 = vmatpush1.bf16.msra.mxu0 0
  %256 = vmatprep.subr.bf16.mxu0 0
  %257 = vmatpush1.bf16.msra.mxu0 0
  %258 = vmatprep.subr.bf16.mxu0 0
  %259 = vmatpush1.bf16.msra.mxu0 0
  %260 = vmatprep.subr.bf16.mxu0 0
  %261 = vmatpush1.bf16.msra.mxu0 0
  %262 = vmatprep.subr.bf16.mxu0 0
  %263 = vmatpush1.bf16.msra.mxu0 0
  %264 = vmatprep.subr.bf16.mxu0 0
  %265 = vmatpush1.bf16.msra.mxu0 0
  %266 = vmatprep.subr.bf16.mxu0 0
  %267 = vmatpush1.bf16.msra.mxu0 0
  %268 = vmatprep.subr.bf16.mxu0 0
  %269 = vmatpush1.bf16.msra.mxu0 0
  %270 = vmatprep.subr.bf16.mxu0 0
  %271 = vmatpush1.bf16.msra.mxu0 0
  %272 = vmatprep.subr.bf16.mxu0 0
  %273 = vmatpush1.bf16.msra.mxu0 0
  %274 = vmatprep.subr.bf16.mxu0 0
  %275 = vmatpush1.bf16.msra.mxu0 0
  %276 = vmatprep.mubr.bf16.mxu0 0
  %277 = vmatmul.mubr.bf16.gmra.mrb[0].mxu0 %v236
  %v278 = vpop.f32.mrb[0].mxu0
  %v279 = vadd.f32 %v180, %v278
  %v280 = vpop.f32.mrb[0].mxu0
  %v281 = vadd.f32 %v182, %v280
  %v282 = vpop.f32.mrb[0].mxu0
  %v283 = vpop.f32.mrb[0].mxu0
  %284 = vdwg.mxu0
  %v285 = vld [vmem:[%s0 + $0x2] sm:$0x1]
  %v286 = vld [vmem:[%s0 + $0x22] sm:$0x1]
  %v287 = vld [vmem:[%s0 + $0x42] sm:$0x1]
  %v288 = vld [vmem:[%s0 + $0x62] sm:$0x1]
  %v289 = vld [vmem:[%s0 + $0x82] sm:$0x1]
  %v290 = vld [vmem:[%s0 + $0xa2] sm:$0x1]
  %v291 = vld [vmem:[%s0 + $0xc2] sm:$0x1]
  %v292 = vld [vmem:[%s0 + $0xe2] sm:$0x1]
  %v293 = vpack.c.bf16 %v285, %v285
  %v294 = vpack.c.bf16 %v286, %v286
  %v295 = vpack.c.bf16 %v287, %v287
  %v296 = vpack.c.bf16 %v288, %v288
  %v297 = vpack.c.bf16 %v289, %v289
  %v298 = vpack.c.bf16 %v290, %v290
  %v299 = vpack.c.bf16 %v291, %v291
  %v300 = vpack.c.bf16 %v292, %v292
  %s301 = scalar_lea.vmem %s1, 64
  %v302 = vld [vmem:[%s301] sm:$0xff]
  %v303 = vld [vmem:[%s301 + $0x8] sm:$0xff]
  %v304 = vld [vmem:[%s301 + $0x10] sm:$0xff]
  %v305 = vld [vmem:[%s301 + $0x18] sm:$0x33]
  %v314 = vunpack.c.l.b16 %v293
  %v315 = vunpack.c.l.b16 %v294
  %v316 = vunpack.c.l.b16 %v295
  %v317 = vunpack.c.l.b16 %v296
  %v318 = vunpack.c.l.b16 %v297
  %v319 = vunpack.c.l.b16 %v298
  %v320 = vunpack.c.l.b16 %v299
  %v321 = vunpack.c.l.b16 %v300
  %v322 = vrot.slane %v315, 7
  %v323 = vsel %vm95, %v322, %v314
  %v324 = vrot.slane %v316, 6
  %v325 = vsel %vm98, %v324, %v323
  %v326 = vrot.slane %v317, 5
  %v327 = vsel %vm101, %v326, %v325
  %v328 = vrot.slane %v318, 4
  %v329 = vsel %vm104, %v328, %v327
  %v330 = vrot.slane %v319, 3
  %v331 = vsel %vm107, %v330, %v329
  %v332 = vrot.slane %v320, 2
  %v333 = vsel %vm110, %v332, %v331
  %v334 = vrot.slane %v321, 1
  %v335 = vsel %vm113, %v334, %v333
  %v336 = vpack.c.b16 %v335, %v335
  %v341 = vunpack.c.l.b16 %v302
  %v342 = vunpack.c.h.b16 %v302
  %v343 = vunpack.c.l.b16 %v303
  %v344 = vunpack.c.h.b16 %v303
  %v345 = vunpack.c.l.b16 %v304
  %v346 = vunpack.c.h.b16 %v304
  %v347 = vunpack.c.l.b16 %v305
  %v348 = vunpack.c.h.b16 %v305
  %v349 = vpack.c.b16 %v343, %v341
  %v350 = vpack.c.b16 %v344, %v342
  %v351 = vpack.c.b16 %v347, %v345
  %v352 = vpack.c.b16 %v348, %v346
  %v356 = vsel %vm134, %v336, 0
  %v359 = vsel %vm138, %v351, 0
  %v362 = vsel %vm138, %v352, 0
  %364 = vmatprep.subr.bf16.mxu0 %v350
  %365 = vmatpush1.bf16.msra.mxu0 %v349
  %366 = vmatprep.subr.bf16.mxu0 %v362
  %367 = vmatpush1.bf16.msra.mxu0 %v359
  %368 = vmatprep.subr.bf16.mxu0 0
  %369 = vmatpush1.bf16.msra.mxu0 0
  %370 = vmatprep.subr.bf16.mxu0 0
  %371 = vmatpush1.bf16.msra.mxu0 0
  %372 = vmatprep.subr.bf16.mxu0 0
  %373 = vmatpush1.bf16.msra.mxu0 0
  %374 = vmatprep.subr.bf16.mxu0 0
  %375 = vmatpush1.bf16.msra.mxu0 0
  %376 = vmatprep.subr.bf16.mxu0 0
  %377 = vmatpush1.bf16.msra.mxu0 0
  %378 = vmatprep.subr.bf16.mxu0 0
  %379 = vmatpush1.bf16.msra.mxu0 0
  %380 = vmatprep.subr.bf16.mxu0 0
  %381 = vmatpush1.bf16.msra.mxu0 0
  %382 = vmatprep.subr.bf16.mxu0 0
  %383 = vmatpush1.bf16.msra.mxu0 0
  %384 = vmatprep.subr.bf16.mxu0 0
  %385 = vmatpush1.bf16.msra.mxu0 0
  %386 = vmatprep.subr.bf16.mxu0 0
  %387 = vmatpush1.bf16.msra.mxu0 0
  %388 = vmatprep.subr.bf16.mxu0 0
  %389 = vmatpush1.bf16.msra.mxu0 0
  %390 = vmatprep.subr.bf16.mxu0 0
  %391 = vmatpush1.bf16.msra.mxu0 0
  %392 = vmatprep.subr.bf16.mxu0 0
  %393 = vmatpush1.bf16.msra.mxu0 0
  %394 = vmatprep.subr.bf16.mxu0 0
  %395 = vmatpush1.bf16.msra.mxu0 0
  %396 = vmatprep.mubr.bf16.mxu0 0
  %397 = vmatmul.mubr.bf16.gmra.mrb[0].mxu0 %v356
  %v398 = vpop.f32.mrb[0].mxu0
  %v399 = vadd.f32 0.0, %v398
  %v400 = vpop.f32.mrb[0].mxu0
  %v401 = vadd.f32 0.0, %v400
  %v402 = vpop.f32.mrb[0].mxu0
  %v403 = vpop.f32.mrb[0].mxu0
  %404 = vdwg.mxu0
  %v405 = vadd.f32 %v279, %v399
  %v406 = vadd.f32 %v281, %v401
  %v407 = vld [vmem:[%s0 + $0x3] sm:$0x1]
  %v408 = vld [vmem:[%s0 + $0x23] sm:$0x1]
  %v409 = vld [vmem:[%s0 + $0x43] sm:$0x1]
  %v410 = vld [vmem:[%s0 + $0x63] sm:$0x1]
  %v411 = vld [vmem:[%s0 + $0x83] sm:$0x1]
  %v412 = vld [vmem:[%s0 + $0xa3] sm:$0x1]
  %v413 = vld [vmem:[%s0 + $0xc3] sm:$0x1]
  %v414 = vld [vmem:[%s0 + $0xe3] sm:$0x1]
  %v415 = vpack.c.bf16 %v407, %v407
  %v416 = vpack.c.bf16 %v408, %v408
  %v417 = vpack.c.bf16 %v409, %v409
  %v418 = vpack.c.bf16 %v410, %v410
  %v419 = vpack.c.bf16 %v411, %v411
  %v420 = vpack.c.bf16 %v412, %v412
  %v421 = vpack.c.bf16 %v413, %v413
  %v422 = vpack.c.bf16 %v414, %v414
  %s423 = scalar_lea.vmem %s1, 96
  %v424 = vld [vmem:[%s423] sm:$0xff]
  %v425 = vld [vmem:[%s423 + $0x8] sm:$0xff]
  %v426 = vld [vmem:[%s423 + $0x10] sm:$0xff]
  %v427 = vld [vmem:[%s423 + $0x18] sm:$0x33]
  %v436 = vunpack.c.l.b16 %v415
  %v437 = vunpack.c.l.b16 %v416
  %v438 = vunpack.c.l.b16 %v417
  %v439 = vunpack.c.l.b16 %v418
  %v440 = vunpack.c.l.b16 %v419
  %v441 = vunpack.c.l.b16 %v420
  %v442 = vunpack.c.l.b16 %v421
  %v443 = vunpack.c.l.b16 %v422
  %v444 = vrot.slane %v437, 7
  %v445 = vsel %vm95, %v444, %v436
  %v446 = vrot.slane %v438, 6
  %v447 = vsel %vm98, %v446, %v445
  %v448 = vrot.slane %v439, 5
  %v449 = vsel %vm101, %v448, %v447
  %v450 = vrot.slane %v440, 4
  %v451 = vsel %vm104, %v450, %v449
  %v452 = vrot.slane %v441, 3
  %v453 = vsel %vm107, %v452, %v451
  %v454 = vrot.slane %v442, 2
  %v455 = vsel %vm110, %v454, %v453
  %v456 = vrot.slane %v443, 1
  %v457 = vsel %vm113, %v456, %v455
  %v458 = vpack.c.b16 %v457, %v457
  %v463 = vunpack.c.l.b16 %v424
  %v464 = vunpack.c.h.b16 %v424
  %v465 = vunpack.c.l.b16 %v425
  %v466 = vunpack.c.h.b16 %v425
  %v467 = vunpack.c.l.b16 %v426
  %v468 = vunpack.c.h.b16 %v426
  %v469 = vunpack.c.l.b16 %v427
  %v470 = vunpack.c.h.b16 %v427
  %v471 = vpack.c.b16 %v465, %v463
  %v472 = vpack.c.b16 %v466, %v464
  %v473 = vpack.c.b16 %v469, %v467
  %v474 = vpack.c.b16 %v470, %v468
  %v478 = vsel %vm134, %v458, 0
  %v481 = vsel %vm138, %v473, 0
  %v484 = vsel %vm138, %v474, 0
  %486 = vmatprep.subr.bf16.mxu0 %v472
  %487 = vmatpush1.bf16.msra.mxu0 %v471
  %488 = vmatprep.subr.bf16.mxu0 %v484
  %489 = vmatpush1.bf16.msra.mxu0 %v481
  %490 = vmatprep.subr.bf16.mxu0 0
  %491 = vmatpush1.bf16.msra.mxu0 0
  %492 = vmatprep.subr.bf16.mxu0 0
  %493 = vmatpush1.bf16.msra.mxu0 0
  %494 = vmatprep.subr.bf16.mxu0 0
  %495 = vmatpush1.bf16.msra.mxu0 0
  %496 = vmatprep.subr.bf16.mxu0 0
  %497 = vmatpush1.bf16.msra.mxu0 0
  %498 = vmatprep.subr.bf16.mxu0 0
  %499 = vmatpush1.bf16.msra.mxu0 0
  %500 = vmatprep.subr.bf16.mxu0 0
  %501 = vmatpush1.bf16.msra.mxu0 0
  %502 = vmatprep.subr.bf16.mxu0 0
  %503 = vmatpush1.bf16.msra.mxu0 0
  %504 = vmatprep.subr.bf16.mxu0 0
  %505 = vmatpush1.bf16.msra.mxu0 0
  %506 = vmatprep.subr.bf16.mxu0 0
  %507 = vmatpush1.bf16.msra.mxu0 0
  %508 = vmatprep.subr.bf16.mxu0 0
  %509 = vmatpush1.bf16.msra.mxu0 0
  %510 = vmatprep.subr.bf16.mxu0 0
  %511 = vmatpush1.bf16.msra.mxu0 0
  %512 = vmatprep.subr.bf16.mxu0 0
  %513 = vmatpush1.bf16.msra.mxu0 0
  %514 = vmatprep.subr.bf16.mxu0 0
  %515 = vmatpush1.bf16.msra.mxu0 0
  %516 = vmatprep.subr.bf16.mxu0 0
  %517 = vmatpush1.bf16.msra.mxu0 0
  %518 = vmatprep.mubr.bf16.mxu0 0
  %519 = vmatmul.mubr.bf16.gmra.mrb[0].mxu0 %v478
  %v520 = vpop.f32.mrb[0].mxu0
  %v521 = vadd.f32 0.0, %v520
  %v522 = vpop.f32.mrb[0].mxu0
  %v523 = vadd.f32 0.0, %v522
  %v524 = vpop.f32.mrb[0].mxu0
  %v525 = vpop.f32.mrb[0].mxu0
  %526 = vdwg.mxu0
  %v527 = vadd.f32 %v405, %v521
  %v528 = vadd.f32 %v406, %v523
  %v529 = vld [vmem:[%s0 + $0x4] sm:$0x1]
  %v530 = vld [vmem:[%s0 + $0x24] sm:$0x1]
  %v531 = vld [vmem:[%s0 + $0x44] sm:$0x1]
  %v532 = vld [vmem:[%s0 + $0x64] sm:$0x1]
  %v533 = vld [vmem:[%s0 + $0x84] sm:$0x1]
  %v534 = vld [vmem:[%s0 + $0xa4] sm:$0x1]
  %v535 = vld [vmem:[%s0 + $0xc4] sm:$0x1]
  %v536 = vld [vmem:[%s0 + $0xe4] sm:$0x1]
  %v537 = vpack.c.bf16 %v529, %v529
  %v538 = vpack.c.bf16 %v530, %v530
  %v539 = vpack.c.bf16 %v531, %v531
  %v540 = vpack.c.bf16 %v532, %v532
  %v541 = vpack.c.bf16 %v533, %v533
  %v542 = vpack.c.bf16 %v534, %v534
  %v543 = vpack.c.bf16 %v535, %v535
  %v544 = vpack.c.bf16 %v536, %v536
  %s545 = scalar_lea.vmem %s1, 128
  %v546 = vld [vmem:[%s545] sm:$0xff]
  %v547 = vld [vmem:[%s545 + $0x8] sm:$0xff]
  %v548 = vld [vmem:[%s545 + $0x10] sm:$0xff]
  %v549 = vld [vmem:[%s545 + $0x18] sm:$0x33]
  %v558 = vunpack.c.l.b16 %v537
  %v559 = vunpack.c.l.b16 %v538
  %v560 = vunpack.c.l.b16 %v539
  %v561 = vunpack.c.l.b16 %v540
  %v562 = vunpack.c.l.b16 %v541
  %v563 = vunpack.c.l.b16 %v542
  %v564 = vunpack.c.l.b16 %v543
  %v565 = vunpack.c.l.b16 %v544
  %v566 = vrot.slane %v559, 7
  %v567 = vsel %vm95, %v566, %v558
  %v568 = vrot.slane %v560, 6
  %v569 = vsel %vm98, %v568, %v567
  %v570 = vrot.slane %v561, 5
  %v571 = vsel %vm101, %v570, %v569
  %v572 = vrot.slane %v562, 4
  %v573 = vsel %vm104, %v572, %v571
  %v574 = vrot.slane %v563, 3
  %v575 = vsel %vm107, %v574, %v573
  %v576 = vrot.slane %v564, 2
  %v577 = vsel %vm110, %v576, %v575
  %v578 = vrot.slane %v565, 1
  %v579 = vsel %vm113, %v578, %v577
  %v580 = vpack.c.b16 %v579, %v579
  %v585 = vunpack.c.l.b16 %v546
  %v586 = vunpack.c.h.b16 %v546
  %v587 = vunpack.c.l.b16 %v547
  %v588 = vunpack.c.h.b16 %v547
  %v589 = vunpack.c.l.b16 %v548
  %v590 = vunpack.c.h.b16 %v548
  %v591 = vunpack.c.l.b16 %v549
  %v592 = vunpack.c.h.b16 %v549
  %v593 = vpack.c.b16 %v587, %v585
  %v594 = vpack.c.b16 %v588, %v586
  %v595 = vpack.c.b16 %v591, %v589
  %v596 = vpack.c.b16 %v592, %v590
  %v600 = vsel %vm134, %v580, 0
  %v603 = vsel %vm138, %v595, 0
  %v606 = vsel %vm138, %v596, 0
  %608 = vmatprep.subr.bf16.mxu0 %v594
  %609 = vmatpush1.bf16.msra.mxu0 %v593
  %610 = vmatprep.subr.bf16.mxu0 %v606
  %611 = vmatpush1.bf16.msra.mxu0 %v603
  %612 = vmatprep.subr.bf16.mxu0 0
  %613 = vmatpush1.bf16.msra.mxu0 0
  %614 = vmatprep.subr.bf16.mxu0 0
  %615 = vmatpush1.bf16.msra.mxu0 0
  %616 = vmatprep.subr.bf16.mxu0 0
  %617 = vmatpush1.bf16.msra.mxu0 0
  %618 = vmatprep.subr.bf16.mxu0 0
  %619 = vmatpush1.bf16.msra.mxu0 0
  %620 = vmatprep.subr.bf16.mxu0 0
  %621 = vmatpush1.bf16.msra.mxu0 0
  %622 = vmatprep.subr.bf16.mxu0 0
  %623 = vmatpush1.bf16.msra.mxu0 0
  %624 = vmatprep.subr.bf16.mxu0 0
  %625 = vmatpush1.bf16.msra.mxu0 0
  %626 = vmatprep.subr.bf16.mxu0 0
  %627 = vmatpush1.bf16.msra.mxu0 0
  %628 = vmatprep.subr.bf16.mxu0 0
  %629 = vmatpush1.bf16.msra.mxu0 0
  %630 = vmatprep.subr.bf16.mxu0 0
  %631 = vmatpush1.bf16.msra.mxu0 0
  %632 = vmatprep.subr.bf16.mxu0 0
  %633 = vmatpush1.bf16.msra.mxu0 0
  %634 = vmatprep.subr.bf16.mxu0 0
  %635 = vmatpush1.bf16.msra.mxu0 0
  %636 = vmatprep.subr.bf16.mxu0 0
  %637 = vmatpush1.bf16.msra.mxu0 0
  %638 = vmatprep.subr.bf16.mxu0 0
  %639 = vmatpush1.bf16.msra.mxu0 0
  %640 = vmatprep.mubr.bf16.mxu0 0
  %641 = vmatmul.mubr.bf16.gmra.mrb[0].mxu0 %v600
  %v642 = vpop.f32.mrb[0].mxu0
  %v643 = vadd.f32 0.0, %v642
  %v644 = vpop.f32.mrb[0].mxu0
  %v645 = vadd.f32 0.0, %v644
  %v646 = vpop.f32.mrb[0].mxu0
  %v647 = vpop.f32.mrb[0].mxu0
  %648 = vdwg.mxu0
  %v649 = vadd.f32 %v527, %v643
  %v650 = vadd.f32 %v528, %v645
  %v652 = vlaneseq
  %v653 = vshrl.u32 %v652, 7
  %v654 = vsub.s32 0, %v653
  %v655 = vrot.slane %v33, %v654
  %v656 = vlaneseq
  %v657 = vshrl.u32 %v656, 7
  %v658 = vsub.s32 1, %v657
  %v659 = vrot.slane %v33, %v658
  %v662 = vadd.f32 %v649, %v655
  %v663 = vadd.f32 %v650, %v659
  %v664 = vmax.f32 %v662, 0.0
  %v665 = vmax.f32 %v663, 0.0
  %666 = vmatprep.subr.bf16.mxu0 %v129
  %667 = vmatpush1.bf16.msra.mxu0 %v128
  %668 = vmatprep.subr.bf16.mxu0 %v143
  %669 = vmatpush1.bf16.msra.mxu0 %v140
  %670 = vmatprep.subr.bf16.mxu0 0
  %671 = vmatpush1.bf16.msra.mxu0 0
  %672 = vmatprep.subr.bf16.mxu0 0
  %673 = vmatpush1.bf16.msra.mxu0 0
  %674 = vmatprep.subr.bf16.mxu0 0
  %675 = vmatpush1.bf16.msra.mxu0 0
  %676 = vmatprep.subr.bf16.mxu0 0
  %677 = vmatpush1.bf16.msra.mxu0 0
  %678 = vmatprep.subr.bf16.mxu0 0
  %679 = vmatpush1.bf16.msra.mxu0 0
  %680 = vmatprep.subr.bf16.mxu0 0
  %681 = vmatpush1.bf16.msra.mxu0 0
  %682 = vmatprep.subr.bf16.mxu0 0
  %683 = vmatpush1.bf16.msra.mxu0 0
  %684 = vmatprep.subr.bf16.mxu0 0
  %685 = vmatpush1.bf16.msra.mxu0 0
  %686 = vmatprep.subr.bf16.mxu0 0
  %687 = vmatpush1.bf16.msra.mxu0 0
  %688 = vmatprep.subr.bf16.mxu0 0
  %689 = vmatpush1.bf16.msra.mxu0 0
  %690 = vmatprep.subr.bf16.mxu0 0
  %691 = vmatpush1.bf16.msra.mxu0 0
  %692 = vmatprep.subr.bf16.mxu0 0
  %693 = vmatpush1.bf16.msra.mxu0 0
  %694 = vmatprep.subr.bf16.mxu0 0
  %695 = vmatpush1.bf16.msra.mxu0 0
  %696 = vmatprep.subr.bf16.mxu0 0
  %697 = vmatpush1.bf16.msra.mxu0 0
  %698 = vmatprep.mubr.bf16.mxu0 0
  %699 = vmatmul.mubr.bf16.gmra.mrb[0].mxu0 %v478
  %v700 = vpop.f32.mrb[0].mxu0
  %v701 = vadd.f32 0.0, %v700
  %v702 = vpop.f32.mrb[0].mxu0
  %v703 = vadd.f32 0.0, %v702
  %v704 = vpop.f32.mrb[0].mxu0
  %v705 = vpop.f32.mrb[0].mxu0
  %706 = vdwg.mxu0
  %707 = vmatprep.subr.bf16.mxu0 %v230
  %708 = vmatpush1.bf16.msra.mxu0 %v229
  %709 = vmatprep.subr.bf16.mxu0 %v242
  %710 = vmatpush1.bf16.msra.mxu0 %v239
  %711 = vmatprep.subr.bf16.mxu0 0
  %712 = vmatpush1.bf16.msra.mxu0 0
  %713 = vmatprep.subr.bf16.mxu0 0
  %714 = vmatpush1.bf16.msra.mxu0 0
  %715 = vmatprep.subr.bf16.mxu0 0
  %716 = vmatpush1.bf16.msra.mxu0 0
  %717 = vmatprep.subr.bf16.mxu0 0
  %718 = vmatpush1.bf16.msra.mxu0 0
  %719 = vmatprep.subr.bf16.mxu0 0
  %720 = vmatpush1.bf16.msra.mxu0 0
  %721 = vmatprep.subr.bf16.mxu0 0
  %722 = vmatpush1.bf16.msra.mxu0 0
  %723 = vmatprep.subr.bf16.mxu0 0
  %724 = vmatpush1.bf16.msra.mxu0 0
  %725 = vmatprep.subr.bf16.mxu0 0
  %726 = vmatpush1.bf16.msra.mxu0 0
  %727 = vmatprep.subr.bf16.mxu0 0
  %728 = vmatpush1.bf16.msra.mxu0 0
  %729 = vmatprep.subr.bf16.mxu0 0
  %730 = vmatpush1.bf16.msra.mxu0 0
  %731 = vmatprep.subr.bf16.mxu0 0
  %732 = vmatpush1.bf16.msra.mxu0 0
  %733 = vmatprep.subr.bf16.mxu0 0
  %734 = vmatpush1.bf16.msra.mxu0 0
  %735 = vmatprep.subr.bf16.mxu0 0
  %736 = vmatpush1.bf16.msra.mxu0 0
  %737 = vmatprep.subr.bf16.mxu0 0
  %738 = vmatpush1.bf16.msra.mxu0 0
  %739 = vmatprep.mubr.bf16.mxu0 0
  %740 = vmatmul.mubr.bf16.gmra.mrb[0].mxu0 %v356
  %v741 = vpop.f32.mrb[0].mxu0
  %v742 = vadd.f32 %v701, %v741
  %v743 = vpop.f32.mrb[0].mxu0
  %v744 = vadd.f32 %v703, %v743
  %v745 = vpop.f32.mrb[0].mxu0
  %v746 = vpop.f32.mrb[0].mxu0
  %747 = vdwg.mxu0
  %748 = vmatprep.subr.bf16.mxu0 %v350
  %749 = vmatpush1.bf16.msra.mxu0 %v349
  %750 = vmatprep.subr.bf16.mxu0 %v362
  %751 = vmatpush1.bf16.msra.mxu0 %v359
  %752 = vmatprep.subr.bf16.mxu0 0
  %753 = vmatpush1.bf16.msra.mxu0 0
  %754 = vmatprep.subr.bf16.mxu0 0
  %755 = vmatpush1.bf16.msra.mxu0 0
  %756 = vmatprep.subr.bf16.mxu0 0
  %757 = vmatpush1.bf16.msra.mxu0 0
  %758 = vmatprep.subr.bf16.mxu0 0
  %759 = vmatpush1.bf16.msra.mxu0 0
  %760 = vmatprep.subr.bf16.mxu0 0
  %761 = vmatpush1.bf16.msra.mxu0 0
  %762 = vmatprep.subr.bf16.mxu0 0
  %763 = vmatpush1.bf16.msra.mxu0 0
  %764 = vmatprep.subr.bf16.mxu0 0
  %765 = vmatpush1.bf16.msra.mxu0 0
  %766 = vmatprep.subr.bf16.mxu0 0
  %767 = vmatpush1.bf16.msra.mxu0 0
  %768 = vmatprep.subr.bf16.mxu0 0
  %769 = vmatpush1.bf16.msra.mxu0 0
  %770 = vmatprep.subr.bf16.mxu0 0
  %771 = vmatpush1.bf16.msra.mxu0 0
  %772 = vmatprep.subr.bf16.mxu0 0
  %773 = vmatpush1.bf16.msra.mxu0 0
  %774 = vmatprep.subr.bf16.mxu0 0
  %775 = vmatpush1.bf16.msra.mxu0 0
  %776 = vmatprep.subr.bf16.mxu0 0
  %777 = vmatpush1.bf16.msra.mxu0 0
  %778 = vmatprep.subr.bf16.mxu0 0
  %779 = vmatpush1.bf16.msra.mxu0 0
  %780 = vmatprep.mubr.bf16.mxu0 0
  %781 = vmatmul.mubr.bf16.gmra.mrb[0].mxu0 %v600
  %v782 = vpop.f32.mrb[0].mxu0
  %v783 = vadd.f32 0.0, %v782
  %v784 = vpop.f32.mrb[0].mxu0
  %v785 = vadd.f32 0.0, %v784
  %v786 = vpop.f32.mrb[0].mxu0
  %v787 = vpop.f32.mrb[0].mxu0
  %788 = vdwg.mxu0
  %v789 = vadd.f32 %v742, %v783
  %v790 = vadd.f32 %v744, %v785
  %v791 = vld [vmem:[%s0 + $0x5] sm:$0x1]
  %v792 = vld [vmem:[%s0 + $0x25] sm:$0x1]
  %v793 = vld [vmem:[%s0 + $0x45] sm:$0x1]
  %v794 = vld [vmem:[%s0 + $0x65] sm:$0x1]
  %v795 = vld [vmem:[%s0 + $0x85] sm:$0x1]
  %v796 = vld [vmem:[%s0 + $0xa5] sm:$0x1]
  %v797 = vld [vmem:[%s0 + $0xc5] sm:$0x1]
  %v798 = vld [vmem:[%s0 + $0xe5] sm:$0x1]
  %v799 = vpack.c.bf16 %v791, %v791
  %v800 = vpack.c.bf16 %v792, %v792
  %v801 = vpack.c.bf16 %v793, %v793
  %v802 = vpack.c.bf16 %v794, %v794
  %v803 = vpack.c.bf16 %v795, %v795
  %v804 = vpack.c.bf16 %v796, %v796
  %v805 = vpack.c.bf16 %v797, %v797
  %v806 = vpack.c.bf16 %v798, %v798
  %v815 = vunpack.c.l.b16 %v799
  %v816 = vunpack.c.l.b16 %v800
  %v817 = vunpack.c.l.b16 %v801
  %v818 = vunpack.c.l.b16 %v802
  %v819 = vunpack.c.l.b16 %v803
  %v820 = vunpack.c.l.b16 %v804
  %v821 = vunpack.c.l.b16 %v805
  %v822 = vunpack.c.l.b16 %v806
  %v823 = vrot.slane %v816, 7
  %v824 = vsel %vm95, %v823, %v815
  %v825 = vrot.slane %v817, 6
  %v826 = vsel %vm98, %v825, %v824
  %v827 = vrot.slane %v818, 5
  %v828 = vsel %vm101, %v827, %v826
  %v829 = vrot.slane %v819, 4
  %v830 = vsel %vm104, %v829, %v828
  %v831 = vrot.slane %v820, 3
  %v832 = vsel %vm107, %v831, %v830
  %v833 = vrot.slane %v821, 2
  %v834 = vsel %vm110, %v833, %v832
  %v835 = vrot.slane %v822, 1
  %v836 = vsel %vm113, %v835, %v834
  %v837 = vpack.c.b16 %v836, %v836
  %v839 = vsel %vm134, %v837, 0
  %841 = vmatprep.subr.bf16.mxu0 %v472
  %842 = vmatpush1.bf16.msra.mxu0 %v471
  %843 = vmatprep.subr.bf16.mxu0 %v484
  %844 = vmatpush1.bf16.msra.mxu0 %v481
  %845 = vmatprep.subr.bf16.mxu0 0
  %846 = vmatpush1.bf16.msra.mxu0 0
  %847 = vmatprep.subr.bf16.mxu0 0
  %848 = vmatpush1.bf16.msra.mxu0 0
  %849 = vmatprep.subr.bf16.mxu0 0
  %850 = vmatpush1.bf16.msra.mxu0 0
  %851 = vmatprep.subr.bf16.mxu0 0
  %852 = vmatpush1.bf16.msra.mxu0 0
  %853 = vmatprep.subr.bf16.mxu0 0
  %854 = vmatpush1.bf16.msra.mxu0 0
  %855 = vmatprep.subr.bf16.mxu0 0
  %856 = vmatpush1.bf16.msra.mxu0 0
  %857 = vmatprep.subr.bf16.mxu0 0
  %858 = vmatpush1.bf16.msra.mxu0 0
  %859 = vmatprep.subr.bf16.mxu0 0
  %860 = vmatpush1.bf16.msra.mxu0 0
  %861 = vmatprep.subr.bf16.mxu0 0
  %862 = vmatpush1.bf16.msra.mxu0 0
  %863 = vmatprep.subr.bf16.mxu0 0
  %864 = vmatpush1.bf16.msra.mxu0 0
  %865 = vmatprep.subr.bf16.mxu0 0
  %866 = vmatpush1.bf16.msra.mxu0 0
  %867 = vmatprep.subr.bf16.mxu0 0
  %868 = vmatpush1.bf16.msra.mxu0 0
  %869 = vmatprep.subr.bf16.mxu0 0
  %870 = vmatpush1.bf16.msra.mxu0 0
  %871 = vmatprep.subr.bf16.mxu0 0
  %872 = vmatpush1.bf16.msra.mxu0 0
  %873 = vmatprep.mubr.bf16.mxu0 0
  %874 = vmatmul.mubr.bf16.gmra.mrb[0].mxu0 %v839
  %v875 = vpop.f32.mrb[0].mxu0
  %v876 = vadd.f32 0.0, %v875
  %v877 = vpop.f32.mrb[0].mxu0
  %v878 = vadd.f32 0.0, %v877
  %v879 = vpop.f32.mrb[0].mxu0
  %v880 = vpop.f32.mrb[0].mxu0
  %881 = vdwg.mxu0
  %v882 = vadd.f32 %v789, %v876
  %v883 = vadd.f32 %v790, %v878
  %v884 = vld [vmem:[%s0 + $0x6] sm:$0x1]
  %v885 = vld [vmem:[%s0 + $0x26] sm:$0x1]
  %v886 = vld [vmem:[%s0 + $0x46] sm:$0x1]
  %v887 = vld [vmem:[%s0 + $0x66] sm:$0x1]
  %v888 = vld [vmem:[%s0 + $0x86] sm:$0x1]
  %v889 = vld [vmem:[%s0 + $0xa6] sm:$0x1]
  %v890 = vld [vmem:[%s0 + $0xc6] sm:$0x1]
  %v891 = vld [vmem:[%s0 + $0xe6] sm:$0x1]
  %v892 = vpack.c.bf16 %v884, %v884
  %v893 = vpack.c.bf16 %v885, %v885
  %v894 = vpack.c.bf16 %v886, %v886
  %v895 = vpack.c.bf16 %v887, %v887
  %v896 = vpack.c.bf16 %v888, %v888
  %v897 = vpack.c.bf16 %v889, %v889
  %v898 = vpack.c.bf16 %v890, %v890
  %v899 = vpack.c.bf16 %v891, %v891
  %v908 = vunpack.c.l.b16 %v892
  %v909 = vunpack.c.l.b16 %v893
  %v910 = vunpack.c.l.b16 %v894
  %v911 = vunpack.c.l.b16 %v895
  %v912 = vunpack.c.l.b16 %v896
  %v913 = vunpack.c.l.b16 %v897
  %v914 = vunpack.c.l.b16 %v898
  %v915 = vunpack.c.l.b16 %v899
  %v916 = vrot.slane %v909, 7
  %v917 = vsel %vm95, %v916, %v908
  %v918 = vrot.slane %v910, 6
  %v919 = vsel %vm98, %v918, %v917
  %v920 = vrot.slane %v911, 5
  %v921 = vsel %vm101, %v920, %v919
  %v922 = vrot.slane %v912, 4
  %v923 = vsel %vm104, %v922, %v921
  %v924 = vrot.slane %v913, 3
  %v925 = vsel %vm107, %v924, %v923
  %v926 = vrot.slane %v914, 2
  %v927 = vsel %vm110, %v926, %v925
  %v928 = vrot.slane %v915, 1
  %v929 = vsel %vm113, %v928, %v927
  %v930 = vpack.c.b16 %v929, %v929
  %v932 = vsel %vm134, %v930, 0
  %934 = vmatprep.subr.bf16.mxu0 %v594
  %935 = vmatpush1.bf16.msra.mxu0 %v593
  %936 = vmatprep.subr.bf16.mxu0 %v606
  %937 = vmatpush1.bf16.msra.mxu0 %v603
  %938 = vmatprep.subr.bf16.mxu0 0
  %939 = vmatpush1.bf16.msra.mxu0 0
  %940 = vmatprep.subr.bf16.mxu0 0
  %941 = vmatpush1.bf16.msra.mxu0 0
  %942 = vmatprep.subr.bf16.mxu0 0
  %943 = vmatpush1.bf16.msra.mxu0 0
  %944 = vmatprep.subr.bf16.mxu0 0
  %945 = vmatpush1.bf16.msra.mxu0 0
  %946 = vmatprep.subr.bf16.mxu0 0
  %947 = vmatpush1.bf16.msra.mxu0 0
  %948 = vmatprep.subr.bf16.mxu0 0
  %949 = vmatpush1.bf16.msra.mxu0 0
  %950 = vmatprep.subr.bf16.mxu0 0
  %951 = vmatpush1.bf16.msra.mxu0 0
  %952 = vmatprep.subr.bf16.mxu0 0
  %953 = vmatpush1.bf16.msra.mxu0 0
  %954 = vmatprep.subr.bf16.mxu0 0
  %955 = vmatpush1.bf16.msra.mxu0 0
  %956 = vmatprep.subr.bf16.mxu0 0
  %957 = vmatpush1.bf16.msra.mxu0 0
  %958 = vmatprep.subr.bf16.mxu0 0
  %959 = vmatpush1.bf16.msra.mxu0 0
  %960 = vmatprep.subr.bf16.mxu0 0
  %961 = vmatpush1.bf16.msra.mxu0 0
  %962 = vmatprep.subr.bf16.mxu0 0
  %963 = vmatpush1.bf16.msra.mxu0 0
  %964 = vmatprep.subr.bf16.mxu0 0
  %965 = vmatpush1.bf16.msra.mxu0 0
  %966 = vmatprep.mubr.bf16.mxu0 0
  %967 = vmatmul.mubr.bf16.gmra.mrb[0].mxu0 %v932
  %v968 = vpop.f32.mrb[0].mxu0
  %v969 = vadd.f32 0.0, %v968
  %v970 = vpop.f32.mrb[0].mxu0
  %v971 = vadd.f32 0.0, %v970
  %v972 = vpop.f32.mrb[0].mxu0
  %v973 = vpop.f32.mrb[0].mxu0
  %974 = vdwg.mxu0
  %v975 = vadd.f32 %v882, %v969
  %v976 = vadd.f32 %v883, %v971
  %v977 = vadd.f32 %v975, %v655
  %v978 = vadd.f32 %v976, %v659
  %v979 = vmax.f32 %v977, 0.0
  %v980 = vmax.f32 %v978, 0.0
  %v981 = vmax.f32 %v664, %v979
  %v982 = vmax.f32 %v665, %v980
  %984 = vrot.lane.b32.xlu0 %v981, 112
  %v985 = vpop.permute.xlu0 %984
  %v987 = vmax.f32 %v981, %v985
  %989 = vrot.lane.b32.xlu0 %v982, 112
  %v990 = vpop.permute.xlu0 %989
  %v992 = vmax.f32 %v982, %v990
  %994 = vrot.lane.b32.xlu0 %v987, 112
  %v995 = vpop.permute.xlu0 %994
  %997 = vrot.lane.b32.xlu0 %v987, 96
  %v998 = vpop.permute.xlu0 %997
  %1000 = vrot.lane.b32.xlu0 %v987, 80
  %v1001 = vpop.permute.xlu0 %1000
  %1004 = vrot.lane.b32.xlu0 %v992, 64
  %v1005 = vpop.permute.xlu0 %1004
  %1007 = vrot.lane.b32.xlu0 %v992, 48
  %v1008 = vpop.permute.xlu0 %1007
  %vm1010 = vcmask 130048
  %v1011 = vsel %vm1010, %v987, %v995
  %vm1012 = vcmask 261120
  %v1013 = vsel %vm1012, %v1011, %v998
  %vm1014 = vcmask 392192
  %v1015 = vsel %vm1014, %v1013, %v1001
  %vm1016 = vcmask 523264
  %v1017 = vsel %vm1016, %v1015, %v1005
  %vm1018 = vcmask 654336
  %v1019 = vsel %vm1018, %v1017, %v1008
  %1020 = vmatprep.subr.bf16.mxu0 %v129
  %1021 = vmatpush1.bf16.msra.mxu0 %v128
  %1022 = vmatprep.subr.bf16.mxu0 %v143
  %1023 = vmatpush1.bf16.msra.mxu0 %v140
  %1024 = vmatprep.subr.bf16.mxu0 0
  %1025 = vmatpush1.bf16.msra.mxu0 0
  %1026 = vmatprep.subr.bf16.mxu0 0
  %1027 = vmatpush1.bf16.msra.mxu0 0
  %1028 = vmatprep.subr.bf16.mxu0 0
  %1029 = vmatpush1.bf16.msra.mxu0 0
  %1030 = vmatprep.subr.bf16.mxu0 0
  %1031 = vmatpush1.bf16.msra.mxu0 0
  %1032 = vmatprep.subr.bf16.mxu0 0
  %1033 = vmatpush1.bf16.msra.mxu0 0
  %1034 = vmatprep.subr.bf16.mxu0 0
  %1035 = vmatpush1.bf16.msra.mxu0 0
  %1036 = vmatprep.subr.bf16.mxu0 0
  %1037 = vmatpush1.bf16.msra.mxu0 0
  %1038 = vmatprep.subr.bf16.mxu0 0
  %1039 = vmatpush1.bf16.msra.mxu0 0
  %1040 = vmatprep.subr.bf16.mxu0 0
  %1041 = vmatpush1.bf16.msra.mxu0 0
  %1042 = vmatprep.subr.bf16.mxu0 0
  %1043 = vmatpush1.bf16.msra.mxu0 0
  %1044 = vmatprep.subr.bf16.mxu0 0
  %1045 = vmatpush1.bf16.msra.mxu0 0
  %1046 = vmatprep.subr.bf16.mxu0 0
  %1047 = vmatpush1.bf16.msra.mxu0 0
  %1048 = vmatprep.subr.bf16.mxu0 0
  %1049 = vmatpush1.bf16.msra.mxu0 0
  %1050 = vmatprep.subr.bf16.mxu0 0
  %1051 = vmatpush1.bf16.msra.mxu0 0
  %1052 = vmatprep.mubr.bf16.mxu0 0
  %1053 = vmatmul.mubr.bf16.gmra.mrb[0].mxu0 %v839
  %v1054 = vpop.f32.mrb[0].mxu0
  %v1055 = vadd.f32 0.0, %v1054
  %v1056 = vpop.f32.mrb[0].mxu0
  %v1057 = vadd.f32 0.0, %v1056
  %v1058 = vpop.f32.mrb[0].mxu0
  %v1059 = vpop.f32.mrb[0].mxu0
  %1060 = vdwg.mxu0
  %1061 = vmatprep.subr.bf16.mxu0 %v230
  %1062 = vmatpush1.bf16.msra.mxu0 %v229
  %1063 = vmatprep.subr.bf16.mxu0 %v242
  %1064 = vmatpush1.bf16.msra.mxu0 %v239
  %1065 = vmatprep.subr.bf16.mxu0 0
  %1066 = vmatpush1.bf16.msra.mxu0 0
  %1067 = vmatprep.subr.bf16.mxu0 0
  %1068 = vmatpush1.bf16.msra.mxu0 0
  %1069 = vmatprep.subr.bf16.mxu0 0
  %1070 = vmatpush1.bf16.msra.mxu0 0
  %1071 = vmatprep.subr.bf16.mxu0 0
  %1072 = vmatpush1.bf16.msra.mxu0 0
  %1073 = vmatprep.subr.bf16.mxu0 0
  %1074 = vmatpush1.bf16.msra.mxu0 0
  %1075 = vmatprep.subr.bf16.mxu0 0
  %1076 = vmatpush1.bf16.msra.mxu0 0
  %1077 = vmatprep.subr.bf16.mxu0 0
  %1078 = vmatpush1.bf16.msra.mxu0 0
  %1079 = vmatprep.subr.bf16.mxu0 0
  %1080 = vmatpush1.bf16.msra.mxu0 0
  %1081 = vmatprep.subr.bf16.mxu0 0
  %1082 = vmatpush1.bf16.msra.mxu0 0
  %1083 = vmatprep.subr.bf16.mxu0 0
  %1084 = vmatpush1.bf16.msra.mxu0 0
  %1085 = vmatprep.subr.bf16.mxu0 0
  %1086 = vmatpush1.bf16.msra.mxu0 0
  %1087 = vmatprep.subr.bf16.mxu0 0
  %1088 = vmatpush1.bf16.msra.mxu0 0
  %1089 = vmatprep.subr.bf16.mxu0 0
  %1090 = vmatpush1.bf16.msra.mxu0 0
  %1091 = vmatprep.subr.bf16.mxu0 0
  %1092 = vmatpush1.bf16.msra.mxu0 0
  %1093 = vmatprep.mubr.bf16.mxu0 0
  %1094 = vmatmul.mubr.bf16.gmra.mrb[0].mxu0 %v600
  %v1095 = vpop.f32.mrb[0].mxu0
  %v1096 = vadd.f32 %v1055, %v1095
  %v1097 = vpop.f32.mrb[0].mxu0
  %v1098 = vadd.f32 %v1057, %v1097
  %v1099 = vpop.f32.mrb[0].mxu0
  %v1100 = vpop.f32.mrb[0].mxu0
  %1101 = vdwg.mxu0
  %1102 = vmatprep.subr.bf16.mxu0 %v350
  %1103 = vmatpush1.bf16.msra.mxu0 %v349
  %1104 = vmatprep.subr.bf16.mxu0 %v362
  %1105 = vmatpush1.bf16.msra.mxu0 %v359
  %1106 = vmatprep.subr.bf16.mxu0 0
  %1107 = vmatpush1.bf16.msra.mxu0 0
  %1108 = vmatprep.subr.bf16.mxu0 0
  %1109 = vmatpush1.bf16.msra.mxu0 0
  %1110 = vmatprep.subr.bf16.mxu0 0
  %1111 = vmatpush1.bf16.msra.mxu0 0
  %1112 = vmatprep.subr.bf16.mxu0 0
  %1113 = vmatpush1.bf16.msra.mxu0 0
  %1114 = vmatprep.subr.bf16.mxu0 0
  %1115 = vmatpush1.bf16.msra.mxu0 0
  %1116 = vmatprep.subr.bf16.mxu0 0
  %1117 = vmatpush1.bf16.msra.mxu0 0
  %1118 = vmatprep.subr.bf16.mxu0 0
  %1119 = vmatpush1.bf16.msra.mxu0 0
  %1120 = vmatprep.subr.bf16.mxu0 0
  %1121 = vmatpush1.bf16.msra.mxu0 0
  %1122 = vmatprep.subr.bf16.mxu0 0
  %1123 = vmatpush1.bf16.msra.mxu0 0
  %1124 = vmatprep.subr.bf16.mxu0 0
  %1125 = vmatpush1.bf16.msra.mxu0 0
  %1126 = vmatprep.subr.bf16.mxu0 0
  %1127 = vmatpush1.bf16.msra.mxu0 0
  %1128 = vmatprep.subr.bf16.mxu0 0
  %1129 = vmatpush1.bf16.msra.mxu0 0
  %1130 = vmatprep.subr.bf16.mxu0 0
  %1131 = vmatpush1.bf16.msra.mxu0 0
  %1132 = vmatprep.subr.bf16.mxu0 0
  %1133 = vmatpush1.bf16.msra.mxu0 0
  %1134 = vmatprep.mubr.bf16.mxu0 0
  %1135 = vmatmul.mubr.bf16.gmra.mrb[0].mxu0 %v932
  %v1136 = vpop.f32.mrb[0].mxu0
  %v1137 = vadd.f32 0.0, %v1136
  %v1138 = vpop.f32.mrb[0].mxu0
  %v1139 = vadd.f32 0.0, %v1138
  %v1140 = vpop.f32.mrb[0].mxu0
  %v1141 = vpop.f32.mrb[0].mxu0
  %1142 = vdwg.mxu0
  %v1143 = vadd.f32 %v1096, %v1137
  %v1144 = vadd.f32 %v1098, %v1139
  %v1145 = vld [vmem:[%s0 + $0x7] sm:$0x1]
  %v1146 = vld [vmem:[%s0 + $0x27] sm:$0x1]
  %v1147 = vld [vmem:[%s0 + $0x47] sm:$0x1]
  %v1148 = vld [vmem:[%s0 + $0x67] sm:$0x1]
  %v1149 = vld [vmem:[%s0 + $0x87] sm:$0x1]
  %v1150 = vld [vmem:[%s0 + $0xa7] sm:$0x1]
  %v1151 = vld [vmem:[%s0 + $0xc7] sm:$0x1]
  %v1152 = vld [vmem:[%s0 + $0xe7] sm:$0x1]
  %v1153 = vpack.c.bf16 %v1145, %v1145
  %v1154 = vpack.c.bf16 %v1146, %v1146
  %v1155 = vpack.c.bf16 %v1147, %v1147
  %v1156 = vpack.c.bf16 %v1148, %v1148
  %v1157 = vpack.c.bf16 %v1149, %v1149
  %v1158 = vpack.c.bf16 %v1150, %v1150
  %v1159 = vpack.c.bf16 %v1151, %v1151
  %v1160 = vpack.c.bf16 %v1152, %v1152
  %v1169 = vunpack.c.l.b16 %v1153
  %v1170 = vunpack.c.l.b16 %v1154
  %v1171 = vunpack.c.l.b16 %v1155
  %v1172 = vunpack.c.l.b16 %v1156
  %v1173 = vunpack.c.l.b16 %v1157
  %v1174 = vunpack.c.l.b16 %v1158
  %v1175 = vunpack.c.l.b16 %v1159
  %v1176 = vunpack.c.l.b16 %v1160
  %v1177 = vrot.slane %v1170, 7
  %v1178 = vsel %vm95, %v1177, %v1169
  %v1179 = vrot.slane %v1171, 6
  %v1180 = vsel %vm98, %v1179, %v1178
  %v1181 = vrot.slane %v1172, 5
  %v1182 = vsel %vm101, %v1181, %v1180
  %v1183 = vrot.slane %v1173, 4
  %v1184 = vsel %vm104, %v1183, %v1182
  %v1185 = vrot.slane %v1174, 3
  %v1186 = vsel %vm107, %v1185, %v1184
  %v1187 = vrot.slane %v1175, 2
  %v1188 = vsel %vm110, %v1187, %v1186
  %v1189 = vrot.slane %v1176, 1
  %v1190 = vsel %vm113, %v1189, %v1188
  %v1191 = vpack.c.b16 %v1190, %v1190
  %v1193 = vsel %vm134, %v1191, 0
  %1195 = vmatprep.subr.bf16.mxu0 %v472
  %1196 = vmatpush1.bf16.msra.mxu0 %v471
  %1197 = vmatprep.subr.bf16.mxu0 %v484
  %1198 = vmatpush1.bf16.msra.mxu0 %v481
  %1199 = vmatprep.subr.bf16.mxu0 0
  %1200 = vmatpush1.bf16.msra.mxu0 0
  %1201 = vmatprep.subr.bf16.mxu0 0
  %1202 = vmatpush1.bf16.msra.mxu0 0
  %1203 = vmatprep.subr.bf16.mxu0 0
  %1204 = vmatpush1.bf16.msra.mxu0 0
  %1205 = vmatprep.subr.bf16.mxu0 0
  %1206 = vmatpush1.bf16.msra.mxu0 0
  %1207 = vmatprep.subr.bf16.mxu0 0
  %1208 = vmatpush1.bf16.msra.mxu0 0
  %1209 = vmatprep.subr.bf16.mxu0 0
  %1210 = vmatpush1.bf16.msra.mxu0 0
  %1211 = vmatprep.subr.bf16.mxu0 0
  %1212 = vmatpush1.bf16.msra.mxu0 0
  %1213 = vmatprep.subr.bf16.mxu0 0
  %1214 = vmatpush1.bf16.msra.mxu0 0
  %1215 = vmatprep.subr.bf16.mxu0 0
  %1216 = vmatpush1.bf16.msra.mxu0 0
  %1217 = vmatprep.subr.bf16.mxu0 0
  %1218 = vmatpush1.bf16.msra.mxu0 0
  %1219 = vmatprep.subr.bf16.mxu0 0
  %1220 = vmatpush1.bf16.msra.mxu0 0
  %1221 = vmatprep.subr.bf16.mxu0 0
  %1222 = vmatpush1.bf16.msra.mxu0 0
  %1223 = vmatprep.subr.bf16.mxu0 0
  %1224 = vmatpush1.bf16.msra.mxu0 0
  %1225 = vmatprep.subr.bf16.mxu0 0
  %1226 = vmatpush1.bf16.msra.mxu0 0
  %1227 = vmatprep.mubr.bf16.mxu0 0
  %1228 = vmatmul.mubr.bf16.gmra.mrb[0].mxu0 %v1193
  %v1229 = vpop.f32.mrb[0].mxu0
  %v1230 = vadd.f32 0.0, %v1229
  %v1231 = vpop.f32.mrb[0].mxu0
  %v1232 = vadd.f32 0.0, %v1231
  %v1233 = vpop.f32.mrb[0].mxu0
  %v1234 = vpop.f32.mrb[0].mxu0
  %1235 = vdwg.mxu0
  %v1236 = vadd.f32 %v1143, %v1230
  %v1237 = vadd.f32 %v1144, %v1232
  %v1238 = vld [vmem:[%s0 + $0x8] sm:$0x1]
  %v1239 = vld [vmem:[%s0 + $0x28] sm:$0x1]
  %v1240 = vld [vmem:[%s0 + $0x48] sm:$0x1]
  %v1241 = vld [vmem:[%s0 + $0x68] sm:$0x1]
  %v1242 = vld [vmem:[%s0 + $0x88] sm:$0x1]
  %v1243 = vld [vmem:[%s0 + $0xa8] sm:$0x1]
  %v1244 = vld [vmem:[%s0 + $0xc8] sm:$0x1]
  %v1245 = vld [vmem:[%s0 + $0xe8] sm:$0x1]
  %v1246 = vpack.c.bf16 %v1238, %v1238
  %v1247 = vpack.c.bf16 %v1239, %v1239
  %v1248 = vpack.c.bf16 %v1240, %v1240
  %v1249 = vpack.c.bf16 %v1241, %v1241
  %v1250 = vpack.c.bf16 %v1242, %v1242
  %v1251 = vpack.c.bf16 %v1243, %v1243
  %v1252 = vpack.c.bf16 %v1244, %v1244
  %v1253 = vpack.c.bf16 %v1245, %v1245
  %v1262 = vunpack.c.l.b16 %v1246
  %v1263 = vunpack.c.l.b16 %v1247
  %v1264 = vunpack.c.l.b16 %v1248
  %v1265 = vunpack.c.l.b16 %v1249
  %v1266 = vunpack.c.l.b16 %v1250
  %v1267 = vunpack.c.l.b16 %v1251
  %v1268 = vunpack.c.l.b16 %v1252
  %v1269 = vunpack.c.l.b16 %v1253
  %v1270 = vrot.slane %v1263, 7
  %v1271 = vsel %vm95, %v1270, %v1262
  %v1272 = vrot.slane %v1264, 6
  %v1273 = vsel %vm98, %v1272, %v1271
  %v1274 = vrot.slane %v1265, 5
  %v1275 = vsel %vm101, %v1274, %v1273
  %v1276 = vrot.slane %v1266, 4
  %v1277 = vsel %vm104, %v1276, %v1275
  %v1278 = vrot.slane %v1267, 3
  %v1279 = vsel %vm107, %v1278, %v1277
  %v1280 = vrot.slane %v1268, 2
  %v1281 = vsel %vm110, %v1280, %v1279
  %v1282 = vrot.slane %v1269, 1
  %v1283 = vsel %vm113, %v1282, %v1281
  %v1284 = vpack.c.b16 %v1283, %v1283
  %v1286 = vsel %vm134, %v1284, 0
  %1288 = vmatprep.subr.bf16.mxu0 %v594
  %1289 = vmatpush1.bf16.msra.mxu0 %v593
  %1290 = vmatprep.subr.bf16.mxu0 %v606
  %1291 = vmatpush1.bf16.msra.mxu0 %v603
  %1292 = vmatprep.subr.bf16.mxu0 0
  %1293 = vmatpush1.bf16.msra.mxu0 0
  %1294 = vmatprep.subr.bf16.mxu0 0
  %1295 = vmatpush1.bf16.msra.mxu0 0
  %1296 = vmatprep.subr.bf16.mxu0 0
  %1297 = vmatpush1.bf16.msra.mxu0 0
  %1298 = vmatprep.subr.bf16.mxu0 0
  %1299 = vmatpush1.bf16.msra.mxu0 0
  %1300 = vmatprep.subr.bf16.mxu0 0
  %1301 = vmatpush1.bf16.msra.mxu0 0
  %1302 = vmatprep.subr.bf16.mxu0 0
  %1303 = vmatpush1.bf16.msra.mxu0 0
  %1304 = vmatprep.subr.bf16.mxu0 0
  %1305 = vmatpush1.bf16.msra.mxu0 0
  %1306 = vmatprep.subr.bf16.mxu0 0
  %1307 = vmatpush1.bf16.msra.mxu0 0
  %1308 = vmatprep.subr.bf16.mxu0 0
  %1309 = vmatpush1.bf16.msra.mxu0 0
  %1310 = vmatprep.subr.bf16.mxu0 0
  %1311 = vmatpush1.bf16.msra.mxu0 0
  %1312 = vmatprep.subr.bf16.mxu0 0
  %1313 = vmatpush1.bf16.msra.mxu0 0
  %1314 = vmatprep.subr.bf16.mxu0 0
  %1315 = vmatpush1.bf16.msra.mxu0 0
  %1316 = vmatprep.subr.bf16.mxu0 0
  %1317 = vmatpush1.bf16.msra.mxu0 0
  %1318 = vmatprep.subr.bf16.mxu0 0
  %1319 = vmatpush1.bf16.msra.mxu0 0
  %1320 = vmatprep.mubr.bf16.mxu0 0
  %1321 = vmatmul.mubr.bf16.gmra.mrb[0].mxu0 %v1286
  %v1322 = vpop.f32.mrb[0].mxu0
  %v1323 = vadd.f32 0.0, %v1322
  %v1324 = vpop.f32.mrb[0].mxu0
  %v1325 = vadd.f32 0.0, %v1324
  %v1326 = vpop.f32.mrb[0].mxu0
  %v1327 = vpop.f32.mrb[0].mxu0
  %1328 = vdwg.mxu0
  %v1329 = vadd.f32 %v1236, %v1323
  %v1330 = vadd.f32 %v1237, %v1325
  %v1331 = vadd.f32 %v1329, %v655
  %v1332 = vadd.f32 %v1330, %v659
  %v1333 = vmax.f32 %v1331, 0.0
  %v1334 = vmax.f32 %v1332, 0.0
  %1335 = vmatprep.subr.bf16.mxu0 %v129
  %1336 = vmatpush1.bf16.msra.mxu0 %v128
  %1337 = vmatprep.subr.bf16.mxu0 %v143
  %1338 = vmatpush1.bf16.msra.mxu0 %v140
  %1339 = vmatprep.subr.bf16.mxu0 0
  %1340 = vmatpush1.bf16.msra.mxu0 0
  %1341 = vmatprep.subr.bf16.mxu0 0
  %1342 = vmatpush1.bf16.msra.mxu0 0
  %1343 = vmatprep.subr.bf16.mxu0 0
  %1344 = vmatpush1.bf16.msra.mxu0 0
  %1345 = vmatprep.subr.bf16.mxu0 0
  %1346 = vmatpush1.bf16.msra.mxu0 0
  %1347 = vmatprep.subr.bf16.mxu0 0
  %1348 = vmatpush1.bf16.msra.mxu0 0
  %1349 = vmatprep.subr.bf16.mxu0 0
  %1350 = vmatpush1.bf16.msra.mxu0 0
  %1351 = vmatprep.subr.bf16.mxu0 0
  %1352 = vmatpush1.bf16.msra.mxu0 0
  %1353 = vmatprep.subr.bf16.mxu0 0
  %1354 = vmatpush1.bf16.msra.mxu0 0
  %1355 = vmatprep.subr.bf16.mxu0 0
  %1356 = vmatpush1.bf16.msra.mxu0 0
  %1357 = vmatprep.subr.bf16.mxu0 0
  %1358 = vmatpush1.bf16.msra.mxu0 0
  %1359 = vmatprep.subr.bf16.mxu0 0
  %1360 = vmatpush1.bf16.msra.mxu0 0
  %1361 = vmatprep.subr.bf16.mxu0 0
  %1362 = vmatpush1.bf16.msra.mxu0 0
  %1363 = vmatprep.subr.bf16.mxu0 0
  %1364 = vmatpush1.bf16.msra.mxu0 0
  %1365 = vmatprep.subr.bf16.mxu0 0
  %1366 = vmatpush1.bf16.msra.mxu0 0
  %1367 = vmatprep.mubr.bf16.mxu0 0
  %1368 = vmatmul.mubr.bf16.gmra.mrb[0].mxu0 %v1193
  %v1369 = vpop.f32.mrb[0].mxu0
  %v1370 = vadd.f32 0.0, %v1369
  %v1371 = vpop.f32.mrb[0].mxu0
  %v1372 = vadd.f32 0.0, %v1371
  %v1373 = vpop.f32.mrb[0].mxu0
  %v1374 = vpop.f32.mrb[0].mxu0
  %1375 = vdwg.mxu0
  %1376 = vmatprep.subr.bf16.mxu0 %v230
  %1377 = vmatpush1.bf16.msra.mxu0 %v229
  %1378 = vmatprep.subr.bf16.mxu0 %v242
  %1379 = vmatpush1.bf16.msra.mxu0 %v239
  %1380 = vmatprep.subr.bf16.mxu0 0
  %1381 = vmatpush1.bf16.msra.mxu0 0
  %1382 = vmatprep.subr.bf16.mxu0 0
  %1383 = vmatpush1.bf16.msra.mxu0 0
  %1384 = vmatprep.subr.bf16.mxu0 0
  %1385 = vmatpush1.bf16.msra.mxu0 0
  %1386 = vmatprep.subr.bf16.mxu0 0
  %1387 = vmatpush1.bf16.msra.mxu0 0
  %1388 = vmatprep.subr.bf16.mxu0 0
  %1389 = vmatpush1.bf16.msra.mxu0 0
  %1390 = vmatprep.subr.bf16.mxu0 0
  %1391 = vmatpush1.bf16.msra.mxu0 0
  %1392 = vmatprep.subr.bf16.mxu0 0
  %1393 = vmatpush1.bf16.msra.mxu0 0
  %1394 = vmatprep.subr.bf16.mxu0 0
  %1395 = vmatpush1.bf16.msra.mxu0 0
  %1396 = vmatprep.subr.bf16.mxu0 0
  %1397 = vmatpush1.bf16.msra.mxu0 0
  %1398 = vmatprep.subr.bf16.mxu0 0
  %1399 = vmatpush1.bf16.msra.mxu0 0
  %1400 = vmatprep.subr.bf16.mxu0 0
  %1401 = vmatpush1.bf16.msra.mxu0 0
  %1402 = vmatprep.subr.bf16.mxu0 0
  %1403 = vmatpush1.bf16.msra.mxu0 0
  %1404 = vmatprep.subr.bf16.mxu0 0
  %1405 = vmatpush1.bf16.msra.mxu0 0
  %1406 = vmatprep.subr.bf16.mxu0 0
  %1407 = vmatpush1.bf16.msra.mxu0 0
  %1408 = vmatprep.mubr.bf16.mxu0 0
  %1409 = vmatmul.mubr.bf16.gmra.mrb[0].mxu0 %v932
  %v1410 = vpop.f32.mrb[0].mxu0
  %v1411 = vadd.f32 %v1370, %v1410
  %v1412 = vpop.f32.mrb[0].mxu0
  %v1413 = vadd.f32 %v1372, %v1412
  %v1414 = vpop.f32.mrb[0].mxu0
  %v1415 = vpop.f32.mrb[0].mxu0
  %1416 = vdwg.mxu0
  %1417 = vmatprep.subr.bf16.mxu0 %v350
  %1418 = vmatpush1.bf16.msra.mxu0 %v349
  %1419 = vmatprep.subr.bf16.mxu0 %v362
  %1420 = vmatpush1.bf16.msra.mxu0 %v359
  %1421 = vmatprep.subr.bf16.mxu0 0
  %1422 = vmatpush1.bf16.msra.mxu0 0
  %1423 = vmatprep.subr.bf16.mxu0 0
  %1424 = vmatpush1.bf16.msra.mxu0 0
  %1425 = vmatprep.subr.bf16.mxu0 0
  %1426 = vmatpush1.bf16.msra.mxu0 0
  %1427 = vmatprep.subr.bf16.mxu0 0
  %1428 = vmatpush1.bf16.msra.mxu0 0
  %1429 = vmatprep.subr.bf16.mxu0 0
  %1430 = vmatpush1.bf16.msra.mxu0 0
  %1431 = vmatprep.subr.bf16.mxu0 0
  %1432 = vmatpush1.bf16.msra.mxu0 0
  %1433 = vmatprep.subr.bf16.mxu0 0
  %1434 = vmatpush1.bf16.msra.mxu0 0
  %1435 = vmatprep.subr.bf16.mxu0 0
  %1436 = vmatpush1.bf16.msra.mxu0 0
  %1437 = vmatprep.subr.bf16.mxu0 0
  %1438 = vmatpush1.bf16.msra.mxu0 0
  %1439 = vmatprep.subr.bf16.mxu0 0
  %1440 = vmatpush1.bf16.msra.mxu0 0
  %1441 = vmatprep.subr.bf16.mxu0 0
  %1442 = vmatpush1.bf16.msra.mxu0 0
  %1443 = vmatprep.subr.bf16.mxu0 0
  %1444 = vmatpush1.bf16.msra.mxu0 0
  %1445 = vmatprep.subr.bf16.mxu0 0
  %1446 = vmatpush1.bf16.msra.mxu0 0
  %1447 = vmatprep.subr.bf16.mxu0 0
  %1448 = vmatpush1.bf16.msra.mxu0 0
  %1449 = vmatprep.mubr.bf16.mxu0 0
  %1450 = vmatmul.mubr.bf16.gmra.mrb[0].mxu0 %v1286
  %v1451 = vpop.f32.mrb[0].mxu0
  %v1452 = vadd.f32 0.0, %v1451
  %v1453 = vpop.f32.mrb[0].mxu0
  %v1454 = vadd.f32 0.0, %v1453
  %v1455 = vpop.f32.mrb[0].mxu0
  %v1456 = vpop.f32.mrb[0].mxu0
  %1457 = vdwg.mxu0
  %v1458 = vadd.f32 %v1411, %v1452
  %v1459 = vadd.f32 %v1413, %v1454
  %v1460 = vld [vmem:[%s0 + $0x9] sm:$0x1]
  %v1461 = vld [vmem:[%s0 + $0x29] sm:$0x1]
  %v1462 = vld [vmem:[%s0 + $0x49] sm:$0x1]
  %v1463 = vld [vmem:[%s0 + $0x69] sm:$0x1]
  %v1464 = vld [vmem:[%s0 + $0x89] sm:$0x1]
  %v1465 = vld [vmem:[%s0 + $0xa9] sm:$0x1]
  %v1466 = vld [vmem:[%s0 + $0xc9] sm:$0x1]
  %v1467 = vld [vmem:[%s0 + $0xe9] sm:$0x1]
  %v1468 = vpack.c.bf16 %v1460, %v1460
  %v1469 = vpack.c.bf16 %v1461, %v1461
  %v1470 = vpack.c.bf16 %v1462, %v1462
  %v1471 = vpack.c.bf16 %v1463, %v1463
  %v1472 = vpack.c.bf16 %v1464, %v1464
  %v1473 = vpack.c.bf16 %v1465, %v1465
  %v1474 = vpack.c.bf16 %v1466, %v1466
  %v1475 = vpack.c.bf16 %v1467, %v1467
  %v1484 = vunpack.c.l.b16 %v1468
  %v1485 = vunpack.c.l.b16 %v1469
  %v1486 = vunpack.c.l.b16 %v1470
  %v1487 = vunpack.c.l.b16 %v1471
  %v1488 = vunpack.c.l.b16 %v1472
  %v1489 = vunpack.c.l.b16 %v1473
  %v1490 = vunpack.c.l.b16 %v1474
  %v1491 = vunpack.c.l.b16 %v1475
  %v1492 = vrot.slane %v1485, 7
  %v1493 = vsel %vm95, %v1492, %v1484
  %v1494 = vrot.slane %v1486, 6
  %v1495 = vsel %vm98, %v1494, %v1493
  %v1496 = vrot.slane %v1487, 5
  %v1497 = vsel %vm101, %v1496, %v1495
  %v1498 = vrot.slane %v1488, 4
  %v1499 = vsel %vm104, %v1498, %v1497
  %v1500 = vrot.slane %v1489, 3
  %v1501 = vsel %vm107, %v1500, %v1499
  %v1502 = vrot.slane %v1490, 2
  %v1503 = vsel %vm110, %v1502, %v1501
  %v1504 = vrot.slane %v1491, 1
  %v1505 = vsel %vm113, %v1504, %v1503
  %v1506 = vpack.c.b16 %v1505, %v1505
  %v1508 = vsel %vm134, %v1506, 0
  %1510 = vmatprep.subr.bf16.mxu0 %v472
  %1511 = vmatpush1.bf16.msra.mxu0 %v471
  %1512 = vmatprep.subr.bf16.mxu0 %v484
  %1513 = vmatpush1.bf16.msra.mxu0 %v481
  %1514 = vmatprep.subr.bf16.mxu0 0
  %1515 = vmatpush1.bf16.msra.mxu0 0
  %1516 = vmatprep.subr.bf16.mxu0 0
  %1517 = vmatpush1.bf16.msra.mxu0 0
  %1518 = vmatprep.subr.bf16.mxu0 0
  %1519 = vmatpush1.bf16.msra.mxu0 0
  %1520 = vmatprep.subr.bf16.mxu0 0
  %1521 = vmatpush1.bf16.msra.mxu0 0
  %1522 = vmatprep.subr.bf16.mxu0 0
  %1523 = vmatpush1.bf16.msra.mxu0 0
  %1524 = vmatprep.subr.bf16.mxu0 0
  %1525 = vmatpush1.bf16.msra.mxu0 0
  %1526 = vmatprep.subr.bf16.mxu0 0
  %1527 = vmatpush1.bf16.msra.mxu0 0
  %1528 = vmatprep.subr.bf16.mxu0 0
  %1529 = vmatpush1.bf16.msra.mxu0 0
  %1530 = vmatprep.subr.bf16.mxu0 0
  %1531 = vmatpush1.bf16.msra.mxu0 0
  %1532 = vmatprep.subr.bf16.mxu0 0
  %1533 = vmatpush1.bf16.msra.mxu0 0
  %1534 = vmatprep.subr.bf16.mxu0 0
  %1535 = vmatpush1.bf16.msra.mxu0 0
  %1536 = vmatprep.subr.bf16.mxu0 0
  %1537 = vmatpush1.bf16.msra.mxu0 0
  %1538 = vmatprep.subr.bf16.mxu0 0
  %1539 = vmatpush1.bf16.msra.mxu0 0
  %1540 = vmatprep.subr.bf16.mxu0 0
  %1541 = vmatpush1.bf16.msra.mxu0 0
  %1542 = vmatprep.mubr.bf16.mxu0 0
  %1543 = vmatmul.mubr.bf16.gmra.mrb[0].mxu0 %v1508
  %v1544 = vpop.f32.mrb[0].mxu0
  %v1545 = vadd.f32 0.0, %v1544
  %v1546 = vpop.f32.mrb[0].mxu0
  %v1547 = vadd.f32 0.0, %v1546
  %v1548 = vpop.f32.mrb[0].mxu0
  %v1549 = vpop.f32.mrb[0].mxu0
  %1550 = vdwg.mxu0
  %v1551 = vadd.f32 %v1458, %v1545
  %v1552 = vadd.f32 %v1459, %v1547
  %v1553 = vld [vmem:[%s0 + $0xa] sm:$0x1]
  %v1554 = vld [vmem:[%s0 + $0x2a] sm:$0x1]
  %v1555 = vld [vmem:[%s0 + $0x4a] sm:$0x1]
  %v1556 = vld [vmem:[%s0 + $0x6a] sm:$0x1]
  %v1557 = vld [vmem:[%s0 + $0x8a] sm:$0x1]
  %v1558 = vld [vmem:[%s0 + $0xaa] sm:$0x1]
  %v1559 = vld [vmem:[%s0 + $0xca] sm:$0x1]
  %v1560 = vld [vmem:[%s0 + $0xea] sm:$0x1]
  %v1561 = vpack.c.bf16 %v1553, %v1553
  %v1562 = vpack.c.bf16 %v1554, %v1554
  %v1563 = vpack.c.bf16 %v1555, %v1555
  %v1564 = vpack.c.bf16 %v1556, %v1556
  %v1565 = vpack.c.bf16 %v1557, %v1557
  %v1566 = vpack.c.bf16 %v1558, %v1558
  %v1567 = vpack.c.bf16 %v1559, %v1559
  %v1568 = vpack.c.bf16 %v1560, %v1560
  %v1577 = vunpack.c.l.b16 %v1561
  %v1578 = vunpack.c.l.b16 %v1562
  %v1579 = vunpack.c.l.b16 %v1563
  %v1580 = vunpack.c.l.b16 %v1564
  %v1581 = vunpack.c.l.b16 %v1565
  %v1582 = vunpack.c.l.b16 %v1566
  %v1583 = vunpack.c.l.b16 %v1567
  %v1584 = vunpack.c.l.b16 %v1568
  %v1585 = vrot.slane %v1578, 7
  %v1586 = vsel %vm95, %v1585, %v1577
  %v1587 = vrot.slane %v1579, 6
  %v1588 = vsel %vm98, %v1587, %v1586
  %v1589 = vrot.slane %v1580, 5
  %v1590 = vsel %vm101, %v1589, %v1588
  %v1591 = vrot.slane %v1581, 4
  %v1592 = vsel %vm104, %v1591, %v1590
  %v1593 = vrot.slane %v1582, 3
  %v1594 = vsel %vm107, %v1593, %v1592
  %v1595 = vrot.slane %v1583, 2
  %v1596 = vsel %vm110, %v1595, %v1594
  %v1597 = vrot.slane %v1584, 1
  %v1598 = vsel %vm113, %v1597, %v1596
  %v1599 = vpack.c.b16 %v1598, %v1598
  %v1601 = vsel %vm134, %v1599, 0
  %1603 = vmatprep.subr.bf16.mxu0 %v594
  %1604 = vmatpush1.bf16.msra.mxu0 %v593
  %1605 = vmatprep.subr.bf16.mxu0 %v606
  %1606 = vmatpush1.bf16.msra.mxu0 %v603
  %1607 = vmatprep.subr.bf16.mxu0 0
  %1608 = vmatpush1.bf16.msra.mxu0 0
  %1609 = vmatprep.subr.bf16.mxu0 0
  %1610 = vmatpush1.bf16.msra.mxu0 0
  %1611 = vmatprep.subr.bf16.mxu0 0
  %1612 = vmatpush1.bf16.msra.mxu0 0
  %1613 = vmatprep.subr.bf16.mxu0 0
  %1614 = vmatpush1.bf16.msra.mxu0 0
  %1615 = vmatprep.subr.bf16.mxu0 0
  %1616 = vmatpush1.bf16.msra.mxu0 0
  %1617 = vmatprep.subr.bf16.mxu0 0
  %1618 = vmatpush1.bf16.msra.mxu0 0
  %1619 = vmatprep.subr.bf16.mxu0 0
  %1620 = vmatpush1.bf16.msra.mxu0 0
  %1621 = vmatprep.subr.bf16.mxu0 0
  %1622 = vmatpush1.bf16.msra.mxu0 0
  %1623 = vmatprep.subr.bf16.mxu0 0
  %1624 = vmatpush1.bf16.msra.mxu0 0
  %1625 = vmatprep.subr.bf16.mxu0 0
  %1626 = vmatpush1.bf16.msra.mxu0 0
  %1627 = vmatprep.subr.bf16.mxu0 0
  %1628 = vmatpush1.bf16.msra.mxu0 0
  %1629 = vmatprep.subr.bf16.mxu0 0
  %1630 = vmatpush1.bf16.msra.mxu0 0
  %1631 = vmatprep.subr.bf16.mxu0 0
  %1632 = vmatpush1.bf16.msra.mxu0 0
  %1633 = vmatprep.subr.bf16.mxu0 0
  %1634 = vmatpush1.bf16.msra.mxu0 0
  %1635 = vmatprep.mubr.bf16.mxu0 0
  %1636 = vmatmul.mubr.bf16.gmra.mrb[0].mxu0 %v1601
  %v1637 = vpop.f32.mrb[0].mxu0
  %v1638 = vadd.f32 0.0, %v1637
  %v1639 = vpop.f32.mrb[0].mxu0
  %v1640 = vadd.f32 0.0, %v1639
  %v1641 = vpop.f32.mrb[0].mxu0
  %v1642 = vpop.f32.mrb[0].mxu0
  %1643 = vdwg.mxu0
  %v1644 = vadd.f32 %v1551, %v1638
  %v1645 = vadd.f32 %v1552, %v1640
  %v1646 = vadd.f32 %v1644, %v655
  %v1647 = vadd.f32 %v1645, %v659
  %v1648 = vmax.f32 %v1646, 0.0
  %v1649 = vmax.f32 %v1647, 0.0
  %v1650 = vmax.f32 %v1333, %v1648
  %v1651 = vmax.f32 %v1334, %v1649
  %1653 = vrot.lane.b32.xlu0 %v1650, 112
  %v1654 = vpop.permute.xlu0 %1653
  %v1656 = vmax.f32 %v1650, %v1654
  %1658 = vrot.lane.b32.xlu0 %v1651, 112
  %v1659 = vpop.permute.xlu0 %1658
  %v1661 = vmax.f32 %v1651, %v1659
  %1663 = vrot.lane.b32.xlu0 %v1656, 112
  %v1664 = vpop.permute.xlu0 %1663
  %1666 = vrot.lane.b32.xlu0 %v1656, 96
  %v1667 = vpop.permute.xlu0 %1666
  %1669 = vrot.lane.b32.xlu0 %v1656, 80
  %v1670 = vpop.permute.xlu0 %1669
  %1673 = vrot.lane.b32.xlu0 %v1661, 64
  %v1674 = vpop.permute.xlu0 %1673
  %1676 = vrot.lane.b32.xlu0 %v1661, 48
  %v1677 = vpop.permute.xlu0 %1676
  %v1679 = vsel %vm1010, %v1656, %v1664
  %v1680 = vsel %vm1012, %v1679, %v1667
  %v1681 = vsel %vm1014, %v1680, %v1670
  %v1682 = vsel %vm1016, %v1681, %v1674
  %v1683 = vsel %vm1018, %v1682, %v1677
  %1684 = vmatprep.subr.bf16.mxu0 %v129
  %1685 = vmatpush1.bf16.msra.mxu0 %v128
  %1686 = vmatprep.subr.bf16.mxu0 %v143
  %1687 = vmatpush1.bf16.msra.mxu0 %v140
  %1688 = vmatprep.subr.bf16.mxu0 0
  %1689 = vmatpush1.bf16.msra.mxu0 0
  %1690 = vmatprep.subr.bf16.mxu0 0
  %1691 = vmatpush1.bf16.msra.mxu0 0
  %1692 = vmatprep.subr.bf16.mxu0 0
  %1693 = vmatpush1.bf16.msra.mxu0 0
  %1694 = vmatprep.subr.bf16.mxu0 0
  %1695 = vmatpush1.bf16.msra.mxu0 0
  %1696 = vmatprep.subr.bf16.mxu0 0
  %1697 = vmatpush1.bf16.msra.mxu0 0
  %1698 = vmatprep.subr.bf16.mxu0 0
  %1699 = vmatpush1.bf16.msra.mxu0 0
  %1700 = vmatprep.subr.bf16.mxu0 0
  %1701 = vmatpush1.bf16.msra.mxu0 0
  %1702 = vmatprep.subr.bf16.mxu0 0
  %1703 = vmatpush1.bf16.msra.mxu0 0
  %1704 = vmatprep.subr.bf16.mxu0 0
  %1705 = vmatpush1.bf16.msra.mxu0 0
  %1706 = vmatprep.subr.bf16.mxu0 0
  %1707 = vmatpush1.bf16.msra.mxu0 0
  %1708 = vmatprep.subr.bf16.mxu0 0
  %1709 = vmatpush1.bf16.msra.mxu0 0
  %1710 = vmatprep.subr.bf16.mxu0 0
  %1711 = vmatpush1.bf16.msra.mxu0 0
  %1712 = vmatprep.subr.bf16.mxu0 0
  %1713 = vmatpush1.bf16.msra.mxu0 0
  %1714 = vmatprep.subr.bf16.mxu0 0
  %1715 = vmatpush1.bf16.msra.mxu0 0
  %1716 = vmatprep.mubr.bf16.mxu0 0
  %1717 = vmatmul.mubr.bf16.gmra.mrb[0].mxu0 %v1508
  %v1718 = vpop.f32.mrb[0].mxu0
  %v1719 = vadd.f32 0.0, %v1718
  %v1720 = vpop.f32.mrb[0].mxu0
  %v1721 = vadd.f32 0.0, %v1720
  %v1722 = vpop.f32.mrb[0].mxu0
  %v1723 = vpop.f32.mrb[0].mxu0
  %1724 = vdwg.mxu0
  %1725 = vmatprep.subr.bf16.mxu0 %v230
  %1726 = vmatpush1.bf16.msra.mxu0 %v229
  %1727 = vmatprep.subr.bf16.mxu0 %v242
  %1728 = vmatpush1.bf16.msra.mxu0 %v239
  %1729 = vmatprep.subr.bf16.mxu0 0
  %1730 = vmatpush1.bf16.msra.mxu0 0
  %1731 = vmatprep.subr.bf16.mxu0 0
  %1732 = vmatpush1.bf16.msra.mxu0 0
  %1733 = vmatprep.subr.bf16.mxu0 0
  %1734 = vmatpush1.bf16.msra.mxu0 0
  %1735 = vmatprep.subr.bf16.mxu0 0
  %1736 = vmatpush1.bf16.msra.mxu0 0
  %1737 = vmatprep.subr.bf16.mxu0 0
  %1738 = vmatpush1.bf16.msra.mxu0 0
  %1739 = vmatprep.subr.bf16.mxu0 0
  %1740 = vmatpush1.bf16.msra.mxu0 0
  %1741 = vmatprep.subr.bf16.mxu0 0
  %1742 = vmatpush1.bf16.msra.mxu0 0
  %1743 = vmatprep.subr.bf16.mxu0 0
  %1744 = vmatpush1.bf16.msra.mxu0 0
  %1745 = vmatprep.subr.bf16.mxu0 0
  %1746 = vmatpush1.bf16.msra.mxu0 0
  %1747 = vmatprep.subr.bf16.mxu0 0
  %1748 = vmatpush1.bf16.msra.mxu0 0
  %1749 = vmatprep.subr.bf16.mxu0 0
  %1750 = vmatpush1.bf16.msra.mxu0 0
  %1751 = vmatprep.subr.bf16.mxu0 0
  %1752 = vmatpush1.bf16.msra.mxu0 0
  %1753 = vmatprep.subr.bf16.mxu0 0
  %1754 = vmatpush1.bf16.msra.mxu0 0
  %1755 = vmatprep.subr.bf16.mxu0 0
  %1756 = vmatpush1.bf16.msra.mxu0 0
  %1757 = vmatprep.mubr.bf16.mxu0 0
  %1758 = vmatmul.mubr.bf16.gmra.mrb[0].mxu0 %v1286
  %v1759 = vpop.f32.mrb[0].mxu0
  %v1760 = vadd.f32 %v1719, %v1759
  %v1761 = vpop.f32.mrb[0].mxu0
  %v1762 = vadd.f32 %v1721, %v1761
  %v1763 = vpop.f32.mrb[0].mxu0
  %v1764 = vpop.f32.mrb[0].mxu0
  %1765 = vdwg.mxu0
  %1766 = vmatprep.subr.bf16.mxu0 %v350
  %1767 = vmatpush1.bf16.msra.mxu0 %v349
  %1768 = vmatprep.subr.bf16.mxu0 %v362
  %1769 = vmatpush1.bf16.msra.mxu0 %v359
  %1770 = vmatprep.subr.bf16.mxu0 0
  %1771 = vmatpush1.bf16.msra.mxu0 0
  %1772 = vmatprep.subr.bf16.mxu0 0
  %1773 = vmatpush1.bf16.msra.mxu0 0
  %1774 = vmatprep.subr.bf16.mxu0 0
  %1775 = vmatpush1.bf16.msra.mxu0 0
  %1776 = vmatprep.subr.bf16.mxu0 0
  %1777 = vmatpush1.bf16.msra.mxu0 0
  %1778 = vmatprep.subr.bf16.mxu0 0
  %1779 = vmatpush1.bf16.msra.mxu0 0
  %1780 = vmatprep.subr.bf16.mxu0 0
  %1781 = vmatpush1.bf16.msra.mxu0 0
  %1782 = vmatprep.subr.bf16.mxu0 0
  %1783 = vmatpush1.bf16.msra.mxu0 0
  %1784 = vmatprep.subr.bf16.mxu0 0
  %1785 = vmatpush1.bf16.msra.mxu0 0
  %1786 = vmatprep.subr.bf16.mxu0 0
  %1787 = vmatpush1.bf16.msra.mxu0 0
  %1788 = vmatprep.subr.bf16.mxu0 0
  %1789 = vmatpush1.bf16.msra.mxu0 0
  %1790 = vmatprep.subr.bf16.mxu0 0
  %1791 = vmatpush1.bf16.msra.mxu0 0
  %1792 = vmatprep.subr.bf16.mxu0 0
  %1793 = vmatpush1.bf16.msra.mxu0 0
  %1794 = vmatprep.subr.bf16.mxu0 0
  %1795 = vmatpush1.bf16.msra.mxu0 0
  %1796 = vmatprep.subr.bf16.mxu0 0
  %1797 = vmatpush1.bf16.msra.mxu0 0
  %1798 = vmatprep.mubr.bf16.mxu0 0
  %1799 = vmatmul.mubr.bf16.gmra.mrb[0].mxu0 %v1601
  %v1800 = vpop.f32.mrb[0].mxu0
  %v1801 = vadd.f32 0.0, %v1800
  %v1802 = vpop.f32.mrb[0].mxu0
  %v1803 = vadd.f32 0.0, %v1802
  %v1804 = vpop.f32.mrb[0].mxu0
  %v1805 = vpop.f32.mrb[0].mxu0
  %1806 = vdwg.mxu0
  %v1807 = vadd.f32 %v1760, %v1801
  %v1808 = vadd.f32 %v1762, %v1803
  %v1809 = vld [vmem:[%s0 + $0xb] sm:$0x1]
  %v1810 = vld [vmem:[%s0 + $0x2b] sm:$0x1]
  %v1811 = vld [vmem:[%s0 + $0x4b] sm:$0x1]
  %v1812 = vld [vmem:[%s0 + $0x6b] sm:$0x1]
  %v1813 = vld [vmem:[%s0 + $0x8b] sm:$0x1]
  %v1814 = vld [vmem:[%s0 + $0xab] sm:$0x1]
  %v1815 = vld [vmem:[%s0 + $0xcb] sm:$0x1]
  %v1816 = vld [vmem:[%s0 + $0xeb] sm:$0x1]
  %v1817 = vpack.c.bf16 %v1809, %v1809
  %v1818 = vpack.c.bf16 %v1810, %v1810
  %v1819 = vpack.c.bf16 %v1811, %v1811
  %v1820 = vpack.c.bf16 %v1812, %v1812
  %v1821 = vpack.c.bf16 %v1813, %v1813
  %v1822 = vpack.c.bf16 %v1814, %v1814
  %v1823 = vpack.c.bf16 %v1815, %v1815
  %v1824 = vpack.c.bf16 %v1816, %v1816
  %v1833 = vunpack.c.l.b16 %v1817
  %v1834 = vunpack.c.l.b16 %v1818
  %v1835 = vunpack.c.l.b16 %v1819
  %v1836 = vunpack.c.l.b16 %v1820
  %v1837 = vunpack.c.l.b16 %v1821
  %v1838 = vunpack.c.l.b16 %v1822
  %v1839 = vunpack.c.l.b16 %v1823
  %v1840 = vunpack.c.l.b16 %v1824
  %v1841 = vrot.slane %v1834, 7
  %v1842 = vsel %vm95, %v1841, %v1833
  %v1843 = vrot.slane %v1835, 6
  %v1844 = vsel %vm98, %v1843, %v1842
  %v1845 = vrot.slane %v1836, 5
  %v1846 = vsel %vm101, %v1845, %v1844
  %v1847 = vrot.slane %v1837, 4
  %v1848 = vsel %vm104, %v1847, %v1846
  %v1849 = vrot.slane %v1838, 3
  %v1850 = vsel %vm107, %v1849, %v1848
  %v1851 = vrot.slane %v1839, 2
  %v1852 = vsel %vm110, %v1851, %v1850
  %v1853 = vrot.slane %v1840, 1
  %v1854 = vsel %vm113, %v1853, %v1852
  %v1855 = vpack.c.b16 %v1854, %v1854
  %v1857 = vsel %vm134, %v1855, 0
  %1859 = vmatprep.subr.bf16.mxu0 %v472
  %1860 = vmatpush1.bf16.msra.mxu0 %v471
  %1861 = vmatprep.subr.bf16.mxu0 %v484
  %1862 = vmatpush1.bf16.msra.mxu0 %v481
  %1863 = vmatprep.subr.bf16.mxu0 0
  %1864 = vmatpush1.bf16.msra.mxu0 0
  %1865 = vmatprep.subr.bf16.mxu0 0
  %1866 = vmatpush1.bf16.msra.mxu0 0
  %1867 = vmatprep.subr.bf16.mxu0 0
  %1868 = vmatpush1.bf16.msra.mxu0 0
  %1869 = vmatprep.subr.bf16.mxu0 0
  %1870 = vmatpush1.bf16.msra.mxu0 0
  %1871 = vmatprep.subr.bf16.mxu0 0
  %1872 = vmatpush1.bf16.msra.mxu0 0
  %1873 = vmatprep.subr.bf16.mxu0 0
  %1874 = vmatpush1.bf16.msra.mxu0 0
  %1875 = vmatprep.subr.bf16.mxu0 0
  %1876 = vmatpush1.bf16.msra.mxu0 0
  %1877 = vmatprep.subr.bf16.mxu0 0
  %1878 = vmatpush1.bf16.msra.mxu0 0
  %1879 = vmatprep.subr.bf16.mxu0 0
  %1880 = vmatpush1.bf16.msra.mxu0 0
  %1881 = vmatprep.subr.bf16.mxu0 0
  %1882 = vmatpush1.bf16.msra.mxu0 0
  %1883 = vmatprep.subr.bf16.mxu0 0
  %1884 = vmatpush1.bf16.msra.mxu0 0
  %1885 = vmatprep.subr.bf16.mxu0 0
  %1886 = vmatpush1.bf16.msra.mxu0 0
  %1887 = vmatprep.subr.bf16.mxu0 0
  %1888 = vmatpush1.bf16.msra.mxu0 0
  %1889 = vmatprep.subr.bf16.mxu0 0
  %1890 = vmatpush1.bf16.msra.mxu0 0
  %1891 = vmatprep.mubr.bf16.mxu0 0
  %1892 = vmatmul.mubr.bf16.gmra.mrb[0].mxu0 %v1857
  %v1893 = vpop.f32.mrb[0].mxu0
  %v1894 = vadd.f32 0.0, %v1893
  %v1895 = vpop.f32.mrb[0].mxu0
  %v1896 = vadd.f32 0.0, %v1895
  %v1897 = vpop.f32.mrb[0].mxu0
  %v1898 = vpop.f32.mrb[0].mxu0
  %1899 = vdwg.mxu0
  %v1900 = vadd.f32 %v1807, %v1894
  %v1901 = vadd.f32 %v1808, %v1896
  %v1902 = vld [vmem:[%s0 + $0xc] sm:$0x1]
  %v1903 = vld [vmem:[%s0 + $0x2c] sm:$0x1]
  %v1904 = vld [vmem:[%s0 + $0x4c] sm:$0x1]
  %v1905 = vld [vmem:[%s0 + $0x6c] sm:$0x1]
  %v1906 = vld [vmem:[%s0 + $0x8c] sm:$0x1]
  %v1907 = vld [vmem:[%s0 + $0xac] sm:$0x1]
  %v1908 = vld [vmem:[%s0 + $0xcc] sm:$0x1]
  %v1909 = vld [vmem:[%s0 + $0xec] sm:$0x1]
  %v1910 = vpack.c.bf16 %v1902, %v1902
  %v1911 = vpack.c.bf16 %v1903, %v1903
  %v1912 = vpack.c.bf16 %v1904, %v1904
  %v1913 = vpack.c.bf16 %v1905, %v1905
  %v1914 = vpack.c.bf16 %v1906, %v1906
  %v1915 = vpack.c.bf16 %v1907, %v1907
  %v1916 = vpack.c.bf16 %v1908, %v1908
  %v1917 = vpack.c.bf16 %v1909, %v1909
  %v1926 = vunpack.c.l.b16 %v1910
  %v1927 = vunpack.c.l.b16 %v1911
  %v1928 = vunpack.c.l.b16 %v1912
  %v1929 = vunpack.c.l.b16 %v1913
  %v1930 = vunpack.c.l.b16 %v1914
  %v1931 = vunpack.c.l.b16 %v1915
  %v1932 = vunpack.c.l.b16 %v1916
  %v1933 = vunpack.c.l.b16 %v1917
  %v1934 = vrot.slane %v1927, 7
  %v1935 = vsel %vm95, %v1934, %v1926
  %v1936 = vrot.slane %v1928, 6
  %v1937 = vsel %vm98, %v1936, %v1935
  %v1938 = vrot.slane %v1929, 5
  %v1939 = vsel %vm101, %v1938, %v1937
  %v1940 = vrot.slane %v1930, 4
  %v1941 = vsel %vm104, %v1940, %v1939
  %v1942 = vrot.slane %v1931, 3
  %v1943 = vsel %vm107, %v1942, %v1941
  %v1944 = vrot.slane %v1932, 2
  %v1945 = vsel %vm110, %v1944, %v1943
  %v1946 = vrot.slane %v1933, 1
  %v1947 = vsel %vm113, %v1946, %v1945
  %v1948 = vpack.c.b16 %v1947, %v1947
  %v1950 = vsel %vm134, %v1948, 0
  %1952 = vmatprep.subr.bf16.mxu0 %v594
  %1953 = vmatpush1.bf16.msra.mxu0 %v593
  %1954 = vmatprep.subr.bf16.mxu0 %v606
  %1955 = vmatpush1.bf16.msra.mxu0 %v603
  %1956 = vmatprep.subr.bf16.mxu0 0
  %1957 = vmatpush1.bf16.msra.mxu0 0
  %1958 = vmatprep.subr.bf16.mxu0 0
  %1959 = vmatpush1.bf16.msra.mxu0 0
  %1960 = vmatprep.subr.bf16.mxu0 0
  %1961 = vmatpush1.bf16.msra.mxu0 0
  %1962 = vmatprep.subr.bf16.mxu0 0
  %1963 = vmatpush1.bf16.msra.mxu0 0
  %1964 = vmatprep.subr.bf16.mxu0 0
  %1965 = vmatpush1.bf16.msra.mxu0 0
  %1966 = vmatprep.subr.bf16.mxu0 0
  %1967 = vmatpush1.bf16.msra.mxu0 0
  %1968 = vmatprep.subr.bf16.mxu0 0
  %1969 = vmatpush1.bf16.msra.mxu0 0
  %1970 = vmatprep.subr.bf16.mxu0 0
  %1971 = vmatpush1.bf16.msra.mxu0 0
  %1972 = vmatprep.subr.bf16.mxu0 0
  %1973 = vmatpush1.bf16.msra.mxu0 0
  %1974 = vmatprep.subr.bf16.mxu0 0
  %1975 = vmatpush1.bf16.msra.mxu0 0
  %1976 = vmatprep.subr.bf16.mxu0 0
  %1977 = vmatpush1.bf16.msra.mxu0 0
  %1978 = vmatprep.subr.bf16.mxu0 0
  %1979 = vmatpush1.bf16.msra.mxu0 0
  %1980 = vmatprep.subr.bf16.mxu0 0
  %1981 = vmatpush1.bf16.msra.mxu0 0
  %1982 = vmatprep.subr.bf16.mxu0 0
  %1983 = vmatpush1.bf16.msra.mxu0 0
  %1984 = vmatprep.mubr.bf16.mxu0 0
  %1985 = vmatmul.mubr.bf16.gmra.mrb[0].mxu0 %v1950
  %v1986 = vpop.f32.mrb[0].mxu0
  %v1987 = vadd.f32 0.0, %v1986
  %v1988 = vpop.f32.mrb[0].mxu0
  %v1989 = vadd.f32 0.0, %v1988
  %v1990 = vpop.f32.mrb[0].mxu0
  %v1991 = vpop.f32.mrb[0].mxu0
  %1992 = vdwg.mxu0
  %v1993 = vadd.f32 %v1900, %v1987
  %v1994 = vadd.f32 %v1901, %v1989
  %v1995 = vadd.f32 %v1993, %v655
  %v1996 = vadd.f32 %v1994, %v659
  %v1997 = vmax.f32 %v1995, 0.0
  %v1998 = vmax.f32 %v1996, 0.0
  %1999 = vmatprep.subr.bf16.mxu0 %v129
  %2000 = vmatpush1.bf16.msra.mxu0 %v128
  %2001 = vmatprep.subr.bf16.mxu0 %v143
  %2002 = vmatpush1.bf16.msra.mxu0 %v140
  %2003 = vmatprep.subr.bf16.mxu0 0
  %2004 = vmatpush1.bf16.msra.mxu0 0
  %2005 = vmatprep.subr.bf16.mxu0 0
  %2006 = vmatpush1.bf16.msra.mxu0 0
  %2007 = vmatprep.subr.bf16.mxu0 0
  %2008 = vmatpush1.bf16.msra.mxu0 0
  %2009 = vmatprep.subr.bf16.mxu0 0
  %2010 = vmatpush1.bf16.msra.mxu0 0
  %2011 = vmatprep.subr.bf16.mxu0 0
  %2012 = vmatpush1.bf16.msra.mxu0 0
  %2013 = vmatprep.subr.bf16.mxu0 0
  %2014 = vmatpush1.bf16.msra.mxu0 0
  %2015 = vmatprep.subr.bf16.mxu0 0
  %2016 = vmatpush1.bf16.msra.mxu0 0
  %2017 = vmatprep.subr.bf16.mxu0 0
  %2018 = vmatpush1.bf16.msra.mxu0 0
  %2019 = vmatprep.subr.bf16.mxu0 0
  %2020 = vmatpush1.bf16.msra.mxu0 0
  %2021 = vmatprep.subr.bf16.mxu0 0
  %2022 = vmatpush1.bf16.msra.mxu0 0
  %2023 = vmatprep.subr.bf16.mxu0 0
  %2024 = vmatpush1.bf16.msra.mxu0 0
  %2025 = vmatprep.subr.bf16.mxu0 0
  %2026 = vmatpush1.bf16.msra.mxu0 0
  %2027 = vmatprep.subr.bf16.mxu0 0
  %2028 = vmatpush1.bf16.msra.mxu0 0
  %2029 = vmatprep.subr.bf16.mxu0 0
  %2030 = vmatpush1.bf16.msra.mxu0 0
  %2031 = vmatprep.mubr.bf16.mxu0 0
  %2032 = vmatmul.mubr.bf16.gmra.mrb[0].mxu0 %v1857
  %v2033 = vpop.f32.mrb[0].mxu0
  %v2034 = vadd.f32 0.0, %v2033
  %v2035 = vpop.f32.mrb[0].mxu0
  %v2036 = vadd.f32 0.0, %v2035
  %v2037 = vpop.f32.mrb[0].mxu0
  %v2038 = vpop.f32.mrb[0].mxu0
  %2039 = vdwg.mxu0
  %2040 = vmatprep.subr.bf16.mxu0 %v230
  %2041 = vmatpush1.bf16.msra.mxu0 %v229
  %2042 = vmatprep.subr.bf16.mxu0 %v242
  %2043 = vmatpush1.bf16.msra.mxu0 %v239
  %2044 = vmatprep.subr.bf16.mxu0 0
  %2045 = vmatpush1.bf16.msra.mxu0 0
  %2046 = vmatprep.subr.bf16.mxu0 0
  %2047 = vmatpush1.bf16.msra.mxu0 0
  %2048 = vmatprep.subr.bf16.mxu0 0
  %2049 = vmatpush1.bf16.msra.mxu0 0
  %2050 = vmatprep.subr.bf16.mxu0 0
  %2051 = vmatpush1.bf16.msra.mxu0 0
  %2052 = vmatprep.subr.bf16.mxu0 0
  %2053 = vmatpush1.bf16.msra.mxu0 0
  %2054 = vmatprep.subr.bf16.mxu0 0
  %2055 = vmatpush1.bf16.msra.mxu0 0
  %2056 = vmatprep.subr.bf16.mxu0 0
  %2057 = vmatpush1.bf16.msra.mxu0 0
  %2058 = vmatprep.subr.bf16.mxu0 0
  %2059 = vmatpush1.bf16.msra.mxu0 0
  %2060 = vmatprep.subr.bf16.mxu0 0
  %2061 = vmatpush1.bf16.msra.mxu0 0
  %2062 = vmatprep.subr.bf16.mxu0 0
  %2063 = vmatpush1.bf16.msra.mxu0 0
  %2064 = vmatprep.subr.bf16.mxu0 0
  %2065 = vmatpush1.bf16.msra.mxu0 0
  %2066 = vmatprep.subr.bf16.mxu0 0
  %2067 = vmatpush1.bf16.msra.mxu0 0
  %2068 = vmatprep.subr.bf16.mxu0 0
  %2069 = vmatpush1.bf16.msra.mxu0 0
  %2070 = vmatprep.subr.bf16.mxu0 0
  %2071 = vmatpush1.bf16.msra.mxu0 0
  %2072 = vmatprep.mubr.bf16.mxu0 0
  %2073 = vmatmul.mubr.bf16.gmra.mrb[0].mxu0 %v1601
  %v2074 = vpop.f32.mrb[0].mxu0
  %v2075 = vadd.f32 %v2034, %v2074
  %v2076 = vpop.f32.mrb[0].mxu0
  %v2077 = vadd.f32 %v2036, %v2076
  %v2078 = vpop.f32.mrb[0].mxu0
  %v2079 = vpop.f32.mrb[0].mxu0
  %2080 = vdwg.mxu0
  %2081 = vmatprep.subr.bf16.mxu0 %v350
  %2082 = vmatpush1.bf16.msra.mxu0 %v349
  %2083 = vmatprep.subr.bf16.mxu0 %v362
  %2084 = vmatpush1.bf16.msra.mxu0 %v359
  %2085 = vmatprep.subr.bf16.mxu0 0
  %2086 = vmatpush1.bf16.msra.mxu0 0
  %2087 = vmatprep.subr.bf16.mxu0 0
  %2088 = vmatpush1.bf16.msra.mxu0 0
  %2089 = vmatprep.subr.bf16.mxu0 0
  %2090 = vmatpush1.bf16.msra.mxu0 0
  %2091 = vmatprep.subr.bf16.mxu0 0
  %2092 = vmatpush1.bf16.msra.mxu0 0
  %2093 = vmatprep.subr.bf16.mxu0 0
  %2094 = vmatpush1.bf16.msra.mxu0 0
  %2095 = vmatprep.subr.bf16.mxu0 0
  %2096 = vmatpush1.bf16.msra.mxu0 0
  %2097 = vmatprep.subr.bf16.mxu0 0
  %2098 = vmatpush1.bf16.msra.mxu0 0
  %2099 = vmatprep.subr.bf16.mxu0 0
  %2100 = vmatpush1.bf16.msra.mxu0 0
  %2101 = vmatprep.subr.bf16.mxu0 0
  %2102 = vmatpush1.bf16.msra.mxu0 0
  %2103 = vmatprep.subr.bf16.mxu0 0
  %2104 = vmatpush1.bf16.msra.mxu0 0
  %2105 = vmatprep.subr.bf16.mxu0 0
  %2106 = vmatpush1.bf16.msra.mxu0 0
  %2107 = vmatprep.subr.bf16.mxu0 0
  %2108 = vmatpush1.bf16.msra.mxu0 0
  %2109 = vmatprep.subr.bf16.mxu0 0
  %2110 = vmatpush1.bf16.msra.mxu0 0
  %2111 = vmatprep.subr.bf16.mxu0 0
  %2112 = vmatpush1.bf16.msra.mxu0 0
  %2113 = vmatprep.mubr.bf16.mxu0 0
  %2114 = vmatmul.mubr.bf16.gmra.mrb[0].mxu0 %v1950
  %v2115 = vpop.f32.mrb[0].mxu0
  %v2116 = vadd.f32 0.0, %v2115
  %v2117 = vpop.f32.mrb[0].mxu0
  %v2118 = vadd.f32 0.0, %v2117
  %v2119 = vpop.f32.mrb[0].mxu0
  %v2120 = vpop.f32.mrb[0].mxu0
  %2121 = vdwg.mxu0
  %v2122 = vadd.f32 %v2075, %v2116
  %v2123 = vadd.f32 %v2077, %v2118
  %v2124 = vld [vmem:[%s0 + $0xd] sm:$0x1]
  %v2125 = vld [vmem:[%s0 + $0x2d] sm:$0x1]
  %v2126 = vld [vmem:[%s0 + $0x4d] sm:$0x1]
  %v2127 = vld [vmem:[%s0 + $0x6d] sm:$0x1]
  %v2128 = vld [vmem:[%s0 + $0x8d] sm:$0x1]
  %v2129 = vld [vmem:[%s0 + $0xad] sm:$0x1]
  %v2130 = vld [vmem:[%s0 + $0xcd] sm:$0x1]
  %v2131 = vld [vmem:[%s0 + $0xed] sm:$0x1]
  %v2132 = vpack.c.bf16 %v2124, %v2124
  %v2133 = vpack.c.bf16 %v2125, %v2125
  %v2134 = vpack.c.bf16 %v2126, %v2126
  %v2135 = vpack.c.bf16 %v2127, %v2127
  %v2136 = vpack.c.bf16 %v2128, %v2128
  %v2137 = vpack.c.bf16 %v2129, %v2129
  %v2138 = vpack.c.bf16 %v2130, %v2130
  %v2139 = vpack.c.bf16 %v2131, %v2131
  %v2148 = vunpack.c.l.b16 %v2132
  %v2149 = vunpack.c.l.b16 %v2133
  %v2150 = vunpack.c.l.b16 %v2134
  %v2151 = vunpack.c.l.b16 %v2135
  %v2152 = vunpack.c.l.b16 %v2136
  %v2153 = vunpack.c.l.b16 %v2137
  %v2154 = vunpack.c.l.b16 %v2138
  %v2155 = vunpack.c.l.b16 %v2139
  %v2156 = vrot.slane %v2149, 7
  %v2157 = vsel %vm95, %v2156, %v2148
  %v2158 = vrot.slane %v2150, 6
  %v2159 = vsel %vm98, %v2158, %v2157
  %v2160 = vrot.slane %v2151, 5
  %v2161 = vsel %vm101, %v2160, %v2159
  %v2162 = vrot.slane %v2152, 4
  %v2163 = vsel %vm104, %v2162, %v2161
  %v2164 = vrot.slane %v2153, 3
  %v2165 = vsel %vm107, %v2164, %v2163
  %v2166 = vrot.slane %v2154, 2
  %v2167 = vsel %vm110, %v2166, %v2165
  %v2168 = vrot.slane %v2155, 1
  %v2169 = vsel %vm113, %v2168, %v2167
  %v2170 = vpack.c.b16 %v2169, %v2169
  %v2172 = vsel %vm134, %v2170, 0
  %2174 = vmatprep.subr.bf16.mxu0 %v472
  %2175 = vmatpush1.bf16.msra.mxu0 %v471
  %2176 = vmatprep.subr.bf16.mxu0 %v484
  %2177 = vmatpush1.bf16.msra.mxu0 %v481
  %2178 = vmatprep.subr.bf16.mxu0 0
  %2179 = vmatpush1.bf16.msra.mxu0 0
  %2180 = vmatprep.subr.bf16.mxu0 0
  %2181 = vmatpush1.bf16.msra.mxu0 0
  %2182 = vmatprep.subr.bf16.mxu0 0
  %2183 = vmatpush1.bf16.msra.mxu0 0
  %2184 = vmatprep.subr.bf16.mxu0 0
  %2185 = vmatpush1.bf16.msra.mxu0 0
  %2186 = vmatprep.subr.bf16.mxu0 0
  %2187 = vmatpush1.bf16.msra.mxu0 0
  %2188 = vmatprep.subr.bf16.mxu0 0
  %2189 = vmatpush1.bf16.msra.mxu0 0
  %2190 = vmatprep.subr.bf16.mxu0 0
  %2191 = vmatpush1.bf16.msra.mxu0 0
  %2192 = vmatprep.subr.bf16.mxu0 0
  %2193 = vmatpush1.bf16.msra.mxu0 0
  %2194 = vmatprep.subr.bf16.mxu0 0
  %2195 = vmatpush1.bf16.msra.mxu0 0
  %2196 = vmatprep.subr.bf16.mxu0 0
  %2197 = vmatpush1.bf16.msra.mxu0 0
  %2198 = vmatprep.subr.bf16.mxu0 0
  %2199 = vmatpush1.bf16.msra.mxu0 0
  %2200 = vmatprep.subr.bf16.mxu0 0
  %2201 = vmatpush1.bf16.msra.mxu0 0
  %2202 = vmatprep.subr.bf16.mxu0 0
  %2203 = vmatpush1.bf16.msra.mxu0 0
  %2204 = vmatprep.subr.bf16.mxu0 0
  %2205 = vmatpush1.bf16.msra.mxu0 0
  %2206 = vmatprep.mubr.bf16.mxu0 0
  %2207 = vmatmul.mubr.bf16.gmra.mrb[0].mxu0 %v2172
  %v2208 = vpop.f32.mrb[0].mxu0
  %v2209 = vadd.f32 0.0, %v2208
  %v2210 = vpop.f32.mrb[0].mxu0
  %v2211 = vadd.f32 0.0, %v2210
  %v2212 = vpop.f32.mrb[0].mxu0
  %v2213 = vpop.f32.mrb[0].mxu0
  %2214 = vdwg.mxu0
  %v2215 = vadd.f32 %v2122, %v2209
  %v2216 = vadd.f32 %v2123, %v2211
  %v2217 = vld [vmem:[%s0 + $0xe] sm:$0x1]
  %v2218 = vld [vmem:[%s0 + $0x2e] sm:$0x1]
  %v2219 = vld [vmem:[%s0 + $0x4e] sm:$0x1]
  %v2220 = vld [vmem:[%s0 + $0x6e] sm:$0x1]
  %v2221 = vld [vmem:[%s0 + $0x8e] sm:$0x1]
  %v2222 = vld [vmem:[%s0 + $0xae] sm:$0x1]
  %v2223 = vld [vmem:[%s0 + $0xce] sm:$0x1]
  %v2224 = vld [vmem:[%s0 + $0xee] sm:$0x1]
  %v2225 = vpack.c.bf16 %v2217, %v2217
  %v2226 = vpack.c.bf16 %v2218, %v2218
  %v2227 = vpack.c.bf16 %v2219, %v2219
  %v2228 = vpack.c.bf16 %v2220, %v2220
  %v2229 = vpack.c.bf16 %v2221, %v2221
  %v2230 = vpack.c.bf16 %v2222, %v2222
  %v2231 = vpack.c.bf16 %v2223, %v2223
  %v2232 = vpack.c.bf16 %v2224, %v2224
  %v2241 = vunpack.c.l.b16 %v2225
  %v2242 = vunpack.c.l.b16 %v2226
  %v2243 = vunpack.c.l.b16 %v2227
  %v2244 = vunpack.c.l.b16 %v2228
  %v2245 = vunpack.c.l.b16 %v2229
  %v2246 = vunpack.c.l.b16 %v2230
  %v2247 = vunpack.c.l.b16 %v2231
  %v2248 = vunpack.c.l.b16 %v2232
  %v2249 = vrot.slane %v2242, 7
  %v2250 = vsel %vm95, %v2249, %v2241
  %v2251 = vrot.slane %v2243, 6
  %v2252 = vsel %vm98, %v2251, %v2250
  %v2253 = vrot.slane %v2244, 5
  %v2254 = vsel %vm101, %v2253, %v2252
  %v2255 = vrot.slane %v2245, 4
  %v2256 = vsel %vm104, %v2255, %v2254
  %v2257 = vrot.slane %v2246, 3
  %v2258 = vsel %vm107, %v2257, %v2256
  %v2259 = vrot.slane %v2247, 2
  %v2260 = vsel %vm110, %v2259, %v2258
  %v2261 = vrot.slane %v2248, 1
  %v2262 = vsel %vm113, %v2261, %v2260
  %v2263 = vpack.c.b16 %v2262, %v2262
  %v2265 = vsel %vm134, %v2263, 0
  %2267 = vmatprep.subr.bf16.mxu0 %v594
  %2268 = vmatpush1.bf16.msra.mxu0 %v593
  %2269 = vmatprep.subr.bf16.mxu0 %v606
  %2270 = vmatpush1.bf16.msra.mxu0 %v603
  %2271 = vmatprep.subr.bf16.mxu0 0
  %2272 = vmatpush1.bf16.msra.mxu0 0
  %2273 = vmatprep.subr.bf16.mxu0 0
  %2274 = vmatpush1.bf16.msra.mxu0 0
  %2275 = vmatprep.subr.bf16.mxu0 0
  %2276 = vmatpush1.bf16.msra.mxu0 0
  %2277 = vmatprep.subr.bf16.mxu0 0
  %2278 = vmatpush1.bf16.msra.mxu0 0
  %2279 = vmatprep.subr.bf16.mxu0 0
  %2280 = vmatpush1.bf16.msra.mxu0 0
  %2281 = vmatprep.subr.bf16.mxu0 0
  %2282 = vmatpush1.bf16.msra.mxu0 0
  %2283 = vmatprep.subr.bf16.mxu0 0
  %2284 = vmatpush1.bf16.msra.mxu0 0
  %2285 = vmatprep.subr.bf16.mxu0 0
  %2286 = vmatpush1.bf16.msra.mxu0 0
  %2287 = vmatprep.subr.bf16.mxu0 0
  %2288 = vmatpush1.bf16.msra.mxu0 0
  %2289 = vmatprep.subr.bf16.mxu0 0
  %2290 = vmatpush1.bf16.msra.mxu0 0
  %2291 = vmatprep.subr.bf16.mxu0 0
  %2292 = vmatpush1.bf16.msra.mxu0 0
  %2293 = vmatprep.subr.bf16.mxu0 0
  %2294 = vmatpush1.bf16.msra.mxu0 0
  %2295 = vmatprep.subr.bf16.mxu0 0
  %2296 = vmatpush1.bf16.msra.mxu0 0
  %2297 = vmatprep.subr.bf16.mxu0 0
  %2298 = vmatpush1.bf16.msra.mxu0 0
  %2299 = vmatprep.mubr.bf16.mxu0 0
  %2300 = vmatmul.mubr.bf16.gmra.mrb[0].mxu0 %v2265
  %v2301 = vpop.f32.mrb[0].mxu0
  %v2302 = vadd.f32 0.0, %v2301
  %v2303 = vpop.f32.mrb[0].mxu0
  %v2304 = vadd.f32 0.0, %v2303
  %v2305 = vpop.f32.mrb[0].mxu0
  %v2306 = vpop.f32.mrb[0].mxu0
  %2307 = vdwg.mxu0
  %v2308 = vadd.f32 %v2215, %v2302
  %v2309 = vadd.f32 %v2216, %v2304
  %v2310 = vadd.f32 %v2308, %v655
  %v2311 = vadd.f32 %v2309, %v659
  %v2312 = vmax.f32 %v2310, 0.0
  %v2313 = vmax.f32 %v2311, 0.0
  %v2314 = vmax.f32 %v1997, %v2312
  %v2315 = vmax.f32 %v1998, %v2313
  %2317 = vrot.lane.b32.xlu0 %v2314, 112
  %v2318 = vpop.permute.xlu0 %2317
  %v2320 = vmax.f32 %v2314, %v2318
  %2322 = vrot.lane.b32.xlu0 %v2315, 112
  %v2323 = vpop.permute.xlu0 %2322
  %v2325 = vmax.f32 %v2315, %v2323
  %2327 = vrot.lane.b32.xlu0 %v2320, 112
  %v2328 = vpop.permute.xlu0 %2327
  %2330 = vrot.lane.b32.xlu0 %v2320, 96
  %v2331 = vpop.permute.xlu0 %2330
  %2333 = vrot.lane.b32.xlu0 %v2320, 80
  %v2334 = vpop.permute.xlu0 %2333
  %2337 = vrot.lane.b32.xlu0 %v2325, 64
  %v2338 = vpop.permute.xlu0 %2337
  %2340 = vrot.lane.b32.xlu0 %v2325, 48
  %v2341 = vpop.permute.xlu0 %2340
  %v2343 = vsel %vm1010, %v2320, %v2328
  %v2344 = vsel %vm1012, %v2343, %v2331
  %v2345 = vsel %vm1014, %v2344, %v2334
  %v2346 = vsel %vm1016, %v2345, %v2338
  %v2347 = vsel %vm1018, %v2346, %v2341
  %2348 = vmatprep.subr.bf16.mxu0 %v129
  %2349 = vmatpush1.bf16.msra.mxu0 %v128
  %2350 = vmatprep.subr.bf16.mxu0 %v143
  %2351 = vmatpush1.bf16.msra.mxu0 %v140
  %2352 = vmatprep.subr.bf16.mxu0 0
  %2353 = vmatpush1.bf16.msra.mxu0 0
  %2354 = vmatprep.subr.bf16.mxu0 0
  %2355 = vmatpush1.bf16.msra.mxu0 0
  %2356 = vmatprep.subr.bf16.mxu0 0
  %2357 = vmatpush1.bf16.msra.mxu0 0
  %2358 = vmatprep.subr.bf16.mxu0 0
  %2359 = vmatpush1.bf16.msra.mxu0 0
  %2360 = vmatprep.subr.bf16.mxu0 0
  %2361 = vmatpush1.bf16.msra.mxu0 0
  %2362 = vmatprep.subr.bf16.mxu0 0
  %2363 = vmatpush1.bf16.msra.mxu0 0
  %2364 = vmatprep.subr.bf16.mxu0 0
  %2365 = vmatpush1.bf16.msra.mxu0 0
  %2366 = vmatprep.subr.bf16.mxu0 0
  %2367 = vmatpush1.bf16.msra.mxu0 0
  %2368 = vmatprep.subr.bf16.mxu0 0
  %2369 = vmatpush1.bf16.msra.mxu0 0
  %2370 = vmatprep.subr.bf16.mxu0 0
  %2371 = vmatpush1.bf16.msra.mxu0 0
  %2372 = vmatprep.subr.bf16.mxu0 0
  %2373 = vmatpush1.bf16.msra.mxu0 0
  %2374 = vmatprep.subr.bf16.mxu0 0
  %2375 = vmatpush1.bf16.msra.mxu0 0
  %2376 = vmatprep.subr.bf16.mxu0 0
  %2377 = vmatpush1.bf16.msra.mxu0 0
  %2378 = vmatprep.subr.bf16.mxu0 0
  %2379 = vmatpush1.bf16.msra.mxu0 0
  %2380 = vmatprep.mubr.bf16.mxu0 0
  %2381 = vmatmul.mubr.bf16.gmra.mrb[0].mxu0 %v2172
  %v2382 = vpop.f32.mrb[0].mxu0
  %v2383 = vadd.f32 0.0, %v2382
  %v2384 = vpop.f32.mrb[0].mxu0
  %v2385 = vadd.f32 0.0, %v2384
  %v2386 = vpop.f32.mrb[0].mxu0
  %v2387 = vpop.f32.mrb[0].mxu0
  %2388 = vdwg.mxu0
  %2389 = vmatprep.subr.bf16.mxu0 %v230
  %2390 = vmatpush1.bf16.msra.mxu0 %v229
  %2391 = vmatprep.subr.bf16.mxu0 %v242
  %2392 = vmatpush1.bf16.msra.mxu0 %v239
  %2393 = vmatprep.subr.bf16.mxu0 0
  %2394 = vmatpush1.bf16.msra.mxu0 0
  %2395 = vmatprep.subr.bf16.mxu0 0
  %2396 = vmatpush1.bf16.msra.mxu0 0
  %2397 = vmatprep.subr.bf16.mxu0 0
  %2398 = vmatpush1.bf16.msra.mxu0 0
  %2399 = vmatprep.subr.bf16.mxu0 0
  %2400 = vmatpush1.bf16.msra.mxu0 0
  %2401 = vmatprep.subr.bf16.mxu0 0
  %2402 = vmatpush1.bf16.msra.mxu0 0
  %2403 = vmatprep.subr.bf16.mxu0 0
  %2404 = vmatpush1.bf16.msra.mxu0 0
  %2405 = vmatprep.subr.bf16.mxu0 0
  %2406 = vmatpush1.bf16.msra.mxu0 0
  %2407 = vmatprep.subr.bf16.mxu0 0
  %2408 = vmatpush1.bf16.msra.mxu0 0
  %2409 = vmatprep.subr.bf16.mxu0 0
  %2410 = vmatpush1.bf16.msra.mxu0 0
  %2411 = vmatprep.subr.bf16.mxu0 0
  %2412 = vmatpush1.bf16.msra.mxu0 0
  %2413 = vmatprep.subr.bf16.mxu0 0
  %2414 = vmatpush1.bf16.msra.mxu0 0
  %2415 = vmatprep.subr.bf16.mxu0 0
  %2416 = vmatpush1.bf16.msra.mxu0 0
  %2417 = vmatprep.subr.bf16.mxu0 0
  %2418 = vmatpush1.bf16.msra.mxu0 0
  %2419 = vmatprep.subr.bf16.mxu0 0
  %2420 = vmatpush1.bf16.msra.mxu0 0
  %2421 = vmatprep.mubr.bf16.mxu0 0
  %2422 = vmatmul.mubr.bf16.gmra.mrb[0].mxu0 %v1950
  %v2423 = vpop.f32.mrb[0].mxu0
  %v2424 = vadd.f32 %v2383, %v2423
  %v2425 = vpop.f32.mrb[0].mxu0
  %v2426 = vadd.f32 %v2385, %v2425
  %v2427 = vpop.f32.mrb[0].mxu0
  %v2428 = vpop.f32.mrb[0].mxu0
  %2429 = vdwg.mxu0
  %2430 = vmatprep.subr.bf16.mxu0 %v350
  %2431 = vmatpush1.bf16.msra.mxu0 %v349
  %2432 = vmatprep.subr.bf16.mxu0 %v362
  %2433 = vmatpush1.bf16.msra.mxu0 %v359
  %2434 = vmatprep.subr.bf16.mxu0 0
  %2435 = vmatpush1.bf16.msra.mxu0 0
  %2436 = vmatprep.subr.bf16.mxu0 0
  %2437 = vmatpush1.bf16.msra.mxu0 0
  %2438 = vmatprep.subr.bf16.mxu0 0
  %2439 = vmatpush1.bf16.msra.mxu0 0
  %2440 = vmatprep.subr.bf16.mxu0 0
  %2441 = vmatpush1.bf16.msra.mxu0 0
  %2442 = vmatprep.subr.bf16.mxu0 0
  %2443 = vmatpush1.bf16.msra.mxu0 0
  %2444 = vmatprep.subr.bf16.mxu0 0
  %2445 = vmatpush1.bf16.msra.mxu0 0
  %2446 = vmatprep.subr.bf16.mxu0 0
  %2447 = vmatpush1.bf16.msra.mxu0 0
  %2448 = vmatprep.subr.bf16.mxu0 0
  %2449 = vmatpush1.bf16.msra.mxu0 0
  %2450 = vmatprep.subr.bf16.mxu0 0
  %2451 = vmatpush1.bf16.msra.mxu0 0
  %2452 = vmatprep.subr.bf16.mxu0 0
  %2453 = vmatpush1.bf16.msra.mxu0 0
  %2454 = vmatprep.subr.bf16.mxu0 0
  %2455 = vmatpush1.bf16.msra.mxu0 0
  %2456 = vmatprep.subr.bf16.mxu0 0
  %2457 = vmatpush1.bf16.msra.mxu0 0
  %2458 = vmatprep.subr.bf16.mxu0 0
  %2459 = vmatpush1.bf16.msra.mxu0 0
  %2460 = vmatprep.subr.bf16.mxu0 0
  %2461 = vmatpush1.bf16.msra.mxu0 0
  %2462 = vmatprep.mubr.bf16.mxu0 0
  %2463 = vmatmul.mubr.bf16.gmra.mrb[0].mxu0 %v2265
  %v2464 = vpop.f32.mrb[0].mxu0
  %v2465 = vadd.f32 0.0, %v2464
  %v2466 = vpop.f32.mrb[0].mxu0
  %v2467 = vadd.f32 0.0, %v2466
  %v2468 = vpop.f32.mrb[0].mxu0
  %v2469 = vpop.f32.mrb[0].mxu0
  %2470 = vdwg.mxu0
  %v2471 = vadd.f32 %v2424, %v2465
  %v2472 = vadd.f32 %v2426, %v2467
  %v2473 = vld [vmem:[%s0 + $0xf] sm:$0x1]
  %v2474 = vld [vmem:[%s0 + $0x2f] sm:$0x1]
  %v2475 = vld [vmem:[%s0 + $0x4f] sm:$0x1]
  %v2476 = vld [vmem:[%s0 + $0x6f] sm:$0x1]
  %v2477 = vld [vmem:[%s0 + $0x8f] sm:$0x1]
  %v2478 = vld [vmem:[%s0 + $0xaf] sm:$0x1]
  %v2479 = vld [vmem:[%s0 + $0xcf] sm:$0x1]
  %v2480 = vld [vmem:[%s0 + $0xef] sm:$0x1]
  %v2481 = vpack.c.bf16 %v2473, %v2473
  %v2482 = vpack.c.bf16 %v2474, %v2474
  %v2483 = vpack.c.bf16 %v2475, %v2475
  %v2484 = vpack.c.bf16 %v2476, %v2476
  %v2485 = vpack.c.bf16 %v2477, %v2477
  %v2486 = vpack.c.bf16 %v2478, %v2478
  %v2487 = vpack.c.bf16 %v2479, %v2479
  %v2488 = vpack.c.bf16 %v2480, %v2480
  %v2497 = vunpack.c.l.b16 %v2481
  %v2498 = vunpack.c.l.b16 %v2482
  %v2499 = vunpack.c.l.b16 %v2483
  %v2500 = vunpack.c.l.b16 %v2484
  %v2501 = vunpack.c.l.b16 %v2485
  %v2502 = vunpack.c.l.b16 %v2486
  %v2503 = vunpack.c.l.b16 %v2487
  %v2504 = vunpack.c.l.b16 %v2488
  %v2505 = vrot.slane %v2498, 7
  %v2506 = vsel %vm95, %v2505, %v2497
  %v2507 = vrot.slane %v2499, 6
  %v2508 = vsel %vm98, %v2507, %v2506
  %v2509 = vrot.slane %v2500, 5
  %v2510 = vsel %vm101, %v2509, %v2508
  %v2511 = vrot.slane %v2501, 4
  %v2512 = vsel %vm104, %v2511, %v2510
  %v2513 = vrot.slane %v2502, 3
  %v2514 = vsel %vm107, %v2513, %v2512
  %v2515 = vrot.slane %v2503, 2
  %v2516 = vsel %vm110, %v2515, %v2514
  %v2517 = vrot.slane %v2504, 1
  %v2518 = vsel %vm113, %v2517, %v2516
  %v2519 = vpack.c.b16 %v2518, %v2518
  %v2521 = vsel %vm134, %v2519, 0
  %2523 = vmatprep.subr.bf16.mxu0 %v472
  %2524 = vmatpush1.bf16.msra.mxu0 %v471
  %2525 = vmatprep.subr.bf16.mxu0 %v484
  %2526 = vmatpush1.bf16.msra.mxu0 %v481
  %2527 = vmatprep.subr.bf16.mxu0 0
  %2528 = vmatpush1.bf16.msra.mxu0 0
  %2529 = vmatprep.subr.bf16.mxu0 0
  %2530 = vmatpush1.bf16.msra.mxu0 0
  %2531 = vmatprep.subr.bf16.mxu0 0
  %2532 = vmatpush1.bf16.msra.mxu0 0
  %2533 = vmatprep.subr.bf16.mxu0 0
  %2534 = vmatpush1.bf16.msra.mxu0 0
  %2535 = vmatprep.subr.bf16.mxu0 0
  %2536 = vmatpush1.bf16.msra.mxu0 0
  %2537 = vmatprep.subr.bf16.mxu0 0
  %2538 = vmatpush1.bf16.msra.mxu0 0
  %2539 = vmatprep.subr.bf16.mxu0 0
  %2540 = vmatpush1.bf16.msra.mxu0 0
  %2541 = vmatprep.subr.bf16.mxu0 0
  %2542 = vmatpush1.bf16.msra.mxu0 0
  %2543 = vmatprep.subr.bf16.mxu0 0
  %2544 = vmatpush1.bf16.msra.mxu0 0
  %2545 = vmatprep.subr.bf16.mxu0 0
  %2546 = vmatpush1.bf16.msra.mxu0 0
  %2547 = vmatprep.subr.bf16.mxu0 0
  %2548 = vmatpush1.bf16.msra.mxu0 0
  %2549 = vmatprep.subr.bf16.mxu0 0
  %2550 = vmatpush1.bf16.msra.mxu0 0
  %2551 = vmatprep.subr.bf16.mxu0 0
  %2552 = vmatpush1.bf16.msra.mxu0 0
  %2553 = vmatprep.subr.bf16.mxu0 0
  %2554 = vmatpush1.bf16.msra.mxu0 0
  %2555 = vmatprep.mubr.bf16.mxu0 0
  %2556 = vmatmul.mubr.bf16.gmra.mrb[0].mxu0 %v2521
  %v2557 = vpop.f32.mrb[0].mxu0
  %v2558 = vadd.f32 0.0, %v2557
  %v2559 = vpop.f32.mrb[0].mxu0
  %v2560 = vadd.f32 0.0, %v2559
  %v2561 = vpop.f32.mrb[0].mxu0
  %v2562 = vpop.f32.mrb[0].mxu0
  %2563 = vdwg.mxu0
  %v2564 = vadd.f32 %v2471, %v2558
  %v2565 = vadd.f32 %v2472, %v2560
  %v2566 = vld [vmem:[%s0 + $0x10] sm:$0x1]
  %v2567 = vld [vmem:[%s0 + $0x30] sm:$0x1]
  %v2568 = vld [vmem:[%s0 + $0x50] sm:$0x1]
  %v2569 = vld [vmem:[%s0 + $0x70] sm:$0x1]
  %v2570 = vld [vmem:[%s0 + $0x90] sm:$0x1]
  %v2571 = vld [vmem:[%s0 + $0xb0] sm:$0x1]
  %v2572 = vld [vmem:[%s0 + $0xd0] sm:$0x1]
  %v2573 = vld [vmem:[%s0 + $0xf0] sm:$0x1]
  %v2574 = vpack.c.bf16 %v2566, %v2566
  %v2575 = vpack.c.bf16 %v2567, %v2567
  %v2576 = vpack.c.bf16 %v2568, %v2568
  %v2577 = vpack.c.bf16 %v2569, %v2569
  %v2578 = vpack.c.bf16 %v2570, %v2570
  %v2579 = vpack.c.bf16 %v2571, %v2571
  %v2580 = vpack.c.bf16 %v2572, %v2572
  %v2581 = vpack.c.bf16 %v2573, %v2573
  %v2590 = vunpack.c.l.b16 %v2574
  %v2591 = vunpack.c.l.b16 %v2575
  %v2592 = vunpack.c.l.b16 %v2576
  %v2593 = vunpack.c.l.b16 %v2577
  %v2594 = vunpack.c.l.b16 %v2578
  %v2595 = vunpack.c.l.b16 %v2579
  %v2596 = vunpack.c.l.b16 %v2580
  %v2597 = vunpack.c.l.b16 %v2581
  %v2598 = vrot.slane %v2591, 7
  %v2599 = vsel %vm95, %v2598, %v2590
  %v2600 = vrot.slane %v2592, 6
  %v2601 = vsel %vm98, %v2600, %v2599
  %v2602 = vrot.slane %v2593, 5
  %v2603 = vsel %vm101, %v2602, %v2601
  %v2604 = vrot.slane %v2594, 4
  %v2605 = vsel %vm104, %v2604, %v2603
  %v2606 = vrot.slane %v2595, 3
  %v2607 = vsel %vm107, %v2606, %v2605
  %v2608 = vrot.slane %v2596, 2
  %v2609 = vsel %vm110, %v2608, %v2607
  %v2610 = vrot.slane %v2597, 1
  %v2611 = vsel %vm113, %v2610, %v2609
  %v2612 = vpack.c.b16 %v2611, %v2611
  %v2614 = vsel %vm134, %v2612, 0
  %2616 = vmatprep.subr.bf16.mxu0 %v594
  %2617 = vmatpush1.bf16.msra.mxu0 %v593
  %2618 = vmatprep.subr.bf16.mxu0 %v606
  %2619 = vmatpush1.bf16.msra.mxu0 %v603
  %2620 = vmatprep.subr.bf16.mxu0 0
  %2621 = vmatpush1.bf16.msra.mxu0 0
  %2622 = vmatprep.subr.bf16.mxu0 0
  %2623 = vmatpush1.bf16.msra.mxu0 0
  %2624 = vmatprep.subr.bf16.mxu0 0
  %2625 = vmatpush1.bf16.msra.mxu0 0
  %2626 = vmatprep.subr.bf16.mxu0 0
  %2627 = vmatpush1.bf16.msra.mxu0 0
  %2628 = vmatprep.subr.bf16.mxu0 0
  %2629 = vmatpush1.bf16.msra.mxu0 0
  %2630 = vmatprep.subr.bf16.mxu0 0
  %2631 = vmatpush1.bf16.msra.mxu0 0
  %2632 = vmatprep.subr.bf16.mxu0 0
  %2633 = vmatpush1.bf16.msra.mxu0 0
  %2634 = vmatprep.subr.bf16.mxu0 0
  %2635 = vmatpush1.bf16.msra.mxu0 0
  %2636 = vmatprep.subr.bf16.mxu0 0
  %2637 = vmatpush1.bf16.msra.mxu0 0
  %2638 = vmatprep.subr.bf16.mxu0 0
  %2639 = vmatpush1.bf16.msra.mxu0 0
  %2640 = vmatprep.subr.bf16.mxu0 0
  %2641 = vmatpush1.bf16.msra.mxu0 0
  %2642 = vmatprep.subr.bf16.mxu0 0
  %2643 = vmatpush1.bf16.msra.mxu0 0
  %2644 = vmatprep.subr.bf16.mxu0 0
  %2645 = vmatpush1.bf16.msra.mxu0 0
  %2646 = vmatprep.subr.bf16.mxu0 0
  %2647 = vmatpush1.bf16.msra.mxu0 0
  %2648 = vmatprep.mubr.bf16.mxu0 0
  %2649 = vmatmul.mubr.bf16.gmra.mrb[0].mxu0 %v2614
  %v2650 = vpop.f32.mrb[0].mxu0
  %v2651 = vadd.f32 0.0, %v2650
  %v2652 = vpop.f32.mrb[0].mxu0
  %v2653 = vadd.f32 0.0, %v2652
  %v2654 = vpop.f32.mrb[0].mxu0
  %v2655 = vpop.f32.mrb[0].mxu0
  %2656 = vdwg.mxu0
  %v2657 = vadd.f32 %v2564, %v2651
  %v2658 = vadd.f32 %v2565, %v2653
  %v2659 = vadd.f32 %v2657, %v655
  %v2660 = vadd.f32 %v2658, %v659
  %v2661 = vmax.f32 %v2659, 0.0
  %v2662 = vmax.f32 %v2660, 0.0
  %2663 = vmatprep.subr.bf16.mxu0 %v129
  %2664 = vmatpush1.bf16.msra.mxu0 %v128
  %2665 = vmatprep.subr.bf16.mxu0 %v143
  %2666 = vmatpush1.bf16.msra.mxu0 %v140
  %2667 = vmatprep.subr.bf16.mxu0 0
  %2668 = vmatpush1.bf16.msra.mxu0 0
  %2669 = vmatprep.subr.bf16.mxu0 0
  %2670 = vmatpush1.bf16.msra.mxu0 0
  %2671 = vmatprep.subr.bf16.mxu0 0
  %2672 = vmatpush1.bf16.msra.mxu0 0
  %2673 = vmatprep.subr.bf16.mxu0 0
  %2674 = vmatpush1.bf16.msra.mxu0 0
  %2675 = vmatprep.subr.bf16.mxu0 0
  %2676 = vmatpush1.bf16.msra.mxu0 0
  %2677 = vmatprep.subr.bf16.mxu0 0
  %2678 = vmatpush1.bf16.msra.mxu0 0
  %2679 = vmatprep.subr.bf16.mxu0 0
  %2680 = vmatpush1.bf16.msra.mxu0 0
  %2681 = vmatprep.subr.bf16.mxu0 0
  %2682 = vmatpush1.bf16.msra.mxu0 0
  %2683 = vmatprep.subr.bf16.mxu0 0
  %2684 = vmatpush1.bf16.msra.mxu0 0
  %2685 = vmatprep.subr.bf16.mxu0 0
  %2686 = vmatpush1.bf16.msra.mxu0 0
  %2687 = vmatprep.subr.bf16.mxu0 0
  %2688 = vmatpush1.bf16.msra.mxu0 0
  %2689 = vmatprep.subr.bf16.mxu0 0
  %2690 = vmatpush1.bf16.msra.mxu0 0
  %2691 = vmatprep.subr.bf16.mxu0 0
  %2692 = vmatpush1.bf16.msra.mxu0 0
  %2693 = vmatprep.subr.bf16.mxu0 0
  %2694 = vmatpush1.bf16.msra.mxu0 0
  %2695 = vmatprep.mubr.bf16.mxu0 0
  %2696 = vmatmul.mubr.bf16.gmra.mrb[0].mxu0 %v2521
  %v2697 = vpop.f32.mrb[0].mxu0
  %v2698 = vadd.f32 0.0, %v2697
  %v2699 = vpop.f32.mrb[0].mxu0
  %v2700 = vadd.f32 0.0, %v2699
  %v2701 = vpop.f32.mrb[0].mxu0
  %v2702 = vpop.f32.mrb[0].mxu0
  %2703 = vdwg.mxu0
  %2704 = vmatprep.subr.bf16.mxu0 %v230
  %2705 = vmatpush1.bf16.msra.mxu0 %v229
  %2706 = vmatprep.subr.bf16.mxu0 %v242
  %2707 = vmatpush1.bf16.msra.mxu0 %v239
  %2708 = vmatprep.subr.bf16.mxu0 0
  %2709 = vmatpush1.bf16.msra.mxu0 0
  %2710 = vmatprep.subr.bf16.mxu0 0
  %2711 = vmatpush1.bf16.msra.mxu0 0
  %2712 = vmatprep.subr.bf16.mxu0 0
  %2713 = vmatpush1.bf16.msra.mxu0 0
  %2714 = vmatprep.subr.bf16.mxu0 0
  %2715 = vmatpush1.bf16.msra.mxu0 0
  %2716 = vmatprep.subr.bf16.mxu0 0
  %2717 = vmatpush1.bf16.msra.mxu0 0
  %2718 = vmatprep.subr.bf16.mxu0 0
  %2719 = vmatpush1.bf16.msra.mxu0 0
  %2720 = vmatprep.subr.bf16.mxu0 0
  %2721 = vmatpush1.bf16.msra.mxu0 0
  %2722 = vmatprep.subr.bf16.mxu0 0
  %2723 = vmatpush1.bf16.msra.mxu0 0
  %2724 = vmatprep.subr.bf16.mxu0 0
  %2725 = vmatpush1.bf16.msra.mxu0 0
  %2726 = vmatprep.subr.bf16.mxu0 0
  %2727 = vmatpush1.bf16.msra.mxu0 0
  %2728 = vmatprep.subr.bf16.mxu0 0
  %2729 = vmatpush1.bf16.msra.mxu0 0
  %2730 = vmatprep.subr.bf16.mxu0 0
  %2731 = vmatpush1.bf16.msra.mxu0 0
  %2732 = vmatprep.subr.bf16.mxu0 0
  %2733 = vmatpush1.bf16.msra.mxu0 0
  %2734 = vmatprep.subr.bf16.mxu0 0
  %2735 = vmatpush1.bf16.msra.mxu0 0
  %2736 = vmatprep.mubr.bf16.mxu0 0
  %2737 = vmatmul.mubr.bf16.gmra.mrb[0].mxu0 %v2265
  %v2738 = vpop.f32.mrb[0].mxu0
  %v2739 = vadd.f32 %v2698, %v2738
  %v2740 = vpop.f32.mrb[0].mxu0
  %v2741 = vadd.f32 %v2700, %v2740
  %v2742 = vpop.f32.mrb[0].mxu0
  %v2743 = vpop.f32.mrb[0].mxu0
  %2744 = vdwg.mxu0
  %2745 = vmatprep.subr.bf16.mxu0 %v350
  %2746 = vmatpush1.bf16.msra.mxu0 %v349
  %2747 = vmatprep.subr.bf16.mxu0 %v362
  %2748 = vmatpush1.bf16.msra.mxu0 %v359
  %2749 = vmatprep.subr.bf16.mxu0 0
  %2750 = vmatpush1.bf16.msra.mxu0 0
  %2751 = vmatprep.subr.bf16.mxu0 0
  %2752 = vmatpush1.bf16.msra.mxu0 0
  %2753 = vmatprep.subr.bf16.mxu0 0
  %2754 = vmatpush1.bf16.msra.mxu0 0
  %2755 = vmatprep.subr.bf16.mxu0 0
  %2756 = vmatpush1.bf16.msra.mxu0 0
  %2757 = vmatprep.subr.bf16.mxu0 0
  %2758 = vmatpush1.bf16.msra.mxu0 0
  %2759 = vmatprep.subr.bf16.mxu0 0
  %2760 = vmatpush1.bf16.msra.mxu0 0
  %2761 = vmatprep.subr.bf16.mxu0 0
  %2762 = vmatpush1.bf16.msra.mxu0 0
  %2763 = vmatprep.subr.bf16.mxu0 0
  %2764 = vmatpush1.bf16.msra.mxu0 0
  %2765 = vmatprep.subr.bf16.mxu0 0
  %2766 = vmatpush1.bf16.msra.mxu0 0
  %2767 = vmatprep.subr.bf16.mxu0 0
  %2768 = vmatpush1.bf16.msra.mxu0 0
  %2769 = vmatprep.subr.bf16.mxu0 0
  %2770 = vmatpush1.bf16.msra.mxu0 0
  %2771 = vmatprep.subr.bf16.mxu0 0
  %2772 = vmatpush1.bf16.msra.mxu0 0
  %2773 = vmatprep.subr.bf16.mxu0 0
  %2774 = vmatpush1.bf16.msra.mxu0 0
  %2775 = vmatprep.subr.bf16.mxu0 0
  %2776 = vmatpush1.bf16.msra.mxu0 0
  %2777 = vmatprep.mubr.bf16.mxu0 0
  %2778 = vmatmul.mubr.bf16.gmra.mrb[0].mxu0 %v2614
  %v2779 = vpop.f32.mrb[0].mxu0
  %v2780 = vadd.f32 0.0, %v2779
  %v2781 = vpop.f32.mrb[0].mxu0
  %v2782 = vadd.f32 0.0, %v2781
  %v2783 = vpop.f32.mrb[0].mxu0
  %v2784 = vpop.f32.mrb[0].mxu0
  %2785 = vdwg.mxu0
  %v2786 = vadd.f32 %v2739, %v2780
  %v2787 = vadd.f32 %v2741, %v2782
  %v2788 = vld [vmem:[%s0 + $0x11] sm:$0x1]
  %v2789 = vld [vmem:[%s0 + $0x31] sm:$0x1]
  %v2790 = vld [vmem:[%s0 + $0x51] sm:$0x1]
  %v2791 = vld [vmem:[%s0 + $0x71] sm:$0x1]
  %v2792 = vld [vmem:[%s0 + $0x91] sm:$0x1]
  %v2793 = vld [vmem:[%s0 + $0xb1] sm:$0x1]
  %v2794 = vld [vmem:[%s0 + $0xd1] sm:$0x1]
  %v2795 = vld [vmem:[%s0 + $0xf1] sm:$0x1]
  %v2796 = vpack.c.bf16 %v2788, %v2788
  %v2797 = vpack.c.bf16 %v2789, %v2789
  %v2798 = vpack.c.bf16 %v2790, %v2790
  %v2799 = vpack.c.bf16 %v2791, %v2791
  %v2800 = vpack.c.bf16 %v2792, %v2792
  %v2801 = vpack.c.bf16 %v2793, %v2793
  %v2802 = vpack.c.bf16 %v2794, %v2794
  %v2803 = vpack.c.bf16 %v2795, %v2795
  %v2812 = vunpack.c.l.b16 %v2796
  %v2813 = vunpack.c.l.b16 %v2797
  %v2814 = vunpack.c.l.b16 %v2798
  %v2815 = vunpack.c.l.b16 %v2799
  %v2816 = vunpack.c.l.b16 %v2800
  %v2817 = vunpack.c.l.b16 %v2801
  %v2818 = vunpack.c.l.b16 %v2802
  %v2819 = vunpack.c.l.b16 %v2803
  %v2820 = vrot.slane %v2813, 7
  %v2821 = vsel %vm95, %v2820, %v2812
  %v2822 = vrot.slane %v2814, 6
  %v2823 = vsel %vm98, %v2822, %v2821
  %v2824 = vrot.slane %v2815, 5
  %v2825 = vsel %vm101, %v2824, %v2823
  %v2826 = vrot.slane %v2816, 4
  %v2827 = vsel %vm104, %v2826, %v2825
  %v2828 = vrot.slane %v2817, 3
  %v2829 = vsel %vm107, %v2828, %v2827
  %v2830 = vrot.slane %v2818, 2
  %v2831 = vsel %vm110, %v2830, %v2829
  %v2832 = vrot.slane %v2819, 1
  %v2833 = vsel %vm113, %v2832, %v2831
  %v2834 = vpack.c.b16 %v2833, %v2833
  %v2836 = vsel %vm134, %v2834, 0
  %2838 = vmatprep.subr.bf16.mxu0 %v472
  %2839 = vmatpush1.bf16.msra.mxu0 %v471
  %2840 = vmatprep.subr.bf16.mxu0 %v484
  %2841 = vmatpush1.bf16.msra.mxu0 %v481
  %2842 = vmatprep.subr.bf16.mxu0 0
  %2843 = vmatpush1.bf16.msra.mxu0 0
  %2844 = vmatprep.subr.bf16.mxu0 0
  %2845 = vmatpush1.bf16.msra.mxu0 0
  %2846 = vmatprep.subr.bf16.mxu0 0
  %2847 = vmatpush1.bf16.msra.mxu0 0
  %2848 = vmatprep.subr.bf16.mxu0 0
  %2849 = vmatpush1.bf16.msra.mxu0 0
  %2850 = vmatprep.subr.bf16.mxu0 0
  %2851 = vmatpush1.bf16.msra.mxu0 0
  %2852 = vmatprep.subr.bf16.mxu0 0
  %2853 = vmatpush1.bf16.msra.mxu0 0
  %2854 = vmatprep.subr.bf16.mxu0 0
  %2855 = vmatpush1.bf16.msra.mxu0 0
  %2856 = vmatprep.subr.bf16.mxu0 0
  %2857 = vmatpush1.bf16.msra.mxu0 0
  %2858 = vmatprep.subr.bf16.mxu0 0
  %2859 = vmatpush1.bf16.msra.mxu0 0
  %2860 = vmatprep.subr.bf16.mxu0 0
  %2861 = vmatpush1.bf16.msra.mxu0 0
  %2862 = vmatprep.subr.bf16.mxu0 0
  %2863 = vmatpush1.bf16.msra.mxu0 0
  %2864 = vmatprep.subr.bf16.mxu0 0
  %2865 = vmatpush1.bf16.msra.mxu0 0
  %2866 = vmatprep.subr.bf16.mxu0 0
  %2867 = vmatpush1.bf16.msra.mxu0 0
  %2868 = vmatprep.subr.bf16.mxu0 0
  %2869 = vmatpush1.bf16.msra.mxu0 0
  %2870 = vmatprep.mubr.bf16.mxu0 0
  %2871 = vmatmul.mubr.bf16.gmra.mrb[0].mxu0 %v2836
  %v2872 = vpop.f32.mrb[0].mxu0
  %v2873 = vadd.f32 0.0, %v2872
  %v2874 = vpop.f32.mrb[0].mxu0
  %v2875 = vadd.f32 0.0, %v2874
  %v2876 = vpop.f32.mrb[0].mxu0
  %v2877 = vpop.f32.mrb[0].mxu0
  %2878 = vdwg.mxu0
  %v2879 = vadd.f32 %v2786, %v2873
  %v2880 = vadd.f32 %v2787, %v2875
  %v2881 = vld [vmem:[%s0 + $0x12] sm:$0x1]
  %v2882 = vld [vmem:[%s0 + $0x32] sm:$0x1]
  %v2883 = vld [vmem:[%s0 + $0x52] sm:$0x1]
  %v2884 = vld [vmem:[%s0 + $0x72] sm:$0x1]
  %v2885 = vld [vmem:[%s0 + $0x92] sm:$0x1]
  %v2886 = vld [vmem:[%s0 + $0xb2] sm:$0x1]
  %v2887 = vld [vmem:[%s0 + $0xd2] sm:$0x1]
  %v2888 = vld [vmem:[%s0 + $0xf2] sm:$0x1]
  %v2889 = vpack.c.bf16 %v2881, %v2881
  %v2890 = vpack.c.bf16 %v2882, %v2882
  %v2891 = vpack.c.bf16 %v2883, %v2883
  %v2892 = vpack.c.bf16 %v2884, %v2884
  %v2893 = vpack.c.bf16 %v2885, %v2885
  %v2894 = vpack.c.bf16 %v2886, %v2886
  %v2895 = vpack.c.bf16 %v2887, %v2887
  %v2896 = vpack.c.bf16 %v2888, %v2888
  %v2905 = vunpack.c.l.b16 %v2889
  %v2906 = vunpack.c.l.b16 %v2890
  %v2907 = vunpack.c.l.b16 %v2891
  %v2908 = vunpack.c.l.b16 %v2892
  %v2909 = vunpack.c.l.b16 %v2893
  %v2910 = vunpack.c.l.b16 %v2894
  %v2911 = vunpack.c.l.b16 %v2895
  %v2912 = vunpack.c.l.b16 %v2896
  %v2913 = vrot.slane %v2906, 7
  %v2914 = vsel %vm95, %v2913, %v2905
  %v2915 = vrot.slane %v2907, 6
  %v2916 = vsel %vm98, %v2915, %v2914
  %v2917 = vrot.slane %v2908, 5
  %v2918 = vsel %vm101, %v2917, %v2916
  %v2919 = vrot.slane %v2909, 4
  %v2920 = vsel %vm104, %v2919, %v2918
  %v2921 = vrot.slane %v2910, 3
  %v2922 = vsel %vm107, %v2921, %v2920
  %v2923 = vrot.slane %v2911, 2
  %v2924 = vsel %vm110, %v2923, %v2922
  %v2925 = vrot.slane %v2912, 1
  %v2926 = vsel %vm113, %v2925, %v2924
  %v2927 = vpack.c.b16 %v2926, %v2926
  %v2929 = vsel %vm134, %v2927, 0
  %2931 = vmatprep.subr.bf16.mxu0 %v594
  %2932 = vmatpush1.bf16.msra.mxu0 %v593
  %2933 = vmatprep.subr.bf16.mxu0 %v606
  %2934 = vmatpush1.bf16.msra.mxu0 %v603
  %2935 = vmatprep.subr.bf16.mxu0 0
  %2936 = vmatpush1.bf16.msra.mxu0 0
  %2937 = vmatprep.subr.bf16.mxu0 0
  %2938 = vmatpush1.bf16.msra.mxu0 0
  %2939 = vmatprep.subr.bf16.mxu0 0
  %2940 = vmatpush1.bf16.msra.mxu0 0
  %2941 = vmatprep.subr.bf16.mxu0 0
  %2942 = vmatpush1.bf16.msra.mxu0 0
  %2943 = vmatprep.subr.bf16.mxu0 0
  %2944 = vmatpush1.bf16.msra.mxu0 0
  %2945 = vmatprep.subr.bf16.mxu0 0
  %2946 = vmatpush1.bf16.msra.mxu0 0
  %2947 = vmatprep.subr.bf16.mxu0 0
  %2948 = vmatpush1.bf16.msra.mxu0 0
  %2949 = vmatprep.subr.bf16.mxu0 0
  %2950 = vmatpush1.bf16.msra.mxu0 0
  %2951 = vmatprep.subr.bf16.mxu0 0
  %2952 = vmatpush1.bf16.msra.mxu0 0
  %2953 = vmatprep.subr.bf16.mxu0 0
  %2954 = vmatpush1.bf16.msra.mxu0 0
  %2955 = vmatprep.subr.bf16.mxu0 0
  %2956 = vmatpush1.bf16.msra.mxu0 0
  %2957 = vmatprep.subr.bf16.mxu0 0
  %2958 = vmatpush1.bf16.msra.mxu0 0
  %2959 = vmatprep.subr.bf16.mxu0 0
  %2960 = vmatpush1.bf16.msra.mxu0 0
  %2961 = vmatprep.subr.bf16.mxu0 0
  %2962 = vmatpush1.bf16.msra.mxu0 0
  %2963 = vmatprep.mubr.bf16.mxu0 0
  %2964 = vmatmul.mubr.bf16.gmra.mrb[0].mxu0 %v2929
  %v2965 = vpop.f32.mrb[0].mxu0
  %v2966 = vadd.f32 0.0, %v2965
  %v2967 = vpop.f32.mrb[0].mxu0
  %v2968 = vadd.f32 0.0, %v2967
  %v2969 = vpop.f32.mrb[0].mxu0
  %v2970 = vpop.f32.mrb[0].mxu0
  %2971 = vdwg.mxu0
  %v2972 = vadd.f32 %v2879, %v2966
  %v2973 = vadd.f32 %v2880, %v2968
  %v2974 = vadd.f32 %v2972, %v655
  %v2975 = vadd.f32 %v2973, %v659
  %v2976 = vmax.f32 %v2974, 0.0
  %v2977 = vmax.f32 %v2975, 0.0
  %v2978 = vmax.f32 %v2661, %v2976
  %v2979 = vmax.f32 %v2662, %v2977
  %2981 = vrot.lane.b32.xlu0 %v2978, 112
  %v2982 = vpop.permute.xlu0 %2981
  %v2984 = vmax.f32 %v2978, %v2982
  %2986 = vrot.lane.b32.xlu0 %v2979, 112
  %v2987 = vpop.permute.xlu0 %2986
  %v2989 = vmax.f32 %v2979, %v2987
  %2991 = vrot.lane.b32.xlu0 %v2984, 112
  %v2992 = vpop.permute.xlu0 %2991
  %2994 = vrot.lane.b32.xlu0 %v2984, 96
  %v2995 = vpop.permute.xlu0 %2994
  %2997 = vrot.lane.b32.xlu0 %v2984, 80
  %v2998 = vpop.permute.xlu0 %2997
  %3001 = vrot.lane.b32.xlu0 %v2989, 64
  %v3002 = vpop.permute.xlu0 %3001
  %3004 = vrot.lane.b32.xlu0 %v2989, 48
  %v3005 = vpop.permute.xlu0 %3004
  %v3007 = vsel %vm1010, %v2984, %v2992
  %v3008 = vsel %vm1012, %v3007, %v2995
  %v3009 = vsel %vm1014, %v3008, %v2998
  %v3010 = vsel %vm1016, %v3009, %v3002
  %v3011 = vsel %vm1018, %v3010, %v3005
  %3012 = vmatprep.subr.bf16.mxu0 %v129
  %3013 = vmatpush1.bf16.msra.mxu0 %v128
  %3014 = vmatprep.subr.bf16.mxu0 %v143
  %3015 = vmatpush1.bf16.msra.mxu0 %v140
  %3016 = vmatprep.subr.bf16.mxu0 0
  %3017 = vmatpush1.bf16.msra.mxu0 0
  %3018 = vmatprep.subr.bf16.mxu0 0
  %3019 = vmatpush1.bf16.msra.mxu0 0
  %3020 = vmatprep.subr.bf16.mxu0 0
  %3021 = vmatpush1.bf16.msra.mxu0 0
  %3022 = vmatprep.subr.bf16.mxu0 0
  %3023 = vmatpush1.bf16.msra.mxu0 0
  %3024 = vmatprep.subr.bf16.mxu0 0
  %3025 = vmatpush1.bf16.msra.mxu0 0
  %3026 = vmatprep.subr.bf16.mxu0 0
  %3027 = vmatpush1.bf16.msra.mxu0 0
  %3028 = vmatprep.subr.bf16.mxu0 0
  %3029 = vmatpush1.bf16.msra.mxu0 0
  %3030 = vmatprep.subr.bf16.mxu0 0
  %3031 = vmatpush1.bf16.msra.mxu0 0
  %3032 = vmatprep.subr.bf16.mxu0 0
  %3033 = vmatpush1.bf16.msra.mxu0 0
  %3034 = vmatprep.subr.bf16.mxu0 0
  %3035 = vmatpush1.bf16.msra.mxu0 0
  %3036 = vmatprep.subr.bf16.mxu0 0
  %3037 = vmatpush1.bf16.msra.mxu0 0
  %3038 = vmatprep.subr.bf16.mxu0 0
  %3039 = vmatpush1.bf16.msra.mxu0 0
  %3040 = vmatprep.subr.bf16.mxu0 0
  %3041 = vmatpush1.bf16.msra.mxu0 0
  %3042 = vmatprep.subr.bf16.mxu0 0
  %3043 = vmatpush1.bf16.msra.mxu0 0
  %3044 = vmatprep.mubr.bf16.mxu0 0
  %3045 = vmatmul.mubr.bf16.gmra.mrb[0].mxu0 %v2836
  %v3046 = vpop.f32.mrb[0].mxu0
  %v3047 = vadd.f32 0.0, %v3046
  %v3048 = vpop.f32.mrb[0].mxu0
  %v3049 = vadd.f32 0.0, %v3048
  %v3050 = vpop.f32.mrb[0].mxu0
  %v3051 = vpop.f32.mrb[0].mxu0
  %3052 = vdwg.mxu0
  %3053 = vmatprep.subr.bf16.mxu0 %v230
  %3054 = vmatpush1.bf16.msra.mxu0 %v229
  %3055 = vmatprep.subr.bf16.mxu0 %v242
  %3056 = vmatpush1.bf16.msra.mxu0 %v239
  %3057 = vmatprep.subr.bf16.mxu0 0
  %3058 = vmatpush1.bf16.msra.mxu0 0
  %3059 = vmatprep.subr.bf16.mxu0 0
  %3060 = vmatpush1.bf16.msra.mxu0 0
  %3061 = vmatprep.subr.bf16.mxu0 0
  %3062 = vmatpush1.bf16.msra.mxu0 0
  %3063 = vmatprep.subr.bf16.mxu0 0
  %3064 = vmatpush1.bf16.msra.mxu0 0
  %3065 = vmatprep.subr.bf16.mxu0 0
  %3066 = vmatpush1.bf16.msra.mxu0 0
  %3067 = vmatprep.subr.bf16.mxu0 0
  %3068 = vmatpush1.bf16.msra.mxu0 0
  %3069 = vmatprep.subr.bf16.mxu0 0
  %3070 = vmatpush1.bf16.msra.mxu0 0
  %3071 = vmatprep.subr.bf16.mxu0 0
  %3072 = vmatpush1.bf16.msra.mxu0 0
  %3073 = vmatprep.subr.bf16.mxu0 0
  %3074 = vmatpush1.bf16.msra.mxu0 0
  %3075 = vmatprep.subr.bf16.mxu0 0
  %3076 = vmatpush1.bf16.msra.mxu0 0
  %3077 = vmatprep.subr.bf16.mxu0 0
  %3078 = vmatpush1.bf16.msra.mxu0 0
  %3079 = vmatprep.subr.bf16.mxu0 0
  %3080 = vmatpush1.bf16.msra.mxu0 0
  %3081 = vmatprep.subr.bf16.mxu0 0
  %3082 = vmatpush1.bf16.msra.mxu0 0
  %3083 = vmatprep.subr.bf16.mxu0 0
  %3084 = vmatpush1.bf16.msra.mxu0 0
  %3085 = vmatprep.mubr.bf16.mxu0 0
  %3086 = vmatmul.mubr.bf16.gmra.mrb[0].mxu0 %v2614
  %v3087 = vpop.f32.mrb[0].mxu0
  %v3088 = vadd.f32 %v3047, %v3087
  %v3089 = vpop.f32.mrb[0].mxu0
  %v3090 = vadd.f32 %v3049, %v3089
  %v3091 = vpop.f32.mrb[0].mxu0
  %v3092 = vpop.f32.mrb[0].mxu0
  %3093 = vdwg.mxu0
  %3094 = vmatprep.subr.bf16.mxu0 %v350
  %3095 = vmatpush1.bf16.msra.mxu0 %v349
  %3096 = vmatprep.subr.bf16.mxu0 %v362
  %3097 = vmatpush1.bf16.msra.mxu0 %v359
  %3098 = vmatprep.subr.bf16.mxu0 0
  %3099 = vmatpush1.bf16.msra.mxu0 0
  %3100 = vmatprep.subr.bf16.mxu0 0
  %3101 = vmatpush1.bf16.msra.mxu0 0
  %3102 = vmatprep.subr.bf16.mxu0 0
  %3103 = vmatpush1.bf16.msra.mxu0 0
  %3104 = vmatprep.subr.bf16.mxu0 0
  %3105 = vmatpush1.bf16.msra.mxu0 0
  %3106 = vmatprep.subr.bf16.mxu0 0
  %3107 = vmatpush1.bf16.msra.mxu0 0
  %3108 = vmatprep.subr.bf16.mxu0 0
  %3109 = vmatpush1.bf16.msra.mxu0 0
  %3110 = vmatprep.subr.bf16.mxu0 0
  %3111 = vmatpush1.bf16.msra.mxu0 0
  %3112 = vmatprep.subr.bf16.mxu0 0
  %3113 = vmatpush1.bf16.msra.mxu0 0
  %3114 = vmatprep.subr.bf16.mxu0 0
  %3115 = vmatpush1.bf16.msra.mxu0 0
  %3116 = vmatprep.subr.bf16.mxu0 0
  %3117 = vmatpush1.bf16.msra.mxu0 0
  %3118 = vmatprep.subr.bf16.mxu0 0
  %3119 = vmatpush1.bf16.msra.mxu0 0
  %3120 = vmatprep.subr.bf16.mxu0 0
  %3121 = vmatpush1.bf16.msra.mxu0 0
  %3122 = vmatprep.subr.bf16.mxu0 0
  %3123 = vmatpush1.bf16.msra.mxu0 0
  %3124 = vmatprep.subr.bf16.mxu0 0
  %3125 = vmatpush1.bf16.msra.mxu0 0
  %3126 = vmatprep.mubr.bf16.mxu0 0
  %3127 = vmatmul.mubr.bf16.gmra.mrb[0].mxu0 %v2929
  %v3128 = vpop.f32.mrb[0].mxu0
  %v3129 = vadd.f32 0.0, %v3128
  %v3130 = vpop.f32.mrb[0].mxu0
  %v3131 = vadd.f32 0.0, %v3130
  %v3132 = vpop.f32.mrb[0].mxu0
  %v3133 = vpop.f32.mrb[0].mxu0
  %3134 = vdwg.mxu0
  %v3135 = vadd.f32 %v3088, %v3129
  %v3136 = vadd.f32 %v3090, %v3131
  %v3137 = vld [vmem:[%s0 + $0x13] sm:$0x1]
  %v3138 = vld [vmem:[%s0 + $0x33] sm:$0x1]
  %v3139 = vld [vmem:[%s0 + $0x53] sm:$0x1]
  %v3140 = vld [vmem:[%s0 + $0x73] sm:$0x1]
  %v3141 = vld [vmem:[%s0 + $0x93] sm:$0x1]
  %v3142 = vld [vmem:[%s0 + $0xb3] sm:$0x1]
  %v3143 = vld [vmem:[%s0 + $0xd3] sm:$0x1]
  %v3144 = vld [vmem:[%s0 + $0xf3] sm:$0x1]
  %v3145 = vpack.c.bf16 %v3137, %v3137
  %v3146 = vpack.c.bf16 %v3138, %v3138
  %v3147 = vpack.c.bf16 %v3139, %v3139
  %v3148 = vpack.c.bf16 %v3140, %v3140
  %v3149 = vpack.c.bf16 %v3141, %v3141
  %v3150 = vpack.c.bf16 %v3142, %v3142
  %v3151 = vpack.c.bf16 %v3143, %v3143
  %v3152 = vpack.c.bf16 %v3144, %v3144
  %v3161 = vunpack.c.l.b16 %v3145
  %v3162 = vunpack.c.l.b16 %v3146
  %v3163 = vunpack.c.l.b16 %v3147
  %v3164 = vunpack.c.l.b16 %v3148
  %v3165 = vunpack.c.l.b16 %v3149
  %v3166 = vunpack.c.l.b16 %v3150
  %v3167 = vunpack.c.l.b16 %v3151
  %v3168 = vunpack.c.l.b16 %v3152
  %v3169 = vrot.slane %v3162, 7
  %v3170 = vsel %vm95, %v3169, %v3161
  %v3171 = vrot.slane %v3163, 6
  %v3172 = vsel %vm98, %v3171, %v3170
  %v3173 = vrot.slane %v3164, 5
  %v3174 = vsel %vm101, %v3173, %v3172
  %v3175 = vrot.slane %v3165, 4
  %v3176 = vsel %vm104, %v3175, %v3174
  %v3177 = vrot.slane %v3166, 3
  %v3178 = vsel %vm107, %v3177, %v3176
  %v3179 = vrot.slane %v3167, 2
  %v3180 = vsel %vm110, %v3179, %v3178
  %v3181 = vrot.slane %v3168, 1
  %v3182 = vsel %vm113, %v3181, %v3180
  %v3183 = vpack.c.b16 %v3182, %v3182
  %v3185 = vsel %vm134, %v3183, 0
  %3187 = vmatprep.subr.bf16.mxu0 %v472
  %3188 = vmatpush1.bf16.msra.mxu0 %v471
  %3189 = vmatprep.subr.bf16.mxu0 %v484
  %3190 = vmatpush1.bf16.msra.mxu0 %v481
  %3191 = vmatprep.subr.bf16.mxu0 0
  %3192 = vmatpush1.bf16.msra.mxu0 0
  %3193 = vmatprep.subr.bf16.mxu0 0
  %3194 = vmatpush1.bf16.msra.mxu0 0
  %3195 = vmatprep.subr.bf16.mxu0 0
  %3196 = vmatpush1.bf16.msra.mxu0 0
  %3197 = vmatprep.subr.bf16.mxu0 0
  %3198 = vmatpush1.bf16.msra.mxu0 0
  %3199 = vmatprep.subr.bf16.mxu0 0
  %3200 = vmatpush1.bf16.msra.mxu0 0
  %3201 = vmatprep.subr.bf16.mxu0 0
  %3202 = vmatpush1.bf16.msra.mxu0 0
  %3203 = vmatprep.subr.bf16.mxu0 0
  %3204 = vmatpush1.bf16.msra.mxu0 0
  %3205 = vmatprep.subr.bf16.mxu0 0
  %3206 = vmatpush1.bf16.msra.mxu0 0
  %3207 = vmatprep.subr.bf16.mxu0 0
  %3208 = vmatpush1.bf16.msra.mxu0 0
  %3209 = vmatprep.subr.bf16.mxu0 0
  %3210 = vmatpush1.bf16.msra.mxu0 0
  %3211 = vmatprep.subr.bf16.mxu0 0
  %3212 = vmatpush1.bf16.msra.mxu0 0
  %3213 = vmatprep.subr.bf16.mxu0 0
  %3214 = vmatpush1.bf16.msra.mxu0 0
  %3215 = vmatprep.subr.bf16.mxu0 0
  %3216 = vmatpush1.bf16.msra.mxu0 0
  %3217 = vmatprep.subr.bf16.mxu0 0
  %3218 = vmatpush1.bf16.msra.mxu0 0
  %3219 = vmatprep.mubr.bf16.mxu0 0
  %3220 = vmatmul.mubr.bf16.gmra.mrb[0].mxu0 %v3185
  %v3221 = vpop.f32.mrb[0].mxu0
  %v3222 = vadd.f32 0.0, %v3221
  %v3223 = vpop.f32.mrb[0].mxu0
  %v3224 = vadd.f32 0.0, %v3223
  %v3225 = vpop.f32.mrb[0].mxu0
  %v3226 = vpop.f32.mrb[0].mxu0
  %3227 = vdwg.mxu0
  %v3228 = vadd.f32 %v3135, %v3222
  %v3229 = vadd.f32 %v3136, %v3224
  %v3230 = vld [vmem:[%s0 + $0x14] sm:$0x1]
  %v3231 = vld [vmem:[%s0 + $0x34] sm:$0x1]
  %v3232 = vld [vmem:[%s0 + $0x54] sm:$0x1]
  %v3233 = vld [vmem:[%s0 + $0x74] sm:$0x1]
  %v3234 = vld [vmem:[%s0 + $0x94] sm:$0x1]
  %v3235 = vld [vmem:[%s0 + $0xb4] sm:$0x1]
  %v3236 = vld [vmem:[%s0 + $0xd4] sm:$0x1]
  %v3237 = vld [vmem:[%s0 + $0xf4] sm:$0x1]
  %v3238 = vpack.c.bf16 %v3230, %v3230
  %v3239 = vpack.c.bf16 %v3231, %v3231
  %v3240 = vpack.c.bf16 %v3232, %v3232
  %v3241 = vpack.c.bf16 %v3233, %v3233
  %v3242 = vpack.c.bf16 %v3234, %v3234
  %v3243 = vpack.c.bf16 %v3235, %v3235
  %v3244 = vpack.c.bf16 %v3236, %v3236
  %v3245 = vpack.c.bf16 %v3237, %v3237
  %v3254 = vunpack.c.l.b16 %v3238
  %v3255 = vunpack.c.l.b16 %v3239
  %v3256 = vunpack.c.l.b16 %v3240
  %v3257 = vunpack.c.l.b16 %v3241
  %v3258 = vunpack.c.l.b16 %v3242
  %v3259 = vunpack.c.l.b16 %v3243
  %v3260 = vunpack.c.l.b16 %v3244
  %v3261 = vunpack.c.l.b16 %v3245
  %v3262 = vrot.slane %v3255, 7
  %v3263 = vsel %vm95, %v3262, %v3254
  %v3264 = vrot.slane %v3256, 6
  %v3265 = vsel %vm98, %v3264, %v3263
  %v3266 = vrot.slane %v3257, 5
  %v3267 = vsel %vm101, %v3266, %v3265
  %v3268 = vrot.slane %v3258, 4
  %v3269 = vsel %vm104, %v3268, %v3267
  %v3270 = vrot.slane %v3259, 3
  %v3271 = vsel %vm107, %v3270, %v3269
  %v3272 = vrot.slane %v3260, 2
  %v3273 = vsel %vm110, %v3272, %v3271
  %v3274 = vrot.slane %v3261, 1
  %v3275 = vsel %vm113, %v3274, %v3273
  %v3276 = vpack.c.b16 %v3275, %v3275
  %v3278 = vsel %vm134, %v3276, 0
  %3280 = vmatprep.subr.bf16.mxu0 %v594
  %3281 = vmatpush1.bf16.msra.mxu0 %v593
  %3282 = vmatprep.subr.bf16.mxu0 %v606
  %3283 = vmatpush1.bf16.msra.mxu0 %v603
  %3284 = vmatprep.subr.bf16.mxu0 0
  %3285 = vmatpush1.bf16.msra.mxu0 0
  %3286 = vmatprep.subr.bf16.mxu0 0
  %3287 = vmatpush1.bf16.msra.mxu0 0
  %3288 = vmatprep.subr.bf16.mxu0 0
  %3289 = vmatpush1.bf16.msra.mxu0 0
  %3290 = vmatprep.subr.bf16.mxu0 0
  %3291 = vmatpush1.bf16.msra.mxu0 0
  %3292 = vmatprep.subr.bf16.mxu0 0
  %3293 = vmatpush1.bf16.msra.mxu0 0
  %3294 = vmatprep.subr.bf16.mxu0 0
  %3295 = vmatpush1.bf16.msra.mxu0 0
  %3296 = vmatprep.subr.bf16.mxu0 0
  %3297 = vmatpush1.bf16.msra.mxu0 0
  %3298 = vmatprep.subr.bf16.mxu0 0
  %3299 = vmatpush1.bf16.msra.mxu0 0
  %3300 = vmatprep.subr.bf16.mxu0 0
  %3301 = vmatpush1.bf16.msra.mxu0 0
  %3302 = vmatprep.subr.bf16.mxu0 0
  %3303 = vmatpush1.bf16.msra.mxu0 0
  %3304 = vmatprep.subr.bf16.mxu0 0
  %3305 = vmatpush1.bf16.msra.mxu0 0
  %3306 = vmatprep.subr.bf16.mxu0 0
  %3307 = vmatpush1.bf16.msra.mxu0 0
  %3308 = vmatprep.subr.bf16.mxu0 0
  %3309 = vmatpush1.bf16.msra.mxu0 0
  %3310 = vmatprep.subr.bf16.mxu0 0
  %3311 = vmatpush1.bf16.msra.mxu0 0
  %3312 = vmatprep.mubr.bf16.mxu0 0
  %3313 = vmatmul.mubr.bf16.gmra.mrb[0].mxu0 %v3278
  %v3314 = vpop.f32.mrb[0].mxu0
  %v3315 = vadd.f32 0.0, %v3314
  %v3316 = vpop.f32.mrb[0].mxu0
  %v3317 = vadd.f32 0.0, %v3316
  %v3318 = vpop.f32.mrb[0].mxu0
  %v3319 = vpop.f32.mrb[0].mxu0
  %3320 = vdwg.mxu0
  %v3321 = vadd.f32 %v3228, %v3315
  %v3322 = vadd.f32 %v3229, %v3317
  %v3323 = vadd.f32 %v3321, %v655
  %v3324 = vadd.f32 %v3322, %v659
  %v3325 = vmax.f32 %v3323, 0.0
  %v3326 = vmax.f32 %v3324, 0.0
  %3327 = vmatprep.subr.bf16.mxu0 %v129
  %3328 = vmatpush1.bf16.msra.mxu0 %v128
  %3329 = vmatprep.subr.bf16.mxu0 %v143
  %3330 = vmatpush1.bf16.msra.mxu0 %v140
  %3331 = vmatprep.subr.bf16.mxu0 0
  %3332 = vmatpush1.bf16.msra.mxu0 0
  %3333 = vmatprep.subr.bf16.mxu0 0
  %3334 = vmatpush1.bf16.msra.mxu0 0
  %3335 = vmatprep.subr.bf16.mxu0 0
  %3336 = vmatpush1.bf16.msra.mxu0 0
  %3337 = vmatprep.subr.bf16.mxu0 0
  %3338 = vmatpush1.bf16.msra.mxu0 0
  %3339 = vmatprep.subr.bf16.mxu0 0
  %3340 = vmatpush1.bf16.msra.mxu0 0
  %3341 = vmatprep.subr.bf16.mxu0 0
  %3342 = vmatpush1.bf16.msra.mxu0 0
  %3343 = vmatprep.subr.bf16.mxu0 0
  %3344 = vmatpush1.bf16.msra.mxu0 0
  %3345 = vmatprep.subr.bf16.mxu0 0
  %3346 = vmatpush1.bf16.msra.mxu0 0
  %3347 = vmatprep.subr.bf16.mxu0 0
  %3348 = vmatpush1.bf16.msra.mxu0 0
  %3349 = vmatprep.subr.bf16.mxu0 0
  %3350 = vmatpush1.bf16.msra.mxu0 0
  %3351 = vmatprep.subr.bf16.mxu0 0
  %3352 = vmatpush1.bf16.msra.mxu0 0
  %3353 = vmatprep.subr.bf16.mxu0 0
  %3354 = vmatpush1.bf16.msra.mxu0 0
  %3355 = vmatprep.subr.bf16.mxu0 0
  %3356 = vmatpush1.bf16.msra.mxu0 0
  %3357 = vmatprep.subr.bf16.mxu0 0
  %3358 = vmatpush1.bf16.msra.mxu0 0
  %3359 = vmatprep.mubr.bf16.mxu0 0
  %3360 = vmatmul.mubr.bf16.gmra.mrb[0].mxu0 %v3185
  %v3361 = vpop.f32.mrb[0].mxu0
  %v3362 = vadd.f32 0.0, %v3361
  %v3363 = vpop.f32.mrb[0].mxu0
  %v3364 = vadd.f32 0.0, %v3363
  %v3365 = vpop.f32.mrb[0].mxu0
  %v3366 = vpop.f32.mrb[0].mxu0
  %3367 = vdwg.mxu0
  %3368 = vmatprep.subr.bf16.mxu0 %v230
  %3369 = vmatpush1.bf16.msra.mxu0 %v229
  %3370 = vmatprep.subr.bf16.mxu0 %v242
  %3371 = vmatpush1.bf16.msra.mxu0 %v239
  %3372 = vmatprep.subr.bf16.mxu0 0
  %3373 = vmatpush1.bf16.msra.mxu0 0
  %3374 = vmatprep.subr.bf16.mxu0 0
  %3375 = vmatpush1.bf16.msra.mxu0 0
  %3376 = vmatprep.subr.bf16.mxu0 0
  %3377 = vmatpush1.bf16.msra.mxu0 0
  %3378 = vmatprep.subr.bf16.mxu0 0
  %3379 = vmatpush1.bf16.msra.mxu0 0
  %3380 = vmatprep.subr.bf16.mxu0 0
  %3381 = vmatpush1.bf16.msra.mxu0 0
  %3382 = vmatprep.subr.bf16.mxu0 0
  %3383 = vmatpush1.bf16.msra.mxu0 0
  %3384 = vmatprep.subr.bf16.mxu0 0
  %3385 = vmatpush1.bf16.msra.mxu0 0
  %3386 = vmatprep.subr.bf16.mxu0 0
  %3387 = vmatpush1.bf16.msra.mxu0 0
  %3388 = vmatprep.subr.bf16.mxu0 0
  %3389 = vmatpush1.bf16.msra.mxu0 0
  %3390 = vmatprep.subr.bf16.mxu0 0
  %3391 = vmatpush1.bf16.msra.mxu0 0
  %3392 = vmatprep.subr.bf16.mxu0 0
  %3393 = vmatpush1.bf16.msra.mxu0 0
  %3394 = vmatprep.subr.bf16.mxu0 0
  %3395 = vmatpush1.bf16.msra.mxu0 0
  %3396 = vmatprep.subr.bf16.mxu0 0
  %3397 = vmatpush1.bf16.msra.mxu0 0
  %3398 = vmatprep.subr.bf16.mxu0 0
  %3399 = vmatpush1.bf16.msra.mxu0 0
  %3400 = vmatprep.mubr.bf16.mxu0 0
  %3401 = vmatmul.mubr.bf16.gmra.mrb[0].mxu0 %v2929
  %v3402 = vpop.f32.mrb[0].mxu0
  %v3403 = vadd.f32 %v3362, %v3402
  %v3404 = vpop.f32.mrb[0].mxu0
  %v3405 = vadd.f32 %v3364, %v3404
  %v3406 = vpop.f32.mrb[0].mxu0
  %v3407 = vpop.f32.mrb[0].mxu0
  %3408 = vdwg.mxu0
  %3409 = vmatprep.subr.bf16.mxu0 %v350
  %3410 = vmatpush1.bf16.msra.mxu0 %v349
  %3411 = vmatprep.subr.bf16.mxu0 %v362
  %3412 = vmatpush1.bf16.msra.mxu0 %v359
  %3413 = vmatprep.subr.bf16.mxu0 0
  %3414 = vmatpush1.bf16.msra.mxu0 0
  %3415 = vmatprep.subr.bf16.mxu0 0
  %3416 = vmatpush1.bf16.msra.mxu0 0
  %3417 = vmatprep.subr.bf16.mxu0 0
  %3418 = vmatpush1.bf16.msra.mxu0 0
  %3419 = vmatprep.subr.bf16.mxu0 0
  %3420 = vmatpush1.bf16.msra.mxu0 0
  %3421 = vmatprep.subr.bf16.mxu0 0
  %3422 = vmatpush1.bf16.msra.mxu0 0
  %3423 = vmatprep.subr.bf16.mxu0 0
  %3424 = vmatpush1.bf16.msra.mxu0 0
  %3425 = vmatprep.subr.bf16.mxu0 0
  %3426 = vmatpush1.bf16.msra.mxu0 0
  %3427 = vmatprep.subr.bf16.mxu0 0
  %3428 = vmatpush1.bf16.msra.mxu0 0
  %3429 = vmatprep.subr.bf16.mxu0 0
  %3430 = vmatpush1.bf16.msra.mxu0 0
  %3431 = vmatprep.subr.bf16.mxu0 0
  %3432 = vmatpush1.bf16.msra.mxu0 0
  %3433 = vmatprep.subr.bf16.mxu0 0
  %3434 = vmatpush1.bf16.msra.mxu0 0
  %3435 = vmatprep.subr.bf16.mxu0 0
  %3436 = vmatpush1.bf16.msra.mxu0 0
  %3437 = vmatprep.subr.bf16.mxu0 0
  %3438 = vmatpush1.bf16.msra.mxu0 0
  %3439 = vmatprep.subr.bf16.mxu0 0
  %3440 = vmatpush1.bf16.msra.mxu0 0
  %3441 = vmatprep.mubr.bf16.mxu0 0
  %3442 = vmatmul.mubr.bf16.gmra.mrb[0].mxu0 %v3278
  %v3443 = vpop.f32.mrb[0].mxu0
  %v3444 = vadd.f32 0.0, %v3443
  %v3445 = vpop.f32.mrb[0].mxu0
  %v3446 = vadd.f32 0.0, %v3445
  %v3447 = vpop.f32.mrb[0].mxu0
  %v3448 = vpop.f32.mrb[0].mxu0
  %3449 = vdwg.mxu0
  %v3450 = vadd.f32 %v3403, %v3444
  %v3451 = vadd.f32 %v3405, %v3446
  %v3452 = vld [vmem:[%s0 + $0x15] sm:$0x1]
  %v3453 = vld [vmem:[%s0 + $0x35] sm:$0x1]
  %v3454 = vld [vmem:[%s0 + $0x55] sm:$0x1]
  %v3455 = vld [vmem:[%s0 + $0x75] sm:$0x1]
  %v3456 = vld [vmem:[%s0 + $0x95] sm:$0x1]
  %v3457 = vld [vmem:[%s0 + $0xb5] sm:$0x1]
  %v3458 = vld [vmem:[%s0 + $0xd5] sm:$0x1]
  %v3459 = vld [vmem:[%s0 + $0xf5] sm:$0x1]
  %v3460 = vpack.c.bf16 %v3452, %v3452
  %v3461 = vpack.c.bf16 %v3453, %v3453
  %v3462 = vpack.c.bf16 %v3454, %v3454
  %v3463 = vpack.c.bf16 %v3455, %v3455
  %v3464 = vpack.c.bf16 %v3456, %v3456
  %v3465 = vpack.c.bf16 %v3457, %v3457
  %v3466 = vpack.c.bf16 %v3458, %v3458
  %v3467 = vpack.c.bf16 %v3459, %v3459
  %v3476 = vunpack.c.l.b16 %v3460
  %v3477 = vunpack.c.l.b16 %v3461
  %v3478 = vunpack.c.l.b16 %v3462
  %v3479 = vunpack.c.l.b16 %v3463
  %v3480 = vunpack.c.l.b16 %v3464
  %v3481 = vunpack.c.l.b16 %v3465
  %v3482 = vunpack.c.l.b16 %v3466
  %v3483 = vunpack.c.l.b16 %v3467
  %v3484 = vrot.slane %v3477, 7
  %v3485 = vsel %vm95, %v3484, %v3476
  %v3486 = vrot.slane %v3478, 6
  %v3487 = vsel %vm98, %v3486, %v3485
  %v3488 = vrot.slane %v3479, 5
  %v3489 = vsel %vm101, %v3488, %v3487
  %v3490 = vrot.slane %v3480, 4
  %v3491 = vsel %vm104, %v3490, %v3489
  %v3492 = vrot.slane %v3481, 3
  %v3493 = vsel %vm107, %v3492, %v3491
  %v3494 = vrot.slane %v3482, 2
  %v3495 = vsel %vm110, %v3494, %v3493
  %v3496 = vrot.slane %v3483, 1
  %v3497 = vsel %vm113, %v3496, %v3495
  %v3498 = vpack.c.b16 %v3497, %v3497
  %v3500 = vsel %vm134, %v3498, 0
  %3502 = vmatprep.subr.bf16.mxu0 %v472
  %3503 = vmatpush1.bf16.msra.mxu0 %v471
  %3504 = vmatprep.subr.bf16.mxu0 %v484
  %3505 = vmatpush1.bf16.msra.mxu0 %v481
  %3506 = vmatprep.subr.bf16.mxu0 0
  %3507 = vmatpush1.bf16.msra.mxu0 0
  %3508 = vmatprep.subr.bf16.mxu0 0
  %3509 = vmatpush1.bf16.msra.mxu0 0
  %3510 = vmatprep.subr.bf16.mxu0 0
  %3511 = vmatpush1.bf16.msra.mxu0 0
  %3512 = vmatprep.subr.bf16.mxu0 0
  %3513 = vmatpush1.bf16.msra.mxu0 0
  %3514 = vmatprep.subr.bf16.mxu0 0
  %3515 = vmatpush1.bf16.msra.mxu0 0
  %3516 = vmatprep.subr.bf16.mxu0 0
  %3517 = vmatpush1.bf16.msra.mxu0 0
  %3518 = vmatprep.subr.bf16.mxu0 0
  %3519 = vmatpush1.bf16.msra.mxu0 0
  %3520 = vmatprep.subr.bf16.mxu0 0
  %3521 = vmatpush1.bf16.msra.mxu0 0
  %3522 = vmatprep.subr.bf16.mxu0 0
  %3523 = vmatpush1.bf16.msra.mxu0 0
  %3524 = vmatprep.subr.bf16.mxu0 0
  %3525 = vmatpush1.bf16.msra.mxu0 0
  %3526 = vmatprep.subr.bf16.mxu0 0
  %3527 = vmatpush1.bf16.msra.mxu0 0
  %3528 = vmatprep.subr.bf16.mxu0 0
  %3529 = vmatpush1.bf16.msra.mxu0 0
  %3530 = vmatprep.subr.bf16.mxu0 0
  %3531 = vmatpush1.bf16.msra.mxu0 0
  %3532 = vmatprep.subr.bf16.mxu0 0
  %3533 = vmatpush1.bf16.msra.mxu0 0
  %3534 = vmatprep.mubr.bf16.mxu0 0
  %3535 = vmatmul.mubr.bf16.gmra.mrb[0].mxu0 %v3500
  %v3536 = vpop.f32.mrb[0].mxu0
  %v3537 = vadd.f32 0.0, %v3536
  %v3538 = vpop.f32.mrb[0].mxu0
  %v3539 = vadd.f32 0.0, %v3538
  %v3540 = vpop.f32.mrb[0].mxu0
  %v3541 = vpop.f32.mrb[0].mxu0
  %3542 = vdwg.mxu0
  %v3543 = vadd.f32 %v3450, %v3537
  %v3544 = vadd.f32 %v3451, %v3539
  %v3545 = vld [vmem:[%s0 + $0x16] sm:$0x1]
  %v3546 = vld [vmem:[%s0 + $0x36] sm:$0x1]
  %v3547 = vld [vmem:[%s0 + $0x56] sm:$0x1]
  %v3548 = vld [vmem:[%s0 + $0x76] sm:$0x1]
  %v3549 = vld [vmem:[%s0 + $0x96] sm:$0x1]
  %v3550 = vld [vmem:[%s0 + $0xb6] sm:$0x1]
  %v3551 = vld [vmem:[%s0 + $0xd6] sm:$0x1]
  %v3552 = vld [vmem:[%s0 + $0xf6] sm:$0x1]
  %v3553 = vpack.c.bf16 %v3545, %v3545
  %v3554 = vpack.c.bf16 %v3546, %v3546
  %v3555 = vpack.c.bf16 %v3547, %v3547
  %v3556 = vpack.c.bf16 %v3548, %v3548
  %v3557 = vpack.c.bf16 %v3549, %v3549
  %v3558 = vpack.c.bf16 %v3550, %v3550
  %v3559 = vpack.c.bf16 %v3551, %v3551
  %v3560 = vpack.c.bf16 %v3552, %v3552
  %v3569 = vunpack.c.l.b16 %v3553
  %v3570 = vunpack.c.l.b16 %v3554
  %v3571 = vunpack.c.l.b16 %v3555
  %v3572 = vunpack.c.l.b16 %v3556
  %v3573 = vunpack.c.l.b16 %v3557
  %v3574 = vunpack.c.l.b16 %v3558
  %v3575 = vunpack.c.l.b16 %v3559
  %v3576 = vunpack.c.l.b16 %v3560
  %v3577 = vrot.slane %v3570, 7
  %v3578 = vsel %vm95, %v3577, %v3569
  %v3579 = vrot.slane %v3571, 6
  %v3580 = vsel %vm98, %v3579, %v3578
  %v3581 = vrot.slane %v3572, 5
  %v3582 = vsel %vm101, %v3581, %v3580
  %v3583 = vrot.slane %v3573, 4
  %v3584 = vsel %vm104, %v3583, %v3582
  %v3585 = vrot.slane %v3574, 3
  %v3586 = vsel %vm107, %v3585, %v3584
  %v3587 = vrot.slane %v3575, 2
  %v3588 = vsel %vm110, %v3587, %v3586
  %v3589 = vrot.slane %v3576, 1
  %v3590 = vsel %vm113, %v3589, %v3588
  %v3591 = vpack.c.b16 %v3590, %v3590
  %v3593 = vsel %vm134, %v3591, 0
  %3595 = vmatprep.subr.bf16.mxu0 %v594
  %3596 = vmatpush1.bf16.msra.mxu0 %v593
  %3597 = vmatprep.subr.bf16.mxu0 %v606
  %3598 = vmatpush1.bf16.msra.mxu0 %v603
  %3599 = vmatprep.subr.bf16.mxu0 0
  %3600 = vmatpush1.bf16.msra.mxu0 0
  %3601 = vmatprep.subr.bf16.mxu0 0
  %3602 = vmatpush1.bf16.msra.mxu0 0
  %3603 = vmatprep.subr.bf16.mxu0 0
  %3604 = vmatpush1.bf16.msra.mxu0 0
  %3605 = vmatprep.subr.bf16.mxu0 0
  %3606 = vmatpush1.bf16.msra.mxu0 0
  %3607 = vmatprep.subr.bf16.mxu0 0
  %3608 = vmatpush1.bf16.msra.mxu0 0
  %3609 = vmatprep.subr.bf16.mxu0 0
  %3610 = vmatpush1.bf16.msra.mxu0 0
  %3611 = vmatprep.subr.bf16.mxu0 0
  %3612 = vmatpush1.bf16.msra.mxu0 0
  %3613 = vmatprep.subr.bf16.mxu0 0
  %3614 = vmatpush1.bf16.msra.mxu0 0
  %3615 = vmatprep.subr.bf16.mxu0 0
  %3616 = vmatpush1.bf16.msra.mxu0 0
  %3617 = vmatprep.subr.bf16.mxu0 0
  %3618 = vmatpush1.bf16.msra.mxu0 0
  %3619 = vmatprep.subr.bf16.mxu0 0
  %3620 = vmatpush1.bf16.msra.mxu0 0
  %3621 = vmatprep.subr.bf16.mxu0 0
  %3622 = vmatpush1.bf16.msra.mxu0 0
  %3623 = vmatprep.subr.bf16.mxu0 0
  %3624 = vmatpush1.bf16.msra.mxu0 0
  %3625 = vmatprep.subr.bf16.mxu0 0
  %3626 = vmatpush1.bf16.msra.mxu0 0
  %3627 = vmatprep.mubr.bf16.mxu0 0
  %3628 = vmatmul.mubr.bf16.gmra.mrb[0].mxu0 %v3593
  %v3629 = vpop.f32.mrb[0].mxu0
  %v3630 = vadd.f32 0.0, %v3629
  %v3631 = vpop.f32.mrb[0].mxu0
  %v3632 = vadd.f32 0.0, %v3631
  %v3633 = vpop.f32.mrb[0].mxu0
  %v3634 = vpop.f32.mrb[0].mxu0
  %3635 = vdwg.mxu0
  %v3636 = vadd.f32 %v3543, %v3630
  %v3637 = vadd.f32 %v3544, %v3632
  %v3638 = vadd.f32 %v3636, %v655
  %v3639 = vadd.f32 %v3637, %v659
  %v3640 = vmax.f32 %v3638, 0.0
  %v3641 = vmax.f32 %v3639, 0.0
  %v3642 = vmax.f32 %v3325, %v3640
  %v3643 = vmax.f32 %v3326, %v3641
  %3645 = vrot.lane.b32.xlu0 %v3642, 112
  %v3646 = vpop.permute.xlu0 %3645
  %v3648 = vmax.f32 %v3642, %v3646
  %3650 = vrot.lane.b32.xlu0 %v3643, 112
  %v3651 = vpop.permute.xlu0 %3650
  %v3653 = vmax.f32 %v3643, %v3651
  %3655 = vrot.lane.b32.xlu0 %v3648, 112
  %v3656 = vpop.permute.xlu0 %3655
  %3658 = vrot.lane.b32.xlu0 %v3648, 96
  %v3659 = vpop.permute.xlu0 %3658
  %3661 = vrot.lane.b32.xlu0 %v3648, 80
  %v3662 = vpop.permute.xlu0 %3661
  %3665 = vrot.lane.b32.xlu0 %v3653, 64
  %v3666 = vpop.permute.xlu0 %3665
  %3668 = vrot.lane.b32.xlu0 %v3653, 48
  %v3669 = vpop.permute.xlu0 %3668
  %v3671 = vsel %vm1010, %v3648, %v3656
  %v3672 = vsel %vm1012, %v3671, %v3659
  %v3673 = vsel %vm1014, %v3672, %v3662
  %v3674 = vsel %vm1016, %v3673, %v3666
  %v3675 = vsel %vm1018, %v3674, %v3669
  %3676 = vmatprep.subr.bf16.mxu0 %v129
  %3677 = vmatpush1.bf16.msra.mxu0 %v128
  %3678 = vmatprep.subr.bf16.mxu0 %v143
  %3679 = vmatpush1.bf16.msra.mxu0 %v140
  %3680 = vmatprep.subr.bf16.mxu0 0
  %3681 = vmatpush1.bf16.msra.mxu0 0
  %3682 = vmatprep.subr.bf16.mxu0 0
  %3683 = vmatpush1.bf16.msra.mxu0 0
  %3684 = vmatprep.subr.bf16.mxu0 0
  %3685 = vmatpush1.bf16.msra.mxu0 0
  %3686 = vmatprep.subr.bf16.mxu0 0
  %3687 = vmatpush1.bf16.msra.mxu0 0
  %3688 = vmatprep.subr.bf16.mxu0 0
  %3689 = vmatpush1.bf16.msra.mxu0 0
  %3690 = vmatprep.subr.bf16.mxu0 0
  %3691 = vmatpush1.bf16.msra.mxu0 0
  %3692 = vmatprep.subr.bf16.mxu0 0
  %3693 = vmatpush1.bf16.msra.mxu0 0
  %3694 = vmatprep.subr.bf16.mxu0 0
  %3695 = vmatpush1.bf16.msra.mxu0 0
  %3696 = vmatprep.subr.bf16.mxu0 0
  %3697 = vmatpush1.bf16.msra.mxu0 0
  %3698 = vmatprep.subr.bf16.mxu0 0
  %3699 = vmatpush1.bf16.msra.mxu0 0
  %3700 = vmatprep.subr.bf16.mxu0 0
  %3701 = vmatpush1.bf16.msra.mxu0 0
  %3702 = vmatprep.subr.bf16.mxu0 0
  %3703 = vmatpush1.bf16.msra.mxu0 0
  %3704 = vmatprep.subr.bf16.mxu0 0
  %3705 = vmatpush1.bf16.msra.mxu0 0
  %3706 = vmatprep.subr.bf16.mxu0 0
  %3707 = vmatpush1.bf16.msra.mxu0 0
  %3708 = vmatprep.mubr.bf16.mxu0 0
  %3709 = vmatmul.mubr.bf16.gmra.mrb[0].mxu0 %v3500
  %v3710 = vpop.f32.mrb[0].mxu0
  %v3711 = vadd.f32 0.0, %v3710
  %v3712 = vpop.f32.mrb[0].mxu0
  %v3713 = vadd.f32 0.0, %v3712
  %v3714 = vpop.f32.mrb[0].mxu0
  %v3715 = vpop.f32.mrb[0].mxu0
  %3716 = vdwg.mxu0
  %3717 = vmatprep.subr.bf16.mxu0 %v230
  %3718 = vmatpush1.bf16.msra.mxu0 %v229
  %3719 = vmatprep.subr.bf16.mxu0 %v242
  %3720 = vmatpush1.bf16.msra.mxu0 %v239
  %3721 = vmatprep.subr.bf16.mxu0 0
  %3722 = vmatpush1.bf16.msra.mxu0 0
  %3723 = vmatprep.subr.bf16.mxu0 0
  %3724 = vmatpush1.bf16.msra.mxu0 0
  %3725 = vmatprep.subr.bf16.mxu0 0
  %3726 = vmatpush1.bf16.msra.mxu0 0
  %3727 = vmatprep.subr.bf16.mxu0 0
  %3728 = vmatpush1.bf16.msra.mxu0 0
  %3729 = vmatprep.subr.bf16.mxu0 0
  %3730 = vmatpush1.bf16.msra.mxu0 0
  %3731 = vmatprep.subr.bf16.mxu0 0
  %3732 = vmatpush1.bf16.msra.mxu0 0
  %3733 = vmatprep.subr.bf16.mxu0 0
  %3734 = vmatpush1.bf16.msra.mxu0 0
  %3735 = vmatprep.subr.bf16.mxu0 0
  %3736 = vmatpush1.bf16.msra.mxu0 0
  %3737 = vmatprep.subr.bf16.mxu0 0
  %3738 = vmatpush1.bf16.msra.mxu0 0
  %3739 = vmatprep.subr.bf16.mxu0 0
  %3740 = vmatpush1.bf16.msra.mxu0 0
  %3741 = vmatprep.subr.bf16.mxu0 0
  %3742 = vmatpush1.bf16.msra.mxu0 0
  %3743 = vmatprep.subr.bf16.mxu0 0
  %3744 = vmatpush1.bf16.msra.mxu0 0
  %3745 = vmatprep.subr.bf16.mxu0 0
  %3746 = vmatpush1.bf16.msra.mxu0 0
  %3747 = vmatprep.subr.bf16.mxu0 0
  %3748 = vmatpush1.bf16.msra.mxu0 0
  %3749 = vmatprep.mubr.bf16.mxu0 0
  %3750 = vmatmul.mubr.bf16.gmra.mrb[0].mxu0 %v3278
  %v3751 = vpop.f32.mrb[0].mxu0
  %v3752 = vadd.f32 %v3711, %v3751
  %v3753 = vpop.f32.mrb[0].mxu0
  %v3754 = vadd.f32 %v3713, %v3753
  %v3755 = vpop.f32.mrb[0].mxu0
  %v3756 = vpop.f32.mrb[0].mxu0
  %3757 = vdwg.mxu0
  %3758 = vmatprep.subr.bf16.mxu0 %v350
  %3759 = vmatpush1.bf16.msra.mxu0 %v349
  %3760 = vmatprep.subr.bf16.mxu0 %v362
  %3761 = vmatpush1.bf16.msra.mxu0 %v359
  %3762 = vmatprep.subr.bf16.mxu0 0
  %3763 = vmatpush1.bf16.msra.mxu0 0
  %3764 = vmatprep.subr.bf16.mxu0 0
  %3765 = vmatpush1.bf16.msra.mxu0 0
  %3766 = vmatprep.subr.bf16.mxu0 0
  %3767 = vmatpush1.bf16.msra.mxu0 0
  %3768 = vmatprep.subr.bf16.mxu0 0
  %3769 = vmatpush1.bf16.msra.mxu0 0
  %3770 = vmatprep.subr.bf16.mxu0 0
  %3771 = vmatpush1.bf16.msra.mxu0 0
  %3772 = vmatprep.subr.bf16.mxu0 0
  %3773 = vmatpush1.bf16.msra.mxu0 0
  %3774 = vmatprep.subr.bf16.mxu0 0
  %3775 = vmatpush1.bf16.msra.mxu0 0
  %3776 = vmatprep.subr.bf16.mxu0 0
  %3777 = vmatpush1.bf16.msra.mxu0 0
  %3778 = vmatprep.subr.bf16.mxu0 0
  %3779 = vmatpush1.bf16.msra.mxu0 0
  %3780 = vmatprep.subr.bf16.mxu0 0
  %3781 = vmatpush1.bf16.msra.mxu0 0
  %3782 = vmatprep.subr.bf16.mxu0 0
  %3783 = vmatpush1.bf16.msra.mxu0 0
  %3784 = vmatprep.subr.bf16.mxu0 0
  %3785 = vmatpush1.bf16.msra.mxu0 0
  %3786 = vmatprep.subr.bf16.mxu0 0
  %3787 = vmatpush1.bf16.msra.mxu0 0
  %3788 = vmatprep.subr.bf16.mxu0 0
  %3789 = vmatpush1.bf16.msra.mxu0 0
  %3790 = vmatprep.mubr.bf16.mxu0 0
  %3791 = vmatmul.mubr.bf16.gmra.mrb[0].mxu0 %v3593
  %v3792 = vpop.f32.mrb[0].mxu0
  %v3793 = vadd.f32 0.0, %v3792
  %v3794 = vpop.f32.mrb[0].mxu0
  %v3795 = vadd.f32 0.0, %v3794
  %v3796 = vpop.f32.mrb[0].mxu0
  %v3797 = vpop.f32.mrb[0].mxu0
  %3798 = vdwg.mxu0
  %v3799 = vadd.f32 %v3752, %v3793
  %v3800 = vadd.f32 %v3754, %v3795
  %v3801 = vld [vmem:[%s0 + $0x17] sm:$0x1]
  %v3802 = vld [vmem:[%s0 + $0x37] sm:$0x1]
  %v3803 = vld [vmem:[%s0 + $0x57] sm:$0x1]
  %v3804 = vld [vmem:[%s0 + $0x77] sm:$0x1]
  %v3805 = vld [vmem:[%s0 + $0x97] sm:$0x1]
  %v3806 = vld [vmem:[%s0 + $0xb7] sm:$0x1]
  %v3807 = vld [vmem:[%s0 + $0xd7] sm:$0x1]
  %v3808 = vld [vmem:[%s0 + $0xf7] sm:$0x1]
  %v3809 = vpack.c.bf16 %v3801, %v3801
  %v3810 = vpack.c.bf16 %v3802, %v3802
  %v3811 = vpack.c.bf16 %v3803, %v3803
  %v3812 = vpack.c.bf16 %v3804, %v3804
  %v3813 = vpack.c.bf16 %v3805, %v3805
  %v3814 = vpack.c.bf16 %v3806, %v3806
  %v3815 = vpack.c.bf16 %v3807, %v3807
  %v3816 = vpack.c.bf16 %v3808, %v3808
  %v3825 = vunpack.c.l.b16 %v3809
  %v3826 = vunpack.c.l.b16 %v3810
  %v3827 = vunpack.c.l.b16 %v3811
  %v3828 = vunpack.c.l.b16 %v3812
  %v3829 = vunpack.c.l.b16 %v3813
  %v3830 = vunpack.c.l.b16 %v3814
  %v3831 = vunpack.c.l.b16 %v3815
  %v3832 = vunpack.c.l.b16 %v3816
  %v3833 = vrot.slane %v3826, 7
  %v3834 = vsel %vm95, %v3833, %v3825
  %v3835 = vrot.slane %v3827, 6
  %v3836 = vsel %vm98, %v3835, %v3834
  %v3837 = vrot.slane %v3828, 5
  %v3838 = vsel %vm101, %v3837, %v3836
  %v3839 = vrot.slane %v3829, 4
  %v3840 = vsel %vm104, %v3839, %v3838
  %v3841 = vrot.slane %v3830, 3
  %v3842 = vsel %vm107, %v3841, %v3840
  %v3843 = vrot.slane %v3831, 2
  %v3844 = vsel %vm110, %v3843, %v3842
  %v3845 = vrot.slane %v3832, 1
  %v3846 = vsel %vm113, %v3845, %v3844
  %v3847 = vpack.c.b16 %v3846, %v3846
  %v3849 = vsel %vm134, %v3847, 0
  %3851 = vmatprep.subr.bf16.mxu0 %v472
  %3852 = vmatpush1.bf16.msra.mxu0 %v471
  %3853 = vmatprep.subr.bf16.mxu0 %v484
  %3854 = vmatpush1.bf16.msra.mxu0 %v481
  %3855 = vmatprep.subr.bf16.mxu0 0
  %3856 = vmatpush1.bf16.msra.mxu0 0
  %3857 = vmatprep.subr.bf16.mxu0 0
  %3858 = vmatpush1.bf16.msra.mxu0 0
  %3859 = vmatprep.subr.bf16.mxu0 0
  %3860 = vmatpush1.bf16.msra.mxu0 0
  %3861 = vmatprep.subr.bf16.mxu0 0
  %3862 = vmatpush1.bf16.msra.mxu0 0
  %3863 = vmatprep.subr.bf16.mxu0 0
  %3864 = vmatpush1.bf16.msra.mxu0 0
  %3865 = vmatprep.subr.bf16.mxu0 0
  %3866 = vmatpush1.bf16.msra.mxu0 0
  %3867 = vmatprep.subr.bf16.mxu0 0
  %3868 = vmatpush1.bf16.msra.mxu0 0
  %3869 = vmatprep.subr.bf16.mxu0 0
  %3870 = vmatpush1.bf16.msra.mxu0 0
  %3871 = vmatprep.subr.bf16.mxu0 0
  %3872 = vmatpush1.bf16.msra.mxu0 0
  %3873 = vmatprep.subr.bf16.mxu0 0
  %3874 = vmatpush1.bf16.msra.mxu0 0
  %3875 = vmatprep.subr.bf16.mxu0 0
  %3876 = vmatpush1.bf16.msra.mxu0 0
  %3877 = vmatprep.subr.bf16.mxu0 0
  %3878 = vmatpush1.bf16.msra.mxu0 0
  %3879 = vmatprep.subr.bf16.mxu0 0
  %3880 = vmatpush1.bf16.msra.mxu0 0
  %3881 = vmatprep.subr.bf16.mxu0 0
  %3882 = vmatpush1.bf16.msra.mxu0 0
  %3883 = vmatprep.mubr.bf16.mxu0 0
  %3884 = vmatmul.mubr.bf16.gmra.mrb[0].mxu0 %v3849
  %v3885 = vpop.f32.mrb[0].mxu0
  %v3886 = vadd.f32 0.0, %v3885
  %v3887 = vpop.f32.mrb[0].mxu0
  %v3888 = vadd.f32 0.0, %v3887
  %v3889 = vpop.f32.mrb[0].mxu0
  %v3890 = vpop.f32.mrb[0].mxu0
  %3891 = vdwg.mxu0
  %v3892 = vadd.f32 %v3799, %v3886
  %v3893 = vadd.f32 %v3800, %v3888
  %v3894 = vld [vmem:[%s0 + $0x18] sm:$0x1]
  %v3895 = vld [vmem:[%s0 + $0x38] sm:$0x1]
  %v3896 = vld [vmem:[%s0 + $0x58] sm:$0x1]
  %v3897 = vld [vmem:[%s0 + $0x78] sm:$0x1]
  %v3898 = vld [vmem:[%s0 + $0x98] sm:$0x1]
  %v3899 = vld [vmem:[%s0 + $0xb8] sm:$0x1]
  %v3900 = vld [vmem:[%s0 + $0xd8] sm:$0x1]
  %v3901 = vld [vmem:[%s0 + $0xf8] sm:$0x1]
  %v3902 = vpack.c.bf16 %v3894, %v3894
  %v3903 = vpack.c.bf16 %v3895, %v3895
  %v3904 = vpack.c.bf16 %v3896, %v3896
  %v3905 = vpack.c.bf16 %v3897, %v3897
  %v3906 = vpack.c.bf16 %v3898, %v3898
  %v3907 = vpack.c.bf16 %v3899, %v3899
  %v3908 = vpack.c.bf16 %v3900, %v3900
  %v3909 = vpack.c.bf16 %v3901, %v3901
  %v3918 = vunpack.c.l.b16 %v3902
  %v3919 = vunpack.c.l.b16 %v3903
  %v3920 = vunpack.c.l.b16 %v3904
  %v3921 = vunpack.c.l.b16 %v3905
  %v3922 = vunpack.c.l.b16 %v3906
  %v3923 = vunpack.c.l.b16 %v3907
  %v3924 = vunpack.c.l.b16 %v3908
  %v3925 = vunpack.c.l.b16 %v3909
  %v3926 = vrot.slane %v3919, 7
  %v3927 = vsel %vm95, %v3926, %v3918
  %v3928 = vrot.slane %v3920, 6
  %v3929 = vsel %vm98, %v3928, %v3927
  %v3930 = vrot.slane %v3921, 5
  %v3931 = vsel %vm101, %v3930, %v3929
  %v3932 = vrot.slane %v3922, 4
  %v3933 = vsel %vm104, %v3932, %v3931
  %v3934 = vrot.slane %v3923, 3
  %v3935 = vsel %vm107, %v3934, %v3933
  %v3936 = vrot.slane %v3924, 2
  %v3937 = vsel %vm110, %v3936, %v3935
  %v3938 = vrot.slane %v3925, 1
  %v3939 = vsel %vm113, %v3938, %v3937
  %v3940 = vpack.c.b16 %v3939, %v3939
  %v3942 = vsel %vm134, %v3940, 0
  %3944 = vmatprep.subr.bf16.mxu0 %v594
  %3945 = vmatpush1.bf16.msra.mxu0 %v593
  %3946 = vmatprep.subr.bf16.mxu0 %v606
  %3947 = vmatpush1.bf16.msra.mxu0 %v603
  %3948 = vmatprep.subr.bf16.mxu0 0
  %3949 = vmatpush1.bf16.msra.mxu0 0
  %3950 = vmatprep.subr.bf16.mxu0 0
  %3951 = vmatpush1.bf16.msra.mxu0 0
  %3952 = vmatprep.subr.bf16.mxu0 0
  %3953 = vmatpush1.bf16.msra.mxu0 0
  %3954 = vmatprep.subr.bf16.mxu0 0
  %3955 = vmatpush1.bf16.msra.mxu0 0
  %3956 = vmatprep.subr.bf16.mxu0 0
  %3957 = vmatpush1.bf16.msra.mxu0 0
  %3958 = vmatprep.subr.bf16.mxu0 0
  %3959 = vmatpush1.bf16.msra.mxu0 0
  %3960 = vmatprep.subr.bf16.mxu0 0
  %3961 = vmatpush1.bf16.msra.mxu0 0
  %3962 = vmatprep.subr.bf16.mxu0 0
  %3963 = vmatpush1.bf16.msra.mxu0 0
  %3964 = vmatprep.subr.bf16.mxu0 0
  %3965 = vmatpush1.bf16.msra.mxu0 0
  %3966 = vmatprep.subr.bf16.mxu0 0
  %3967 = vmatpush1.bf16.msra.mxu0 0
  %3968 = vmatprep.subr.bf16.mxu0 0
  %3969 = vmatpush1.bf16.msra.mxu0 0
  %3970 = vmatprep.subr.bf16.mxu0 0
  %3971 = vmatpush1.bf16.msra.mxu0 0
  %3972 = vmatprep.subr.bf16.mxu0 0
  %3973 = vmatpush1.bf16.msra.mxu0 0
  %3974 = vmatprep.subr.bf16.mxu0 0
  %3975 = vmatpush1.bf16.msra.mxu0 0
  %3976 = vmatprep.mubr.bf16.mxu0 0
  %3977 = vmatmul.mubr.bf16.gmra.mrb[0].mxu0 %v3942
  %v3978 = vpop.f32.mrb[0].mxu0
  %v3979 = vadd.f32 0.0, %v3978
  %v3980 = vpop.f32.mrb[0].mxu0
  %v3981 = vadd.f32 0.0, %v3980
  %v3982 = vpop.f32.mrb[0].mxu0
  %v3983 = vpop.f32.mrb[0].mxu0
  %3984 = vdwg.mxu0
  %v3985 = vadd.f32 %v3892, %v3979
  %v3986 = vadd.f32 %v3893, %v3981
  %v3987 = vadd.f32 %v3985, %v655
  %v3988 = vadd.f32 %v3986, %v659
  %v3989 = vmax.f32 %v3987, 0.0
  %v3990 = vmax.f32 %v3988, 0.0
  %3991 = vmatprep.subr.bf16.mxu0 %v129
  %3992 = vmatpush1.bf16.msra.mxu0 %v128
  %3993 = vmatprep.subr.bf16.mxu0 %v143
  %3994 = vmatpush1.bf16.msra.mxu0 %v140
  %3995 = vmatprep.subr.bf16.mxu0 0
  %3996 = vmatpush1.bf16.msra.mxu0 0
  %3997 = vmatprep.subr.bf16.mxu0 0
  %3998 = vmatpush1.bf16.msra.mxu0 0
  %3999 = vmatprep.subr.bf16.mxu0 0
  %4000 = vmatpush1.bf16.msra.mxu0 0
  %4001 = vmatprep.subr.bf16.mxu0 0
  %4002 = vmatpush1.bf16.msra.mxu0 0
  %4003 = vmatprep.subr.bf16.mxu0 0
  %4004 = vmatpush1.bf16.msra.mxu0 0
  %4005 = vmatprep.subr.bf16.mxu0 0
  %4006 = vmatpush1.bf16.msra.mxu0 0
  %4007 = vmatprep.subr.bf16.mxu0 0
  %4008 = vmatpush1.bf16.msra.mxu0 0
  %4009 = vmatprep.subr.bf16.mxu0 0
  %4010 = vmatpush1.bf16.msra.mxu0 0
  %4011 = vmatprep.subr.bf16.mxu0 0
  %4012 = vmatpush1.bf16.msra.mxu0 0
  %4013 = vmatprep.subr.bf16.mxu0 0
  %4014 = vmatpush1.bf16.msra.mxu0 0
  %4015 = vmatprep.subr.bf16.mxu0 0
  %4016 = vmatpush1.bf16.msra.mxu0 0
  %4017 = vmatprep.subr.bf16.mxu0 0
  %4018 = vmatpush1.bf16.msra.mxu0 0
  %4019 = vmatprep.subr.bf16.mxu0 0
  %4020 = vmatpush1.bf16.msra.mxu0 0
  %4021 = vmatprep.subr.bf16.mxu0 0
  %4022 = vmatpush1.bf16.msra.mxu0 0
  %4023 = vmatprep.mubr.bf16.mxu0 0
  %4024 = vmatmul.mubr.bf16.gmra.mrb[0].mxu0 %v3849
  %v4025 = vpop.f32.mrb[0].mxu0
  %v4026 = vadd.f32 0.0, %v4025
  %v4027 = vpop.f32.mrb[0].mxu0
  %v4028 = vadd.f32 0.0, %v4027
  %v4029 = vpop.f32.mrb[0].mxu0
  %v4030 = vpop.f32.mrb[0].mxu0
  %4031 = vdwg.mxu0
  %4032 = vmatprep.subr.bf16.mxu0 %v230
  %4033 = vmatpush1.bf16.msra.mxu0 %v229
  %4034 = vmatprep.subr.bf16.mxu0 %v242
  %4035 = vmatpush1.bf16.msra.mxu0 %v239
  %4036 = vmatprep.subr.bf16.mxu0 0
  %4037 = vmatpush1.bf16.msra.mxu0 0
  %4038 = vmatprep.subr.bf16.mxu0 0
  %4039 = vmatpush1.bf16.msra.mxu0 0
  %4040 = vmatprep.subr.bf16.mxu0 0
  %4041 = vmatpush1.bf16.msra.mxu0 0
  %4042 = vmatprep.subr.bf16.mxu0 0
  %4043 = vmatpush1.bf16.msra.mxu0 0
  %4044 = vmatprep.subr.bf16.mxu0 0
  %4045 = vmatpush1.bf16.msra.mxu0 0
  %4046 = vmatprep.subr.bf16.mxu0 0
  %4047 = vmatpush1.bf16.msra.mxu0 0
  %4048 = vmatprep.subr.bf16.mxu0 0
  %4049 = vmatpush1.bf16.msra.mxu0 0
  %4050 = vmatprep.subr.bf16.mxu0 0
  %4051 = vmatpush1.bf16.msra.mxu0 0
  %4052 = vmatprep.subr.bf16.mxu0 0
  %4053 = vmatpush1.bf16.msra.mxu0 0
  %4054 = vmatprep.subr.bf16.mxu0 0
  %4055 = vmatpush1.bf16.msra.mxu0 0
  %4056 = vmatprep.subr.bf16.mxu0 0
  %4057 = vmatpush1.bf16.msra.mxu0 0
  %4058 = vmatprep.subr.bf16.mxu0 0
  %4059 = vmatpush1.bf16.msra.mxu0 0
  %4060 = vmatprep.subr.bf16.mxu0 0
  %4061 = vmatpush1.bf16.msra.mxu0 0
  %4062 = vmatprep.subr.bf16.mxu0 0
  %4063 = vmatpush1.bf16.msra.mxu0 0
  %4064 = vmatprep.mubr.bf16.mxu0 0
  %4065 = vmatmul.mubr.bf16.gmra.mrb[0].mxu0 %v3593
  %v4066 = vpop.f32.mrb[0].mxu0
  %v4067 = vadd.f32 %v4026, %v4066
  %v4068 = vpop.f32.mrb[0].mxu0
  %v4069 = vadd.f32 %v4028, %v4068
  %v4070 = vpop.f32.mrb[0].mxu0
  %v4071 = vpop.f32.mrb[0].mxu0
  %4072 = vdwg.mxu0
  %4073 = vmatprep.subr.bf16.mxu0 %v350
  %4074 = vmatpush1.bf16.msra.mxu0 %v349
  %4075 = vmatprep.subr.bf16.mxu0 %v362
  %4076 = vmatpush1.bf16.msra.mxu0 %v359
  %4077 = vmatprep.subr.bf16.mxu0 0
  %4078 = vmatpush1.bf16.msra.mxu0 0
  %4079 = vmatprep.subr.bf16.mxu0 0
  %4080 = vmatpush1.bf16.msra.mxu0 0
  %4081 = vmatprep.subr.bf16.mxu0 0
  %4082 = vmatpush1.bf16.msra.mxu0 0
  %4083 = vmatprep.subr.bf16.mxu0 0
  %4084 = vmatpush1.bf16.msra.mxu0 0
  %4085 = vmatprep.subr.bf16.mxu0 0
  %4086 = vmatpush1.bf16.msra.mxu0 0
  %4087 = vmatprep.subr.bf16.mxu0 0
  %4088 = vmatpush1.bf16.msra.mxu0 0
  %4089 = vmatprep.subr.bf16.mxu0 0
  %4090 = vmatpush1.bf16.msra.mxu0 0
  %4091 = vmatprep.subr.bf16.mxu0 0
  %4092 = vmatpush1.bf16.msra.mxu0 0
  %4093 = vmatprep.subr.bf16.mxu0 0
  %4094 = vmatpush1.bf16.msra.mxu0 0
  %4095 = vmatprep.subr.bf16.mxu0 0
  %4096 = vmatpush1.bf16.msra.mxu0 0
  %4097 = vmatprep.subr.bf16.mxu0 0
  %4098 = vmatpush1.bf16.msra.mxu0 0
  %4099 = vmatprep.subr.bf16.mxu0 0
  %4100 = vmatpush1.bf16.msra.mxu0 0
  %4101 = vmatprep.subr.bf16.mxu0 0
  %4102 = vmatpush1.bf16.msra.mxu0 0
  %4103 = vmatprep.subr.bf16.mxu0 0
  %4104 = vmatpush1.bf16.msra.mxu0 0
  %4105 = vmatprep.mubr.bf16.mxu0 0
  %4106 = vmatmul.mubr.bf16.gmra.mrb[0].mxu0 %v3942
  %v4107 = vpop.f32.mrb[0].mxu0
  %v4108 = vadd.f32 0.0, %v4107
  %v4109 = vpop.f32.mrb[0].mxu0
  %v4110 = vadd.f32 0.0, %v4109
  %v4111 = vpop.f32.mrb[0].mxu0
  %v4112 = vpop.f32.mrb[0].mxu0
  %4113 = vdwg.mxu0
  %v4114 = vadd.f32 %v4067, %v4108
  %v4115 = vadd.f32 %v4069, %v4110
  %v4116 = vld [vmem:[%s0 + $0x19] sm:$0x1]
  %v4117 = vld [vmem:[%s0 + $0x39] sm:$0x1]
  %v4118 = vld [vmem:[%s0 + $0x59] sm:$0x1]
  %v4119 = vld [vmem:[%s0 + $0x79] sm:$0x1]
  %v4120 = vld [vmem:[%s0 + $0x99] sm:$0x1]
  %v4121 = vld [vmem:[%s0 + $0xb9] sm:$0x1]
  %v4122 = vld [vmem:[%s0 + $0xd9] sm:$0x1]
  %v4123 = vld [vmem:[%s0 + $0xf9] sm:$0x1]
  %v4124 = vpack.c.bf16 %v4116, %v4116
  %v4125 = vpack.c.bf16 %v4117, %v4117
  %v4126 = vpack.c.bf16 %v4118, %v4118
  %v4127 = vpack.c.bf16 %v4119, %v4119
  %v4128 = vpack.c.bf16 %v4120, %v4120
  %v4129 = vpack.c.bf16 %v4121, %v4121
  %v4130 = vpack.c.bf16 %v4122, %v4122
  %v4131 = vpack.c.bf16 %v4123, %v4123
  %v4140 = vunpack.c.l.b16 %v4124
  %v4141 = vunpack.c.l.b16 %v4125
  %v4142 = vunpack.c.l.b16 %v4126
  %v4143 = vunpack.c.l.b16 %v4127
  %v4144 = vunpack.c.l.b16 %v4128
  %v4145 = vunpack.c.l.b16 %v4129
  %v4146 = vunpack.c.l.b16 %v4130
  %v4147 = vunpack.c.l.b16 %v4131
  %v4148 = vrot.slane %v4141, 7
  %v4149 = vsel %vm95, %v4148, %v4140
  %v4150 = vrot.slane %v4142, 6
  %v4151 = vsel %vm98, %v4150, %v4149
  %v4152 = vrot.slane %v4143, 5
  %v4153 = vsel %vm101, %v4152, %v4151
  %v4154 = vrot.slane %v4144, 4
  %v4155 = vsel %vm104, %v4154, %v4153
  %v4156 = vrot.slane %v4145, 3
  %v4157 = vsel %vm107, %v4156, %v4155
  %v4158 = vrot.slane %v4146, 2
  %v4159 = vsel %vm110, %v4158, %v4157
  %v4160 = vrot.slane %v4147, 1
  %v4161 = vsel %vm113, %v4160, %v4159
  %v4162 = vpack.c.b16 %v4161, %v4161
  %v4164 = vsel %vm134, %v4162, 0
  %4166 = vmatprep.subr.bf16.mxu0 %v472
  %4167 = vmatpush1.bf16.msra.mxu0 %v471
  %4168 = vmatprep.subr.bf16.mxu0 %v484
  %4169 = vmatpush1.bf16.msra.mxu0 %v481
  %4170 = vmatprep.subr.bf16.mxu0 0
  %4171 = vmatpush1.bf16.msra.mxu0 0
  %4172 = vmatprep.subr.bf16.mxu0 0
  %4173 = vmatpush1.bf16.msra.mxu0 0
  %4174 = vmatprep.subr.bf16.mxu0 0
  %4175 = vmatpush1.bf16.msra.mxu0 0
  %4176 = vmatprep.subr.bf16.mxu0 0
  %4177 = vmatpush1.bf16.msra.mxu0 0
  %4178 = vmatprep.subr.bf16.mxu0 0
  %4179 = vmatpush1.bf16.msra.mxu0 0
  %4180 = vmatprep.subr.bf16.mxu0 0
  %4181 = vmatpush1.bf16.msra.mxu0 0
  %4182 = vmatprep.subr.bf16.mxu0 0
  %4183 = vmatpush1.bf16.msra.mxu0 0
  %4184 = vmatprep.subr.bf16.mxu0 0
  %4185 = vmatpush1.bf16.msra.mxu0 0
  %4186 = vmatprep.subr.bf16.mxu0 0
  %4187 = vmatpush1.bf16.msra.mxu0 0
  %4188 = vmatprep.subr.bf16.mxu0 0
  %4189 = vmatpush1.bf16.msra.mxu0 0
  %4190 = vmatprep.subr.bf16.mxu0 0
  %4191 = vmatpush1.bf16.msra.mxu0 0
  %4192 = vmatprep.subr.bf16.mxu0 0
  %4193 = vmatpush1.bf16.msra.mxu0 0
  %4194 = vmatprep.subr.bf16.mxu0 0
  %4195 = vmatpush1.bf16.msra.mxu0 0
  %4196 = vmatprep.subr.bf16.mxu0 0
  %4197 = vmatpush1.bf16.msra.mxu0 0
  %4198 = vmatprep.mubr.bf16.mxu0 0
  %4199 = vmatmul.mubr.bf16.gmra.mrb[0].mxu0 %v4164
  %v4200 = vpop.f32.mrb[0].mxu0
  %v4201 = vadd.f32 0.0, %v4200
  %v4202 = vpop.f32.mrb[0].mxu0
  %v4203 = vadd.f32 0.0, %v4202
  %v4204 = vpop.f32.mrb[0].mxu0
  %v4205 = vpop.f32.mrb[0].mxu0
  %4206 = vdwg.mxu0
  %v4207 = vadd.f32 %v4114, %v4201
  %v4208 = vadd.f32 %v4115, %v4203
  %v4209 = vld [vmem:[%s0 + $0x1a] sm:$0x1]
  %v4210 = vld [vmem:[%s0 + $0x3a] sm:$0x1]
  %v4211 = vld [vmem:[%s0 + $0x5a] sm:$0x1]
  %v4212 = vld [vmem:[%s0 + $0x7a] sm:$0x1]
  %v4213 = vld [vmem:[%s0 + $0x9a] sm:$0x1]
  %v4214 = vld [vmem:[%s0 + $0xba] sm:$0x1]
  %v4215 = vld [vmem:[%s0 + $0xda] sm:$0x1]
  %v4216 = vld [vmem:[%s0 + $0xfa] sm:$0x1]
  %v4217 = vpack.c.bf16 %v4209, %v4209
  %v4218 = vpack.c.bf16 %v4210, %v4210
  %v4219 = vpack.c.bf16 %v4211, %v4211
  %v4220 = vpack.c.bf16 %v4212, %v4212
  %v4221 = vpack.c.bf16 %v4213, %v4213
  %v4222 = vpack.c.bf16 %v4214, %v4214
  %v4223 = vpack.c.bf16 %v4215, %v4215
  %v4224 = vpack.c.bf16 %v4216, %v4216
  %v4233 = vunpack.c.l.b16 %v4217
  %v4234 = vunpack.c.l.b16 %v4218
  %v4235 = vunpack.c.l.b16 %v4219
  %v4236 = vunpack.c.l.b16 %v4220
  %v4237 = vunpack.c.l.b16 %v4221
  %v4238 = vunpack.c.l.b16 %v4222
  %v4239 = vunpack.c.l.b16 %v4223
  %v4240 = vunpack.c.l.b16 %v4224
  %v4241 = vrot.slane %v4234, 7
  %v4242 = vsel %vm95, %v4241, %v4233
  %v4243 = vrot.slane %v4235, 6
  %v4244 = vsel %vm98, %v4243, %v4242
  %v4245 = vrot.slane %v4236, 5
  %v4246 = vsel %vm101, %v4245, %v4244
  %v4247 = vrot.slane %v4237, 4
  %v4248 = vsel %vm104, %v4247, %v4246
  %v4249 = vrot.slane %v4238, 3
  %v4250 = vsel %vm107, %v4249, %v4248
  %v4251 = vrot.slane %v4239, 2
  %v4252 = vsel %vm110, %v4251, %v4250
  %v4253 = vrot.slane %v4240, 1
  %v4254 = vsel %vm113, %v4253, %v4252
  %v4255 = vpack.c.b16 %v4254, %v4254
  %v4257 = vsel %vm134, %v4255, 0
  %4259 = vmatprep.subr.bf16.mxu0 %v594
  %4260 = vmatpush1.bf16.msra.mxu0 %v593
  %4261 = vmatprep.subr.bf16.mxu0 %v606
  %4262 = vmatpush1.bf16.msra.mxu0 %v603
  %4263 = vmatprep.subr.bf16.mxu0 0
  %4264 = vmatpush1.bf16.msra.mxu0 0
  %4265 = vmatprep.subr.bf16.mxu0 0
  %4266 = vmatpush1.bf16.msra.mxu0 0
  %4267 = vmatprep.subr.bf16.mxu0 0
  %4268 = vmatpush1.bf16.msra.mxu0 0
  %4269 = vmatprep.subr.bf16.mxu0 0
  %4270 = vmatpush1.bf16.msra.mxu0 0
  %4271 = vmatprep.subr.bf16.mxu0 0
  %4272 = vmatpush1.bf16.msra.mxu0 0
  %4273 = vmatprep.subr.bf16.mxu0 0
  %4274 = vmatpush1.bf16.msra.mxu0 0
  %4275 = vmatprep.subr.bf16.mxu0 0
  %4276 = vmatpush1.bf16.msra.mxu0 0
  %4277 = vmatprep.subr.bf16.mxu0 0
  %4278 = vmatpush1.bf16.msra.mxu0 0
  %4279 = vmatprep.subr.bf16.mxu0 0
  %4280 = vmatpush1.bf16.msra.mxu0 0
  %4281 = vmatprep.subr.bf16.mxu0 0
  %4282 = vmatpush1.bf16.msra.mxu0 0
  %4283 = vmatprep.subr.bf16.mxu0 0
  %4284 = vmatpush1.bf16.msra.mxu0 0
  %4285 = vmatprep.subr.bf16.mxu0 0
  %4286 = vmatpush1.bf16.msra.mxu0 0
  %4287 = vmatprep.subr.bf16.mxu0 0
  %4288 = vmatpush1.bf16.msra.mxu0 0
  %4289 = vmatprep.subr.bf16.mxu0 0
  %4290 = vmatpush1.bf16.msra.mxu0 0
  %4291 = vmatprep.mubr.bf16.mxu0 0
  %4292 = vmatmul.mubr.bf16.gmra.mrb[0].mxu0 %v4257
  %v4293 = vpop.f32.mrb[0].mxu0
  %v4294 = vadd.f32 0.0, %v4293
  %v4295 = vpop.f32.mrb[0].mxu0
  %v4296 = vadd.f32 0.0, %v4295
  %v4297 = vpop.f32.mrb[0].mxu0
  %v4298 = vpop.f32.mrb[0].mxu0
  %4299 = vdwg.mxu0
  %v4300 = vadd.f32 %v4207, %v4294
  %v4301 = vadd.f32 %v4208, %v4296
  %v4302 = vadd.f32 %v4300, %v655
  %v4303 = vadd.f32 %v4301, %v659
  %v4304 = vmax.f32 %v4302, 0.0
  %v4305 = vmax.f32 %v4303, 0.0
  %v4306 = vmax.f32 %v3989, %v4304
  %v4307 = vmax.f32 %v3990, %v4305
  %4309 = vrot.lane.b32.xlu0 %v4306, 112
  %v4310 = vpop.permute.xlu0 %4309
  %v4312 = vmax.f32 %v4306, %v4310
  %4314 = vrot.lane.b32.xlu0 %v4307, 112
  %v4315 = vpop.permute.xlu0 %4314
  %v4317 = vmax.f32 %v4307, %v4315
  %4319 = vrot.lane.b32.xlu0 %v4312, 112
  %v4320 = vpop.permute.xlu0 %4319
  %4322 = vrot.lane.b32.xlu0 %v4312, 96
  %v4323 = vpop.permute.xlu0 %4322
  %4325 = vrot.lane.b32.xlu0 %v4312, 80
  %v4326 = vpop.permute.xlu0 %4325
  %4329 = vrot.lane.b32.xlu0 %v4317, 64
  %v4330 = vpop.permute.xlu0 %4329
  %4332 = vrot.lane.b32.xlu0 %v4317, 48
  %v4333 = vpop.permute.xlu0 %4332
  %v4335 = vsel %vm1010, %v4312, %v4320
  %v4336 = vsel %vm1012, %v4335, %v4323
  %v4337 = vsel %vm1014, %v4336, %v4326
  %v4338 = vsel %vm1016, %v4337, %v4330
  %v4339 = vsel %vm1018, %v4338, %v4333
  %v4340 = vpack.c.bf16 %v1019, %v1019
  %v4341 = vld [vmem:[%s3] sm:$0xf]
  %v4342 = vld [vmem:[%s3 + $0x4] sm:$0xf]
  %v4343 = vld [vmem:[%s3 + $0x8] sm:$0xf]
  %v4344 = vld [vmem:[%s3 + $0xc] sm:$0xf]
  %v4345 = vld [vmem:[%s3 + $0x10] sm:$0xf]
  %v4346 = vld [vmem:[%s3 + $0x14] sm:$0xf]
  %v4347 = vld [vmem:[%s3 + $0x18] sm:$0xf]
  %v4348 = vld [vmem:[%s3 + $0x1c] sm:$0xf]
  %v4349 = vld [vmem:[%s3 + $0x20] sm:$0xf]
  %v4350 = vld [vmem:[%s3 + $0x24] sm:$0xf]
  %v4351 = vld [vmem:[%s3 + $0x28] sm:$0xf]
  %v4352 = vld [vmem:[%s3 + $0x2c] sm:$0xf]
  %v4353 = vpack.c.bf16 %v1683, %v1683
  %s4354 = scalar_lea.vmem %s3, 48
  %v4355 = vld [vmem:[%s4354] sm:$0xf]
  %v4356 = vld [vmem:[%s4354 + $0x4] sm:$0xf]
  %v4357 = vld [vmem:[%s4354 + $0x8] sm:$0xf]
  %v4358 = vld [vmem:[%s4354 + $0xc] sm:$0xf]
  %v4359 = vld [vmem:[%s4354 + $0x10] sm:$0xf]
  %v4360 = vld [vmem:[%s4354 + $0x14] sm:$0xf]
  %v4361 = vld [vmem:[%s4354 + $0x18] sm:$0xf]
  %v4362 = vld [vmem:[%s4354 + $0x1c] sm:$0xf]
  %v4363 = vld [vmem:[%s4354 + $0x20] sm:$0xf]
  %v4364 = vld [vmem:[%s4354 + $0x24] sm:$0xf]
  %v4365 = vld [vmem:[%s4354 + $0x28] sm:$0xf]
  %v4366 = vld [vmem:[%s4354 + $0x2c] sm:$0xf]
  %v4379 = vunpack.c.l.b16 %v4355
  %v4380 = vunpack.c.l.b16 %v4356
  %v4381 = vunpack.c.l.b16 %v4357
  %v4382 = vunpack.c.l.b16 %v4358
  %v4383 = vunpack.c.l.b16 %v4359
  %v4384 = vunpack.c.l.b16 %v4360
  %v4385 = vunpack.c.l.b16 %v4361
  %v4386 = vunpack.c.l.b16 %v4362
  %v4387 = vunpack.c.l.b16 %v4363
  %v4388 = vunpack.c.l.b16 %v4364
  %v4389 = vunpack.c.l.b16 %v4365
  %v4390 = vunpack.c.l.b16 %v4366
  %v4391 = vpack.c.b16 %v4380, %v4379
  %v4392 = vpack.c.b16 %v4382, %v4381
  %v4393 = vpack.c.b16 %v4384, %v4383
  %v4394 = vpack.c.b16 %v4386, %v4385
  %v4395 = vpack.c.b16 %v4388, %v4387
  %v4396 = vpack.c.b16 %v4390, %v4389
  %vm4403 = vcmask 785408
  %v4405 = vsel %vm4403, %v4353, 0
  %4407 = vmatprep.subr.bf16.mxu0 0
  %4408 = vmatpush1.bf16.msra.mxu0 %v4391
  %4409 = vmatprep.subr.bf16.mxu0 0
  %4410 = vmatpush1.bf16.msra.mxu0 %v4392
  %4411 = vmatprep.subr.bf16.mxu0 0
  %4412 = vmatpush1.bf16.msra.mxu0 %v4393
  %4413 = vmatprep.subr.bf16.mxu0 0
  %4414 = vmatpush1.bf16.msra.mxu0 %v4394
  %4415 = vmatprep.subr.bf16.mxu0 0
  %4416 = vmatpush1.bf16.msra.mxu0 %v4395
  %4417 = vmatprep.subr.bf16.mxu0 0
  %4418 = vmatpush1.bf16.msra.mxu0 %v4396
  %4419 = vmatprep.subr.bf16.mxu0 0
  %4420 = vmatpush1.bf16.msra.mxu0 0
  %4421 = vmatprep.subr.bf16.mxu0 0
  %4422 = vmatpush1.bf16.msra.mxu0 0
  %4423 = vmatprep.subr.bf16.mxu0 0
  %4424 = vmatpush1.bf16.msra.mxu0 0
  %4425 = vmatprep.subr.bf16.mxu0 0
  %4426 = vmatpush1.bf16.msra.mxu0 0
  %4427 = vmatprep.subr.bf16.mxu0 0
  %4428 = vmatpush1.bf16.msra.mxu0 0
  %4429 = vmatprep.subr.bf16.mxu0 0
  %4430 = vmatpush1.bf16.msra.mxu0 0
  %4431 = vmatprep.subr.bf16.mxu0 0
  %4432 = vmatpush1.bf16.msra.mxu0 0
  %4433 = vmatprep.subr.bf16.mxu0 0
  %4434 = vmatpush1.bf16.msra.mxu0 0
  %4435 = vmatprep.subr.bf16.mxu0 0
  %4436 = vmatpush1.bf16.msra.mxu0 0
  %4437 = vmatprep.subr.bf16.mxu0 0
  %4438 = vmatpush1.bf16.msra.mxu0 0
  %4439 = vmatprep.mubr.bf16.mxu0 0
  %4440 = vmatmul.mubr.bf16.gmra.mrb[0].mxu0 %v4405
  %v4441 = vpop.f32.mrb[0].mxu0
  %v4442 = vadd.f32 0.0, %v4441
  %v4443 = vpop.f32.mrb[0].mxu0
  %v4444 = vpop.f32.mrb[0].mxu0
  %v4445 = vpop.f32.mrb[0].mxu0
  %4446 = vdwg.mxu0
  %v4459 = vunpack.c.l.b16 %v4341
  %v4460 = vunpack.c.l.b16 %v4342
  %v4461 = vunpack.c.l.b16 %v4343
  %v4462 = vunpack.c.l.b16 %v4344
  %v4463 = vunpack.c.l.b16 %v4345
  %v4464 = vunpack.c.l.b16 %v4346
  %v4465 = vunpack.c.l.b16 %v4347
  %v4466 = vunpack.c.l.b16 %v4348
  %v4467 = vunpack.c.l.b16 %v4349
  %v4468 = vunpack.c.l.b16 %v4350
  %v4469 = vunpack.c.l.b16 %v4351
  %v4470 = vunpack.c.l.b16 %v4352
  %v4471 = vpack.c.b16 %v4460, %v4459
  %v4472 = vpack.c.b16 %v4462, %v4461
  %v4473 = vpack.c.b16 %v4464, %v4463
  %v4474 = vpack.c.b16 %v4466, %v4465
  %v4475 = vpack.c.b16 %v4468, %v4467
  %v4476 = vpack.c.b16 %v4470, %v4469
  %v4484 = vsel %vm4403, %v4340, 0
  %4486 = vmatprep.subr.bf16.mxu0 0
  %4487 = vmatpush1.bf16.msra.mxu0 %v4471
  %4488 = vmatprep.subr.bf16.mxu0 0
  %4489 = vmatpush1.bf16.msra.mxu0 %v4472
  %4490 = vmatprep.subr.bf16.mxu0 0
  %4491 = vmatpush1.bf16.msra.mxu0 %v4473
  %4492 = vmatprep.subr.bf16.mxu0 0
  %4493 = vmatpush1.bf16.msra.mxu0 %v4474
  %4494 = vmatprep.subr.bf16.mxu0 0
  %4495 = vmatpush1.bf16.msra.mxu0 %v4475
  %4496 = vmatprep.subr.bf16.mxu0 0
  %4497 = vmatpush1.bf16.msra.mxu0 %v4476
  %4498 = vmatprep.subr.bf16.mxu0 0
  %4499 = vmatpush1.bf16.msra.mxu0 0
  %4500 = vmatprep.subr.bf16.mxu0 0
  %4501 = vmatpush1.bf16.msra.mxu0 0
  %4502 = vmatprep.subr.bf16.mxu0 0
  %4503 = vmatpush1.bf16.msra.mxu0 0
  %4504 = vmatprep.subr.bf16.mxu0 0
  %4505 = vmatpush1.bf16.msra.mxu0 0
  %4506 = vmatprep.subr.bf16.mxu0 0
  %4507 = vmatpush1.bf16.msra.mxu0 0
  %4508 = vmatprep.subr.bf16.mxu0 0
  %4509 = vmatpush1.bf16.msra.mxu0 0
  %4510 = vmatprep.subr.bf16.mxu0 0
  %4511 = vmatpush1.bf16.msra.mxu0 0
  %4512 = vmatprep.subr.bf16.mxu0 0
  %4513 = vmatpush1.bf16.msra.mxu0 0
  %4514 = vmatprep.subr.bf16.mxu0 0
  %4515 = vmatpush1.bf16.msra.mxu0 0
  %4516 = vmatprep.subr.bf16.mxu0 0
  %4517 = vmatpush1.bf16.msra.mxu0 0
  %4518 = vmatprep.mubr.bf16.mxu0 0
  %4519 = vmatmul.mubr.bf16.gmra.mrb[0].mxu0 %v4484
  %v4520 = vpop.f32.mrb[0].mxu0
  %v4521 = vadd.f32 %v4442, %v4520
  %v4522 = vpop.f32.mrb[0].mxu0
  %v4523 = vpop.f32.mrb[0].mxu0
  %v4524 = vpop.f32.mrb[0].mxu0
  %4525 = vdwg.mxu0
  %v4526 = vpack.c.bf16 %v2347, %v2347
  %s4527 = scalar_lea.vmem %s3, 96
  %v4528 = vld [vmem:[%s4527] sm:$0xf]
  %v4529 = vld [vmem:[%s4527 + $0x4] sm:$0xf]
  %v4530 = vld [vmem:[%s4527 + $0x8] sm:$0xf]
  %v4531 = vld [vmem:[%s4527 + $0xc] sm:$0xf]
  %v4532 = vld [vmem:[%s4527 + $0x10] sm:$0xf]
  %v4533 = vld [vmem:[%s4527 + $0x14] sm:$0xf]
  %v4534 = vld [vmem:[%s4527 + $0x18] sm:$0xf]
  %v4535 = vld [vmem:[%s4527 + $0x1c] sm:$0xf]
  %v4536 = vld [vmem:[%s4527 + $0x20] sm:$0xf]
  %v4537 = vld [vmem:[%s4527 + $0x24] sm:$0xf]
  %v4538 = vld [vmem:[%s4527 + $0x28] sm:$0xf]
  %v4539 = vld [vmem:[%s4527 + $0x2c] sm:$0xf]
  %v4552 = vunpack.c.l.b16 %v4528
  %v4553 = vunpack.c.l.b16 %v4529
  %v4554 = vunpack.c.l.b16 %v4530
  %v4555 = vunpack.c.l.b16 %v4531
  %v4556 = vunpack.c.l.b16 %v4532
  %v4557 = vunpack.c.l.b16 %v4533
  %v4558 = vunpack.c.l.b16 %v4534
  %v4559 = vunpack.c.l.b16 %v4535
  %v4560 = vunpack.c.l.b16 %v4536
  %v4561 = vunpack.c.l.b16 %v4537
  %v4562 = vunpack.c.l.b16 %v4538
  %v4563 = vunpack.c.l.b16 %v4539
  %v4564 = vpack.c.b16 %v4553, %v4552
  %v4565 = vpack.c.b16 %v4555, %v4554
  %v4566 = vpack.c.b16 %v4557, %v4556
  %v4567 = vpack.c.b16 %v4559, %v4558
  %v4568 = vpack.c.b16 %v4561, %v4560
  %v4569 = vpack.c.b16 %v4563, %v4562
  %v4577 = vsel %vm4403, %v4526, 0
  %4579 = vmatprep.subr.bf16.mxu0 0
  %4580 = vmatpush1.bf16.msra.mxu0 %v4564
  %4581 = vmatprep.subr.bf16.mxu0 0
  %4582 = vmatpush1.bf16.msra.mxu0 %v4565
  %4583 = vmatprep.subr.bf16.mxu0 0
  %4584 = vmatpush1.bf16.msra.mxu0 %v4566
  %4585 = vmatprep.subr.bf16.mxu0 0
  %4586 = vmatpush1.bf16.msra.mxu0 %v4567
  %4587 = vmatprep.subr.bf16.mxu0 0
  %4588 = vmatpush1.bf16.msra.mxu0 %v4568
  %4589 = vmatprep.subr.bf16.mxu0 0
  %4590 = vmatpush1.bf16.msra.mxu0 %v4569
  %4591 = vmatprep.subr.bf16.mxu0 0
  %4592 = vmatpush1.bf16.msra.mxu0 0
  %4593 = vmatprep.subr.bf16.mxu0 0
  %4594 = vmatpush1.bf16.msra.mxu0 0
  %4595 = vmatprep.subr.bf16.mxu0 0
  %4596 = vmatpush1.bf16.msra.mxu0 0
  %4597 = vmatprep.subr.bf16.mxu0 0
  %4598 = vmatpush1.bf16.msra.mxu0 0
  %4599 = vmatprep.subr.bf16.mxu0 0
  %4600 = vmatpush1.bf16.msra.mxu0 0
  %4601 = vmatprep.subr.bf16.mxu0 0
  %4602 = vmatpush1.bf16.msra.mxu0 0
  %4603 = vmatprep.subr.bf16.mxu0 0
  %4604 = vmatpush1.bf16.msra.mxu0 0
  %4605 = vmatprep.subr.bf16.mxu0 0
  %4606 = vmatpush1.bf16.msra.mxu0 0
  %4607 = vmatprep.subr.bf16.mxu0 0
  %4608 = vmatpush1.bf16.msra.mxu0 0
  %4609 = vmatprep.subr.bf16.mxu0 0
  %4610 = vmatpush1.bf16.msra.mxu0 0
  %4611 = vmatprep.mubr.bf16.mxu0 0
  %4612 = vmatmul.mubr.bf16.gmra.mrb[0].mxu0 %v4577
  %v4613 = vpop.f32.mrb[0].mxu0
  %v4614 = vadd.f32 0.0, %v4613
  %v4615 = vpop.f32.mrb[0].mxu0
  %v4616 = vpop.f32.mrb[0].mxu0
  %v4617 = vpop.f32.mrb[0].mxu0
  %4618 = vdwg.mxu0
  %v4619 = vadd.f32 %v4521, %v4614
  %v4621 = vlaneseq
  %v4622 = vshrl.u32 %v4621, 7
  %v4623 = vsub.s32 0, %v4622
  %v4624 = vrot.slane %v34, %v4623
  %v4626 = vadd.f32 %v4619, %v4624
  %v4627 = vmax.f32 %v4626, 0.0
  %4628 = vmatprep.subr.bf16.mxu0 0
  %4629 = vmatpush1.bf16.msra.mxu0 %v4391
  %4630 = vmatprep.subr.bf16.mxu0 0
  %4631 = vmatpush1.bf16.msra.mxu0 %v4392
  %4632 = vmatprep.subr.bf16.mxu0 0
  %4633 = vmatpush1.bf16.msra.mxu0 %v4393
  %4634 = vmatprep.subr.bf16.mxu0 0
  %4635 = vmatpush1.bf16.msra.mxu0 %v4394
  %4636 = vmatprep.subr.bf16.mxu0 0
  %4637 = vmatpush1.bf16.msra.mxu0 %v4395
  %4638 = vmatprep.subr.bf16.mxu0 0
  %4639 = vmatpush1.bf16.msra.mxu0 %v4396
  %4640 = vmatprep.subr.bf16.mxu0 0
  %4641 = vmatpush1.bf16.msra.mxu0 0
  %4642 = vmatprep.subr.bf16.mxu0 0
  %4643 = vmatpush1.bf16.msra.mxu0 0
  %4644 = vmatprep.subr.bf16.mxu0 0
  %4645 = vmatpush1.bf16.msra.mxu0 0
  %4646 = vmatprep.subr.bf16.mxu0 0
  %4647 = vmatpush1.bf16.msra.mxu0 0
  %4648 = vmatprep.subr.bf16.mxu0 0
  %4649 = vmatpush1.bf16.msra.mxu0 0
  %4650 = vmatprep.subr.bf16.mxu0 0
  %4651 = vmatpush1.bf16.msra.mxu0 0
  %4652 = vmatprep.subr.bf16.mxu0 0
  %4653 = vmatpush1.bf16.msra.mxu0 0
  %4654 = vmatprep.subr.bf16.mxu0 0
  %4655 = vmatpush1.bf16.msra.mxu0 0
  %4656 = vmatprep.subr.bf16.mxu0 0
  %4657 = vmatpush1.bf16.msra.mxu0 0
  %4658 = vmatprep.subr.bf16.mxu0 0
  %4659 = vmatpush1.bf16.msra.mxu0 0
  %4660 = vmatprep.mubr.bf16.mxu0 0
  %4661 = vmatmul.mubr.bf16.gmra.mrb[0].mxu0 %v4577
  %v4662 = vpop.f32.mrb[0].mxu0
  %v4663 = vadd.f32 0.0, %v4662
  %v4664 = vpop.f32.mrb[0].mxu0
  %v4665 = vpop.f32.mrb[0].mxu0
  %v4666 = vpop.f32.mrb[0].mxu0
  %4667 = vdwg.mxu0
  %4668 = vmatprep.subr.bf16.mxu0 0
  %4669 = vmatpush1.bf16.msra.mxu0 %v4471
  %4670 = vmatprep.subr.bf16.mxu0 0
  %4671 = vmatpush1.bf16.msra.mxu0 %v4472
  %4672 = vmatprep.subr.bf16.mxu0 0
  %4673 = vmatpush1.bf16.msra.mxu0 %v4473
  %4674 = vmatprep.subr.bf16.mxu0 0
  %4675 = vmatpush1.bf16.msra.mxu0 %v4474
  %4676 = vmatprep.subr.bf16.mxu0 0
  %4677 = vmatpush1.bf16.msra.mxu0 %v4475
  %4678 = vmatprep.subr.bf16.mxu0 0
  %4679 = vmatpush1.bf16.msra.mxu0 %v4476
  %4680 = vmatprep.subr.bf16.mxu0 0
  %4681 = vmatpush1.bf16.msra.mxu0 0
  %4682 = vmatprep.subr.bf16.mxu0 0
  %4683 = vmatpush1.bf16.msra.mxu0 0
  %4684 = vmatprep.subr.bf16.mxu0 0
  %4685 = vmatpush1.bf16.msra.mxu0 0
  %4686 = vmatprep.subr.bf16.mxu0 0
  %4687 = vmatpush1.bf16.msra.mxu0 0
  %4688 = vmatprep.subr.bf16.mxu0 0
  %4689 = vmatpush1.bf16.msra.mxu0 0
  %4690 = vmatprep.subr.bf16.mxu0 0
  %4691 = vmatpush1.bf16.msra.mxu0 0
  %4692 = vmatprep.subr.bf16.mxu0 0
  %4693 = vmatpush1.bf16.msra.mxu0 0
  %4694 = vmatprep.subr.bf16.mxu0 0
  %4695 = vmatpush1.bf16.msra.mxu0 0
  %4696 = vmatprep.subr.bf16.mxu0 0
  %4697 = vmatpush1.bf16.msra.mxu0 0
  %4698 = vmatprep.subr.bf16.mxu0 0
  %4699 = vmatpush1.bf16.msra.mxu0 0
  %4700 = vmatprep.mubr.bf16.mxu0 0
  %4701 = vmatmul.mubr.bf16.gmra.mrb[0].mxu0 %v4405
  %v4702 = vpop.f32.mrb[0].mxu0
  %v4703 = vadd.f32 %v4663, %v4702
  %v4704 = vpop.f32.mrb[0].mxu0
  %v4705 = vpop.f32.mrb[0].mxu0
  %v4706 = vpop.f32.mrb[0].mxu0
  %4707 = vdwg.mxu0
  %v4708 = vpack.c.bf16 %v3011, %v3011
  %v4710 = vsel %vm4403, %v4708, 0
  %4712 = vmatprep.subr.bf16.mxu0 0
  %4713 = vmatpush1.bf16.msra.mxu0 %v4564
  %4714 = vmatprep.subr.bf16.mxu0 0
  %4715 = vmatpush1.bf16.msra.mxu0 %v4565
  %4716 = vmatprep.subr.bf16.mxu0 0
  %4717 = vmatpush1.bf16.msra.mxu0 %v4566
  %4718 = vmatprep.subr.bf16.mxu0 0
  %4719 = vmatpush1.bf16.msra.mxu0 %v4567
  %4720 = vmatprep.subr.bf16.mxu0 0
  %4721 = vmatpush1.bf16.msra.mxu0 %v4568
  %4722 = vmatprep.subr.bf16.mxu0 0
  %4723 = vmatpush1.bf16.msra.mxu0 %v4569
  %4724 = vmatprep.subr.bf16.mxu0 0
  %4725 = vmatpush1.bf16.msra.mxu0 0
  %4726 = vmatprep.subr.bf16.mxu0 0
  %4727 = vmatpush1.bf16.msra.mxu0 0
  %4728 = vmatprep.subr.bf16.mxu0 0
  %4729 = vmatpush1.bf16.msra.mxu0 0
  %4730 = vmatprep.subr.bf16.mxu0 0
  %4731 = vmatpush1.bf16.msra.mxu0 0
  %4732 = vmatprep.subr.bf16.mxu0 0
  %4733 = vmatpush1.bf16.msra.mxu0 0
  %4734 = vmatprep.subr.bf16.mxu0 0
  %4735 = vmatpush1.bf16.msra.mxu0 0
  %4736 = vmatprep.subr.bf16.mxu0 0
  %4737 = vmatpush1.bf16.msra.mxu0 0
  %4738 = vmatprep.subr.bf16.mxu0 0
  %4739 = vmatpush1.bf16.msra.mxu0 0
  %4740 = vmatprep.subr.bf16.mxu0 0
  %4741 = vmatpush1.bf16.msra.mxu0 0
  %4742 = vmatprep.subr.bf16.mxu0 0
  %4743 = vmatpush1.bf16.msra.mxu0 0
  %4744 = vmatprep.mubr.bf16.mxu0 0
  %4745 = vmatmul.mubr.bf16.gmra.mrb[0].mxu0 %v4710
  %v4746 = vpop.f32.mrb[0].mxu0
  %v4747 = vadd.f32 0.0, %v4746
  %v4748 = vpop.f32.mrb[0].mxu0
  %v4749 = vpop.f32.mrb[0].mxu0
  %v4750 = vpop.f32.mrb[0].mxu0
  %4751 = vdwg.mxu0
  %v4752 = vadd.f32 %v4703, %v4747
  %v4753 = vadd.f32 %v4752, %v4624
  %v4754 = vmax.f32 %v4753, 0.0
  %4755 = vmatprep.subr.bf16.mxu0 0
  %4756 = vmatpush1.bf16.msra.mxu0 %v4391
  %4757 = vmatprep.subr.bf16.mxu0 0
  %4758 = vmatpush1.bf16.msra.mxu0 %v4392
  %4759 = vmatprep.subr.bf16.mxu0 0
  %4760 = vmatpush1.bf16.msra.mxu0 %v4393
  %4761 = vmatprep.subr.bf16.mxu0 0
  %4762 = vmatpush1.bf16.msra.mxu0 %v4394
  %4763 = vmatprep.subr.bf16.mxu0 0
  %4764 = vmatpush1.bf16.msra.mxu0 %v4395
  %4765 = vmatprep.subr.bf16.mxu0 0
  %4766 = vmatpush1.bf16.msra.mxu0 %v4396
  %4767 = vmatprep.subr.bf16.mxu0 0
  %4768 = vmatpush1.bf16.msra.mxu0 0
  %4769 = vmatprep.subr.bf16.mxu0 0
  %4770 = vmatpush1.bf16.msra.mxu0 0
  %4771 = vmatprep.subr.bf16.mxu0 0
  %4772 = vmatpush1.bf16.msra.mxu0 0
  %4773 = vmatprep.subr.bf16.mxu0 0
  %4774 = vmatpush1.bf16.msra.mxu0 0
  %4775 = vmatprep.subr.bf16.mxu0 0
  %4776 = vmatpush1.bf16.msra.mxu0 0
  %4777 = vmatprep.subr.bf16.mxu0 0
  %4778 = vmatpush1.bf16.msra.mxu0 0
  %4779 = vmatprep.subr.bf16.mxu0 0
  %4780 = vmatpush1.bf16.msra.mxu0 0
  %4781 = vmatprep.subr.bf16.mxu0 0
  %4782 = vmatpush1.bf16.msra.mxu0 0
  %4783 = vmatprep.subr.bf16.mxu0 0
  %4784 = vmatpush1.bf16.msra.mxu0 0
  %4785 = vmatprep.subr.bf16.mxu0 0
  %4786 = vmatpush1.bf16.msra.mxu0 0
  %4787 = vmatprep.mubr.bf16.mxu0 0
  %4788 = vmatmul.mubr.bf16.gmra.mrb[0].mxu0 %v4710
  %v4789 = vpop.f32.mrb[0].mxu0
  %v4790 = vadd.f32 0.0, %v4789
  %v4791 = vpop.f32.mrb[0].mxu0
  %v4792 = vpop.f32.mrb[0].mxu0
  %v4793 = vpop.f32.mrb[0].mxu0
  %4794 = vdwg.mxu0
  %4795 = vmatprep.subr.bf16.mxu0 0
  %4796 = vmatpush1.bf16.msra.mxu0 %v4471
  %4797 = vmatprep.subr.bf16.mxu0 0
  %4798 = vmatpush1.bf16.msra.mxu0 %v4472
  %4799 = vmatprep.subr.bf16.mxu0 0
  %4800 = vmatpush1.bf16.msra.mxu0 %v4473
  %4801 = vmatprep.subr.bf16.mxu0 0
  %4802 = vmatpush1.bf16.msra.mxu0 %v4474
  %4803 = vmatprep.subr.bf16.mxu0 0
  %4804 = vmatpush1.bf16.msra.mxu0 %v4475
  %4805 = vmatprep.subr.bf16.mxu0 0
  %4806 = vmatpush1.bf16.msra.mxu0 %v4476
  %4807 = vmatprep.subr.bf16.mxu0 0
  %4808 = vmatpush1.bf16.msra.mxu0 0
  %4809 = vmatprep.subr.bf16.mxu0 0
  %4810 = vmatpush1.bf16.msra.mxu0 0
  %4811 = vmatprep.subr.bf16.mxu0 0
  %4812 = vmatpush1.bf16.msra.mxu0 0
  %4813 = vmatprep.subr.bf16.mxu0 0
  %4814 = vmatpush1.bf16.msra.mxu0 0
  %4815 = vmatprep.subr.bf16.mxu0 0
  %4816 = vmatpush1.bf16.msra.mxu0 0
  %4817 = vmatprep.subr.bf16.mxu0 0
  %4818 = vmatpush1.bf16.msra.mxu0 0
  %4819 = vmatprep.subr.bf16.mxu0 0
  %4820 = vmatpush1.bf16.msra.mxu0 0
  %4821 = vmatprep.subr.bf16.mxu0 0
  %4822 = vmatpush1.bf16.msra.mxu0 0
  %4823 = vmatprep.subr.bf16.mxu0 0
  %4824 = vmatpush1.bf16.msra.mxu0 0
  %4825 = vmatprep.subr.bf16.mxu0 0
  %4826 = vmatpush1.bf16.msra.mxu0 0
  %4827 = vmatprep.mubr.bf16.mxu0 0
  %4828 = vmatmul.mubr.bf16.gmra.mrb[0].mxu0 %v4577
  %v4829 = vpop.f32.mrb[0].mxu0
  %v4830 = vadd.f32 %v4790, %v4829
  %v4831 = vpop.f32.mrb[0].mxu0
  %v4832 = vpop.f32.mrb[0].mxu0
  %v4833 = vpop.f32.mrb[0].mxu0
  %4834 = vdwg.mxu0
  %v4835 = vpack.c.bf16 %v3675, %v3675
  %v4837 = vsel %vm4403, %v4835, 0
  %4839 = vmatprep.subr.bf16.mxu0 0
  %4840 = vmatpush1.bf16.msra.mxu0 %v4564
  %4841 = vmatprep.subr.bf16.mxu0 0
  %4842 = vmatpush1.bf16.msra.mxu0 %v4565
  %4843 = vmatprep.subr.bf16.mxu0 0
  %4844 = vmatpush1.bf16.msra.mxu0 %v4566
  %4845 = vmatprep.subr.bf16.mxu0 0
  %4846 = vmatpush1.bf16.msra.mxu0 %v4567
  %4847 = vmatprep.subr.bf16.mxu0 0
  %4848 = vmatpush1.bf16.msra.mxu0 %v4568
  %4849 = vmatprep.subr.bf16.mxu0 0
  %4850 = vmatpush1.bf16.msra.mxu0 %v4569
  %4851 = vmatprep.subr.bf16.mxu0 0
  %4852 = vmatpush1.bf16.msra.mxu0 0
  %4853 = vmatprep.subr.bf16.mxu0 0
  %4854 = vmatpush1.bf16.msra.mxu0 0
  %4855 = vmatprep.subr.bf16.mxu0 0
  %4856 = vmatpush1.bf16.msra.mxu0 0
  %4857 = vmatprep.subr.bf16.mxu0 0
  %4858 = vmatpush1.bf16.msra.mxu0 0
  %4859 = vmatprep.subr.bf16.mxu0 0
  %4860 = vmatpush1.bf16.msra.mxu0 0
  %4861 = vmatprep.subr.bf16.mxu0 0
  %4862 = vmatpush1.bf16.msra.mxu0 0
  %4863 = vmatprep.subr.bf16.mxu0 0
  %4864 = vmatpush1.bf16.msra.mxu0 0
  %4865 = vmatprep.subr.bf16.mxu0 0
  %4866 = vmatpush1.bf16.msra.mxu0 0
  %4867 = vmatprep.subr.bf16.mxu0 0
  %4868 = vmatpush1.bf16.msra.mxu0 0
  %4869 = vmatprep.subr.bf16.mxu0 0
  %4870 = vmatpush1.bf16.msra.mxu0 0
  %4871 = vmatprep.mubr.bf16.mxu0 0
  %4872 = vmatmul.mubr.bf16.gmra.mrb[0].mxu0 %v4837
  %v4873 = vpop.f32.mrb[0].mxu0
  %v4874 = vadd.f32 0.0, %v4873
  %v4875 = vpop.f32.mrb[0].mxu0
  %v4876 = vpop.f32.mrb[0].mxu0
  %v4877 = vpop.f32.mrb[0].mxu0
  %4878 = vdwg.mxu0
  %v4879 = vadd.f32 %v4830, %v4874
  %v4880 = vadd.f32 %v4879, %v4624
  %v4881 = vmax.f32 %v4880, 0.0
  %4882 = vmatprep.subr.bf16.mxu0 0
  %4883 = vmatpush1.bf16.msra.mxu0 %v4391
  %4884 = vmatprep.subr.bf16.mxu0 0
  %4885 = vmatpush1.bf16.msra.mxu0 %v4392
  %4886 = vmatprep.subr.bf16.mxu0 0
  %4887 = vmatpush1.bf16.msra.mxu0 %v4393
  %4888 = vmatprep.subr.bf16.mxu0 0
  %4889 = vmatpush1.bf16.msra.mxu0 %v4394
  %4890 = vmatprep.subr.bf16.mxu0 0
  %4891 = vmatpush1.bf16.msra.mxu0 %v4395
  %4892 = vmatprep.subr.bf16.mxu0 0
  %4893 = vmatpush1.bf16.msra.mxu0 %v4396
  %4894 = vmatprep.subr.bf16.mxu0 0
  %4895 = vmatpush1.bf16.msra.mxu0 0
  %4896 = vmatprep.subr.bf16.mxu0 0
  %4897 = vmatpush1.bf16.msra.mxu0 0
  %4898 = vmatprep.subr.bf16.mxu0 0
  %4899 = vmatpush1.bf16.msra.mxu0 0
  %4900 = vmatprep.subr.bf16.mxu0 0
  %4901 = vmatpush1.bf16.msra.mxu0 0
  %4902 = vmatprep.subr.bf16.mxu0 0
  %4903 = vmatpush1.bf16.msra.mxu0 0
  %4904 = vmatprep.subr.bf16.mxu0 0
  %4905 = vmatpush1.bf16.msra.mxu0 0
  %4906 = vmatprep.subr.bf16.mxu0 0
  %4907 = vmatpush1.bf16.msra.mxu0 0
  %4908 = vmatprep.subr.bf16.mxu0 0
  %4909 = vmatpush1.bf16.msra.mxu0 0
  %4910 = vmatprep.subr.bf16.mxu0 0
  %4911 = vmatpush1.bf16.msra.mxu0 0
  %4912 = vmatprep.subr.bf16.mxu0 0
  %4913 = vmatpush1.bf16.msra.mxu0 0
  %4914 = vmatprep.mubr.bf16.mxu0 0
  %4915 = vmatmul.mubr.bf16.gmra.mrb[0].mxu0 %v4837
  %v4916 = vpop.f32.mrb[0].mxu0
  %v4917 = vadd.f32 0.0, %v4916
  %v4918 = vpop.f32.mrb[0].mxu0
  %v4919 = vpop.f32.mrb[0].mxu0
  %v4920 = vpop.f32.mrb[0].mxu0
  %4921 = vdwg.mxu0
  %4922 = vmatprep.subr.bf16.mxu0 0
  %4923 = vmatpush1.bf16.msra.mxu0 %v4471
  %4924 = vmatprep.subr.bf16.mxu0 0
  %4925 = vmatpush1.bf16.msra.mxu0 %v4472
  %4926 = vmatprep.subr.bf16.mxu0 0
  %4927 = vmatpush1.bf16.msra.mxu0 %v4473
  %4928 = vmatprep.subr.bf16.mxu0 0
  %4929 = vmatpush1.bf16.msra.mxu0 %v4474
  %4930 = vmatprep.subr.bf16.mxu0 0
  %4931 = vmatpush1.bf16.msra.mxu0 %v4475
  %4932 = vmatprep.subr.bf16.mxu0 0
  %4933 = vmatpush1.bf16.msra.mxu0 %v4476
  %4934 = vmatprep.subr.bf16.mxu0 0
  %4935 = vmatpush1.bf16.msra.mxu0 0
  %4936 = vmatprep.subr.bf16.mxu0 0
  %4937 = vmatpush1.bf16.msra.mxu0 0
  %4938 = vmatprep.subr.bf16.mxu0 0
  %4939 = vmatpush1.bf16.msra.mxu0 0
  %4940 = vmatprep.subr.bf16.mxu0 0
  %4941 = vmatpush1.bf16.msra.mxu0 0
  %4942 = vmatprep.subr.bf16.mxu0 0
  %4943 = vmatpush1.bf16.msra.mxu0 0
  %4944 = vmatprep.subr.bf16.mxu0 0
  %4945 = vmatpush1.bf16.msra.mxu0 0
  %4946 = vmatprep.subr.bf16.mxu0 0
  %4947 = vmatpush1.bf16.msra.mxu0 0
  %4948 = vmatprep.subr.bf16.mxu0 0
  %4949 = vmatpush1.bf16.msra.mxu0 0
  %4950 = vmatprep.subr.bf16.mxu0 0
  %4951 = vmatpush1.bf16.msra.mxu0 0
  %4952 = vmatprep.subr.bf16.mxu0 0
  %4953 = vmatpush1.bf16.msra.mxu0 0
  %4954 = vmatprep.mubr.bf16.mxu0 0
  %4955 = vmatmul.mubr.bf16.gmra.mrb[0].mxu0 %v4710
  %v4956 = vpop.f32.mrb[0].mxu0
  %v4957 = vadd.f32 %v4917, %v4956
  %v4958 = vpop.f32.mrb[0].mxu0
  %v4959 = vpop.f32.mrb[0].mxu0
  %v4960 = vpop.f32.mrb[0].mxu0
  %4961 = vdwg.mxu0
  %v4962 = vpack.c.bf16 %v4339, %v4339
  %v4964 = vsel %vm4403, %v4962, 0
  %4966 = vmatprep.subr.bf16.mxu0 0
  %4967 = vmatpush1.bf16.msra.mxu0 %v4564
  %4968 = vmatprep.subr.bf16.mxu0 0
  %4969 = vmatpush1.bf16.msra.mxu0 %v4565
  %4970 = vmatprep.subr.bf16.mxu0 0
  %4971 = vmatpush1.bf16.msra.mxu0 %v4566
  %4972 = vmatprep.subr.bf16.mxu0 0
  %4973 = vmatpush1.bf16.msra.mxu0 %v4567
  %4974 = vmatprep.subr.bf16.mxu0 0
  %4975 = vmatpush1.bf16.msra.mxu0 %v4568
  %4976 = vmatprep.subr.bf16.mxu0 0
  %4977 = vmatpush1.bf16.msra.mxu0 %v4569
  %4978 = vmatprep.subr.bf16.mxu0 0
  %4979 = vmatpush1.bf16.msra.mxu0 0
  %4980 = vmatprep.subr.bf16.mxu0 0
  %4981 = vmatpush1.bf16.msra.mxu0 0
  %4982 = vmatprep.subr.bf16.mxu0 0
  %4983 = vmatpush1.bf16.msra.mxu0 0
  %4984 = vmatprep.subr.bf16.mxu0 0
  %4985 = vmatpush1.bf16.msra.mxu0 0
  %4986 = vmatprep.subr.bf16.mxu0 0
  %4987 = vmatpush1.bf16.msra.mxu0 0
  %4988 = vmatprep.subr.bf16.mxu0 0
  %4989 = vmatpush1.bf16.msra.mxu0 0
  %4990 = vmatprep.subr.bf16.mxu0 0
  %4991 = vmatpush1.bf16.msra.mxu0 0
  %4992 = vmatprep.subr.bf16.mxu0 0
  %4993 = vmatpush1.bf16.msra.mxu0 0
  %4994 = vmatprep.subr.bf16.mxu0 0
  %4995 = vmatpush1.bf16.msra.mxu0 0
  %4996 = vmatprep.subr.bf16.mxu0 0
  %4997 = vmatpush1.bf16.msra.mxu0 0
  %4998 = vmatprep.mubr.bf16.mxu0 0
  %4999 = vmatmul.mubr.bf16.gmra.mrb[0].mxu0 %v4964
  %v5000 = vpop.f32.mrb[0].mxu0
  %v5001 = vadd.f32 0.0, %v5000
  %v5002 = vpop.f32.mrb[0].mxu0
  %v5003 = vpop.f32.mrb[0].mxu0
  %v5004 = vpop.f32.mrb[0].mxu0
  %5005 = vdwg.mxu0
  %v5006 = vadd.f32 %v4957, %v5001
  %v5007 = vadd.f32 %v5006, %v4624
  %v5008 = vmax.f32 %v5007, 0.0
  %v5009 = vpack.c.bf16 %v4627, %v4627
  %v5010 = vld [vmem:[%s5] sm:$0xf]
  %v5011 = vld [vmem:[%s5 + $0x4] sm:$0xf]
  %v5012 = vld [vmem:[%s5 + $0x8] sm:$0xf]
  %v5013 = vld [vmem:[%s5 + $0xc] sm:$0xf]
  %v5014 = vld [vmem:[%s5 + $0x10] sm:$0xf]
  %v5015 = vld [vmem:[%s5 + $0x14] sm:$0xf]
  %v5016 = vld [vmem:[%s5 + $0x18] sm:$0xf]
  %v5017 = vld [vmem:[%s5 + $0x1c] sm:$0xf]
  %v5018 = vld [vmem:[%s5 + $0x20] sm:$0xf]
  %v5019 = vld [vmem:[%s5 + $0x24] sm:$0xf]
  %v5020 = vld [vmem:[%s5 + $0x28] sm:$0xf]
  %v5021 = vld [vmem:[%s5 + $0x2c] sm:$0xf]
  %v5022 = vld [vmem:[%s5 + $0x30] sm:$0xf]
  %v5023 = vld [vmem:[%s5 + $0x34] sm:$0xf]
  %v5024 = vld [vmem:[%s5 + $0x38] sm:$0xf]
  %v5025 = vld [vmem:[%s5 + $0x3c] sm:$0xf]
  %v5026 = vpack.c.bf16 %v4754, %v4754
  %s5027 = scalar_lea.vmem %s5, 64
  %v5028 = vld [vmem:[%s5027] sm:$0xf]
  %v5029 = vld [vmem:[%s5027 + $0x4] sm:$0xf]
  %v5030 = vld [vmem:[%s5027 + $0x8] sm:$0xf]
  %v5031 = vld [vmem:[%s5027 + $0xc] sm:$0xf]
  %v5032 = vld [vmem:[%s5027 + $0x10] sm:$0xf]
  %v5033 = vld [vmem:[%s5027 + $0x14] sm:$0xf]
  %v5034 = vld [vmem:[%s5027 + $0x18] sm:$0xf]
  %v5035 = vld [vmem:[%s5027 + $0x1c] sm:$0xf]
  %v5036 = vld [vmem:[%s5027 + $0x20] sm:$0xf]
  %v5037 = vld [vmem:[%s5027 + $0x24] sm:$0xf]
  %v5038 = vld [vmem:[%s5027 + $0x28] sm:$0xf]
  %v5039 = vld [vmem:[%s5027 + $0x2c] sm:$0xf]
  %v5040 = vld [vmem:[%s5027 + $0x30] sm:$0xf]
  %v5041 = vld [vmem:[%s5027 + $0x34] sm:$0xf]
  %v5042 = vld [vmem:[%s5027 + $0x38] sm:$0xf]
  %v5043 = vld [vmem:[%s5027 + $0x3c] sm:$0xf]
  %v5060 = vunpack.c.l.b16 %v5028
  %v5061 = vunpack.c.l.b16 %v5029
  %v5062 = vunpack.c.l.b16 %v5030
  %v5063 = vunpack.c.l.b16 %v5031
  %v5064 = vunpack.c.l.b16 %v5032
  %v5065 = vunpack.c.l.b16 %v5033
  %v5066 = vunpack.c.l.b16 %v5034
  %v5067 = vunpack.c.l.b16 %v5035
  %v5068 = vunpack.c.l.b16 %v5036
  %v5069 = vunpack.c.l.b16 %v5037
  %v5070 = vunpack.c.l.b16 %v5038
  %v5071 = vunpack.c.l.b16 %v5039
  %v5072 = vunpack.c.l.b16 %v5040
  %v5073 = vunpack.c.l.b16 %v5041
  %v5074 = vunpack.c.l.b16 %v5042
  %v5075 = vunpack.c.l.b16 %v5043
  %v5076 = vpack.c.b16 %v5061, %v5060
  %v5077 = vpack.c.b16 %v5063, %v5062
  %v5078 = vpack.c.b16 %v5065, %v5064
  %v5079 = vpack.c.b16 %v5067, %v5066
  %v5080 = vpack.c.b16 %v5069, %v5068
  %v5081 = vpack.c.b16 %v5071, %v5070
  %v5082 = vpack.c.b16 %v5073, %v5072
  %v5083 = vpack.c.b16 %v5075, %v5074
  %5092 = vmatprep.subr.bf16.mxu0 0
  %5093 = vmatpush1.bf16.msra.mxu0 %v5076
  %5094 = vmatprep.subr.bf16.mxu0 0
  %5095 = vmatpush1.bf16.msra.mxu0 %v5077
  %5096 = vmatprep.subr.bf16.mxu0 0
  %5097 = vmatpush1.bf16.msra.mxu0 %v5078
  %5098 = vmatprep.subr.bf16.mxu0 0
  %5099 = vmatpush1.bf16.msra.mxu0 %v5079
  %5100 = vmatprep.subr.bf16.mxu0 0
  %5101 = vmatpush1.bf16.msra.mxu0 %v5080
  %5102 = vmatprep.subr.bf16.mxu0 0
  %5103 = vmatpush1.bf16.msra.mxu0 %v5081
  %5104 = vmatprep.subr.bf16.mxu0 0
  %5105 = vmatpush1.bf16.msra.mxu0 %v5082
  %5106 = vmatprep.subr.bf16.mxu0 0
  %5107 = vmatpush1.bf16.msra.mxu0 %v5083
  %5108 = vmatprep.subr.bf16.mxu0 0
  %5109 = vmatpush1.bf16.msra.mxu0 0
  %5110 = vmatprep.subr.bf16.mxu0 0
  %5111 = vmatpush1.bf16.msra.mxu0 0
  %5112 = vmatprep.subr.bf16.mxu0 0
  %5113 = vmatpush1.bf16.msra.mxu0 0
  %5114 = vmatprep.subr.bf16.mxu0 0
  %5115 = vmatpush1.bf16.msra.mxu0 0
  %5116 = vmatprep.subr.bf16.mxu0 0
  %5117 = vmatpush1.bf16.msra.mxu0 0
  %5118 = vmatprep.subr.bf16.mxu0 0
  %5119 = vmatpush1.bf16.msra.mxu0 0
  %5120 = vmatprep.subr.bf16.mxu0 0
  %5121 = vmatpush1.bf16.msra.mxu0 0
  %5122 = vmatprep.subr.bf16.mxu0 0
  %5123 = vmatpush1.bf16.msra.mxu0 0
  %5124 = vmatprep.mubr.bf16.mxu0 0
  %5125 = vmatmul.mubr.bf16.gmra.mrb[0].mxu0 %v5026
  %v5126 = vpop.f32.mrb[0].mxu0
  %v5127 = vadd.f32 0.0, %v5126
  %v5128 = vpop.f32.mrb[0].mxu0
  %v5129 = vpop.f32.mrb[0].mxu0
  %v5130 = vpop.f32.mrb[0].mxu0
  %5131 = vdwg.mxu0
  %v5148 = vunpack.c.l.b16 %v5010
  %v5149 = vunpack.c.l.b16 %v5011
  %v5150 = vunpack.c.l.b16 %v5012
  %v5151 = vunpack.c.l.b16 %v5013
  %v5152 = vunpack.c.l.b16 %v5014
  %v5153 = vunpack.c.l.b16 %v5015
  %v5154 = vunpack.c.l.b16 %v5016
  %v5155 = vunpack.c.l.b16 %v5017
  %v5156 = vunpack.c.l.b16 %v5018
  %v5157 = vunpack.c.l.b16 %v5019
  %v5158 = vunpack.c.l.b16 %v5020
  %v5159 = vunpack.c.l.b16 %v5021
  %v5160 = vunpack.c.l.b16 %v5022
  %v5161 = vunpack.c.l.b16 %v5023
  %v5162 = vunpack.c.l.b16 %v5024
  %v5163 = vunpack.c.l.b16 %v5025
  %v5164 = vpack.c.b16 %v5149, %v5148
  %v5165 = vpack.c.b16 %v5151, %v5150
  %v5166 = vpack.c.b16 %v5153, %v5152
  %v5167 = vpack.c.b16 %v5155, %v5154
  %v5168 = vpack.c.b16 %v5157, %v5156
  %v5169 = vpack.c.b16 %v5159, %v5158
  %v5170 = vpack.c.b16 %v5161, %v5160
  %v5171 = vpack.c.b16 %v5163, %v5162
  %5180 = vmatprep.subr.bf16.mxu0 0
  %5181 = vmatpush1.bf16.msra.mxu0 %v5164
  %5182 = vmatprep.subr.bf16.mxu0 0
  %5183 = vmatpush1.bf16.msra.mxu0 %v5165
  %5184 = vmatprep.subr.bf16.mxu0 0
  %5185 = vmatpush1.bf16.msra.mxu0 %v5166
  %5186 = vmatprep.subr.bf16.mxu0 0
  %5187 = vmatpush1.bf16.msra.mxu0 %v5167
  %5188 = vmatprep.subr.bf16.mxu0 0
  %5189 = vmatpush1.bf16.msra.mxu0 %v5168
  %5190 = vmatprep.subr.bf16.mxu0 0
  %5191 = vmatpush1.bf16.msra.mxu0 %v5169
  %5192 = vmatprep.subr.bf16.mxu0 0
  %5193 = vmatpush1.bf16.msra.mxu0 %v5170
  %5194 = vmatprep.subr.bf16.mxu0 0
  %5195 = vmatpush1.bf16.msra.mxu0 %v5171
  %5196 = vmatprep.subr.bf16.mxu0 0
  %5197 = vmatpush1.bf16.msra.mxu0 0
  %5198 = vmatprep.subr.bf16.mxu0 0
  %5199 = vmatpush1.bf16.msra.mxu0 0
  %5200 = vmatprep.subr.bf16.mxu0 0
  %5201 = vmatpush1.bf16.msra.mxu0 0
  %5202 = vmatprep.subr.bf16.mxu0 0
  %5203 = vmatpush1.bf16.msra.mxu0 0
  %5204 = vmatprep.subr.bf16.mxu0 0
  %5205 = vmatpush1.bf16.msra.mxu0 0
  %5206 = vmatprep.subr.bf16.mxu0 0
  %5207 = vmatpush1.bf16.msra.mxu0 0
  %5208 = vmatprep.subr.bf16.mxu0 0
  %5209 = vmatpush1.bf16.msra.mxu0 0
  %5210 = vmatprep.subr.bf16.mxu0 0
  %5211 = vmatpush1.bf16.msra.mxu0 0
  %5212 = vmatprep.mubr.bf16.mxu0 0
  %5213 = vmatmul.mubr.bf16.gmra.mrb[0].mxu0 %v5009
  %v5214 = vpop.f32.mrb[0].mxu0
  %v5215 = vadd.f32 %v5127, %v5214
  %v5216 = vpop.f32.mrb[0].mxu0
  %v5217 = vpop.f32.mrb[0].mxu0
  %v5218 = vpop.f32.mrb[0].mxu0
  %5219 = vdwg.mxu0
  %v5220 = vpack.c.bf16 %v4881, %v4881
  %s5221 = scalar_lea.vmem %s5, 128
  %v5222 = vld [vmem:[%s5221] sm:$0xf]
  %v5223 = vld [vmem:[%s5221 + $0x4] sm:$0xf]
  %v5224 = vld [vmem:[%s5221 + $0x8] sm:$0xf]
  %v5225 = vld [vmem:[%s5221 + $0xc] sm:$0xf]
  %v5226 = vld [vmem:[%s5221 + $0x10] sm:$0xf]
  %v5227 = vld [vmem:[%s5221 + $0x14] sm:$0xf]
  %v5228 = vld [vmem:[%s5221 + $0x18] sm:$0xf]
  %v5229 = vld [vmem:[%s5221 + $0x1c] sm:$0xf]
  %v5230 = vld [vmem:[%s5221 + $0x20] sm:$0xf]
  %v5231 = vld [vmem:[%s5221 + $0x24] sm:$0xf]
  %v5232 = vld [vmem:[%s5221 + $0x28] sm:$0xf]
  %v5233 = vld [vmem:[%s5221 + $0x2c] sm:$0xf]
  %v5234 = vld [vmem:[%s5221 + $0x30] sm:$0xf]
  %v5235 = vld [vmem:[%s5221 + $0x34] sm:$0xf]
  %v5236 = vld [vmem:[%s5221 + $0x38] sm:$0xf]
  %v5237 = vld [vmem:[%s5221 + $0x3c] sm:$0xf]
  %v5254 = vunpack.c.l.b16 %v5222
  %v5255 = vunpack.c.l.b16 %v5223
  %v5256 = vunpack.c.l.b16 %v5224
  %v5257 = vunpack.c.l.b16 %v5225
  %v5258 = vunpack.c.l.b16 %v5226
  %v5259 = vunpack.c.l.b16 %v5227
  %v5260 = vunpack.c.l.b16 %v5228
  %v5261 = vunpack.c.l.b16 %v5229
  %v5262 = vunpack.c.l.b16 %v5230
  %v5263 = vunpack.c.l.b16 %v5231
  %v5264 = vunpack.c.l.b16 %v5232
  %v5265 = vunpack.c.l.b16 %v5233
  %v5266 = vunpack.c.l.b16 %v5234
  %v5267 = vunpack.c.l.b16 %v5235
  %v5268 = vunpack.c.l.b16 %v5236
  %v5269 = vunpack.c.l.b16 %v5237
  %v5270 = vpack.c.b16 %v5255, %v5254
  %v5271 = vpack.c.b16 %v5257, %v5256
  %v5272 = vpack.c.b16 %v5259, %v5258
  %v5273 = vpack.c.b16 %v5261, %v5260
  %v5274 = vpack.c.b16 %v5263, %v5262
  %v5275 = vpack.c.b16 %v5265, %v5264
  %v5276 = vpack.c.b16 %v5267, %v5266
  %v5277 = vpack.c.b16 %v5269, %v5268
  %5286 = vmatprep.subr.bf16.mxu0 0
  %5287 = vmatpush1.bf16.msra.mxu0 %v5270
  %5288 = vmatprep.subr.bf16.mxu0 0
  %5289 = vmatpush1.bf16.msra.mxu0 %v5271
  %5290 = vmatprep.subr.bf16.mxu0 0
  %5291 = vmatpush1.bf16.msra.mxu0 %v5272
  %5292 = vmatprep.subr.bf16.mxu0 0
  %5293 = vmatpush1.bf16.msra.mxu0 %v5273
  %5294 = vmatprep.subr.bf16.mxu0 0
  %5295 = vmatpush1.bf16.msra.mxu0 %v5274
  %5296 = vmatprep.subr.bf16.mxu0 0
  %5297 = vmatpush1.bf16.msra.mxu0 %v5275
  %5298 = vmatprep.subr.bf16.mxu0 0
  %5299 = vmatpush1.bf16.msra.mxu0 %v5276
  %5300 = vmatprep.subr.bf16.mxu0 0
  %5301 = vmatpush1.bf16.msra.mxu0 %v5277
  %5302 = vmatprep.subr.bf16.mxu0 0
  %5303 = vmatpush1.bf16.msra.mxu0 0
  %5304 = vmatprep.subr.bf16.mxu0 0
  %5305 = vmatpush1.bf16.msra.mxu0 0
  %5306 = vmatprep.subr.bf16.mxu0 0
  %5307 = vmatpush1.bf16.msra.mxu0 0
  %5308 = vmatprep.subr.bf16.mxu0 0
  %5309 = vmatpush1.bf16.msra.mxu0 0
  %5310 = vmatprep.subr.bf16.mxu0 0
  %5311 = vmatpush1.bf16.msra.mxu0 0
  %5312 = vmatprep.subr.bf16.mxu0 0
  %5313 = vmatpush1.bf16.msra.mxu0 0
  %5314 = vmatprep.subr.bf16.mxu0 0
  %5315 = vmatpush1.bf16.msra.mxu0 0
  %5316 = vmatprep.subr.bf16.mxu0 0
  %5317 = vmatpush1.bf16.msra.mxu0 0
  %5318 = vmatprep.mubr.bf16.mxu0 0
  %5319 = vmatmul.mubr.bf16.gmra.mrb[0].mxu0 %v5220
  %v5320 = vpop.f32.mrb[0].mxu0
  %v5321 = vadd.f32 0.0, %v5320
  %v5322 = vpop.f32.mrb[0].mxu0
  %v5323 = vpop.f32.mrb[0].mxu0
  %v5324 = vpop.f32.mrb[0].mxu0
  %5325 = vdwg.mxu0
  %v5326 = vadd.f32 %v5215, %v5321
  %v5328 = vlaneseq
  %v5329 = vshrl.u32 %v5328, 7
  %v5330 = vsub.s32 0, %v5329
  %v5331 = vrot.slane %v35, %v5330
  %v5333 = vadd.f32 %v5326, %v5331
  %v5334 = vmax.f32 %v5333, 0.0
  %5335 = vmatprep.subr.bf16.mxu0 0
  %5336 = vmatpush1.bf16.msra.mxu0 %v5076
  %5337 = vmatprep.subr.bf16.mxu0 0
  %5338 = vmatpush1.bf16.msra.mxu0 %v5077
  %5339 = vmatprep.subr.bf16.mxu0 0
  %5340 = vmatpush1.bf16.msra.mxu0 %v5078
  %5341 = vmatprep.subr.bf16.mxu0 0
  %5342 = vmatpush1.bf16.msra.mxu0 %v5079
  %5343 = vmatprep.subr.bf16.mxu0 0
  %5344 = vmatpush1.bf16.msra.mxu0 %v5080
  %5345 = vmatprep.subr.bf16.mxu0 0
  %5346 = vmatpush1.bf16.msra.mxu0 %v5081
  %5347 = vmatprep.subr.bf16.mxu0 0
  %5348 = vmatpush1.bf16.msra.mxu0 %v5082
  %5349 = vmatprep.subr.bf16.mxu0 0
  %5350 = vmatpush1.bf16.msra.mxu0 %v5083
  %5351 = vmatprep.subr.bf16.mxu0 0
  %5352 = vmatpush1.bf16.msra.mxu0 0
  %5353 = vmatprep.subr.bf16.mxu0 0
  %5354 = vmatpush1.bf16.msra.mxu0 0
  %5355 = vmatprep.subr.bf16.mxu0 0
  %5356 = vmatpush1.bf16.msra.mxu0 0
  %5357 = vmatprep.subr.bf16.mxu0 0
  %5358 = vmatpush1.bf16.msra.mxu0 0
  %5359 = vmatprep.subr.bf16.mxu0 0
  %5360 = vmatpush1.bf16.msra.mxu0 0
  %5361 = vmatprep.subr.bf16.mxu0 0
  %5362 = vmatpush1.bf16.msra.mxu0 0
  %5363 = vmatprep.subr.bf16.mxu0 0
  %5364 = vmatpush1.bf16.msra.mxu0 0
  %5365 = vmatprep.subr.bf16.mxu0 0
  %5366 = vmatpush1.bf16.msra.mxu0 0
  %5367 = vmatprep.mubr.bf16.mxu0 0
  %5368 = vmatmul.mubr.bf16.gmra.mrb[0].mxu0 %v5220
  %v5369 = vpop.f32.mrb[0].mxu0
  %v5370 = vadd.f32 0.0, %v5369
  %v5371 = vpop.f32.mrb[0].mxu0
  %v5372 = vpop.f32.mrb[0].mxu0
  %v5373 = vpop.f32.mrb[0].mxu0
  %5374 = vdwg.mxu0
  %5375 = vmatprep.subr.bf16.mxu0 0
  %5376 = vmatpush1.bf16.msra.mxu0 %v5164
  %5377 = vmatprep.subr.bf16.mxu0 0
  %5378 = vmatpush1.bf16.msra.mxu0 %v5165
  %5379 = vmatprep.subr.bf16.mxu0 0
  %5380 = vmatpush1.bf16.msra.mxu0 %v5166
  %5381 = vmatprep.subr.bf16.mxu0 0
  %5382 = vmatpush1.bf16.msra.mxu0 %v5167
  %5383 = vmatprep.subr.bf16.mxu0 0
  %5384 = vmatpush1.bf16.msra.mxu0 %v5168
  %5385 = vmatprep.subr.bf16.mxu0 0
  %5386 = vmatpush1.bf16.msra.mxu0 %v5169
  %5387 = vmatprep.subr.bf16.mxu0 0
  %5388 = vmatpush1.bf16.msra.mxu0 %v5170
  %5389 = vmatprep.subr.bf16.mxu0 0
  %5390 = vmatpush1.bf16.msra.mxu0 %v5171
  %5391 = vmatprep.subr.bf16.mxu0 0
  %5392 = vmatpush1.bf16.msra.mxu0 0
  %5393 = vmatprep.subr.bf16.mxu0 0
  %5394 = vmatpush1.bf16.msra.mxu0 0
  %5395 = vmatprep.subr.bf16.mxu0 0
  %5396 = vmatpush1.bf16.msra.mxu0 0
  %5397 = vmatprep.subr.bf16.mxu0 0
  %5398 = vmatpush1.bf16.msra.mxu0 0
  %5399 = vmatprep.subr.bf16.mxu0 0
  %5400 = vmatpush1.bf16.msra.mxu0 0
  %5401 = vmatprep.subr.bf16.mxu0 0
  %5402 = vmatpush1.bf16.msra.mxu0 0
  %5403 = vmatprep.subr.bf16.mxu0 0
  %5404 = vmatpush1.bf16.msra.mxu0 0
  %5405 = vmatprep.subr.bf16.mxu0 0
  %5406 = vmatpush1.bf16.msra.mxu0 0
  %5407 = vmatprep.mubr.bf16.mxu0 0
  %5408 = vmatmul.mubr.bf16.gmra.mrb[0].mxu0 %v5026
  %v5409 = vpop.f32.mrb[0].mxu0
  %v5410 = vadd.f32 %v5370, %v5409
  %v5411 = vpop.f32.mrb[0].mxu0
  %v5412 = vpop.f32.mrb[0].mxu0
  %v5413 = vpop.f32.mrb[0].mxu0
  %5414 = vdwg.mxu0
  %v5415 = vpack.c.bf16 %v5008, %v5008
  %5416 = vmatprep.subr.bf16.mxu0 0
  %5417 = vmatpush1.bf16.msra.mxu0 %v5270
  %5418 = vmatprep.subr.bf16.mxu0 0
  %5419 = vmatpush1.bf16.msra.mxu0 %v5271
  %5420 = vmatprep.subr.bf16.mxu0 0
  %5421 = vmatpush1.bf16.msra.mxu0 %v5272
  %5422 = vmatprep.subr.bf16.mxu0 0
  %5423 = vmatpush1.bf16.msra.mxu0 %v5273
  %5424 = vmatprep.subr.bf16.mxu0 0
  %5425 = vmatpush1.bf16.msra.mxu0 %v5274
  %5426 = vmatprep.subr.bf16.mxu0 0
  %5427 = vmatpush1.bf16.msra.mxu0 %v5275
  %5428 = vmatprep.subr.bf16.mxu0 0
  %5429 = vmatpush1.bf16.msra.mxu0 %v5276
  %5430 = vmatprep.subr.bf16.mxu0 0
  %5431 = vmatpush1.bf16.msra.mxu0 %v5277
  %5432 = vmatprep.subr.bf16.mxu0 0
  %5433 = vmatpush1.bf16.msra.mxu0 0
  %5434 = vmatprep.subr.bf16.mxu0 0
  %5435 = vmatpush1.bf16.msra.mxu0 0
  %5436 = vmatprep.subr.bf16.mxu0 0
  %5437 = vmatpush1.bf16.msra.mxu0 0
  %5438 = vmatprep.subr.bf16.mxu0 0
  %5439 = vmatpush1.bf16.msra.mxu0 0
  %5440 = vmatprep.subr.bf16.mxu0 0
  %5441 = vmatpush1.bf16.msra.mxu0 0
  %5442 = vmatprep.subr.bf16.mxu0 0
  %5443 = vmatpush1.bf16.msra.mxu0 0
  %5444 = vmatprep.subr.bf16.mxu0 0
  %5445 = vmatpush1.bf16.msra.mxu0 0
  %5446 = vmatprep.subr.bf16.mxu0 0
  %5447 = vmatpush1.bf16.msra.mxu0 0
  %5448 = vmatprep.mubr.bf16.mxu0 0
  %5449 = vmatmul.mubr.bf16.gmra.mrb[0].mxu0 %v5415
  %v5450 = vpop.f32.mrb[0].mxu0
  %v5451 = vadd.f32 0.0, %v5450
  %v5452 = vpop.f32.mrb[0].mxu0
  %v5453 = vpop.f32.mrb[0].mxu0
  %v5454 = vpop.f32.mrb[0].mxu0
  %5455 = vdwg.mxu0
  %v5456 = vadd.f32 %v5410, %v5451
  %v5457 = vadd.f32 %v5456, %v5331
  %v5458 = vmax.f32 %v5457, 0.0
  %5460 = vrot.lane.b32.xlu0 %v5334, 64
  %v5461 = vpop.permute.xlu0 %5460
  %v5463 = vmax.f32 %v5334, %v5461
  %5465 = vrot.lane.b32.xlu0 %v5458, 64
  %v5466 = vpop.permute.xlu0 %5465
  %v5468 = vmax.f32 %v5458, %v5466
  %v5469 = vmax.f32 %v5463, %v5468
  %v5470 = vpack.c.bf16 %v5469, %v5469
  %v5471 = vld [vmem:[%s7] sm:$0xf]
  %v5472 = vld [vmem:[%s7 + $0x4] sm:$0xf]
  %v5473 = vld [vmem:[%s7 + $0x8] sm:$0xf]
  %v5474 = vld [vmem:[%s7 + $0xc] sm:$0xf]
  %v5475 = vld [vmem:[%s7 + $0x10] sm:$0xf]
  %v5476 = vld [vmem:[%s7 + $0x14] sm:$0xf]
  %v5477 = vld [vmem:[%s7 + $0x18] sm:$0xf]
  %v5478 = vld [vmem:[%s7 + $0x1c] sm:$0xf]
  %v5480 = vlaneseq
  %v5481 = vshrl.u32 %v5480, 7
  %v5482 = vsub.s32 0, %v5481
  %v5483 = vrot.slane %v36, %v5482
  %v5493 = vunpack.c.l.b16 %v5471
  %v5494 = vunpack.c.l.b16 %v5472
  %v5495 = vunpack.c.l.b16 %v5473
  %v5496 = vunpack.c.l.b16 %v5474
  %v5497 = vunpack.c.l.b16 %v5475
  %v5498 = vunpack.c.l.b16 %v5476
  %v5499 = vunpack.c.l.b16 %v5477
  %v5500 = vunpack.c.l.b16 %v5478
  %v5501 = vpack.c.b16 %v5494, %v5493
  %v5502 = vpack.c.b16 %v5496, %v5495
  %v5503 = vpack.c.b16 %v5498, %v5497
  %v5504 = vpack.c.b16 %v5500, %v5499
  %v5510 = vsel %vm1016, %v5470, 0
  %5512 = vmatprep.subr.bf16.mxu0 0
  %5513 = vmatpush1.bf16.msra.mxu0 %v5501
  %5514 = vmatprep.subr.bf16.mxu0 0
  %5515 = vmatpush1.bf16.msra.mxu0 %v5502
  %5516 = vmatprep.subr.bf16.mxu0 0
  %5517 = vmatpush1.bf16.msra.mxu0 %v5503
  %5518 = vmatprep.subr.bf16.mxu0 0
  %5519 = vmatpush1.bf16.msra.mxu0 %v5504
  %5520 = vmatprep.subr.bf16.mxu0 0
  %5521 = vmatpush1.bf16.msra.mxu0 0
  %5522 = vmatprep.subr.bf16.mxu0 0
  %5523 = vmatpush1.bf16.msra.mxu0 0
  %5524 = vmatprep.subr.bf16.mxu0 0
  %5525 = vmatpush1.bf16.msra.mxu0 0
  %5526 = vmatprep.subr.bf16.mxu0 0
  %5527 = vmatpush1.bf16.msra.mxu0 0
  %5528 = vmatprep.subr.bf16.mxu0 0
  %5529 = vmatpush1.bf16.msra.mxu0 0
  %5530 = vmatprep.subr.bf16.mxu0 0
  %5531 = vmatpush1.bf16.msra.mxu0 0
  %5532 = vmatprep.subr.bf16.mxu0 0
  %5533 = vmatpush1.bf16.msra.mxu0 0
  %5534 = vmatprep.subr.bf16.mxu0 0
  %5535 = vmatpush1.bf16.msra.mxu0 0
  %5536 = vmatprep.subr.bf16.mxu0 0
  %5537 = vmatpush1.bf16.msra.mxu0 0
  %5538 = vmatprep.subr.bf16.mxu0 0
  %5539 = vmatpush1.bf16.msra.mxu0 0
  %5540 = vmatprep.subr.bf16.mxu0 0
  %5541 = vmatpush1.bf16.msra.mxu0 0
  %5542 = vmatprep.subr.bf16.mxu0 0
  %5543 = vmatpush1.bf16.msra.mxu0 0
  %5544 = vmatprep.mubr.bf16.mxu0 0
  %5545 = vmatmul.mubr.bf16.gmra.mrb[0].mxu0 %v5510
  %v5546 = vpop.f32.mrb[0].mxu0
  %v5547 = vadd.f32 %v5483, %v5546
  %v5548 = vpop.f32.mrb[0].mxu0
  %v5549 = vpop.f32.mrb[0].mxu0
  %v5550 = vpop.f32.mrb[0].mxu0
  %5551 = vdwg.mxu0
  %vm5552 = vcmask 80896
  %5553 = vst.msk [vmem:[%s9] sm:$0xff] %vm5552, %v5547
  // Predicated region
  $region38: #{_lambda_.1} parent=0 // pred_check
    _
  $region39: #{_lambda_.1} parent=0 // pred_check_branch
    %5555 = sbr.rel (0) target = $region41
  $region40: #{_lambda_.1} parent=0 // pred_region
    _
  $region41: #{_lambda_.1} parent=0 // pred_fallthru
    _
  // Predicated region
  $region42: #{_lambda_.1} parent=0 // pred_check
    _
  $region43: #{_lambda_.1} parent=0 // pred_check_branch
    %5557 = sbr.rel (0) target = $region45
  $region44: #{_lambda_.1} parent=0 // pred_region
    _
  $region45: #{_lambda_.1} parent=0 // pred_fallthru
    _

</llo_original>
